<compile_context>
chip_gen: v6e
topology: v6e:2x2x1
jax: 0.10.0
libtpu: 0.0.40
codegen_flags: <defaults>
</compile_context>

<pallas_src>
import math
from functools import partial

import jax
import jax.numpy as jnp
from jax.experimental import pallas as pl
from jax.experimental.pallas import tpu as pltpu


# -----------------------------------------------------------------------------
# Small helpers (tile / padding policy)
# -----------------------------------------------------------------------------
def _round_up(x, m):
    return ((x + m - 1) // m) * m


def _pad_channels(c):
    """Lane-friendly channel widths: 3->4, 64->64, 96->128, 128->128."""
    if c <= 4:
        return 4
    if c <= 64:
        return 64
    return _round_up(c, 128)


def _pad_k(k):
    """Contraction dim: keep it 128-aligned when tiled; tiny K just 8-aligned."""
    if k % 128 == 0:
        return k
    return _round_up(k, 128) if k > 128 else _round_up(k, 8)


def _choose_tk(k_pad):
    """Whole K if it fits comfortably, else the largest <=768 divisor that is a
    multiple of 128 (k_pad > 128 is always a multiple of 128 here)."""
    if k_pad <= 768:
        return k_pad
    for cand in range(768, 127, -128):
        if k_pad % cand == 0:
            return cand
    return 128


def _choose_tm(m):
    return 512 if m >= 512 else _round_up(m, 8)


# -----------------------------------------------------------------------------
# Fused conv-as-matmul Pallas kernel:  out = epilogue(patches @ W + b)
# epilogue = [ReLU] then optionally (+ identity, ReLU)  -- matches ResUnit:
#   conv2 has its own ReLU (final_activation), then x = ReLU(x + identity).
# -----------------------------------------------------------------------------
def _conv_matmul_kernel(*refs, apply_relu, fuse_residual):
    if fuse_residual:
        x_ref, w_ref, b_ref, res_ref, o_ref, acc_ref = refs
    else:
        x_ref, w_ref, b_ref, o_ref, acc_ref = refs
        res_ref = None

    @pl.when(pl.program_id(2) == 0)
    def _init():
        acc_ref[...] = jnp.zeros_like(acc_ref)

    acc_ref[...] += jnp.dot(x_ref[...], w_ref[...],
                            preferred_element_type=jnp.float32)

    @pl.when(pl.program_id(2) == pl.num_programs(2) - 1)
    def _finalize():
        r = acc_ref[...] + b_ref[...]              # f32 epilogue
        if apply_relu:                             # conv block's own activation
            r = jnp.maximum(r, 0.0)
        if fuse_residual:                          # ResUnit: add identity, ReLU
            r = jnp.maximum(r + res_ref[...].astype(jnp.float32), 0.0)
        o_ref[...] = r.astype(o_ref.dtype)


def fused_conv_matmul(patches, w, b, *, apply_relu, residual=None,
                      out_dtype=jnp.bfloat16):
    """Tiled (M,K)@(K,N) + bias [+ReLU] [+identity, ReLU] on the MXU.

    patches: (M, K_pad) bf16, w: (K_pad, Cout_pad) bf16, b: (1, Cout_pad) f32,
    residual: optional (M, Cout_pad) bf16 added in the epilogue.
    """
    M, Kp = patches.shape
    Kp2, Nc = w.shape
    assert Kp == Kp2, (Kp, Kp2)

    tm = _choose_tm(M)
    Mp = _round_up(M, tm)
    if Mp != M:
        patches = jnp.pad(patches, ((0, Mp - M), (0, 0)))
        if residual is not None:
            residual = jnp.pad(residual, ((0, Mp - M), (0, 0)))
    tn = 128 if Nc % 128 == 0 else Nc
    tk = _choose_tk(Kp)
    grid = (Mp // tm, Nc // tn, Kp // tk)

    in_specs = [
        pl.BlockSpec((tm, tk), lambda i, j, k: (i, k)),   # im2col patches
        pl.BlockSpec((tk, tn), lambda i, j, k: (k, j)),   # pre-baked weights
        pl.BlockSpec((1, tn), lambda i, j, k: (0, j)),    # bias (f32)
    ]
    args = [patches, w, b]
    if residual is not None:
        in_specs.append(pl.BlockSpec((tm, tn), lambda i, j, k: (i, j)))
        args.append(residual)

    out = pl.pallas_call(
        partial(_conv_matmul_kernel, apply_relu=apply_relu,
                fuse_residual=residual is not None),
        out_shape=jax.ShapeDtypeStruct((Mp, Nc), out_dtype),
        grid_spec=pltpu.PrefetchScalarGridSpec(
            num_scalar_prefetch=0,
            grid=grid,
            in_specs=in_specs,
            out_specs=pl.BlockSpec((tm, tn), lambda i, j, k: (i, j)),
            scratch_shapes=[pltpu.VMEM((tm, tn), jnp.float32)],
        ),
        compiler_params=pltpu.CompilerParams(
            dimension_semantics=("parallel", "parallel", "arbitrary"),
            vmem_limit_bytes=32 * 1024 * 1024,
        ),
    )(*args)
    return out[:M] if Mp != M else out


# -----------------------------------------------------------------------------
# Glue: im2col (patch order (kh, kw, cin_pad)), conv / ResUnit composition
# -----------------------------------------------------------------------------
def im2col(x, kh, kw, stride, padding, k_pad):
    """x: (N,H,W,C) bf16 -> (N*Ho*Wo, k_pad) patches; 1x1 convs skip im2col."""
    N, H, W, C = x.shape
    if kh == 1 and kw == 1 and padding == 0:
        if stride != 1:
            x = x[:, ::stride, ::stride, :]
        _, Ho, Wo, _ = x.shape
        cols = x
    else:
        xp = jnp.pad(x, ((0, 0), (padding, padding), (padding, padding), (0, 0)))
        Ho = (H + 2 * padding - kh) // stride + 1
        Wo = (W + 2 * padding - kw) // stride + 1
        slabs = []
        for i in range(kh):
            for j in range(kw):
                slabs.append(xp[:, i:i + stride * Ho:stride,
                                j:j + stride * Wo:stride, :])
        cols = jnp.concatenate(slabs, axis=-1)      # (N, Ho, Wo, kh*kw*C)
    k = cols.shape[-1]
    if k_pad > k:
        cols = jnp.pad(cols, ((0, 0), (0, 0), (0, 0), (0, k_pad - k)))
    return cols.reshape(N * Ho * Wo, k_pad), N, Ho, Wo


def conv_forward(x, layer, *, relu, residual=None, out_dtype=jnp.bfloat16):
    """Conv2d(bias=True) [+ReLU] [+fused residual add+ReLU]. x: NHWC bf16."""
    patches, N, Ho, Wo = im2col(x, layer["kh"], layer["kw"], layer["stride"],
                                layer["padding"], layer["k_pad"])
    res2 = None
    if residual is not None:
        res2 = residual.reshape(N * Ho * Wo, layer["cout_pad"])
    out = fused_conv_matmul(patches, layer["w"], layer["b"], apply_relu=relu,
                            residual=res2, out_dtype=out_dtype)
    return out.reshape(N, Ho, Wo, layer["cout_pad"])


def res_unit_forward(x, unit):
    """ResUnit (bottleneck=False): body = conv3x3(ReLU) -> conv3x3(ReLU),
    identity = optional 1x1 conv; residual add + ReLU fused into conv2."""
    if "identity" in unit:
        identity = conv_forward(x, unit["identity"], relu=False)
    else:
        identity = x
    y = conv_forward(x, unit["conv1"], relu=True)
    y = conv_forward(y, unit["conv2"], relu=True, residual=identity)
    return y


# -----------------------------------------------------------------------------
# Parameters: PyTorch-faithful init (kaiming_uniform fan_out/relu, zero bias),
# then pre-baked once into MXU-friendly padded K-major bf16 layout.
# -----------------------------------------------------------------------------
def init_conv(key, cin, cout, k):
    fan_out = cout * k * k
    bound = math.sqrt(2.0) * math.sqrt(3.0 / fan_out)
    w = jax.random.uniform(key, (cout, cin, k, k), jnp.float32, -bound, bound)
    b = jnp.zeros((cout,), jnp.float32)
    return w, b


def prepare_conv(w, b, stride, padding):
    cout, cin, kh, kw = w.shape
    cin_p = _pad_channels(cin)
    cout_p = _pad_channels(cout)
    w = jnp.pad(w, ((0, cout_p - cout), (0, cin_p - cin), (0, 0), (0, 0)))
    w2 = jnp.transpose(w, (2, 3, 1, 0)).reshape(kh * kw * cin_p, cout_p)
    k_raw = kh * kw * cin_p
    k_pad = _pad_k(k_raw)
    if k_pad > k_raw:
        w2 = jnp.pad(w2, ((0, k_pad - k_raw), (0, 0)))
    b2 = jnp.pad(b, (0, cout_p - cout)).reshape(1, cout_p).astype(jnp.float32)
    return {"w": w2.astype(jnp.bfloat16), "b": b2, "kh": kh, "kw": kw,
            "stride": stride, "padding": padding,
            "cin_pad": cin_p, "cout_pad": cout_p, "k_pad": k_pad}


def init_basic_encoder_params(key, output_dim):
    keys = iter(jax.random.split(key, 64))
    params = {"output_dim": output_dim}
    w, b = init_conv(next(keys), 3, 64, 7)
    params["init"] = prepare_conv(w, b, stride=2, padding=3)   # conv7x7_block
    channels = [[64, 64], [96, 96], [128, 128]]
    in_c = 64
    stages = []
    for i, cps in enumerate(channels):
        units = []
        for j, out_c in enumerate(cps):
            stride = 2 if (j == 0 and i != 0) else 1
            unit = {}
            w, b = init_conv(next(keys), in_c, out_c, 3)
            unit["conv1"] = prepare_conv(w, b, stride=stride, padding=1)
            w, b = init_conv(next(keys), out_c, out_c, 3)
            unit["conv2"] = prepare_conv(w, b, stride=1, padding=1)
            if in_c != out_c or stride != 1:
                w, b = init_conv(next(keys), in_c, out_c, 1)
                unit["identity"] = prepare_conv(w, b, stride=stride, padding=0)
            units.append(unit)
            in_c = out_c
        stages.append(units)
    params["stages"] = stages
    w, b = init_conv(next(keys), in_c, output_dim, 1)
    params["final"] = prepare_conv(w, b, stride=1, padding=0)  # final 1x1
    return params


# -----------------------------------------------------------------------------
# Full forward pass (mirrors BasicEncoder.forward, incl. list/tuple input path)
# -----------------------------------------------------------------------------
def basic_encoder_forward(params, x_nchw):
    is_list = isinstance(x_nchw, (tuple, list))
    if is_list:
        batch_dim = x_nchw[0].shape[0]
        x_nchw = jnp.concatenate(x_nchw, axis=0)

    x = jnp.transpose(x_nchw, (0, 2, 3, 1))                 # NCHW -> NHWC
    cpad = params["init"]["cin_pad"] - x.shape[-1]
    if cpad > 0:
        x = jnp.pad(x, ((0, 0), (0, 0), (0, 0), (0, cpad)))  # 3 -> 4 channels
    x = x.astype(jnp.bfloat16)

    x = conv_forward(x, params["init"], relu=True)           # 7x7/s2 + ReLU
    for stage in params["stages"]:
        for unit in stage:
            x = res_unit_forward(x, unit)
    x = conv_forward(x, params["final"], relu=False, out_dtype=jnp.float32)
    x = x[..., :params["output_dim"]]                        # drop channel pad
    # dropout_rate = 0.0 -> no dropout module
    out = jnp.transpose(x, (0, 3, 1, 2))                     # NHWC -> NCHW

    if is_list:
        return (out[:batch_dim], out[batch_dim:])
    return out


if __name__ == "__main__":
    key = jax.random.PRNGKey(0)
    pkey, xkey = jax.random.split(key)
    output_dim = 128
    params = init_basic_encoder_params(pkey, output_dim)

    x = jax.random.normal(xkey, (2, 3, 16, 16), jnp.float32)  # NCHW like PyTorch
    fwd = jax.jit(lambda inp: basic_encoder_forward(params, inp))
    out = fwd(x)
    out = jax.block_until_ready(out)
    assert out.shape == (2, output_dim, 2, 2), out.shape
    assert bool(jnp.all(jnp.isfinite(out)))
    print("KERNEL_OK")
</pallas_src>

<mosaic_0001>
module attributes {stable_mosaic.version = 11 : i64} {
  func.func @_conv_matmul_kernel(%arg0: i32, %arg1: i32, %arg2: i32, %arg3: memref<128x256xbf16, #tpu.memory_space<vmem>>, %arg4: memref<256x64xbf16, #tpu.memory_space<vmem>>, %arg5: memref<1x64xf32, #tpu.memory_space<vmem>>, %arg6: memref<128x64xbf16, #tpu.memory_space<vmem>>, %arg7: memref<128x64xf32, #tpu.memory_space<vmem>>) attributes {dimension_semantics = [#tpu.dimension_semantics<parallel>, #tpu.dimension_semantics<parallel>, #tpu.dimension_semantics<arbitrary>], iteration_bounds = array<i64: 1, 1, 1>, scalar_prefetch = 0 : i64, scratch_operands = 1 : i64, tpu.core_type = #tpu.core_type<tc>, window_params = [{transform_indices = @transform_0, window_bounds = array<i64: 128, 256>}, {transform_indices = @transform_1, window_bounds = array<i64: 256, 64>}, {transform_indices = @transform_2, window_bounds = array<i64: 1, 64>}, {transform_indices = @transform_3, window_bounds = array<i64: 128, 64>}]} {
    %c0_i32 = arith.constant 0 : i32
    %0 = arith.cmpi eq, %arg2, %c0_i32 : i32
    %1 = arith.extui %0 : i1 to i32
    %c0_i32_0 = arith.constant 0 : i32
    %2 = arith.cmpi ne, %1, %c0_i32_0 : i32
    scf.if %2 {
      %cst_10 = arith.constant 0.000000e+00 : f32
      %12 = vector.broadcast %cst_10 : f32 to vector<128x64xf32>
      %c0_11 = arith.constant 0 : index
      %c0_12 = arith.constant 0 : index
      %13 = vector.load %arg7[%c0_11, %c0_12] : memref<128x64xf32, #tpu.memory_space<vmem>>, vector<128x64xf32>
      tpu.vector_store %arg7[%c0_11, %c0_12], %12 {strides = array<i32>} : memref<128x64xf32, #tpu.memory_space<vmem>>, vector<128x64xf32>,
    } else {
    }
    %c0 = arith.constant 0 : index
    %c0_1 = arith.constant 0 : index
    %3 = vector.load %arg7[%c0, %c0_1] : memref<128x64xf32, #tpu.memory_space<vmem>>, vector<128x64xf32>
    %c0_2 = arith.constant 0 : index
    %c0_3 = arith.constant 0 : index
    %4 = vector.load %arg3[%c0_2, %c0_3] : memref<128x256xbf16, #tpu.memory_space<vmem>>, vector<128x256xbf16>
    %c0_4 = arith.constant 0 : index
    %c0_5 = arith.constant 0 : index
    %5 = vector.load %arg4[%c0_4, %c0_5] : memref<256x64xbf16, #tpu.memory_space<vmem>>, vector<256x64xbf16>
    %cst = arith.constant dense<0.000000e+00> : vector<128x64xf32>
    %6 = tpu.matmul %4, %5, %cst {dimension_numbers = #tpu.dot_dimension_numbers<[1], [0], [0], [1], [0, 0, 1, 1], [], []>} : vector<128x256xbf16>, vector<256x64xbf16>, vector<128x64xf32> -> vector<128x64xf32>
    %7 = arith.addf %3, %6 : vector<128x64xf32>
    %c0_6 = arith.constant 0 : index
    %c0_7 = arith.constant 0 : index
    %8 = vector.load %arg7[%c0_6, %c0_7] : memref<128x64xf32, #tpu.memory_space<vmem>>, vector<128x64xf32>
    tpu.vector_store %arg7[%c0_6, %c0_7], %7 {strides = array<i32>} : memref<128x64xf32, #tpu.memory_space<vmem>>, vector<128x64xf32>,
    %c0_i32_8 = arith.constant 0 : i32
    %9 = arith.cmpi eq, %arg2, %c0_i32_8 : i32
    %10 = arith.extui %9 : i1 to i32
    %c0_i32_9 = arith.constant 0 : i32
    %11 = arith.cmpi ne, %10, %c0_i32_9 : i32
    scf.if %11 {
      %c0_10 = arith.constant 0 : index
      %c0_11 = arith.constant 0 : index
      %12 = vector.load %arg7[%c0_10, %c0_11] : memref<128x64xf32, #tpu.memory_space<vmem>>, vector<128x64xf32>
      %c0_12 = arith.constant 0 : index
      %c0_13 = arith.constant 0 : index
      %13 = vector.load %arg5[%c0_12, %c0_13] : memref<1x64xf32, #tpu.memory_space<vmem>>, vector<1x64xf32>
      %14 = vector.broadcast %13 : vector<1x64xf32> to vector<128x64xf32>
      %15 = arith.addf %12, %14 : vector<128x64xf32>
      %cst_14 = arith.constant 0.000000e+00 : f32
      %16 = vector.broadcast %cst_14 : f32 to vector<128x64xf32>
      %17 = arith.maximumf %15, %16 : vector<128x64xf32>
      %18 = arith.truncf %17 : vector<128x64xf32> to vector<128x64xbf16>
      %c0_15 = arith.constant 0 : index
      %c0_16 = arith.constant 0 : index
      %19 = vector.load %arg6[%c0_15, %c0_16] : memref<128x64xbf16, #tpu.memory_space<vmem>>, vector<128x64xbf16>
      tpu.vector_store %arg6[%c0_15, %c0_16], %18 {strides = array<i32>} : memref<128x64xbf16, #tpu.memory_space<vmem>>, vector<128x64xbf16>,
    } else {
    }
    return
  }
  func.func @transform_0(%arg0: i32, %arg1: i32, %arg2: i32) -> (i32, i32) {
    %c0_i32 = arith.constant 0 : i32
    return %arg0, %arg2 : i32, i32
  }
  func.func @transform_1(%arg0: i32, %arg1: i32, %arg2: i32) -> (i32, i32) {
    %c0_i32 = arith.constant 0 : i32
    return %arg2, %arg1 : i32, i32
  }
  func.func @transform_2(%arg0: i32, %arg1: i32, %arg2: i32) -> (i32, i32) {
    %c0_i32 = arith.constant 0 : i32
    %c0_i32_0 = arith.constant 0 : i32
    return %c0_i32, %arg1 : i32, i32
  }
  func.func @transform_3(%arg0: i32, %arg1: i32, %arg2: i32) -> (i32, i32) {
    %c0_i32 = arith.constant 0 : i32
    return %arg0, %arg1 : i32, i32
  }
}

module attributes {stable_mosaic.version = 11 : i64} {
  func.func @_conv_matmul_kernel(%arg0: i32, %arg1: i32, %arg2: i32, %arg3: memref<128x640xbf16, #tpu.memory_space<vmem>>, %arg4: memref<640x64xbf16, #tpu.memory_space<vmem>>, %arg5: memref<1x64xf32, #tpu.memory_space<vmem>>, %arg6: memref<128x64xbf16, #tpu.memory_space<vmem>>, %arg7: memref<128x64xf32, #tpu.memory_space<vmem>>) attributes {dimension_semantics = [#tpu.dimension_semantics<parallel>, #tpu.dimension_semantics<parallel>, #tpu.dimension_semantics<arbitrary>], iteration_bounds = array<i64: 1, 1, 1>, scalar_prefetch = 0 : i64, scratch_operands = 1 : i64, tpu.core_type = #tpu.core_type<tc>, window_params = [{transform_indices = @transform_0, window_bounds = array<i64: 128, 640>}, {transform_indices = @transform_1, window_bounds = array<i64: 640, 64>}, {transform_indices = @transform_2, window_bounds = array<i64: 1, 64>}, {transform_indices = @transform_3, window_bounds = array<i64: 128, 64>}]} {
    %c0_i32 = arith.constant 0 : i32
    %0 = arith.cmpi eq, %arg2, %c0_i32 : i32
    %1 = arith.extui %0 : i1 to i32
    %c0_i32_0 = arith.constant 0 : i32
    %2 = arith.cmpi ne, %1, %c0_i32_0 : i32
    scf.if %2 {
      %cst_10 = arith.constant 0.000000e+00 : f32
      %12 = vector.broadcast %cst_10 : f32 to vector<128x64xf32>
      %c0_11 = arith.constant 0 : index
      %c0_12 = arith.constant 0 : index
      %13 = vector.load %arg7[%c0_11, %c0_12] : memref<128x64xf32, #tpu.memory_space<vmem>>, vector<128x64xf32>
      tpu.vector_store %arg7[%c0_11, %c0_12], %12 {strides = array<i32>} : memref<128x64xf32, #tpu.memory_space<vmem>>, vector<128x64xf32>,
    } else {
    }
    %c0 = arith.constant 0 : index
    %c0_1 = arith.constant 0 : index
    %3 = vector.load %arg7[%c0, %c0_1] : memref<128x64xf32, #tpu.memory_space<vmem>>, vector<128x64xf32>
    %c0_2 = arith.constant 0 : index
    %c0_3 = arith.constant 0 : index
    %4 = vector.load %arg3[%c0_2, %c0_3] : memref<128x640xbf16, #tpu.memory_space<vmem>>, vector<128x640xbf16>
    %c0_4 = arith.constant 0 : index
    %c0_5 = arith.constant 0 : index
    %5 = vector.load %arg4[%c0_4, %c0_5] : memref<640x64xbf16, #tpu.memory_space<vmem>>, vector<640x64xbf16>
    %cst = arith.constant dense<0.000000e+00> : vector<128x64xf32>
    %6 = tpu.matmul %4, %5, %cst {dimension_numbers = #tpu.dot_dimension_numbers<[1], [0], [0], [1], [0, 0, 1, 1], [], []>} : vector<128x640xbf16>, vector<640x64xbf16>, vector<128x64xf32> -> vector<128x64xf32>
    %7 = arith.addf %3, %6 : vector<128x64xf32>
    %c0_6 = arith.constant 0 : index
    %c0_7 = arith.constant 0 : index
    %8 = vector.load %arg7[%c0_6, %c0_7] : memref<128x64xf32, #tpu.memory_space<vmem>>, vector<128x64xf32>
    tpu.vector_store %arg7[%c0_6, %c0_7], %7 {strides = array<i32>} : memref<128x64xf32, #tpu.memory_space<vmem>>, vector<128x64xf32>,
    %c0_i32_8 = arith.constant 0 : i32
    %9 = arith.cmpi eq, %arg2, %c0_i32_8 : i32
    %10 = arith.extui %9 : i1 to i32
    %c0_i32_9 = arith.constant 0 : i32
    %11 = arith.cmpi ne, %10, %c0_i32_9 : i32
    scf.if %11 {
      %c0_10 = arith.constant 0 : index
      %c0_11 = arith.constant 0 : index
      %12 = vector.load %arg7[%c0_10, %c0_11] : memref<128x64xf32, #tpu.memory_space<vmem>>, vector<128x64xf32>
      %c0_12 = arith.constant 0 : index
      %c0_13 = arith.constant 0 : index
      %13 = vector.load %arg5[%c0_12, %c0_13] : memref<1x64xf32, #tpu.memory_space<vmem>>, vector<1x64xf32>
      %14 = vector.broadcast %13 : vector<1x64xf32> to vector<128x64xf32>
      %15 = arith.addf %12, %14 : vector<128x64xf32>
      %cst_14 = arith.constant 0.000000e+00 : f32
      %16 = vector.broadcast %cst_14 : f32 to vector<128x64xf32>
      %17 = arith.maximumf %15, %16 : vector<128x64xf32>
      %18 = arith.truncf %17 : vector<128x64xf32> to vector<128x64xbf16>
      %c0_15 = arith.constant 0 : index
      %c0_16 = arith.constant 0 : index
      %19 = vector.load %arg6[%c0_15, %c0_16] : memref<128x64xbf16, #tpu.memory_space<vmem>>, vector<128x64xbf16>
      tpu.vector_store %arg6[%c0_15, %c0_16], %18 {strides = array<i32>} : memref<128x64xbf16, #tpu.memory_space<vmem>>, vector<128x64xbf16>,
    } else {
    }
    return
  }
  func.func @transform_0(%arg0: i32, %arg1: i32, %arg2: i32) -> (i32, i32) {
    %c0_i32 = arith.constant 0 : i32
    return %arg0, %arg2 : i32, i32
  }
  func.func @transform_1(%arg0: i32, %arg1: i32, %arg2: i32) -> (i32, i32) {
    %c0_i32 = arith.constant 0 : i32
    return %arg2, %arg1 : i32, i32
  }
  func.func @transform_2(%arg0: i32, %arg1: i32, %arg2: i32) -> (i32, i32) {
    %c0_i32 = arith.constant 0 : i32
    %c0_i32_0 = arith.constant 0 : i32
    return %c0_i32, %arg1 : i32, i32
  }
  func.func @transform_3(%arg0: i32, %arg1: i32, %arg2: i32) -> (i32, i32) {
    %c0_i32 = arith.constant 0 : i32
    return %arg0, %arg1 : i32, i32
  }
}

module attributes {stable_mosaic.version = 11 : i64} {
  func.func @_conv_matmul_kernel(%arg0: i32, %arg1: i32, %arg2: i32, %arg3: memref<128x640xbf16, #tpu.memory_space<vmem>>, %arg4: memref<640x64xbf16, #tpu.memory_space<vmem>>, %arg5: memref<1x64xf32, #tpu.memory_space<vmem>>, %arg6: memref<128x64xbf16, #tpu.memory_space<vmem>>, %arg7: memref<128x64xbf16, #tpu.memory_space<vmem>>, %arg8: memref<128x64xf32, #tpu.memory_space<vmem>>) attributes {dimension_semantics = [#tpu.dimension_semantics<parallel>, #tpu.dimension_semantics<parallel>, #tpu.dimension_semantics<arbitrary>], iteration_bounds = array<i64: 1, 1, 1>, scalar_prefetch = 0 : i64, scratch_operands = 1 : i64, tpu.core_type = #tpu.core_type<tc>, window_params = [{transform_indices = @transform_0, window_bounds = array<i64: 128, 640>}, {transform_indices = @transform_1, window_bounds = array<i64: 640, 64>}, {transform_indices = @transform_2, window_bounds = array<i64: 1, 64>}, {transform_indices = @transform_3, window_bounds = array<i64: 128, 64>}, {transform_indices = @transform_4, window_bounds = array<i64: 128, 64>}]} {
    %c0_i32 = arith.constant 0 : i32
    %0 = arith.cmpi eq, %arg2, %c0_i32 : i32
    %1 = arith.extui %0 : i1 to i32
    %c0_i32_0 = arith.constant 0 : i32
    %2 = arith.cmpi ne, %1, %c0_i32_0 : i32
    scf.if %2 {
      %cst_10 = arith.constant 0.000000e+00 : f32
      %12 = vector.broadcast %cst_10 : f32 to vector<128x64xf32>
      %c0_11 = arith.constant 0 : index
      %c0_12 = arith.constant 0 : index
      %13 = vector.load %arg8[%c0_11, %c0_12] : memref<128x64xf32, #tpu.memory_space<vmem>>, vector<128x64xf32>
      tpu.vector_store %arg8[%c0_11, %c0_12], %12 {strides = array<i32>} : memref<128x64xf32, #tpu.memory_space<vmem>>, vector<128x64xf32>,
    } else {
    }
    %c0 = arith.constant 0 : index
    %c0_1 = arith.constant 0 : index
    %3 = vector.load %arg8[%c0, %c0_1] : memref<128x64xf32, #tpu.memory_space<vmem>>, vector<128x64xf32>
    %c0_2 = arith.constant 0 : index
    %c0_3 = arith.constant 0 : index
    %4 = vector.load %arg3[%c0_2, %c0_3] : memref<128x640xbf16, #tpu.memory_space<vmem>>, vector<128x640xbf16>
    %c0_4 = arith.constant 0 : index
    %c0_5 = arith.constant 0 : index
    %5 = vector.load %arg4[%c0_4, %c0_5] : memref<640x64xbf16, #tpu.memory_space<vmem>>, vector<640x64xbf16>
    %cst = arith.constant dense<0.000000e+00> : vector<128x64xf32>
    %6 = tpu.matmul %4, %5, %cst {dimension_numbers = #tpu.dot_dimension_numbers<[1], [0], [0], [1], [0, 0, 1, 1], [], []>} : vector<128x640xbf16>, vector<640x64xbf16>, vector<128x64xf32> -> vector<128x64xf32>
    %7 = arith.addf %3, %6 : vector<128x64xf32>
    %c0_6 = arith.constant 0 : index
    %c0_7 = arith.constant 0 : index
    %8 = vector.load %arg8[%c0_6, %c0_7] : memref<128x64xf32, #tpu.memory_space<vmem>>, vector<128x64xf32>
    tpu.vector_store %arg8[%c0_6, %c0_7], %7 {strides = array<i32>} : memref<128x64xf32, #tpu.memory_space<vmem>>, vector<128x64xf32>,
    %c0_i32_8 = arith.constant 0 : i32
    %9 = arith.cmpi eq, %arg2, %c0_i32_8 : i32
    %10 = arith.extui %9 : i1 to i32
    %c0_i32_9 = arith.constant 0 : i32
    %11 = arith.cmpi ne, %10, %c0_i32_9 : i32
    scf.if %11 {
      %c0_10 = arith.constant 0 : index
      %c0_11 = arith.constant 0 : index
      %12 = vector.load %arg8[%c0_10, %c0_11] : memref<128x64xf32, #tpu.memory_space<vmem>>, vector<128x64xf32>
      %c0_12 = arith.constant 0 : index
      %c0_13 = arith.constant 0 : index
      %13 = vector.load %arg5[%c0_12, %c0_13] : memref<1x64xf32, #tpu.memory_space<vmem>>, vector<1x64xf32>
      %14 = vector.broadcast %13 : vector<1x64xf32> to vector<128x64xf32>
      %15 = arith.addf %12, %14 : vector<128x64xf32>
      %cst_14 = arith.constant 0.000000e+00 : f32
      %16 = vector.broadcast %cst_14 : f32 to vector<128x64xf32>
      %17 = arith.maximumf %15, %16 : vector<128x64xf32>
      %c0_15 = arith.constant 0 : index
      %c0_16 = arith.constant 0 : index
      %18 = vector.load %arg6[%c0_15, %c0_16] : memref<128x64xbf16, #tpu.memory_space<vmem>>, vector<128x64xbf16>
      %19 = arith.extf %18 : vector<128x64xbf16> to vector<128x64xf32>
      %20 = arith.addf %17, %19 : vector<128x64xf32>
      %cst_17 = arith.constant 0.000000e+00 : f32
      %21 = vector.broadcast %cst_17 : f32 to vector<128x64xf32>
      %22 = arith.maximumf %20, %21 : vector<128x64xf32>
      %23 = arith.truncf %22 : vector<128x64xf32> to vector<128x64xbf16>
      %c0_18 = arith.constant 0 : index
      %c0_19 = arith.constant 0 : index
      %24 = vector.load %arg7[%c0_18, %c0_19] : memref<128x64xbf16, #tpu.memory_space<vmem>>, vector<128x64xbf16>
      tpu.vector_store %arg7[%c0_18, %c0_19], %23 {strides = array<i32>} : memref<128x64xbf16, #tpu.memory_space<vmem>>, vector<128x64xbf16>,
    } else {
    }
    return
  }
  func.func @transform_0(%arg0: i32, %arg1: i32, %arg2: i32) -> (i32, i32) {
    %c0_i32 = arith.constant 0 : i32
    return %arg0, %arg2 : i32, i32
  }
  func.func @transform_1(%arg0: i32, %arg1: i32, %arg2: i32) -> (i32, i32) {
    %c0_i32 = arith.constant 0 : i32
    return %arg2, %arg1 : i32, i32
  }
  func.func @transform_2(%arg0: i32, %arg1: i32, %arg2: i32) -> (i32, i32) {
    %c0_i32 = arith.constant 0 : i32
    %c0_i32_0 = arith.constant 0 : i32
    return %c0_i32, %arg1 : i32, i32
  }
  func.func @transform_3(%arg0: i32, %arg1: i32, %arg2: i32) -> (i32, i32) {
    %c0_i32 = arith.constant 0 : i32
    return %arg0, %arg1 : i32, i32
  }
  func.func @transform_4(%arg0: i32, %arg1: i32, %arg2: i32) -> (i32, i32) {
    %c0_i32 = arith.constant 0 : i32
    return %arg0, %arg1 : i32, i32
  }
}

module attributes {stable_mosaic.version = 11 : i64} {
  func.func @_conv_matmul_kernel(%arg0: i32, %arg1: i32, %arg2: i32, %arg3: memref<32x640xbf16, #tpu.memory_space<vmem>>, %arg4: memref<640x128xbf16, #tpu.memory_space<vmem>>, %arg5: memref<1x128xf32, #tpu.memory_space<vmem>>, %arg6: memref<32x128xbf16, #tpu.memory_space<vmem>>, %arg7: memref<32x128xf32, #tpu.memory_space<vmem>>) attributes {dimension_semantics = [#tpu.dimension_semantics<parallel>, #tpu.dimension_semantics<parallel>, #tpu.dimension_semantics<arbitrary>], iteration_bounds = array<i64: 1, 1, 1>, scalar_prefetch = 0 : i64, scratch_operands = 1 : i64, tpu.core_type = #tpu.core_type<tc>, window_params = [{transform_indices = @transform_0, window_bounds = array<i64: 32, 640>}, {transform_indices = @transform_1, window_bounds = array<i64: 640, 128>}, {transform_indices = @transform_2, window_bounds = array<i64: 1, 128>}, {transform_indices = @transform_3, window_bounds = array<i64: 32, 128>}]} {
    %c0_i32 = arith.constant 0 : i32
    %0 = arith.cmpi eq, %arg2, %c0_i32 : i32
    %1 = arith.extui %0 : i1 to i32
    %c0_i32_0 = arith.constant 0 : i32
    %2 = arith.cmpi ne, %1, %c0_i32_0 : i32
    scf.if %2 {
      %cst_10 = arith.constant 0.000000e+00 : f32
      %12 = vector.broadcast %cst_10 : f32 to vector<32x128xf32>
      %c0_11 = arith.constant 0 : index
      %c0_12 = arith.constant 0 : index
      %13 = vector.load %arg7[%c0_11, %c0_12] : memref<32x128xf32, #tpu.memory_space<vmem>>, vector<32x128xf32>
      tpu.vector_store %arg7[%c0_11, %c0_12], %12 {strides = array<i32>} : memref<32x128xf32, #tpu.memory_space<vmem>>, vector<32x128xf32>,
    } else {
    }
    %c0 = arith.constant 0 : index
    %c0_1 = arith.constant 0 : index
    %3 = vector.load %arg7[%c0, %c0_1] : memref<32x128xf32, #tpu.memory_space<vmem>>, vector<32x128xf32>
    %c0_2 = arith.constant 0 : index
    %c0_3 = arith.constant 0 : index
    %4 = vector.load %arg3[%c0_2, %c0_3] : memref<32x640xbf16, #tpu.memory_space<vmem>>, vector<32x640xbf16>
    %c0_4 = arith.constant 0 : index
    %c0_5 = arith.constant 0 : index
    %5 = vector.load %arg4[%c0_4, %c0_5] : memref<640x128xbf16, #tpu.memory_space<vmem>>, vector<640x128xbf16>
    %cst = arith.constant dense<0.000000e+00> : vector<32x128xf32>
    %6 = tpu.matmul %4, %5, %cst {dimension_numbers = #tpu.dot_dimension_numbers<[1], [0], [0], [1], [0, 0, 1, 1], [], []>} : vector<32x640xbf16>, vector<640x128xbf16>, vector<32x128xf32> -> vector<32x128xf32>
    %7 = arith.addf %3, %6 : vector<32x128xf32>
    %c0_6 = arith.constant 0 : index
    %c0_7 = arith.constant 0 : index
    %8 = vector.load %arg7[%c0_6, %c0_7] : memref<32x128xf32, #tpu.memory_space<vmem>>, vector<32x128xf32>
    tpu.vector_store %arg7[%c0_6, %c0_7], %7 {strides = array<i32>} : memref<32x128xf32, #tpu.memory_space<vmem>>, vector<32x128xf32>,
    %c0_i32_8 = arith.constant 0 : i32
    %9 = arith.cmpi eq, %arg2, %c0_i32_8 : i32
    %10 = arith.extui %9 : i1 to i32
    %c0_i32_9 = arith.constant 0 : i32
    %11 = arith.cmpi ne, %10, %c0_i32_9 : i32
    scf.if %11 {
      %c0_10 = arith.constant 0 : index
      %c0_11 = arith.constant 0 : index
      %12 = vector.load %arg7[%c0_10, %c0_11] : memref<32x128xf32, #tpu.memory_space<vmem>>, vector<32x128xf32>
      %c0_12 = arith.constant 0 : index
      %c0_13 = arith.constant 0 : index
      %13 = vector.load %arg5[%c0_12, %c0_13] : memref<1x128xf32, #tpu.memory_space<vmem>>, vector<1x128xf32>
      %14 = vector.broadcast %13 : vector<1x128xf32> to vector<32x128xf32>
      %15 = arith.addf %12, %14 : vector<32x128xf32>
      %cst_14 = arith.constant 0.000000e+00 : f32
      %16 = vector.broadcast %cst_14 : f32 to vector<32x128xf32>
      %17 = arith.maximumf %15, %16 : vector<32x128xf32>
      %18 = arith.truncf %17 : vector<32x128xf32> to vector<32x128xbf16>
      %c0_15 = arith.constant 0 : index
      %c0_16 = arith.constant 0 : index
      %19 = vector.load %arg6[%c0_15, %c0_16] : memref<32x128xbf16, #tpu.memory_space<vmem>>, vector<32x128xbf16>
      tpu.vector_store %arg6[%c0_15, %c0_16], %18 {strides = array<i32>} : memref<32x128xbf16, #tpu.memory_space<vmem>>, vector<32x128xbf16>,
    } else {
    }
    return
  }
  func.func @transform_0(%arg0: i32, %arg1: i32, %arg2: i32) -> (i32, i32) {
    %c0_i32 = arith.constant 0 : i32
    return %arg0, %arg2 : i32, i32
  }
  func.func @transform_1(%arg0: i32, %arg1: i32, %arg2: i32) -> (i32, i32) {
    %c0_i32 = arith.constant 0 : i32
    return %arg2, %arg1 : i32, i32
  }
  func.func @transform_2(%arg0: i32, %arg1: i32, %arg2: i32) -> (i32, i32) {
    %c0_i32 = arith.constant 0 : i32
    %c0_i32_0 = arith.constant 0 : i32
    return %c0_i32, %arg1 : i32, i32
  }
  func.func @transform_3(%arg0: i32, %arg1: i32, %arg2: i32) -> (i32, i32) {
    %c0_i32 = arith.constant 0 : i32
    return %arg0, %arg1 : i32, i32
  }
}

module attributes {stable_mosaic.version = 11 : i64} {
  func.func @_conv_matmul_kernel(%arg0: i32, %arg1: i32, %arg2: i32, %arg3: memref<32x64xbf16, #tpu.memory_space<vmem>>, %arg4: memref<64x128xbf16, #tpu.memory_space<vmem>>, %arg5: memref<1x128xf32, #tpu.memory_space<vmem>>, %arg6: memref<32x128xbf16, #tpu.memory_space<vmem>>, %arg7: memref<32x128xf32, #tpu.memory_space<vmem>>) attributes {dimension_semantics = [#tpu.dimension_semantics<parallel>, #tpu.dimension_semantics<parallel>, #tpu.dimension_semantics<arbitrary>], iteration_bounds = array<i64: 1, 1, 1>, scalar_prefetch = 0 : i64, scratch_operands = 1 : i64, tpu.core_type = #tpu.core_type<tc>, window_params = [{transform_indices = @transform_0, window_bounds = array<i64: 32, 64>}, {transform_indices = @transform_1, window_bounds = array<i64: 64, 128>}, {transform_indices = @transform_2, window_bounds = array<i64: 1, 128>}, {transform_indices = @transform_3, window_bounds = array<i64: 32, 128>}]} {
    %c0_i32 = arith.constant 0 : i32
    %0 = arith.cmpi eq, %arg2, %c0_i32 : i32
    %1 = arith.extui %0 : i1 to i32
    %c0_i32_0 = arith.constant 0 : i32
    %2 = arith.cmpi ne, %1, %c0_i32_0 : i32
    scf.if %2 {
      %cst_10 = arith.constant 0.000000e+00 : f32
      %12 = vector.broadcast %cst_10 : f32 to vector<32x128xf32>
      %c0_11 = arith.constant 0 : index
      %c0_12 = arith.constant 0 : index
      %13 = vector.load %arg7[%c0_11, %c0_12] : memref<32x128xf32, #tpu.memory_space<vmem>>, vector<32x128xf32>
      tpu.vector_store %arg7[%c0_11, %c0_12], %12 {strides = array<i32>} : memref<32x128xf32, #tpu.memory_space<vmem>>, vector<32x128xf32>,
    } else {
    }
    %c0 = arith.constant 0 : index
    %c0_1 = arith.constant 0 : index
    %3 = vector.load %arg7[%c0, %c0_1] : memref<32x128xf32, #tpu.memory_space<vmem>>, vector<32x128xf32>
    %c0_2 = arith.constant 0 : index
    %c0_3 = arith.constant 0 : index
    %4 = vector.load %arg3[%c0_2, %c0_3] : memref<32x64xbf16, #tpu.memory_space<vmem>>, vector<32x64xbf16>
    %c0_4 = arith.constant 0 : index
    %c0_5 = arith.constant 0 : index
    %5 = vector.load %arg4[%c0_4, %c0_5] : memref<64x128xbf16, #tpu.memory_space<vmem>>, vector<64x128xbf16>
    %cst = arith.constant dense<0.000000e+00> : vector<32x128xf32>
    %6 = tpu.matmul %4, %5, %cst {dimension_numbers = #tpu.dot_dimension_numbers<[1], [0], [0], [1], [0, 0, 1, 1], [], []>} : vector<32x64xbf16>, vector<64x128xbf16>, vector<32x128xf32> -> vector<32x128xf32>
    %7 = arith.addf %3, %6 : vector<32x128xf32>
    %c0_6 = arith.constant 0 : index
    %c0_7 = arith.constant 0 : index
    %8 = vector.load %arg7[%c0_6, %c0_7] : memref<32x128xf32, #tpu.memory_space<vmem>>, vector<32x128xf32>
    tpu.vector_store %arg7[%c0_6, %c0_7], %7 {strides = array<i32>} : memref<32x128xf32, #tpu.memory_space<vmem>>, vector<32x128xf32>,
    %c0_i32_8 = arith.constant 0 : i32
    %9 = arith.cmpi eq, %arg2, %c0_i32_8 : i32
    %10 = arith.extui %9 : i1 to i32
    %c0_i32_9 = arith.constant 0 : i32
    %11 = arith.cmpi ne, %10, %c0_i32_9 : i32
    scf.if %11 {
      %c0_10 = arith.constant 0 : index
      %c0_11 = arith.constant 0 : index
      %12 = vector.load %arg7[%c0_10, %c0_11] : memref<32x128xf32, #tpu.memory_space<vmem>>, vector<32x128xf32>
      %c0_12 = arith.constant 0 : index
      %c0_13 = arith.constant 0 : index
      %13 = vector.load %arg5[%c0_12, %c0_13] : memref<1x128xf32, #tpu.memory_space<vmem>>, vector<1x128xf32>
      %14 = vector.broadcast %13 : vector<1x128xf32> to vector<32x128xf32>
      %15 = arith.addf %12, %14 : vector<32x128xf32>
      %16 = arith.truncf %15 : vector<32x128xf32> to vector<32x128xbf16>
      %c0_14 = arith.constant 0 : index
      %c0_15 = arith.constant 0 : index
      %17 = vector.load %arg6[%c0_14, %c0_15] : memref<32x128xbf16, #tpu.memory_space<vmem>>, vector<32x128xbf16>
      tpu.vector_store %arg6[%c0_14, %c0_15], %16 {strides = array<i32>} : memref<32x128xbf16, #tpu.memory_space<vmem>>, vector<32x128xbf16>,
    } else {
    }
    return
  }
  func.func @transform_0(%arg0: i32, %arg1: i32, %arg2: i32) -> (i32, i32) {
    %c0_i32 = arith.constant 0 : i32
    return %arg0, %arg2 : i32, i32
  }
  func.func @transform_1(%arg0: i32, %arg1: i32, %arg2: i32) -> (i32, i32) {
    %c0_i32 = arith.constant 0 : i32
    return %arg2, %arg1 : i32, i32
  }
  func.func @transform_2(%arg0: i32, %arg1: i32, %arg2: i32) -> (i32, i32) {
    %c0_i32 = arith.constant 0 : i32
    %c0_i32_0 = arith.constant 0 : i32
    return %c0_i32, %arg1 : i32, i32
  }
  func.func @transform_3(%arg0: i32, %arg1: i32, %arg2: i32) -> (i32, i32) {
    %c0_i32 = arith.constant 0 : i32
    return %arg0, %arg1 : i32, i32
  }
}

module attributes {stable_mosaic.version = 11 : i64} {
  func.func @_conv_matmul_kernel(%arg0: i32, %arg1: i32, %arg2: i32, %arg3: memref<32x384xbf16, #tpu.memory_space<vmem>>, %arg4: memref<384x128xbf16, #tpu.memory_space<vmem>>, %arg5: memref<1x128xf32, #tpu.memory_space<vmem>>, %arg6: memref<32x128xbf16, #tpu.memory_space<vmem>>, %arg7: memref<32x128xbf16, #tpu.memory_space<vmem>>, %arg8: memref<32x128xf32, #tpu.memory_space<vmem>>) attributes {dimension_semantics = [#tpu.dimension_semantics<parallel>, #tpu.dimension_semantics<parallel>, #tpu.dimension_semantics<arbitrary>], iteration_bounds = array<i64: 1, 1, 3>, scalar_prefetch = 0 : i64, scratch_operands = 1 : i64, tpu.core_type = #tpu.core_type<tc>, window_params = [{transform_indices = @transform_0, window_bounds = array<i64: 32, 384>}, {transform_indices = @transform_1, window_bounds = array<i64: 384, 128>}, {transform_indices = @transform_2, window_bounds = array<i64: 1, 128>}, {transform_indices = @transform_3, window_bounds = array<i64: 32, 128>}, {transform_indices = @transform_4, window_bounds = array<i64: 32, 128>}]} {
    %c0_i32 = arith.constant 0 : i32
    %0 = arith.cmpi eq, %arg2, %c0_i32 : i32
    %1 = arith.extui %0 : i1 to i32
    %c0_i32_0 = arith.constant 0 : i32
    %2 = arith.cmpi ne, %1, %c0_i32_0 : i32
    scf.if %2 {
      %cst_9 = arith.constant 0.000000e+00 : f32
      %12 = vector.broadcast %cst_9 : f32 to vector<32x128xf32>
      %c0_10 = arith.constant 0 : index
      %c0_11 = arith.constant 0 : index
      %13 = vector.load %arg8[%c0_10, %c0_11] : memref<32x128xf32, #tpu.memory_space<vmem>>, vector<32x128xf32>
      tpu.vector_store %arg8[%c0_10, %c0_11], %12 {strides = array<i32>} : memref<32x128xf32, #tpu.memory_space<vmem>>, vector<32x128xf32>,
    } else {
    }
    %c0 = arith.constant 0 : index
    %c0_1 = arith.constant 0 : index
    %3 = vector.load %arg8[%c0, %c0_1] : memref<32x128xf32, #tpu.memory_space<vmem>>, vector<32x128xf32>
    %c0_2 = arith.constant 0 : index
    %c0_3 = arith.constant 0 : index
    %4 = vector.load %arg3[%c0_2, %c0_3] : memref<32x384xbf16, #tpu.memory_space<vmem>>, vector<32x384xbf16>
    %c0_4 = arith.constant 0 : index
    %c0_5 = arith.constant 0 : index
    %5 = vector.load %arg4[%c0_4, %c0_5] : memref<384x128xbf16, #tpu.memory_space<vmem>>, vector<384x128xbf16>
    %cst = arith.constant dense<0.000000e+00> : vector<32x128xf32>
    %6 = tpu.matmul %4, %5, %cst {dimension_numbers = #tpu.dot_dimension_numbers<[1], [0], [0], [1], [0, 0, 1, 1], [], []>} : vector<32x384xbf16>, vector<384x128xbf16>, vector<32x128xf32> -> vector<32x128xf32>
    %7 = arith.addf %3, %6 : vector<32x128xf32>
    %c0_6 = arith.constant 0 : index
    %c0_7 = arith.constant 0 : index
    %8 = vector.load %arg8[%c0_6, %c0_7] : memref<32x128xf32, #tpu.memory_space<vmem>>, vector<32x128xf32>
    tpu.vector_store %arg8[%c0_6, %c0_7], %7 {strides = array<i32>} : memref<32x128xf32, #tpu.memory_space<vmem>>, vector<32x128xf32>,
    %c2_i32 = arith.constant 2 : i32
    %9 = arith.cmpi eq, %arg2, %c2_i32 : i32
    %10 = arith.extui %9 : i1 to i32
    %c0_i32_8 = arith.constant 0 : i32
    %11 = arith.cmpi ne, %10, %c0_i32_8 : i32
    scf.if %11 {
      %c0_9 = arith.constant 0 : index
      %c0_10 = arith.constant 0 : index
      %12 = vector.load %arg8[%c0_9, %c0_10] : memref<32x128xf32, #tpu.memory_space<vmem>>, vector<32x128xf32>
      %c0_11 = arith.constant 0 : index
      %c0_12 = arith.constant 0 : index
      %13 = vector.load %arg5[%c0_11, %c0_12] : memref<1x128xf32, #tpu.memory_space<vmem>>, vector<1x128xf32>
      %14 = vector.broadcast %13 : vector<1x128xf32> to vector<32x128xf32>
      %15 = arith.addf %12, %14 : vector<32x128xf32>
      %cst_13 = arith.constant 0.000000e+00 : f32
      %16 = vector.broadcast %cst_13 : f32 to vector<32x128xf32>
      %17 = arith.maximumf %15, %16 : vector<32x128xf32>
      %c0_14 = arith.constant 0 : index
      %c0_15 = arith.constant 0 : index
      %18 = vector.load %arg6[%c0_14, %c0_15] : memref<32x128xbf16, #tpu.memory_space<vmem>>, vector<32x128xbf16>
      %19 = arith.extf %18 : vector<32x128xbf16> to vector<32x128xf32>
      %20 = arith.addf %17, %19 : vector<32x128xf32>
      %cst_16 = arith.constant 0.000000e+00 : f32
      %21 = vector.broadcast %cst_16 : f32 to vector<32x128xf32>
      %22 = arith.maximumf %20, %21 : vector<32x128xf32>
      %23 = arith.truncf %22 : vector<32x128xf32> to vector<32x128xbf16>
      %c0_17 = arith.constant 0 : index
      %c0_18 = arith.constant 0 : index
      %24 = vector.load %arg7[%c0_17, %c0_18] : memref<32x128xbf16, #tpu.memory_space<vmem>>, vector<32x128xbf16>
      tpu.vector_store %arg7[%c0_17, %c0_18], %23 {strides = array<i32>} : memref<32x128xbf16, #tpu.memory_space<vmem>>, vector<32x128xbf16>,
    } else {
    }
    return
  }
  func.func @transform_0(%arg0: i32, %arg1: i32, %arg2: i32) -> (i32, i32) {
    %c0_i32 = arith.constant 0 : i32
    return %arg0, %arg2 : i32, i32
  }
  func.func @transform_1(%arg0: i32, %arg1: i32, %arg2: i32) -> (i32, i32) {
    %c0_i32 = arith.constant 0 : i32
    return %arg2, %arg1 : i32, i32
  }
  func.func @transform_2(%arg0: i32, %arg1: i32, %arg2: i32) -> (i32, i32) {
    %c0_i32 = arith.constant 0 : i32
    %c0_i32_0 = arith.constant 0 : i32
    return %c0_i32, %arg1 : i32, i32
  }
  func.func @transform_3(%arg0: i32, %arg1: i32, %arg2: i32) -> (i32, i32) {
    %c0_i32 = arith.constant 0 : i32
    return %arg0, %arg1 : i32, i32
  }
  func.func @transform_4(%arg0: i32, %arg1: i32, %arg2: i32) -> (i32, i32) {
    %c0_i32 = arith.constant 0 : i32
    return %arg0, %arg1 : i32, i32
  }
}

module attributes {stable_mosaic.version = 11 : i64} {
  func.func @_conv_matmul_kernel(%arg0: i32, %arg1: i32, %arg2: i32, %arg3: memref<32x384xbf16, #tpu.memory_space<vmem>>, %arg4: memref<384x128xbf16, #tpu.memory_space<vmem>>, %arg5: memref<1x128xf32, #tpu.memory_space<vmem>>, %arg6: memref<32x128xbf16, #tpu.memory_space<vmem>>, %arg7: memref<32x128xf32, #tpu.memory_space<vmem>>) attributes {dimension_semantics = [#tpu.dimension_semantics<parallel>, #tpu.dimension_semantics<parallel>, #tpu.dimension_semantics<arbitrary>], iteration_bounds = array<i64: 1, 1, 3>, scalar_prefetch = 0 : i64, scratch_operands = 1 : i64, tpu.core_type = #tpu.core_type<tc>, window_params = [{transform_indices = @transform_0, window_bounds = array<i64: 32, 384>}, {transform_indices = @transform_1, window_bounds = array<i64: 384, 128>}, {transform_indices = @transform_2, window_bounds = array<i64: 1, 128>}, {transform_indices = @transform_3, window_bounds = array<i64: 32, 128>}]} {
    %c0_i32 = arith.constant 0 : i32
    %0 = arith.cmpi eq, %arg2, %c0_i32 : i32
    %1 = arith.extui %0 : i1 to i32
    %c0_i32_0 = arith.constant 0 : i32
    %2 = arith.cmpi ne, %1, %c0_i32_0 : i32
    scf.if %2 {
      %cst_9 = arith.constant 0.000000e+00 : f32
      %12 = vector.broadcast %cst_9 : f32 to vector<32x128xf32>
      %c0_10 = arith.constant 0 : index
      %c0_11 = arith.constant 0 : index
      %13 = vector.load %arg7[%c0_10, %c0_11] : memref<32x128xf32, #tpu.memory_space<vmem>>, vector<32x128xf32>
      tpu.vector_store %arg7[%c0_10, %c0_11], %12 {strides = array<i32>} : memref<32x128xf32, #tpu.memory_space<vmem>>, vector<32x128xf32>,
    } else {
    }
    %c0 = arith.constant 0 : index
    %c0_1 = arith.constant 0 : index
    %3 = vector.load %arg7[%c0, %c0_1] : memref<32x128xf32, #tpu.memory_space<vmem>>, vector<32x128xf32>
    %c0_2 = arith.constant 0 : index
    %c0_3 = arith.constant 0 : index
    %4 = vector.load %arg3[%c0_2, %c0_3] : memref<32x384xbf16, #tpu.memory_space<vmem>>, vector<32x384xbf16>
    %c0_4 = arith.constant 0 : index
    %c0_5 = arith.constant 0 : index
    %5 = vector.load %arg4[%c0_4, %c0_5] : memref<384x128xbf16, #tpu.memory_space<vmem>>, vector<384x128xbf16>
    %cst = arith.constant dense<0.000000e+00> : vector<32x128xf32>
    %6 = tpu.matmul %4, %5, %cst {dimension_numbers = #tpu.dot_dimension_numbers<[1], [0], [0], [1], [0, 0, 1, 1], [], []>} : vector<32x384xbf16>, vector<384x128xbf16>, vector<32x128xf32> -> vector<32x128xf32>
    %7 = arith.addf %3, %6 : vector<32x128xf32>
    %c0_6 = arith.constant 0 : index
    %c0_7 = arith.constant 0 : index
    %8 = vector.load %arg7[%c0_6, %c0_7] : memref<32x128xf32, #tpu.memory_space<vmem>>, vector<32x128xf32>
    tpu.vector_store %arg7[%c0_6, %c0_7], %7 {strides = array<i32>} : memref<32x128xf32, #tpu.memory_space<vmem>>, vector<32x128xf32>,
    %c2_i32 = arith.constant 2 : i32
    %9 = arith.cmpi eq, %arg2, %c2_i32 : i32
    %10 = arith.extui %9 : i1 to i32
    %c0_i32_8 = arith.constant 0 : i32
    %11 = arith.cmpi ne, %10, %c0_i32_8 : i32
    scf.if %11 {
      %c0_9 = arith.constant 0 : index
      %c0_10 = arith.constant 0 : index
      %12 = vector.load %arg7[%c0_9, %c0_10] : memref<32x128xf32, #tpu.memory_space<vmem>>, vector<32x128xf32>
      %c0_11 = arith.constant 0 : index
      %c0_12 = arith.constant 0 : index
      %13 = vector.load %arg5[%c0_11, %c0_12] : memref<1x128xf32, #tpu.memory_space<vmem>>, vector<1x128xf32>
      %14 = vector.broadcast %13 : vector<1x128xf32> to vector<32x128xf32>
      %15 = arith.addf %12, %14 : vector<32x128xf32>
      %cst_13 = arith.constant 0.000000e+00 : f32
      %16 = vector.broadcast %cst_13 : f32 to vector<32x128xf32>
      %17 = arith.maximumf %15, %16 : vector<32x128xf32>
      %18 = arith.truncf %17 : vector<32x128xf32> to vector<32x128xbf16>
      %c0_14 = arith.constant 0 : index
      %c0_15 = arith.constant 0 : index
      %19 = vector.load %arg6[%c0_14, %c0_15] : memref<32x128xbf16, #tpu.memory_space<vmem>>, vector<32x128xbf16>
      tpu.vector_store %arg6[%c0_14, %c0_15], %18 {strides = array<i32>} : memref<32x128xbf16, #tpu.memory_space<vmem>>, vector<32x128xbf16>,
    } else {
    }
    return
  }
  func.func @transform_0(%arg0: i32, %arg1: i32, %arg2: i32) -> (i32, i32) {
    %c0_i32 = arith.constant 0 : i32
    return %arg0, %arg2 : i32, i32
  }
  func.func @transform_1(%arg0: i32, %arg1: i32, %arg2: i32) -> (i32, i32) {
    %c0_i32 = arith.constant 0 : i32
    return %arg2, %arg1 : i32, i32
  }
  func.func @transform_2(%arg0: i32, %arg1: i32, %arg2: i32) -> (i32, i32) {
    %c0_i32 = arith.constant 0 : i32
    %c0_i32_0 = arith.constant 0 : i32
    return %c0_i32, %arg1 : i32, i32
  }
  func.func @transform_3(%arg0: i32, %arg1: i32, %arg2: i32) -> (i32, i32) {
    %c0_i32 = arith.constant 0 : i32
    return %arg0, %arg1 : i32, i32
  }
}

module attributes {stable_mosaic.version = 11 : i64} {
  func.func @_conv_matmul_kernel(%arg0: i32, %arg1: i32, %arg2: i32, %arg3: memref<8x384xbf16, #tpu.memory_space<vmem>>, %arg4: memref<384x128xbf16, #tpu.memory_space<vmem>>, %arg5: memref<1x128xf32, #tpu.memory_space<vmem>>, %arg6: memref<8x128xbf16, #tpu.memory_space<vmem>>, %arg7: memref<8x128xf32, #tpu.memory_space<vmem>>) attributes {dimension_semantics = [#tpu.dimension_semantics<parallel>, #tpu.dimension_semantics<parallel>, #tpu.dimension_semantics<arbitrary>], iteration_bounds = array<i64: 1, 1, 3>, scalar_prefetch = 0 : i64, scratch_operands = 1 : i64, tpu.core_type = #tpu.core_type<tc>, window_params = [{transform_indices = @transform_0, window_bounds = array<i64: 8, 384>}, {transform_indices = @transform_1, window_bounds = array<i64: 384, 128>}, {transform_indices = @transform_2, window_bounds = array<i64: 1, 128>}, {transform_indices = @transform_3, window_bounds = array<i64: 8, 128>}]} {
    %c0_i32 = arith.constant 0 : i32
    %0 = arith.cmpi eq, %arg2, %c0_i32 : i32
    %1 = arith.extui %0 : i1 to i32
    %c0_i32_0 = arith.constant 0 : i32
    %2 = arith.cmpi ne, %1, %c0_i32_0 : i32
    scf.if %2 {
      %cst_9 = arith.constant 0.000000e+00 : f32
      %12 = vector.broadcast %cst_9 : f32 to vector<8x128xf32>
      %c0_10 = arith.constant 0 : index
      %c0_11 = arith.constant 0 : index
      %13 = vector.load %arg7[%c0_10, %c0_11] : memref<8x128xf32, #tpu.memory_space<vmem>>, vector<8x128xf32>
      tpu.vector_store %arg7[%c0_10, %c0_11], %12 {strides = array<i32>} : memref<8x128xf32, #tpu.memory_space<vmem>>, vector<8x128xf32>,
    } else {
    }
    %c0 = arith.constant 0 : index
    %c0_1 = arith.constant 0 : index
    %3 = vector.load %arg7[%c0, %c0_1] : memref<8x128xf32, #tpu.memory_space<vmem>>, vector<8x128xf32>
    %c0_2 = arith.constant 0 : index
    %c0_3 = arith.constant 0 : index
    %4 = vector.load %arg3[%c0_2, %c0_3] : memref<8x384xbf16, #tpu.memory_space<vmem>>, vector<8x384xbf16>
    %c0_4 = arith.constant 0 : index
    %c0_5 = arith.constant 0 : index
    %5 = vector.load %arg4[%c0_4, %c0_5] : memref<384x128xbf16, #tpu.memory_space<vmem>>, vector<384x128xbf16>
    %cst = arith.constant dense<0.000000e+00> : vector<8x128xf32>
    %6 = tpu.matmul %4, %5, %cst {dimension_numbers = #tpu.dot_dimension_numbers<[1], [0], [0], [1], [0, 0, 1, 1], [], []>} : vector<8x384xbf16>, vector<384x128xbf16>, vector<8x128xf32> -> vector<8x128xf32>
    %7 = arith.addf %3, %6 : vector<8x128xf32>
    %c0_6 = arith.constant 0 : index
    %c0_7 = arith.constant 0 : index
    %8 = vector.load %arg7[%c0_6, %c0_7] : memref<8x128xf32, #tpu.memory_space<vmem>>, vector<8x128xf32>
    tpu.vector_store %arg7[%c0_6, %c0_7], %7 {strides = array<i32>} : memref<8x128xf32, #tpu.memory_space<vmem>>, vector<8x128xf32>,
    %c2_i32 = arith.constant 2 : i32
    %9 = arith.cmpi eq, %arg2, %c2_i32 : i32
    %10 = arith.extui %9 : i1 to i32
    %c0_i32_8 = arith.constant 0 : i32
    %11 = arith.cmpi ne, %10, %c0_i32_8 : i32
    scf.if %11 {
      %c0_9 = arith.constant 0 : index
      %c0_10 = arith.constant 0 : index
      %12 = vector.load %arg7[%c0_9, %c0_10] : memref<8x128xf32, #tpu.memory_space<vmem>>, vector<8x128xf32>
      %c0_11 = arith.constant 0 : index
      %c0_12 = arith.constant 0 : index
      %13 = vector.load %arg5[%c0_11, %c0_12] : memref<1x128xf32, #tpu.memory_space<vmem>>, vector<1x128xf32>
      %14 = vector.broadcast %13 : vector<1x128xf32> to vector<8x128xf32>
      %15 = arith.addf %12, %14 : vector<8x128xf32>
      %cst_13 = arith.constant 0.000000e+00 : f32
      %16 = vector.broadcast %cst_13 : f32 to vector<8x128xf32>
      %17 = arith.maximumf %15, %16 : vector<8x128xf32>
      %18 = arith.truncf %17 : vector<8x128xf32> to vector<8x128xbf16>
      %c0_14 = arith.constant 0 : index
      %c0_15 = arith.constant 0 : index
      %19 = vector.load %arg6[%c0_14, %c0_15] : memref<8x128xbf16, #tpu.memory_space<vmem>>, vector<8x128xbf16>
      tpu.vector_store %arg6[%c0_14, %c0_15], %18 {strides = array<i32>} : memref<8x128xbf16, #tpu.memory_space<vmem>>, vector<8x128xbf16>,
    } else {
    }
    return
  }
  func.func @transform_0(%arg0: i32, %arg1: i32, %arg2: i32) -> (i32, i32) {
    %c0_i32 = arith.constant 0 : i32
    return %arg0, %arg2 : i32, i32
  }
  func.func @transform_1(%arg0: i32, %arg1: i32, %arg2: i32) -> (i32, i32) {
    %c0_i32 = arith.constant 0 : i32
    return %arg2, %arg1 : i32, i32
  }
  func.func @transform_2(%arg0: i32, %arg1: i32, %arg2: i32) -> (i32, i32) {
    %c0_i32 = arith.constant 0 : i32
    %c0_i32_0 = arith.constant 0 : i32
    return %c0_i32, %arg1 : i32, i32
  }
  func.func @transform_3(%arg0: i32, %arg1: i32, %arg2: i32) -> (i32, i32) {
    %c0_i32 = arith.constant 0 : i32
    return %arg0, %arg1 : i32, i32
  }
}

module attributes {stable_mosaic.version = 11 : i64} {
  func.func @_conv_matmul_kernel(%arg0: i32, %arg1: i32, %arg2: i32, %arg3: memref<8x128xbf16, #tpu.memory_space<vmem>>, %arg4: memref<128x128xbf16, #tpu.memory_space<vmem>>, %arg5: memref<1x128xf32, #tpu.memory_space<vmem>>, %arg6: memref<8x128xbf16, #tpu.memory_space<vmem>>, %arg7: memref<8x128xf32, #tpu.memory_space<vmem>>) attributes {dimension_semantics = [#tpu.dimension_semantics<parallel>, #tpu.dimension_semantics<parallel>, #tpu.dimension_semantics<arbitrary>], iteration_bounds = array<i64: 1, 1, 1>, scalar_prefetch = 0 : i64, scratch_operands = 1 : i64, tpu.core_type = #tpu.core_type<tc>, window_params = [{transform_indices = @transform_0, window_bounds = array<i64: 8, 128>}, {transform_indices = @transform_1, window_bounds = array<i64: 128, 128>}, {transform_indices = @transform_2, window_bounds = array<i64: 1, 128>}, {transform_indices = @transform_3, window_bounds = array<i64: 8, 128>}]} {
    %c0_i32 = arith.constant 0 : i32
    %0 = arith.cmpi eq, %arg2, %c0_i32 : i32
    %1 = arith.extui %0 : i1 to i32
    %c0_i32_0 = arith.constant 0 : i32
    %2 = arith.cmpi ne, %1, %c0_i32_0 : i32
    scf.if %2 {
      %cst_10 = arith.constant 0.000000e+00 : f32
      %12 = vector.broadcast %cst_10 : f32 to vector<8x128xf32>
      %c0_11 = arith.constant 0 : index
      %c0_12 = arith.constant 0 : index
      %13 = vector.load %arg7[%c0_11, %c0_12] : memref<8x128xf32, #tpu.memory_space<vmem>>, vector<8x128xf32>
      tpu.vector_store %arg7[%c0_11, %c0_12], %12 {strides = array<i32>} : memref<8x128xf32, #tpu.memory_space<vmem>>, vector<8x128xf32>,
    } else {
    }
    %c0 = arith.constant 0 : index
    %c0_1 = arith.constant 0 : index
    %3 = vector.load %arg7[%c0, %c0_1] : memref<8x128xf32, #tpu.memory_space<vmem>>, vector<8x128xf32>
    %c0_2 = arith.constant 0 : index
    %c0_3 = arith.constant 0 : index
    %4 = vector.load %arg3[%c0_2, %c0_3] : memref<8x128xbf16, #tpu.memory_space<vmem>>, vector<8x128xbf16>
    %c0_4 = arith.constant 0 : index
    %c0_5 = arith.constant 0 : index
    %5 = vector.load %arg4[%c0_4, %c0_5] : memref<128x128xbf16, #tpu.memory_space<vmem>>, vector<128x128xbf16>
    %cst = arith.constant dense<0.000000e+00> : vector<8x128xf32>
    %6 = tpu.matmul %4, %5, %cst {dimension_numbers = #tpu.dot_dimension_numbers<[1], [0], [0], [1], [0, 0, 1, 1], [], []>} : vector<8x128xbf16>, vector<128x128xbf16>, vector<8x128xf32> -> vector<8x128xf32>
    %7 = arith.addf %3, %6 : vector<8x128xf32>
    %c0_6 = arith.constant 0 : index
    %c0_7 = arith.constant 0 : index
    %8 = vector.load %arg7[%c0_6, %c0_7] : memref<8x128xf32, #tpu.memory_space<vmem>>, vector<8x128xf32>
    tpu.vector_store %arg7[%c0_6, %c0_7], %7 {strides = array<i32>} : memref<8x128xf32, #tpu.memory_space<vmem>>, vector<8x128xf32>,
    %c0_i32_8 = arith.constant 0 : i32
    %9 = arith.cmpi eq, %arg2, %c0_i32_8 : i32
    %10 = arith.extui %9 : i1 to i32
    %c0_i32_9 = arith.constant 0 : i32
    %11 = arith.cmpi ne, %10, %c0_i32_9 : i32
    scf.if %11 {
      %c0_10 = arith.constant 0 : index
      %c0_11 = arith.constant 0 : index
      %12 = vector.load %arg7[%c0_10, %c0_11] : memref<8x128xf32, #tpu.memory_space<vmem>>, vector<8x128xf32>
      %c0_12 = arith.constant 0 : index
      %c0_13 = arith.constant 0 : index
      %13 = vector.load %arg5[%c0_12, %c0_13] : memref<1x128xf32, #tpu.memory_space<vmem>>, vector<1x128xf32>
      %14 = vector.broadcast %13 : vector<1x128xf32> to vector<8x128xf32>
      %15 = arith.addf %12, %14 : vector<8x128xf32>
      %16 = arith.truncf %15 : vector<8x128xf32> to vector<8x128xbf16>
      %c0_14 = arith.constant 0 : index
      %c0_15 = arith.constant 0 : index
      %17 = vector.load %arg6[%c0_14, %c0_15] : memref<8x128xbf16, #tpu.memory_space<vmem>>, vector<8x128xbf16>
      tpu.vector_store %arg6[%c0_14, %c0_15], %16 {strides = array<i32>} : memref<8x128xbf16, #tpu.memory_space<vmem>>, vector<8x128xbf16>,
    } else {
    }
    return
  }
  func.func @transform_0(%arg0: i32, %arg1: i32, %arg2: i32) -> (i32, i32) {
    %c0_i32 = arith.constant 0 : i32
    return %arg0, %arg2 : i32, i32
  }
  func.func @transform_1(%arg0: i32, %arg1: i32, %arg2: i32) -> (i32, i32) {
    %c0_i32 = arith.constant 0 : i32
    return %arg2, %arg1 : i32, i32
  }
  func.func @transform_2(%arg0: i32, %arg1: i32, %arg2: i32) -> (i32, i32) {
    %c0_i32 = arith.constant 0 : i32
    %c0_i32_0 = arith.constant 0 : i32
    return %c0_i32, %arg1 : i32, i32
  }
  func.func @transform_3(%arg0: i32, %arg1: i32, %arg2: i32) -> (i32, i32) {
    %c0_i32 = arith.constant 0 : i32
    return %arg0, %arg1 : i32, i32
  }
}

module attributes {stable_mosaic.version = 11 : i64} {
  func.func @_conv_matmul_kernel(%arg0: i32, %arg1: i32, %arg2: i32, %arg3: memref<8x128xbf16, #tpu.memory_space<vmem>>, %arg4: memref<128x128xbf16, #tpu.memory_space<vmem>>, %arg5: memref<1x128xf32, #tpu.memory_space<vmem>>, %arg6: memref<8x128xf32, #tpu.memory_space<vmem>>, %arg7: memref<8x128xf32, #tpu.memory_space<vmem>>) attributes {dimension_semantics = [#tpu.dimension_semantics<parallel>, #tpu.dimension_semantics<parallel>, #tpu.dimension_semantics<arbitrary>], iteration_bounds = array<i64: 1, 1, 1>, scalar_prefetch = 0 : i64, scratch_operands = 1 : i64, tpu.core_type = #tpu.core_type<tc>, window_params = [{transform_indices = @transform_0, window_bounds = array<i64: 8, 128>}, {transform_indices = @transform_1, window_bounds = array<i64: 128, 128>}, {transform_indices = @transform_2, window_bounds = array<i64: 1, 128>}, {transform_indices = @transform_3, window_bounds = array<i64: 8, 128>}]} {
    %c0_i32 = arith.constant 0 : i32
    %0 = arith.cmpi eq, %arg2, %c0_i32 : i32
    %1 = arith.extui %0 : i1 to i32
    %c0_i32_0 = arith.constant 0 : i32
    %2 = arith.cmpi ne, %1, %c0_i32_0 : i32
    scf.if %2 {
      %cst_10 = arith.constant 0.000000e+00 : f32
      %12 = vector.broadcast %cst_10 : f32 to vector<8x128xf32>
      %c0_11 = arith.constant 0 : index
      %c0_12 = arith.constant 0 : index
      %13 = vector.load %arg7[%c0_11, %c0_12] : memref<8x128xf32, #tpu.memory_space<vmem>>, vector<8x128xf32>
      tpu.vector_store %arg7[%c0_11, %c0_12], %12 {strides = array<i32>} : memref<8x128xf32, #tpu.memory_space<vmem>>, vector<8x128xf32>,
    } else {
    }
    %c0 = arith.constant 0 : index
    %c0_1 = arith.constant 0 : index
    %3 = vector.load %arg7[%c0, %c0_1] : memref<8x128xf32, #tpu.memory_space<vmem>>, vector<8x128xf32>
    %c0_2 = arith.constant 0 : index
    %c0_3 = arith.constant 0 : index
    %4 = vector.load %arg3[%c0_2, %c0_3] : memref<8x128xbf16, #tpu.memory_space<vmem>>, vector<8x128xbf16>
    %c0_4 = arith.constant 0 : index
    %c0_5 = arith.constant 0 : index
    %5 = vector.load %arg4[%c0_4, %c0_5] : memref<128x128xbf16, #tpu.memory_space<vmem>>, vector<128x128xbf16>
    %cst = arith.constant dense<0.000000e+00> : vector<8x128xf32>
    %6 = tpu.matmul %4, %5, %cst {dimension_numbers = #tpu.dot_dimension_numbers<[1], [0], [0], [1], [0, 0, 1, 1], [], []>} : vector<8x128xbf16>, vector<128x128xbf16>, vector<8x128xf32> -> vector<8x128xf32>
    %7 = arith.addf %3, %6 : vector<8x128xf32>
    %c0_6 = arith.constant 0 : index
    %c0_7 = arith.constant 0 : index
    %8 = vector.load %arg7[%c0_6, %c0_7] : memref<8x128xf32, #tpu.memory_space<vmem>>, vector<8x128xf32>
    tpu.vector_store %arg7[%c0_6, %c0_7], %7 {strides = array<i32>} : memref<8x128xf32, #tpu.memory_space<vmem>>, vector<8x128xf32>,
    %c0_i32_8 = arith.constant 0 : i32
    %9 = arith.cmpi eq, %arg2, %c0_i32_8 : i32
    %10 = arith.extui %9 : i1 to i32
    %c0_i32_9 = arith.constant 0 : i32
    %11 = arith.cmpi ne, %10, %c0_i32_9 : i32
    scf.if %11 {
      %c0_10 = arith.constant 0 : index
      %c0_11 = arith.constant 0 : index
      %12 = vector.load %arg7[%c0_10, %c0_11] : memref<8x128xf32, #tpu.memory_space<vmem>>, vector<8x128xf32>
      %c0_12 = arith.constant 0 : index
      %c0_13 = arith.constant 0 : index
      %13 = vector.load %arg5[%c0_12, %c0_13] : memref<1x128xf32, #tpu.memory_space<vmem>>, vector<1x128xf32>
      %14 = vector.broadcast %13 : vector<1x128xf32> to vector<8x128xf32>
      %15 = arith.addf %12, %14 : vector<8x128xf32>
      %c0_14 = arith.constant 0 : index
      %c0_15 = arith.constant 0 : index
      %16 = vector.load %arg6[%c0_14, %c0_15] : memref<8x128xf32, #tpu.memory_space<vmem>>, vector<8x128xf32>
      tpu.vector_store %arg6[%c0_14, %c0_15], %15 {strides = array<i32>} : memref<8x128xf32, #tpu.memory_space<vmem>>, vector<8x128xf32>,
    } else {
    }
    return
  }
  func.func @transform_0(%arg0: i32, %arg1: i32, %arg2: i32) -> (i32, i32) {
    %c0_i32 = arith.constant 0 : i32
    return %arg0, %arg2 : i32, i32
  }
  func.func @transform_1(%arg0: i32, %arg1: i32, %arg2: i32) -> (i32, i32) {
    %c0_i32 = arith.constant 0 : i32
    return %arg2, %arg1 : i32, i32
  }
  func.func @transform_2(%arg0: i32, %arg1: i32, %arg2: i32) -> (i32, i32) {
    %c0_i32 = arith.constant 0 : i32
    %c0_i32_0 = arith.constant 0 : i32
    return %c0_i32, %arg1 : i32, i32
  }
  func.func @transform_3(%arg0: i32, %arg1: i32, %arg2: i32) -> (i32, i32) {
    %c0_i32 = arith.constant 0 : i32
    return %arg0, %arg1 : i32, i32
  }
}

module attributes {stable_mosaic.version = 11 : i64} {
  func.func @_conv_matmul_kernel(%arg0: i32, %arg1: i32, %arg2: i32, %arg3: memref<8x384xbf16, #tpu.memory_space<vmem>>, %arg4: memref<384x128xbf16, #tpu.memory_space<vmem>>, %arg5: memref<1x128xf32, #tpu.memory_space<vmem>>, %arg6: memref<8x128xbf16, #tpu.memory_space<vmem>>, %arg7: memref<8x128xbf16, #tpu.memory_space<vmem>>, %arg8: memref<8x128xf32, #tpu.memory_space<vmem>>) attributes {dimension_semantics = [#tpu.dimension_semantics<parallel>, #tpu.dimension_semantics<parallel>, #tpu.dimension_semantics<arbitrary>], iteration_bounds = array<i64: 1, 1, 3>, scalar_prefetch = 0 : i64, scratch_operands = 1 : i64, tpu.core_type = #tpu.core_type<tc>, window_params = [{transform_indices = @transform_0, window_bounds = array<i64: 8, 384>}, {transform_indices = @transform_1, window_bounds = array<i64: 384, 128>}, {transform_indices = @transform_2, window_bounds = array<i64: 1, 128>}, {transform_indices = @transform_3, window_bounds = array<i64: 8, 128>}, {transform_indices = @transform_4, window_bounds = array<i64: 8, 128>}]} {
    %c0_i32 = arith.constant 0 : i32
    %0 = arith.cmpi eq, %arg2, %c0_i32 : i32
    %1 = arith.extui %0 : i1 to i32
    %c0_i32_0 = arith.constant 0 : i32
    %2 = arith.cmpi ne, %1, %c0_i32_0 : i32
    scf.if %2 {
      %cst_9 = arith.constant 0.000000e+00 : f32
      %12 = vector.broadcast %cst_9 : f32 to vector<8x128xf32>
      %c0_10 = arith.constant 0 : index
      %c0_11 = arith.constant 0 : index
      %13 = vector.load %arg8[%c0_10, %c0_11] : memref<8x128xf32, #tpu.memory_space<vmem>>, vector<8x128xf32>
      tpu.vector_store %arg8[%c0_10, %c0_11], %12 {strides = array<i32>} : memref<8x128xf32, #tpu.memory_space<vmem>>, vector<8x128xf32>,
    } else {
    }
    %c0 = arith.constant 0 : index
    %c0_1 = arith.constant 0 : index
    %3 = vector.load %arg8[%c0, %c0_1] : memref<8x128xf32, #tpu.memory_space<vmem>>, vector<8x128xf32>
    %c0_2 = arith.constant 0 : index
    %c0_3 = arith.constant 0 : index
    %4 = vector.load %arg3[%c0_2, %c0_3] : memref<8x384xbf16, #tpu.memory_space<vmem>>, vector<8x384xbf16>
    %c0_4 = arith.constant 0 : index
    %c0_5 = arith.constant 0 : index
    %5 = vector.load %arg4[%c0_4, %c0_5] : memref<384x128xbf16, #tpu.memory_space<vmem>>, vector<384x128xbf16>
    %cst = arith.constant dense<0.000000e+00> : vector<8x128xf32>
    %6 = tpu.matmul %4, %5, %cst {dimension_numbers = #tpu.dot_dimension_numbers<[1], [0], [0], [1], [0, 0, 1, 1], [], []>} : vector<8x384xbf16>, vector<384x128xbf16>, vector<8x128xf32> -> vector<8x128xf32>
    %7 = arith.addf %3, %6 : vector<8x128xf32>
    %c0_6 = arith.constant 0 : index
    %c0_7 = arith.constant 0 : index
    %8 = vector.load %arg8[%c0_6, %c0_7] : memref<8x128xf32, #tpu.memory_space<vmem>>, vector<8x128xf32>
    tpu.vector_store %arg8[%c0_6, %c0_7], %7 {strides = array<i32>} : memref<8x128xf32, #tpu.memory_space<vmem>>, vector<8x128xf32>,
    %c2_i32 = arith.constant 2 : i32
    %9 = arith.cmpi eq, %arg2, %c2_i32 : i32
    %10 = arith.extui %9 : i1 to i32
    %c0_i32_8 = arith.constant 0 : i32
    %11 = arith.cmpi ne, %10, %c0_i32_8 : i32
    scf.if %11 {
      %c0_9 = arith.constant 0 : index
      %c0_10 = arith.constant 0 : index
      %12 = vector.load %arg8[%c0_9, %c0_10] : memref<8x128xf32, #tpu.memory_space<vmem>>, vector<8x128xf32>
      %c0_11 = arith.constant 0 : index
      %c0_12 = arith.constant 0 : index
      %13 = vector.load %arg5[%c0_11, %c0_12] : memref<1x128xf32, #tpu.memory_space<vmem>>, vector<1x128xf32>
      %14 = vector.broadcast %13 : vector<1x128xf32> to vector<8x128xf32>
      %15 = arith.addf %12, %14 : vector<8x128xf32>
      %cst_13 = arith.constant 0.000000e+00 : f32
      %16 = vector.broadcast %cst_13 : f32 to vector<8x128xf32>
      %17 = arith.maximumf %15, %16 : vector<8x128xf32>
      %c0_14 = arith.constant 0 : index
      %c0_15 = arith.constant 0 : index
      %18 = vector.load %arg6[%c0_14, %c0_15] : memref<8x128xbf16, #tpu.memory_space<vmem>>, vector<8x128xbf16>
      %19 = arith.extf %18 : vector<8x128xbf16> to vector<8x128xf32>
      %20 = arith.addf %17, %19 : vector<8x128xf32>
      %cst_16 = arith.constant 0.000000e+00 : f32
      %21 = vector.broadcast %cst_16 : f32 to vector<8x128xf32>
      %22 = arith.maximumf %20, %21 : vector<8x128xf32>
      %23 = arith.truncf %22 : vector<8x128xf32> to vector<8x128xbf16>
      %c0_17 = arith.constant 0 : index
      %c0_18 = arith.constant 0 : index
      %24 = vector.load %arg7[%c0_17, %c0_18] : memref<8x128xbf16, #tpu.memory_space<vmem>>, vector<8x128xbf16>
      tpu.vector_store %arg7[%c0_17, %c0_18], %23 {strides = array<i32>} : memref<8x128xbf16, #tpu.memory_space<vmem>>, vector<8x128xbf16>,
    } else {
    }
    return
  }
  func.func @transform_0(%arg0: i32, %arg1: i32, %arg2: i32) -> (i32, i32) {
    %c0_i32 = arith.constant 0 : i32
    return %arg0, %arg2 : i32, i32
  }
  func.func @transform_1(%arg0: i32, %arg1: i32, %arg2: i32) -> (i32, i32) {
    %c0_i32 = arith.constant 0 : i32
    return %arg2, %arg1 : i32, i32
  }
  func.func @transform_2(%arg0: i32, %arg1: i32, %arg2: i32) -> (i32, i32) {
    %c0_i32 = arith.constant 0 : i32
    %c0_i32_0 = arith.constant 0 : i32
    return %c0_i32, %arg1 : i32, i32
  }
  func.func @transform_3(%arg0: i32, %arg1: i32, %arg2: i32) -> (i32, i32) {
    %c0_i32 = arith.constant 0 : i32
    return %arg0, %arg1 : i32, i32
  }
  func.func @transform_4(%arg0: i32, %arg1: i32, %arg2: i32) -> (i32, i32) {
    %c0_i32 = arith.constant 0 : i32
    return %arg0, %arg1 : i32, i32
  }
}

</mosaic_0001>

<llo_original>
// kernel: _lambda_.16
$region0: #{_lambda_.16}
  #allocation0 [shape = 'u32[]', space=smem, size = 0x4, offset = 0x4, fixed_abs, tag = 'smem constant byte address 0x4 - core index']
  #allocation1 [shape = 'u32[144,128]{1,0:T(1,128)}', space=vmem, size = 0x12000, scoped, tag = 'internal scratch']
  #allocation2 [shape = 'f32[128,64]{1,0:T(8,128)}', space=vmem, size = 0x10000, scoped, tag = 'scratch operand']
  %s0 = inlined_call_operand.vmem [shape: bf16[128,256], index: 0, kind: input, shape index: {}]
  %s1 = inlined_call_operand.vmem [shape: bf16[256,64], index: 1, kind: input, shape index: {}]
  %s2 = inlined_call_operand.vmem [shape: f32[1,64], index: 2, kind: input, shape index: {}]
  %s3 = inlined_call_operand.vmem [shape: bf16[128,64], index: 3, kind: output, shape index: {}]
  %s4 = sld [smem:[#allocation0]]
  $region30: #{_lambda_.16} parent=0
    _
  %s6 = ssub.s32 1, %s4
  %s7 = scalar_select 0, %s6, %s4
  // Predicated region
  $region2: #{_lambda_.16} parent=0 // pred_check
    _
  $region3: #{_lambda_.16} parent=0 // pred_check_branch
    %9 = sbr.rel (0) target = $region5
  $region4: #{_lambda_.16} parent=0 // pred_region
    _
  $region5: #{_lambda_.16} parent=0 // pred_fallthru
    _
  // Predicated region
  $region6: #{_lambda_.16} parent=0 // pred_check
    _
  $region7: #{_lambda_.16} parent=0 // pred_check_branch
    %11 = sbr.rel (0) target = $region9
  $region8: #{_lambda_.16} parent=0 // pred_region
    _
  $region9: #{_lambda_.16} parent=0 // pred_fallthru
    _
  // Predicated region
  $region10: #{_lambda_.16} parent=0 // pred_check
    _
  $region11: #{_lambda_.16} parent=0 // pred_check_branch
    %13 = sbr.rel (0) target = $region13
  $region12: #{_lambda_.16} parent=0 // pred_region
    _
  $region13: #{_lambda_.16} parent=0 // pred_fallthru
    _
  %p15 = scmp.eq.s32.totalorder 0, 0
  // Predicated region
  $region14: #{_lambda_.16} parent=0 // pred_check
    %p16 = pneg %p15
  $region15: #{_lambda_.16} parent=0 // pred_check_branch
    %18 = sbr.rel (%p16) target = $region17
  $region16: #{_lambda_.16} parent=0 // pred_region
    %vm19 = vcmask 523264
    %20 = vst.msk [vmem:[#allocation2] sm:$0xff] %vm19, 0.0
    %21 = vst.msk [vmem:[#allocation2 + $0x8] sm:$0xff] %vm19, 0.0
    %22 = vst.msk [vmem:[#allocation2 + $0x10] sm:$0xff] %vm19, 0.0
    %23 = vst.msk [vmem:[#allocation2 + $0x18] sm:$0xff] %vm19, 0.0
    %24 = vst.msk [vmem:[#allocation2 + $0x20] sm:$0xff] %vm19, 0.0
    %25 = vst.msk [vmem:[#allocation2 + $0x28] sm:$0xff] %vm19, 0.0
    %26 = vst.msk [vmem:[#allocation2 + $0x30] sm:$0xff] %vm19, 0.0
    %27 = vst.msk [vmem:[#allocation2 + $0x38] sm:$0xff] %vm19, 0.0
    %28 = vst.msk [vmem:[#allocation2 + $0x40] sm:$0xff] %vm19, 0.0
    %29 = vst.msk [vmem:[#allocation2 + $0x48] sm:$0xff] %vm19, 0.0
    %30 = vst.msk [vmem:[#allocation2 + $0x50] sm:$0xff] %vm19, 0.0
    %31 = vst.msk [vmem:[#allocation2 + $0x58] sm:$0xff] %vm19, 0.0
    %32 = vst.msk [vmem:[#allocation2 + $0x60] sm:$0xff] %vm19, 0.0
    %33 = vst.msk [vmem:[#allocation2 + $0x68] sm:$0xff] %vm19, 0.0
    %34 = vst.msk [vmem:[#allocation2 + $0x70] sm:$0xff] %vm19, 0.0
    %35 = vst.msk [vmem:[#allocation2 + $0x78] sm:$0xff] %vm19, 0.0
  $region17: #{_lambda_.16} parent=0 // pred_fallthru
    _
  %v36 = vld [vmem:[#allocation2] sm:$0xff]
  %v37 = vld [vmem:[#allocation2 + $0x8] sm:$0xff]
  %v38 = vld [vmem:[#allocation2 + $0x10] sm:$0xff]
  %v39 = vld [vmem:[#allocation2 + $0x18] sm:$0xff]
  %v40 = vld [vmem:[#allocation2 + $0x20] sm:$0xff]
  %v41 = vld [vmem:[#allocation2 + $0x28] sm:$0xff]
  %v42 = vld [vmem:[#allocation2 + $0x30] sm:$0xff]
  %v43 = vld [vmem:[#allocation2 + $0x38] sm:$0xff]
  %v44 = vld [vmem:[#allocation2 + $0x40] sm:$0xff]
  %v45 = vld [vmem:[#allocation2 + $0x48] sm:$0xff]
  %v46 = vld [vmem:[#allocation2 + $0x50] sm:$0xff]
  %v47 = vld [vmem:[#allocation2 + $0x58] sm:$0xff]
  %v48 = vld [vmem:[#allocation2 + $0x60] sm:$0xff]
  %v49 = vld [vmem:[#allocation2 + $0x68] sm:$0xff]
  %v50 = vld [vmem:[#allocation2 + $0x70] sm:$0xff]
  %v51 = vld [vmem:[#allocation2 + $0x78] sm:$0xff]
  %v52 = vld [vmem:[%s0] sm:$0xff]
  %v53 = vld [vmem:[%s0 + $0x8] sm:$0xff]
  %v54 = vld [vmem:[%s0 + $0x10] sm:$0xff]
  %v55 = vld [vmem:[%s0 + $0x18] sm:$0xff]
  %v56 = vld [vmem:[%s0 + $0x20] sm:$0xff]
  %v57 = vld [vmem:[%s0 + $0x28] sm:$0xff]
  %v58 = vld [vmem:[%s0 + $0x30] sm:$0xff]
  %v59 = vld [vmem:[%s0 + $0x38] sm:$0xff]
  %v60 = vld [vmem:[%s0 + $0x40] sm:$0xff]
  %v61 = vld [vmem:[%s0 + $0x48] sm:$0xff]
  %v62 = vld [vmem:[%s0 + $0x50] sm:$0xff]
  %v63 = vld [vmem:[%s0 + $0x58] sm:$0xff]
  %v64 = vld [vmem:[%s0 + $0x60] sm:$0xff]
  %v65 = vld [vmem:[%s0 + $0x68] sm:$0xff]
  %v66 = vld [vmem:[%s0 + $0x70] sm:$0xff]
  %v67 = vld [vmem:[%s0 + $0x78] sm:$0xff]
  %v68 = vld [vmem:[%s1] sm:$0xf]
  %v69 = vld [vmem:[%s1 + $0x4] sm:$0xf]
  %v70 = vld [vmem:[%s1 + $0x8] sm:$0xf]
  %v71 = vld [vmem:[%s1 + $0xc] sm:$0xf]
  %v72 = vld [vmem:[%s1 + $0x10] sm:$0xf]
  %v73 = vld [vmem:[%s1 + $0x14] sm:$0xf]
  %v74 = vld [vmem:[%s1 + $0x18] sm:$0xf]
  %v75 = vld [vmem:[%s1 + $0x1c] sm:$0xf]
  %v76 = vld [vmem:[%s1 + $0x20] sm:$0xf]
  %v77 = vld [vmem:[%s1 + $0x24] sm:$0xf]
  %v78 = vld [vmem:[%s1 + $0x28] sm:$0xf]
  %v79 = vld [vmem:[%s1 + $0x2c] sm:$0xf]
  %v80 = vld [vmem:[%s1 + $0x30] sm:$0xf]
  %v81 = vld [vmem:[%s1 + $0x34] sm:$0xf]
  %v82 = vld [vmem:[%s1 + $0x38] sm:$0xf]
  %v83 = vld [vmem:[%s1 + $0x3c] sm:$0xf]
  %v84 = vld [vmem:[%s1 + $0x40] sm:$0xf]
  %v85 = vld [vmem:[%s1 + $0x44] sm:$0xf]
  %v86 = vld [vmem:[%s1 + $0x48] sm:$0xf]
  %v87 = vld [vmem:[%s1 + $0x4c] sm:$0xf]
  %v88 = vld [vmem:[%s1 + $0x50] sm:$0xf]
  %v89 = vld [vmem:[%s1 + $0x54] sm:$0xf]
  %v90 = vld [vmem:[%s1 + $0x58] sm:$0xf]
  %v91 = vld [vmem:[%s1 + $0x5c] sm:$0xf]
  %v92 = vld [vmem:[%s1 + $0x60] sm:$0xf]
  %v93 = vld [vmem:[%s1 + $0x64] sm:$0xf]
  %v94 = vld [vmem:[%s1 + $0x68] sm:$0xf]
  %v95 = vld [vmem:[%s1 + $0x6c] sm:$0xf]
  %v96 = vld [vmem:[%s1 + $0x70] sm:$0xf]
  %v97 = vld [vmem:[%s1 + $0x74] sm:$0xf]
  %v98 = vld [vmem:[%s1 + $0x78] sm:$0xf]
  %v99 = vld [vmem:[%s1 + $0x7c] sm:$0xf]
  %v116 = vunpack.c.l.b16 %v52
  %v117 = vunpack.c.h.b16 %v52
  %v118 = vunpack.c.l.b16 %v53
  %v119 = vunpack.c.h.b16 %v53
  %v120 = vunpack.c.l.b16 %v54
  %v121 = vunpack.c.h.b16 %v54
  %v122 = vunpack.c.l.b16 %v55
  %v123 = vunpack.c.h.b16 %v55
  %v124 = vunpack.c.l.b16 %v56
  %v125 = vunpack.c.h.b16 %v56
  %v126 = vunpack.c.l.b16 %v57
  %v127 = vunpack.c.h.b16 %v57
  %v128 = vunpack.c.l.b16 %v58
  %v129 = vunpack.c.h.b16 %v58
  %v130 = vunpack.c.l.b16 %v59
  %v131 = vunpack.c.h.b16 %v59
  %v132 = vunpack.c.l.b16 %v60
  %v133 = vunpack.c.h.b16 %v60
  %v134 = vunpack.c.l.b16 %v61
  %v135 = vunpack.c.h.b16 %v61
  %v136 = vunpack.c.l.b16 %v62
  %v137 = vunpack.c.h.b16 %v62
  %v138 = vunpack.c.l.b16 %v63
  %v139 = vunpack.c.h.b16 %v63
  %v140 = vunpack.c.l.b16 %v64
  %v141 = vunpack.c.h.b16 %v64
  %v142 = vunpack.c.l.b16 %v65
  %v143 = vunpack.c.h.b16 %v65
  %v144 = vunpack.c.l.b16 %v66
  %v145 = vunpack.c.h.b16 %v66
  %v146 = vunpack.c.l.b16 %v67
  %v147 = vunpack.c.h.b16 %v67
  %v148 = vpack.c.b16 %v118, %v116
  %v149 = vpack.c.b16 %v119, %v117
  %v150 = vpack.c.b16 %v122, %v120
  %v151 = vpack.c.b16 %v123, %v121
  %v152 = vpack.c.b16 %v126, %v124
  %v153 = vpack.c.b16 %v127, %v125
  %v154 = vpack.c.b16 %v130, %v128
  %v155 = vpack.c.b16 %v131, %v129
  %v156 = vpack.c.b16 %v134, %v132
  %v157 = vpack.c.b16 %v135, %v133
  %v158 = vpack.c.b16 %v138, %v136
  %v159 = vpack.c.b16 %v139, %v137
  %v160 = vpack.c.b16 %v142, %v140
  %v161 = vpack.c.b16 %v143, %v141
  %v162 = vpack.c.b16 %v146, %v144
  %v163 = vpack.c.b16 %v147, %v145
  %v212 = vunpack.c.l.b16 %v68
  %v213 = vunpack.c.l.b16 %v69
  %v214 = vunpack.c.l.b16 %v70
  %v215 = vunpack.c.l.b16 %v71
  %v216 = vunpack.c.l.b16 %v72
  %v217 = vunpack.c.l.b16 %v73
  %v218 = vunpack.c.l.b16 %v74
  %v219 = vunpack.c.l.b16 %v75
  %v220 = vunpack.c.l.b16 %v76
  %v221 = vunpack.c.l.b16 %v77
  %v222 = vunpack.c.l.b16 %v78
  %v223 = vunpack.c.l.b16 %v79
  %v224 = vunpack.c.l.b16 %v80
  %v225 = vunpack.c.l.b16 %v81
  %v226 = vunpack.c.l.b16 %v82
  %v227 = vunpack.c.l.b16 %v83
  %v228 = vunpack.c.l.b16 %v84
  %v229 = vunpack.c.l.b16 %v85
  %v230 = vunpack.c.l.b16 %v86
  %v231 = vunpack.c.l.b16 %v87
  %v232 = vunpack.c.l.b16 %v88
  %v233 = vunpack.c.l.b16 %v89
  %v234 = vunpack.c.l.b16 %v90
  %v235 = vunpack.c.l.b16 %v91
  %v236 = vunpack.c.l.b16 %v92
  %v237 = vunpack.c.l.b16 %v93
  %v238 = vunpack.c.l.b16 %v94
  %v239 = vunpack.c.l.b16 %v95
  %v240 = vunpack.c.l.b16 %v96
  %v241 = vunpack.c.l.b16 %v97
  %v242 = vunpack.c.l.b16 %v98
  %v243 = vunpack.c.l.b16 %v99
  %v244 = vpack.c.b16 %v213, %v212
  %v245 = vpack.c.b16 %v215, %v214
  %v246 = vpack.c.b16 %v217, %v216
  %v247 = vpack.c.b16 %v219, %v218
  %v248 = vpack.c.b16 %v221, %v220
  %v249 = vpack.c.b16 %v223, %v222
  %v250 = vpack.c.b16 %v225, %v224
  %v251 = vpack.c.b16 %v227, %v226
  %v252 = vpack.c.b16 %v229, %v228
  %v253 = vpack.c.b16 %v231, %v230
  %v254 = vpack.c.b16 %v233, %v232
  %v255 = vpack.c.b16 %v235, %v234
  %v256 = vpack.c.b16 %v237, %v236
  %v257 = vpack.c.b16 %v239, %v238
  %v258 = vpack.c.b16 %v241, %v240
  %v259 = vpack.c.b16 %v243, %v242
  %276 = vmatprep.subr.bf16.mxu0 0
  %277 = vmatpush1.bf16.msra.mxu0 %v251
  %278 = vmatprep.subr.bf16.mxu0 0
  %279 = vmatpush1.bf16.msra.mxu0 %v250
  %280 = vmatprep.subr.bf16.mxu0 0
  %281 = vmatpush1.bf16.msra.mxu0 %v249
  %282 = vmatprep.subr.bf16.mxu0 0
  %283 = vmatpush1.bf16.msra.mxu0 %v248
  %284 = vmatprep.subr.bf16.mxu0 0
  %285 = vmatpush1.bf16.msra.mxu0 %v247
  %286 = vmatprep.subr.bf16.mxu0 0
  %287 = vmatpush1.bf16.msra.mxu0 %v246
  %288 = vmatprep.subr.bf16.mxu0 0
  %289 = vmatpush1.bf16.msra.mxu0 %v245
  %290 = vmatprep.subr.bf16.mxu0 0
  %291 = vmatpush1.bf16.msra.mxu0 %v244
  %292 = vmatprep.subr.bf16.mxu0 0
  %293 = vmatpush2.bf16.msra.mxu0 %v259
  %294 = vmatprep.subr.bf16.mxu0 0
  %295 = vmatpush2.bf16.msra.mxu0 %v258
  %296 = vmatprep.subr.bf16.mxu0 0
  %297 = vmatpush2.bf16.msra.mxu0 %v257
  %298 = vmatprep.subr.bf16.mxu0 0
  %299 = vmatpush2.bf16.msra.mxu0 %v256
  %300 = vmatprep.subr.bf16.mxu0 0
  %301 = vmatpush2.bf16.msra.mxu0 %v255
  %302 = vmatprep.subr.bf16.mxu0 0
  %303 = vmatpush2.bf16.msra.mxu0 %v254
  %304 = vmatprep.subr.bf16.mxu0 0
  %305 = vmatpush2.bf16.msra.mxu0 %v253
  %306 = vmatprep.subr.bf16.mxu0 0
  %307 = vmatpush2.bf16.msra.mxu0 %v252
  %308 = vmatprep.mubr.bf16.mxu0 %v149
  %309 = vmatmul.mubr.bf16.gmra.mxu0 %v148
  %v310 = vpop.f32.mrf.mxu0
  %v311 = vadd.f32 0.0, %v310
  %v312 = vpop.f32.mrf.mxu0
  %v313 = vpop.f32.mrf.mxu0
  %v314 = vadd.f32 0.0, %v313
  %v315 = vpop.f32.mrf.mxu0
  %316 = vmatprep.mubr.bf16.mxu0 %v151
  %317 = vmatmul.mubr.bf16.gmra.mxu0 %v150
  %v318 = vpop.f32.mrf.mxu0
  %v319 = vadd.f32 0.0, %v318
  %v320 = vpop.f32.mrf.mxu0
  %v321 = vpop.f32.mrf.mxu0
  %v322 = vadd.f32 0.0, %v321
  %v323 = vpop.f32.mrf.mxu0
  %324 = vmatprep.mubr.bf16.mxu0 %v153
  %325 = vmatmul.mubr.bf16.gmra.mxu0 %v152
  %v326 = vpop.f32.mrf.mxu0
  %v327 = vadd.f32 0.0, %v326
  %v328 = vpop.f32.mrf.mxu0
  %v329 = vpop.f32.mrf.mxu0
  %v330 = vadd.f32 0.0, %v329
  %v331 = vpop.f32.mrf.mxu0
  %332 = vmatprep.mubr.bf16.mxu0 %v155
  %333 = vmatmul.mubr.bf16.gmra.mxu0 %v154
  %v334 = vpop.f32.mrf.mxu0
  %v335 = vadd.f32 0.0, %v334
  %v336 = vpop.f32.mrf.mxu0
  %v337 = vpop.f32.mrf.mxu0
  %v338 = vadd.f32 0.0, %v337
  %v339 = vpop.f32.mrf.mxu0
  %340 = vmatprep.mubr.bf16.mxu0 %v157
  %341 = vmatmul.mubr.bf16.gmra.mxu0 %v156
  %v342 = vpop.f32.mrf.mxu0
  %v343 = vadd.f32 0.0, %v342
  %v344 = vpop.f32.mrf.mxu0
  %v345 = vpop.f32.mrf.mxu0
  %v346 = vadd.f32 0.0, %v345
  %v347 = vpop.f32.mrf.mxu0
  %348 = vmatprep.mubr.bf16.mxu0 %v159
  %349 = vmatmul.mubr.bf16.gmra.mxu0 %v158
  %v350 = vpop.f32.mrf.mxu0
  %v351 = vadd.f32 0.0, %v350
  %v352 = vpop.f32.mrf.mxu0
  %v353 = vpop.f32.mrf.mxu0
  %v354 = vadd.f32 0.0, %v353
  %v355 = vpop.f32.mrf.mxu0
  %356 = vmatprep.mubr.bf16.mxu0 %v161
  %357 = vmatmul.mubr.bf16.gmra.mxu0 %v160
  %v358 = vpop.f32.mrf.mxu0
  %v359 = vadd.f32 0.0, %v358
  %v360 = vpop.f32.mrf.mxu0
  %v361 = vpop.f32.mrf.mxu0
  %v362 = vadd.f32 0.0, %v361
  %v363 = vpop.f32.mrf.mxu0
  %364 = vmatprep.mubr.bf16.mxu0 %v163
  %365 = vmatmul.mubr.bf16.gmra.mxu0 %v162
  %v366 = vpop.f32.mrf.mxu0
  %v367 = vadd.f32 0.0, %v366
  %v368 = vpop.f32.mrf.mxu0
  %v369 = vpop.f32.mrf.mxu0
  %v370 = vadd.f32 0.0, %v369
  %v371 = vpop.f32.mrf.mxu0
  %372 = vdwg.mxu0
  %v373 = vadd.f32 %v36, %v311
  %v374 = vadd.f32 %v37, %v314
  %v375 = vadd.f32 %v38, %v319
  %v376 = vadd.f32 %v39, %v322
  %v377 = vadd.f32 %v40, %v327
  %v378 = vadd.f32 %v41, %v330
  %v379 = vadd.f32 %v42, %v335
  %v380 = vadd.f32 %v43, %v338
  %v381 = vadd.f32 %v44, %v343
  %v382 = vadd.f32 %v45, %v346
  %v383 = vadd.f32 %v46, %v351
  %v384 = vadd.f32 %v47, %v354
  %v385 = vadd.f32 %v48, %v359
  %v386 = vadd.f32 %v49, %v362
  %v387 = vadd.f32 %v50, %v367
  %v388 = vadd.f32 %v51, %v370
  %vm389 = vcmask 523264
  %390 = vst.msk [vmem:[#allocation2] sm:$0xff] %vm389, %v373
  %391 = vst.msk [vmem:[#allocation2 + $0x8] sm:$0xff] %vm389, %v374
  %392 = vst.msk [vmem:[#allocation2 + $0x10] sm:$0xff] %vm389, %v375
  %393 = vst.msk [vmem:[#allocation2 + $0x18] sm:$0xff] %vm389, %v376
  %394 = vst.msk [vmem:[#allocation2 + $0x20] sm:$0xff] %vm389, %v377
  %395 = vst.msk [vmem:[#allocation2 + $0x28] sm:$0xff] %vm389, %v378
  %396 = vst.msk [vmem:[#allocation2 + $0x30] sm:$0xff] %vm389, %v379
  %397 = vst.msk [vmem:[#allocation2 + $0x38] sm:$0xff] %vm389, %v380
  %398 = vst.msk [vmem:[#allocation2 + $0x40] sm:$0xff] %vm389, %v381
  %399 = vst.msk [vmem:[#allocation2 + $0x48] sm:$0xff] %vm389, %v382
  %400 = vst.msk [vmem:[#allocation2 + $0x50] sm:$0xff] %vm389, %v383
  %401 = vst.msk [vmem:[#allocation2 + $0x58] sm:$0xff] %vm389, %v384
  %402 = vst.msk [vmem:[#allocation2 + $0x60] sm:$0xff] %vm389, %v385
  %403 = vst.msk [vmem:[#allocation2 + $0x68] sm:$0xff] %vm389, %v386
  %404 = vst.msk [vmem:[#allocation2 + $0x70] sm:$0xff] %vm389, %v387
  %405 = vst.msk [vmem:[#allocation2 + $0x78] sm:$0xff] %vm389, %v388
  // Predicated region
  $region18: #{_lambda_.16} parent=0 // pred_check
    %p406 = pneg %p15
  $region19: #{_lambda_.16} parent=0 // pred_check_branch
    %408 = sbr.rel (%p406) target = $region21
  $region20: #{_lambda_.16} parent=0 // pred_region
    %v409 = vld [vmem:[#allocation2] sm:$0xff]
    %v410 = vld [vmem:[#allocation2 + $0x8] sm:$0xff]
    %v411 = vld [vmem:[#allocation2 + $0x10] sm:$0xff]
    %v412 = vld [vmem:[#allocation2 + $0x18] sm:$0xff]
    %v413 = vld [vmem:[#allocation2 + $0x20] sm:$0xff]
    %v414 = vld [vmem:[#allocation2 + $0x28] sm:$0xff]
    %v415 = vld [vmem:[#allocation2 + $0x30] sm:$0xff]
    %v416 = vld [vmem:[#allocation2 + $0x38] sm:$0xff]
    %v417 = vld [vmem:[#allocation2 + $0x40] sm:$0xff]
    %v418 = vld [vmem:[#allocation2 + $0x48] sm:$0xff]
    %v419 = vld [vmem:[#allocation2 + $0x50] sm:$0xff]
    %v420 = vld [vmem:[#allocation2 + $0x58] sm:$0xff]
    %v421 = vld [vmem:[#allocation2 + $0x60] sm:$0xff]
    %v422 = vld [vmem:[#allocation2 + $0x68] sm:$0xff]
    %v423 = vld [vmem:[#allocation2 + $0x70] sm:$0xff]
    %v424 = vld [vmem:[#allocation2 + $0x78] sm:$0xff]
    %v425 = vld [vmem:[%s2] sm:$0x1]
    %v427 = vlaneseq
    %v428 = vshrl.u32 %v427, 7
    %v429 = vsub.s32 0, %v428
    %v430 = vrot.slane %v425, %v429
    %v432 = vadd.f32 %v409, %v430
    %v433 = vadd.f32 %v410, %v430
    %v434 = vadd.f32 %v411, %v430
    %v435 = vadd.f32 %v412, %v430
    %v436 = vadd.f32 %v413, %v430
    %v437 = vadd.f32 %v414, %v430
    %v438 = vadd.f32 %v415, %v430
    %v439 = vadd.f32 %v416, %v430
    %v440 = vadd.f32 %v417, %v430
    %v441 = vadd.f32 %v418, %v430
    %v442 = vadd.f32 %v419, %v430
    %v443 = vadd.f32 %v420, %v430
    %v444 = vadd.f32 %v421, %v430
    %v445 = vadd.f32 %v422, %v430
    %v446 = vadd.f32 %v423, %v430
    %v447 = vadd.f32 %v424, %v430
    %v448 = vmax.f32 %v432, 0.0
    %v449 = vmax.f32 %v433, 0.0
    %v450 = vmax.f32 %v434, 0.0
    %v451 = vmax.f32 %v435, 0.0
    %v452 = vmax.f32 %v436, 0.0
    %v453 = vmax.f32 %v437, 0.0
    %v454 = vmax.f32 %v438, 0.0
    %v455 = vmax.f32 %v439, 0.0
    %v456 = vmax.f32 %v440, 0.0
    %v457 = vmax.f32 %v441, 0.0
    %v458 = vmax.f32 %v442, 0.0
    %v459 = vmax.f32 %v443, 0.0
    %v460 = vmax.f32 %v444, 0.0
    %v461 = vmax.f32 %v445, 0.0
    %v462 = vmax.f32 %v446, 0.0
    %v463 = vmax.f32 %v447, 0.0
    %v464 = vpack.c.bf16 %v449, %v448
    %v465 = vpack.c.bf16 %v451, %v450
    %v466 = vpack.c.bf16 %v453, %v452
    %v467 = vpack.c.bf16 %v455, %v454
    %v468 = vpack.c.bf16 %v457, %v456
    %v469 = vpack.c.bf16 %v459, %v458
    %v470 = vpack.c.bf16 %v461, %v460
    %v471 = vpack.c.bf16 %v463, %v462
    %v480 = vunpack.c.l.b16 %v464
    %v481 = vunpack.c.h.b16 %v464
    %v482 = vunpack.c.l.b16 %v465
    %v483 = vunpack.c.h.b16 %v465
    %v484 = vunpack.c.l.b16 %v466
    %v485 = vunpack.c.h.b16 %v466
    %v486 = vunpack.c.l.b16 %v467
    %v487 = vunpack.c.h.b16 %v467
    %v488 = vunpack.c.l.b16 %v468
    %v489 = vunpack.c.h.b16 %v468
    %v490 = vunpack.c.l.b16 %v469
    %v491 = vunpack.c.h.b16 %v469
    %v492 = vunpack.c.l.b16 %v470
    %v493 = vunpack.c.h.b16 %v470
    %v494 = vunpack.c.l.b16 %v471
    %v495 = vunpack.c.h.b16 %v471
    %v496 = vpack.c.b16 %v480, %v480
    %v497 = vpack.c.b16 %v481, %v481
    %v498 = vpack.c.b16 %v482, %v482
    %v499 = vpack.c.b16 %v483, %v483
    %v500 = vpack.c.b16 %v484, %v484
    %v501 = vpack.c.b16 %v485, %v485
    %v502 = vpack.c.b16 %v486, %v486
    %v503 = vpack.c.b16 %v487, %v487
    %v504 = vpack.c.b16 %v488, %v488
    %v505 = vpack.c.b16 %v489, %v489
    %v506 = vpack.c.b16 %v490, %v490
    %v507 = vpack.c.b16 %v491, %v491
    %v508 = vpack.c.b16 %v492, %v492
    %v509 = vpack.c.b16 %v493, %v493
    %v510 = vpack.c.b16 %v494, %v494
    %v511 = vpack.c.b16 %v495, %v495
    %vm528 = vcmask 519168
    %529 = vst.msk [vmem:[%s3] sm:$0xf] %vm528, %v496
    %530 = vst.msk [vmem:[%s3 + $0x4] sm:$0xf] %vm528, %v497
    %531 = vst.msk [vmem:[%s3 + $0x8] sm:$0xf] %vm528, %v498
    %532 = vst.msk [vmem:[%s3 + $0xc] sm:$0xf] %vm528, %v499
    %533 = vst.msk [vmem:[%s3 + $0x10] sm:$0xf] %vm528, %v500
    %534 = vst.msk [vmem:[%s3 + $0x14] sm:$0xf] %vm528, %v501
    %535 = vst.msk [vmem:[%s3 + $0x18] sm:$0xf] %vm528, %v502
    %536 = vst.msk [vmem:[%s3 + $0x1c] sm:$0xf] %vm528, %v503
    %537 = vst.msk [vmem:[%s3 + $0x20] sm:$0xf] %vm528, %v504
    %538 = vst.msk [vmem:[%s3 + $0x24] sm:$0xf] %vm528, %v505
    %539 = vst.msk [vmem:[%s3 + $0x28] sm:$0xf] %vm528, %v506
    %540 = vst.msk [vmem:[%s3 + $0x2c] sm:$0xf] %vm528, %v507
    %541 = vst.msk [vmem:[%s3 + $0x30] sm:$0xf] %vm528, %v508
    %542 = vst.msk [vmem:[%s3 + $0x34] sm:$0xf] %vm528, %v509
    %543 = vst.msk [vmem:[%s3 + $0x38] sm:$0xf] %vm528, %v510
    %544 = vst.msk [vmem:[%s3 + $0x3c] sm:$0xf] %vm528, %v511
  $region21: #{_lambda_.16} parent=0 // pred_fallthru
    _
  // Predicated region
  $region22: #{_lambda_.16} parent=0 // pred_check
    _
  $region23: #{_lambda_.16} parent=0 // pred_check_branch
    %546 = sbr.rel (0) target = $region25
  $region24: #{_lambda_.16} parent=0 // pred_region
    _
  $region25: #{_lambda_.16} parent=0 // pred_fallthru
    _
  // Predicated region
  $region26: #{_lambda_.16} parent=0 // pred_check
    _
  $region27: #{_lambda_.16} parent=0 // pred_check_branch
    %548 = sbr.rel (0) target = $region29
  $region28: #{_lambda_.16} parent=0 // pred_region
    _
  $region29: #{_lambda_.16} parent=0 // pred_fallthru
    _

// kernel: _lambda_.17
$region0: #{_lambda_.17}
  #allocation0 [shape = 'u32[]', space=smem, size = 0x4, offset = 0x4, fixed_abs, tag = 'smem constant byte address 0x4 - core index']
  #allocation1 [shape = 'u32[144,128]{1,0:T(1,128)}', space=vmem, size = 0x12000, scoped, tag = 'internal scratch']
  #allocation2 [shape = 'f32[128,64]{1,0:T(8,128)}', space=vmem, size = 0x10000, scoped, tag = 'scratch operand']
  %s0 = inlined_call_operand.vmem [shape: bf16[128,640], index: 0, kind: input, shape index: {}]
  %s1 = inlined_call_operand.vmem [shape: bf16[640,64], index: 1, kind: input, shape index: {}]
  %s2 = inlined_call_operand.vmem [shape: f32[1,64], index: 2, kind: input, shape index: {}]
  %s3 = inlined_call_operand.vmem [shape: bf16[128,64], index: 3, kind: output, shape index: {}]
  %s4 = sld [smem:[#allocation0]]
  $region30: #{_lambda_.17} parent=0
    _
  %s6 = ssub.s32 1, %s4
  %s7 = scalar_select 0, %s6, %s4
  // Predicated region
  $region2: #{_lambda_.17} parent=0 // pred_check
    _
  $region3: #{_lambda_.17} parent=0 // pred_check_branch
    %9 = sbr.rel (0) target = $region5
  $region4: #{_lambda_.17} parent=0 // pred_region
    _
  $region5: #{_lambda_.17} parent=0 // pred_fallthru
    _
  // Predicated region
  $region6: #{_lambda_.17} parent=0 // pred_check
    _
  $region7: #{_lambda_.17} parent=0 // pred_check_branch
    %11 = sbr.rel (0) target = $region9
  $region8: #{_lambda_.17} parent=0 // pred_region
    _
  $region9: #{_lambda_.17} parent=0 // pred_fallthru
    _
  // Predicated region
  $region10: #{_lambda_.17} parent=0 // pred_check
    _
  $region11: #{_lambda_.17} parent=0 // pred_check_branch
    %13 = sbr.rel (0) target = $region13
  $region12: #{_lambda_.17} parent=0 // pred_region
    _
  $region13: #{_lambda_.17} parent=0 // pred_fallthru
    _
  %p15 = scmp.eq.s32.totalorder 0, 0
  // Predicated region
  $region14: #{_lambda_.17} parent=0 // pred_check
    %p16 = pneg %p15
  $region15: #{_lambda_.17} parent=0 // pred_check_branch
    %18 = sbr.rel (%p16) target = $region17
  $region16: #{_lambda_.17} parent=0 // pred_region
    %vm19 = vcmask 523264
    %20 = vst.msk [vmem:[#allocation2] sm:$0xff] %vm19, 0.0
    %21 = vst.msk [vmem:[#allocation2 + $0x8] sm:$0xff] %vm19, 0.0
    %22 = vst.msk [vmem:[#allocation2 + $0x10] sm:$0xff] %vm19, 0.0
    %23 = vst.msk [vmem:[#allocation2 + $0x18] sm:$0xff] %vm19, 0.0
    %24 = vst.msk [vmem:[#allocation2 + $0x20] sm:$0xff] %vm19, 0.0
    %25 = vst.msk [vmem:[#allocation2 + $0x28] sm:$0xff] %vm19, 0.0
    %26 = vst.msk [vmem:[#allocation2 + $0x30] sm:$0xff] %vm19, 0.0
    %27 = vst.msk [vmem:[#allocation2 + $0x38] sm:$0xff] %vm19, 0.0
    %28 = vst.msk [vmem:[#allocation2 + $0x40] sm:$0xff] %vm19, 0.0
    %29 = vst.msk [vmem:[#allocation2 + $0x48] sm:$0xff] %vm19, 0.0
    %30 = vst.msk [vmem:[#allocation2 + $0x50] sm:$0xff] %vm19, 0.0
    %31 = vst.msk [vmem:[#allocation2 + $0x58] sm:$0xff] %vm19, 0.0
    %32 = vst.msk [vmem:[#allocation2 + $0x60] sm:$0xff] %vm19, 0.0
    %33 = vst.msk [vmem:[#allocation2 + $0x68] sm:$0xff] %vm19, 0.0
    %34 = vst.msk [vmem:[#allocation2 + $0x70] sm:$0xff] %vm19, 0.0
    %35 = vst.msk [vmem:[#allocation2 + $0x78] sm:$0xff] %vm19, 0.0
  $region17: #{_lambda_.17} parent=0 // pred_fallthru
    _
  %v36 = vld [vmem:[#allocation2] sm:$0xff]
  %v37 = vld [vmem:[#allocation2 + $0x8] sm:$0xff]
  %v38 = vld [vmem:[#allocation2 + $0x10] sm:$0xff]
  %v39 = vld [vmem:[#allocation2 + $0x18] sm:$0xff]
  %v40 = vld [vmem:[#allocation2 + $0x20] sm:$0xff]
  %v41 = vld [vmem:[#allocation2 + $0x28] sm:$0xff]
  %v42 = vld [vmem:[#allocation2 + $0x30] sm:$0xff]
  %v43 = vld [vmem:[#allocation2 + $0x38] sm:$0xff]
  %v44 = vld [vmem:[#allocation2 + $0x40] sm:$0xff]
  %v45 = vld [vmem:[#allocation2 + $0x48] sm:$0xff]
  %v46 = vld [vmem:[#allocation2 + $0x50] sm:$0xff]
  %v47 = vld [vmem:[#allocation2 + $0x58] sm:$0xff]
  %v48 = vld [vmem:[#allocation2 + $0x60] sm:$0xff]
  %v49 = vld [vmem:[#allocation2 + $0x68] sm:$0xff]
  %v50 = vld [vmem:[#allocation2 + $0x70] sm:$0xff]
  %v51 = vld [vmem:[#allocation2 + $0x78] sm:$0xff]
  %v52 = vld [vmem:[%s0] sm:$0xff]
  %v53 = vld [vmem:[%s0 + $0x8] sm:$0xff]
  %v54 = vld [vmem:[%s0 + $0x10] sm:$0xf]
  %v55 = vld [vmem:[%s0 + $0x14] sm:$0xff]
  %v56 = vld [vmem:[%s0 + $0x1c] sm:$0xff]
  %v57 = vld [vmem:[%s0 + $0x24] sm:$0xf]
  %v58 = vld [vmem:[%s0 + $0x28] sm:$0xff]
  %v59 = vld [vmem:[%s0 + $0x30] sm:$0xff]
  %v60 = vld [vmem:[%s0 + $0x38] sm:$0xf]
  %v61 = vld [vmem:[%s0 + $0x3c] sm:$0xff]
  %v62 = vld [vmem:[%s0 + $0x44] sm:$0xff]
  %v63 = vld [vmem:[%s0 + $0x4c] sm:$0xf]
  %v64 = vld [vmem:[%s0 + $0x50] sm:$0xff]
  %v65 = vld [vmem:[%s0 + $0x58] sm:$0xff]
  %v66 = vld [vmem:[%s0 + $0x60] sm:$0xf]
  %v67 = vld [vmem:[%s0 + $0x64] sm:$0xff]
  %v68 = vld [vmem:[%s0 + $0x6c] sm:$0xff]
  %v69 = vld [vmem:[%s0 + $0x74] sm:$0xf]
  %v70 = vld [vmem:[%s0 + $0x78] sm:$0xff]
  %v71 = vld [vmem:[%s0 + $0x80] sm:$0xff]
  %v72 = vld [vmem:[%s0 + $0x88] sm:$0xf]
  %v73 = vld [vmem:[%s0 + $0x8c] sm:$0xff]
  %v74 = vld [vmem:[%s0 + $0x94] sm:$0xff]
  %v75 = vld [vmem:[%s0 + $0x9c] sm:$0xf]
  %v76 = vld [vmem:[%s0 + $0xa0] sm:$0xff]
  %v77 = vld [vmem:[%s0 + $0xa8] sm:$0xff]
  %v78 = vld [vmem:[%s0 + $0xb0] sm:$0xf]
  %v79 = vld [vmem:[%s0 + $0xb4] sm:$0xff]
  %v80 = vld [vmem:[%s0 + $0xbc] sm:$0xff]
  %v81 = vld [vmem:[%s0 + $0xc4] sm:$0xf]
  %v82 = vld [vmem:[%s0 + $0xc8] sm:$0xff]
  %v83 = vld [vmem:[%s0 + $0xd0] sm:$0xff]
  %v84 = vld [vmem:[%s0 + $0xd8] sm:$0xf]
  %v85 = vld [vmem:[%s0 + $0xdc] sm:$0xff]
  %v86 = vld [vmem:[%s0 + $0xe4] sm:$0xff]
  %v87 = vld [vmem:[%s0 + $0xec] sm:$0xf]
  %v88 = vld [vmem:[%s0 + $0xf0] sm:$0xff]
  %v89 = vld [vmem:[%s0 + $0xf8] sm:$0xff]
  %v90 = vld [vmem:[%s0 + $0x100] sm:$0xf]
  %v91 = vld [vmem:[%s0 + $0x104] sm:$0xff]
  %v92 = vld [vmem:[%s0 + $0x10c] sm:$0xff]
  %v93 = vld [vmem:[%s0 + $0x114] sm:$0xf]
  %v94 = vld [vmem:[%s0 + $0x118] sm:$0xff]
  %v95 = vld [vmem:[%s0 + $0x120] sm:$0xff]
  %v96 = vld [vmem:[%s0 + $0x128] sm:$0xf]
  %v97 = vld [vmem:[%s0 + $0x12c] sm:$0xff]
  %v98 = vld [vmem:[%s0 + $0x134] sm:$0xff]
  %v99 = vld [vmem:[%s0 + $0x13c] sm:$0xf]
  %v100 = vld [vmem:[%s1] sm:$0xf]
  %v101 = vld [vmem:[%s1 + $0x4] sm:$0xf]
  %v102 = vld [vmem:[%s1 + $0x8] sm:$0xf]
  %v103 = vld [vmem:[%s1 + $0xc] sm:$0xf]
  %v104 = vld [vmem:[%s1 + $0x10] sm:$0xf]
  %v105 = vld [vmem:[%s1 + $0x14] sm:$0xf]
  %v106 = vld [vmem:[%s1 + $0x18] sm:$0xf]
  %v107 = vld [vmem:[%s1 + $0x1c] sm:$0xf]
  %v108 = vld [vmem:[%s1 + $0x20] sm:$0xf]
  %v109 = vld [vmem:[%s1 + $0x24] sm:$0xf]
  %v110 = vld [vmem:[%s1 + $0x28] sm:$0xf]
  %v111 = vld [vmem:[%s1 + $0x2c] sm:$0xf]
  %v112 = vld [vmem:[%s1 + $0x30] sm:$0xf]
  %v113 = vld [vmem:[%s1 + $0x34] sm:$0xf]
  %v114 = vld [vmem:[%s1 + $0x38] sm:$0xf]
  %v115 = vld [vmem:[%s1 + $0x3c] sm:$0xf]
  %v116 = vld [vmem:[%s1 + $0x40] sm:$0xf]
  %v117 = vld [vmem:[%s1 + $0x44] sm:$0xf]
  %v118 = vld [vmem:[%s1 + $0x48] sm:$0xf]
  %v119 = vld [vmem:[%s1 + $0x4c] sm:$0xf]
  %v120 = vld [vmem:[%s1 + $0x50] sm:$0xf]
  %v121 = vld [vmem:[%s1 + $0x54] sm:$0xf]
  %v122 = vld [vmem:[%s1 + $0x58] sm:$0xf]
  %v123 = vld [vmem:[%s1 + $0x5c] sm:$0xf]
  %v124 = vld [vmem:[%s1 + $0x60] sm:$0xf]
  %v125 = vld [vmem:[%s1 + $0x64] sm:$0xf]
  %v126 = vld [vmem:[%s1 + $0x68] sm:$0xf]
  %v127 = vld [vmem:[%s1 + $0x6c] sm:$0xf]
  %v128 = vld [vmem:[%s1 + $0x70] sm:$0xf]
  %v129 = vld [vmem:[%s1 + $0x74] sm:$0xf]
  %v130 = vld [vmem:[%s1 + $0x78] sm:$0xf]
  %v131 = vld [vmem:[%s1 + $0x7c] sm:$0xf]
  %v132 = vld [vmem:[%s1 + $0x80] sm:$0xf]
  %v133 = vld [vmem:[%s1 + $0x84] sm:$0xf]
  %v134 = vld [vmem:[%s1 + $0x88] sm:$0xf]
  %v135 = vld [vmem:[%s1 + $0x8c] sm:$0xf]
  %v136 = vld [vmem:[%s1 + $0x90] sm:$0xf]
  %v137 = vld [vmem:[%s1 + $0x94] sm:$0xf]
  %v138 = vld [vmem:[%s1 + $0x98] sm:$0xf]
  %v139 = vld [vmem:[%s1 + $0x9c] sm:$0xf]
  %v140 = vld [vmem:[%s1 + $0xa0] sm:$0xf]
  %v141 = vld [vmem:[%s1 + $0xa4] sm:$0xf]
  %v142 = vld [vmem:[%s1 + $0xa8] sm:$0xf]
  %v143 = vld [vmem:[%s1 + $0xac] sm:$0xf]
  %v144 = vld [vmem:[%s1 + $0xb0] sm:$0xf]
  %v145 = vld [vmem:[%s1 + $0xb4] sm:$0xf]
  %v146 = vld [vmem:[%s1 + $0xb8] sm:$0xf]
  %v147 = vld [vmem:[%s1 + $0xbc] sm:$0xf]
  %v148 = vld [vmem:[%s1 + $0xc0] sm:$0xf]
  %v149 = vld [vmem:[%s1 + $0xc4] sm:$0xf]
  %v150 = vld [vmem:[%s1 + $0xc8] sm:$0xf]
  %v151 = vld [vmem:[%s1 + $0xcc] sm:$0xf]
  %v152 = vld [vmem:[%s1 + $0xd0] sm:$0xf]
  %v153 = vld [vmem:[%s1 + $0xd4] sm:$0xf]
  %v154 = vld [vmem:[%s1 + $0xd8] sm:$0xf]
  %v155 = vld [vmem:[%s1 + $0xdc] sm:$0xf]
  %v156 = vld [vmem:[%s1 + $0xe0] sm:$0xf]
  %v157 = vld [vmem:[%s1 + $0xe4] sm:$0xf]
  %v158 = vld [vmem:[%s1 + $0xe8] sm:$0xf]
  %v159 = vld [vmem:[%s1 + $0xec] sm:$0xf]
  %v160 = vld [vmem:[%s1 + $0xf0] sm:$0xf]
  %v161 = vld [vmem:[%s1 + $0xf4] sm:$0xf]
  %v162 = vld [vmem:[%s1 + $0xf8] sm:$0xf]
  %v163 = vld [vmem:[%s1 + $0xfc] sm:$0xf]
  %v164 = vld [vmem:[%s1 + $0x100] sm:$0xf]
  %v165 = vld [vmem:[%s1 + $0x104] sm:$0xf]
  %v166 = vld [vmem:[%s1 + $0x108] sm:$0xf]
  %v167 = vld [vmem:[%s1 + $0x10c] sm:$0xf]
  %v168 = vld [vmem:[%s1 + $0x110] sm:$0xf]
  %v169 = vld [vmem:[%s1 + $0x114] sm:$0xf]
  %v170 = vld [vmem:[%s1 + $0x118] sm:$0xf]
  %v171 = vld [vmem:[%s1 + $0x11c] sm:$0xf]
  %v172 = vld [vmem:[%s1 + $0x120] sm:$0xf]
  %v173 = vld [vmem:[%s1 + $0x124] sm:$0xf]
  %v174 = vld [vmem:[%s1 + $0x128] sm:$0xf]
  %v175 = vld [vmem:[%s1 + $0x12c] sm:$0xf]
  %v176 = vld [vmem:[%s1 + $0x130] sm:$0xf]
  %v177 = vld [vmem:[%s1 + $0x134] sm:$0xf]
  %v178 = vld [vmem:[%s1 + $0x138] sm:$0xf]
  %v179 = vld [vmem:[%s1 + $0x13c] sm:$0xf]
  %v228 = vunpack.c.l.b16 %v52
  %v229 = vunpack.c.h.b16 %v52
  %v230 = vunpack.c.l.b16 %v53
  %v231 = vunpack.c.h.b16 %v53
  %v232 = vunpack.c.l.b16 %v54
  %v233 = vunpack.c.l.b16 %v55
  %v234 = vunpack.c.h.b16 %v55
  %v235 = vunpack.c.l.b16 %v56
  %v236 = vunpack.c.h.b16 %v56
  %v237 = vunpack.c.l.b16 %v57
  %v238 = vunpack.c.l.b16 %v58
  %v239 = vunpack.c.h.b16 %v58
  %v240 = vunpack.c.l.b16 %v59
  %v241 = vunpack.c.h.b16 %v59
  %v242 = vunpack.c.l.b16 %v60
  %v243 = vunpack.c.l.b16 %v61
  %v244 = vunpack.c.h.b16 %v61
  %v245 = vunpack.c.l.b16 %v62
  %v246 = vunpack.c.h.b16 %v62
  %v247 = vunpack.c.l.b16 %v63
  %v248 = vunpack.c.l.b16 %v64
  %v249 = vunpack.c.h.b16 %v64
  %v250 = vunpack.c.l.b16 %v65
  %v251 = vunpack.c.h.b16 %v65
  %v252 = vunpack.c.l.b16 %v66
  %v253 = vunpack.c.l.b16 %v67
  %v254 = vunpack.c.h.b16 %v67
  %v255 = vunpack.c.l.b16 %v68
  %v256 = vunpack.c.h.b16 %v68
  %v257 = vunpack.c.l.b16 %v69
  %v258 = vunpack.c.l.b16 %v70
  %v259 = vunpack.c.h.b16 %v70
  %v260 = vunpack.c.l.b16 %v71
  %v261 = vunpack.c.h.b16 %v71
  %v262 = vunpack.c.l.b16 %v72
  %v263 = vunpack.c.l.b16 %v73
  %v264 = vunpack.c.h.b16 %v73
  %v265 = vunpack.c.l.b16 %v74
  %v266 = vunpack.c.h.b16 %v74
  %v267 = vunpack.c.l.b16 %v75
  %v268 = vunpack.c.l.b16 %v76
  %v269 = vunpack.c.h.b16 %v76
  %v270 = vunpack.c.l.b16 %v77
  %v271 = vunpack.c.h.b16 %v77
  %v272 = vunpack.c.l.b16 %v78
  %v273 = vunpack.c.l.b16 %v79
  %v274 = vunpack.c.h.b16 %v79
  %v275 = vunpack.c.l.b16 %v80
  %v276 = vunpack.c.h.b16 %v80
  %v277 = vunpack.c.l.b16 %v81
  %v278 = vunpack.c.l.b16 %v82
  %v279 = vunpack.c.h.b16 %v82
  %v280 = vunpack.c.l.b16 %v83
  %v281 = vunpack.c.h.b16 %v83
  %v282 = vunpack.c.l.b16 %v84
  %v283 = vunpack.c.l.b16 %v85
  %v284 = vunpack.c.h.b16 %v85
  %v285 = vunpack.c.l.b16 %v86
  %v286 = vunpack.c.h.b16 %v86
  %v287 = vunpack.c.l.b16 %v87
  %v288 = vunpack.c.l.b16 %v88
  %v289 = vunpack.c.h.b16 %v88
  %v290 = vunpack.c.l.b16 %v89
  %v291 = vunpack.c.h.b16 %v89
  %v292 = vunpack.c.l.b16 %v90
  %v293 = vunpack.c.l.b16 %v91
  %v294 = vunpack.c.h.b16 %v91
  %v295 = vunpack.c.l.b16 %v92
  %v296 = vunpack.c.h.b16 %v92
  %v297 = vunpack.c.l.b16 %v93
  %v298 = vunpack.c.l.b16 %v94
  %v299 = vunpack.c.h.b16 %v94
  %v300 = vunpack.c.l.b16 %v95
  %v301 = vunpack.c.h.b16 %v95
  %v302 = vunpack.c.l.b16 %v96
  %v303 = vunpack.c.l.b16 %v97
  %v304 = vunpack.c.h.b16 %v97
  %v305 = vunpack.c.l.b16 %v98
  %v306 = vunpack.c.h.b16 %v98
  %v307 = vunpack.c.l.b16 %v99
  %v308 = vpack.c.b16 %v233, %v228
  %v309 = vpack.c.b16 %v234, %v229
  %v310 = vpack.c.b16 %v235, %v230
  %v311 = vpack.c.b16 %v236, %v231
  %v312 = vpack.c.b16 %v237, %v232
  %v313 = vpack.c.b16 %v243, %v238
  %v314 = vpack.c.b16 %v244, %v239
  %v315 = vpack.c.b16 %v245, %v240
  %v316 = vpack.c.b16 %v246, %v241
  %v317 = vpack.c.b16 %v247, %v242
  %v318 = vpack.c.b16 %v253, %v248
  %v319 = vpack.c.b16 %v254, %v249
  %v320 = vpack.c.b16 %v255, %v250
  %v321 = vpack.c.b16 %v256, %v251
  %v322 = vpack.c.b16 %v257, %v252
  %v323 = vpack.c.b16 %v263, %v258
  %v324 = vpack.c.b16 %v264, %v259
  %v325 = vpack.c.b16 %v265, %v260
  %v326 = vpack.c.b16 %v266, %v261
  %v327 = vpack.c.b16 %v267, %v262
  %v328 = vpack.c.b16 %v273, %v268
  %v329 = vpack.c.b16 %v274, %v269
  %v330 = vpack.c.b16 %v275, %v270
  %v331 = vpack.c.b16 %v276, %v271
  %v332 = vpack.c.b16 %v277, %v272
  %v333 = vpack.c.b16 %v283, %v278
  %v334 = vpack.c.b16 %v284, %v279
  %v335 = vpack.c.b16 %v285, %v280
  %v336 = vpack.c.b16 %v286, %v281
  %v337 = vpack.c.b16 %v287, %v282
  %v338 = vpack.c.b16 %v293, %v288
  %v339 = vpack.c.b16 %v294, %v289
  %v340 = vpack.c.b16 %v295, %v290
  %v341 = vpack.c.b16 %v296, %v291
  %v342 = vpack.c.b16 %v297, %v292
  %v343 = vpack.c.b16 %v303, %v298
  %v344 = vpack.c.b16 %v304, %v299
  %v345 = vpack.c.b16 %v305, %v300
  %v346 = vpack.c.b16 %v306, %v301
  %v347 = vpack.c.b16 %v307, %v302
  %v468 = vunpack.c.l.b16 %v100
  %v469 = vunpack.c.l.b16 %v101
  %v470 = vunpack.c.l.b16 %v102
  %v471 = vunpack.c.l.b16 %v103
  %v472 = vunpack.c.l.b16 %v104
  %v473 = vunpack.c.l.b16 %v105
  %v474 = vunpack.c.l.b16 %v106
  %v475 = vunpack.c.l.b16 %v107
  %v476 = vunpack.c.l.b16 %v108
  %v477 = vunpack.c.l.b16 %v109
  %v478 = vunpack.c.l.b16 %v110
  %v479 = vunpack.c.l.b16 %v111
  %v480 = vunpack.c.l.b16 %v112
  %v481 = vunpack.c.l.b16 %v113
  %v482 = vunpack.c.l.b16 %v114
  %v483 = vunpack.c.l.b16 %v115
  %v484 = vunpack.c.l.b16 %v116
  %v485 = vunpack.c.l.b16 %v117
  %v486 = vunpack.c.l.b16 %v118
  %v487 = vunpack.c.l.b16 %v119
  %v488 = vunpack.c.l.b16 %v120
  %v489 = vunpack.c.l.b16 %v121
  %v490 = vunpack.c.l.b16 %v122
  %v491 = vunpack.c.l.b16 %v123
  %v492 = vunpack.c.l.b16 %v124
  %v493 = vunpack.c.l.b16 %v125
  %v494 = vunpack.c.l.b16 %v126
  %v495 = vunpack.c.l.b16 %v127
  %v496 = vunpack.c.l.b16 %v128
  %v497 = vunpack.c.l.b16 %v129
  %v498 = vunpack.c.l.b16 %v130
  %v499 = vunpack.c.l.b16 %v131
  %v500 = vunpack.c.l.b16 %v132
  %v501 = vunpack.c.l.b16 %v133
  %v502 = vunpack.c.l.b16 %v134
  %v503 = vunpack.c.l.b16 %v135
  %v504 = vunpack.c.l.b16 %v136
  %v505 = vunpack.c.l.b16 %v137
  %v506 = vunpack.c.l.b16 %v138
  %v507 = vunpack.c.l.b16 %v139
  %v508 = vunpack.c.l.b16 %v140
  %v509 = vunpack.c.l.b16 %v141
  %v510 = vunpack.c.l.b16 %v142
  %v511 = vunpack.c.l.b16 %v143
  %v512 = vunpack.c.l.b16 %v144
  %v513 = vunpack.c.l.b16 %v145
  %v514 = vunpack.c.l.b16 %v146
  %v515 = vunpack.c.l.b16 %v147
  %v516 = vunpack.c.l.b16 %v148
  %v517 = vunpack.c.l.b16 %v149
  %v518 = vunpack.c.l.b16 %v150
  %v519 = vunpack.c.l.b16 %v151
  %v520 = vunpack.c.l.b16 %v152
  %v521 = vunpack.c.l.b16 %v153
  %v522 = vunpack.c.l.b16 %v154
  %v523 = vunpack.c.l.b16 %v155
  %v524 = vunpack.c.l.b16 %v156
  %v525 = vunpack.c.l.b16 %v157
  %v526 = vunpack.c.l.b16 %v158
  %v527 = vunpack.c.l.b16 %v159
  %v528 = vunpack.c.l.b16 %v160
  %v529 = vunpack.c.l.b16 %v161
  %v530 = vunpack.c.l.b16 %v162
  %v531 = vunpack.c.l.b16 %v163
  %v532 = vunpack.c.l.b16 %v164
  %v533 = vunpack.c.l.b16 %v165
  %v534 = vunpack.c.l.b16 %v166
  %v535 = vunpack.c.l.b16 %v167
  %v536 = vunpack.c.l.b16 %v168
  %v537 = vunpack.c.l.b16 %v169
  %v538 = vunpack.c.l.b16 %v170
  %v539 = vunpack.c.l.b16 %v171
  %v540 = vunpack.c.l.b16 %v172
  %v541 = vunpack.c.l.b16 %v173
  %v542 = vunpack.c.l.b16 %v174
  %v543 = vunpack.c.l.b16 %v175
  %v544 = vunpack.c.l.b16 %v176
  %v545 = vunpack.c.l.b16 %v177
  %v546 = vunpack.c.l.b16 %v178
  %v547 = vunpack.c.l.b16 %v179
  %v548 = vpack.c.b16 %v469, %v468
  %v549 = vpack.c.b16 %v471, %v470
  %v550 = vpack.c.b16 %v473, %v472
  %v551 = vpack.c.b16 %v475, %v474
  %v552 = vpack.c.b16 %v477, %v476
  %v553 = vpack.c.b16 %v479, %v478
  %v554 = vpack.c.b16 %v481, %v480
  %v555 = vpack.c.b16 %v483, %v482
  %v556 = vpack.c.b16 %v485, %v484
  %v557 = vpack.c.b16 %v487, %v486
  %v558 = vpack.c.b16 %v489, %v488
  %v559 = vpack.c.b16 %v491, %v490
  %v560 = vpack.c.b16 %v493, %v492
  %v561 = vpack.c.b16 %v495, %v494
  %v562 = vpack.c.b16 %v497, %v496
  %v563 = vpack.c.b16 %v499, %v498
  %v564 = vpack.c.b16 %v501, %v500
  %v565 = vpack.c.b16 %v503, %v502
  %v566 = vpack.c.b16 %v505, %v504
  %v567 = vpack.c.b16 %v507, %v506
  %v568 = vpack.c.b16 %v509, %v508
  %v569 = vpack.c.b16 %v511, %v510
  %v570 = vpack.c.b16 %v513, %v512
  %v571 = vpack.c.b16 %v515, %v514
  %v572 = vpack.c.b16 %v517, %v516
  %v573 = vpack.c.b16 %v519, %v518
  %v574 = vpack.c.b16 %v521, %v520
  %v575 = vpack.c.b16 %v523, %v522
  %v576 = vpack.c.b16 %v525, %v524
  %v577 = vpack.c.b16 %v527, %v526
  %v578 = vpack.c.b16 %v529, %v528
  %v579 = vpack.c.b16 %v531, %v530
  %v580 = vpack.c.b16 %v533, %v532
  %v581 = vpack.c.b16 %v535, %v534
  %v582 = vpack.c.b16 %v537, %v536
  %v583 = vpack.c.b16 %v539, %v538
  %v584 = vpack.c.b16 %v541, %v540
  %v585 = vpack.c.b16 %v543, %v542
  %v586 = vpack.c.b16 %v545, %v544
  %v587 = vpack.c.b16 %v547, %v546
  %628 = vmatprep.subr.bf16.mxu0 0
  %629 = vmatpush1.bf16.msra.mxu0 %v555
  %630 = vmatprep.subr.bf16.mxu0 0
  %631 = vmatpush1.bf16.msra.mxu0 %v554
  %632 = vmatprep.subr.bf16.mxu0 0
  %633 = vmatpush1.bf16.msra.mxu0 %v553
  %634 = vmatprep.subr.bf16.mxu0 0
  %635 = vmatpush1.bf16.msra.mxu0 %v552
  %636 = vmatprep.subr.bf16.mxu0 0
  %637 = vmatpush1.bf16.msra.mxu0 %v551
  %638 = vmatprep.subr.bf16.mxu0 0
  %639 = vmatpush1.bf16.msra.mxu0 %v550
  %640 = vmatprep.subr.bf16.mxu0 0
  %641 = vmatpush1.bf16.msra.mxu0 %v549
  %642 = vmatprep.subr.bf16.mxu0 0
  %643 = vmatpush1.bf16.msra.mxu0 %v548
  %644 = vmatprep.subr.bf16.mxu0 0
  %645 = vmatpush2.bf16.msra.mxu0 %v563
  %646 = vmatprep.subr.bf16.mxu0 0
  %647 = vmatpush2.bf16.msra.mxu0 %v562
  %648 = vmatprep.subr.bf16.mxu0 0
  %649 = vmatpush2.bf16.msra.mxu0 %v561
  %650 = vmatprep.subr.bf16.mxu0 0
  %651 = vmatpush2.bf16.msra.mxu0 %v560
  %652 = vmatprep.subr.bf16.mxu0 0
  %653 = vmatpush2.bf16.msra.mxu0 %v559
  %654 = vmatprep.subr.bf16.mxu0 0
  %655 = vmatpush2.bf16.msra.mxu0 %v558
  %656 = vmatprep.subr.bf16.mxu0 0
  %657 = vmatpush2.bf16.msra.mxu0 %v557
  %658 = vmatprep.subr.bf16.mxu0 0
  %659 = vmatpush2.bf16.msra.mxu0 %v556
  %660 = vmatprep.mubr.bf16.mxu0 %v309
  %661 = vmatmul.mubr.bf16.gmra.mxu0 %v308
  %v662 = vpop.f32.mrf.mxu0
  %v663 = vadd.f32 0.0, %v662
  %v664 = vpop.f32.mrf.mxu0
  %v665 = vpop.f32.mrf.mxu0
  %v666 = vadd.f32 0.0, %v665
  %v667 = vpop.f32.mrf.mxu0
  %668 = vmatprep.mubr.bf16.mxu0 %v314
  %669 = vmatmul.mubr.bf16.gmra.mxu0 %v313
  %v670 = vpop.f32.mrf.mxu0
  %v671 = vadd.f32 0.0, %v670
  %v672 = vpop.f32.mrf.mxu0
  %v673 = vpop.f32.mrf.mxu0
  %v674 = vadd.f32 0.0, %v673
  %v675 = vpop.f32.mrf.mxu0
  %676 = vmatprep.mubr.bf16.mxu0 %v319
  %677 = vmatmul.mubr.bf16.gmra.mxu0 %v318
  %v678 = vpop.f32.mrf.mxu0
  %v679 = vadd.f32 0.0, %v678
  %v680 = vpop.f32.mrf.mxu0
  %v681 = vpop.f32.mrf.mxu0
  %v682 = vadd.f32 0.0, %v681
  %v683 = vpop.f32.mrf.mxu0
  %684 = vmatprep.mubr.bf16.mxu0 %v324
  %685 = vmatmul.mubr.bf16.gmra.mxu0 %v323
  %v686 = vpop.f32.mrf.mxu0
  %v687 = vadd.f32 0.0, %v686
  %v688 = vpop.f32.mrf.mxu0
  %v689 = vpop.f32.mrf.mxu0
  %v690 = vadd.f32 0.0, %v689
  %v691 = vpop.f32.mrf.mxu0
  %692 = vmatprep.mubr.bf16.mxu0 %v329
  %693 = vmatmul.mubr.bf16.gmra.mxu0 %v328
  %v694 = vpop.f32.mrf.mxu0
  %v695 = vadd.f32 0.0, %v694
  %v696 = vpop.f32.mrf.mxu0
  %v697 = vpop.f32.mrf.mxu0
  %v698 = vadd.f32 0.0, %v697
  %v699 = vpop.f32.mrf.mxu0
  %700 = vmatprep.mubr.bf16.mxu0 %v334
  %701 = vmatmul.mubr.bf16.gmra.mxu0 %v333
  %v702 = vpop.f32.mrf.mxu0
  %v703 = vadd.f32 0.0, %v702
  %v704 = vpop.f32.mrf.mxu0
  %v705 = vpop.f32.mrf.mxu0
  %v706 = vadd.f32 0.0, %v705
  %v707 = vpop.f32.mrf.mxu0
  %708 = vmatprep.mubr.bf16.mxu0 %v339
  %709 = vmatmul.mubr.bf16.gmra.mxu0 %v338
  %v710 = vpop.f32.mrf.mxu0
  %v711 = vadd.f32 0.0, %v710
  %v712 = vpop.f32.mrf.mxu0
  %v713 = vpop.f32.mrf.mxu0
  %v714 = vadd.f32 0.0, %v713
  %v715 = vpop.f32.mrf.mxu0
  %716 = vmatprep.mubr.bf16.mxu0 %v344
  %717 = vmatmul.mubr.bf16.gmra.mxu0 %v343
  %v718 = vpop.f32.mrf.mxu0
  %v719 = vadd.f32 0.0, %v718
  %v720 = vpop.f32.mrf.mxu0
  %v721 = vpop.f32.mrf.mxu0
  %v722 = vadd.f32 0.0, %v721
  %v723 = vpop.f32.mrf.mxu0
  %724 = vdwg.mxu0
  %725 = vmatprep.subr.bf16.mxu0 0
  %726 = vmatpush1.bf16.msra.mxu0 %v571
  %727 = vmatprep.subr.bf16.mxu0 0
  %728 = vmatpush1.bf16.msra.mxu0 %v570
  %729 = vmatprep.subr.bf16.mxu0 0
  %730 = vmatpush1.bf16.msra.mxu0 %v569
  %731 = vmatprep.subr.bf16.mxu0 0
  %732 = vmatpush1.bf16.msra.mxu0 %v568
  %733 = vmatprep.subr.bf16.mxu0 0
  %734 = vmatpush1.bf16.msra.mxu0 %v567
  %735 = vmatprep.subr.bf16.mxu0 0
  %736 = vmatpush1.bf16.msra.mxu0 %v566
  %737 = vmatprep.subr.bf16.mxu0 0
  %738 = vmatpush1.bf16.msra.mxu0 %v565
  %739 = vmatprep.subr.bf16.mxu0 0
  %740 = vmatpush1.bf16.msra.mxu0 %v564
  %741 = vmatprep.subr.bf16.mxu0 0
  %742 = vmatpush2.bf16.msra.mxu0 %v579
  %743 = vmatprep.subr.bf16.mxu0 0
  %744 = vmatpush2.bf16.msra.mxu0 %v578
  %745 = vmatprep.subr.bf16.mxu0 0
  %746 = vmatpush2.bf16.msra.mxu0 %v577
  %747 = vmatprep.subr.bf16.mxu0 0
  %748 = vmatpush2.bf16.msra.mxu0 %v576
  %749 = vmatprep.subr.bf16.mxu0 0
  %750 = vmatpush2.bf16.msra.mxu0 %v575
  %751 = vmatprep.subr.bf16.mxu0 0
  %752 = vmatpush2.bf16.msra.mxu0 %v574
  %753 = vmatprep.subr.bf16.mxu0 0
  %754 = vmatpush2.bf16.msra.mxu0 %v573
  %755 = vmatprep.subr.bf16.mxu0 0
  %756 = vmatpush2.bf16.msra.mxu0 %v572
  %757 = vmatprep.mubr.bf16.mxu0 %v311
  %758 = vmatmul.mubr.bf16.gmra.mxu0 %v310
  %v759 = vpop.f32.mrf.mxu0
  %v760 = vadd.f32 %v663, %v759
  %v761 = vpop.f32.mrf.mxu0
  %v762 = vpop.f32.mrf.mxu0
  %v763 = vadd.f32 %v666, %v762
  %v764 = vpop.f32.mrf.mxu0
  %765 = vmatprep.mubr.bf16.mxu0 %v316
  %766 = vmatmul.mubr.bf16.gmra.mxu0 %v315
  %v767 = vpop.f32.mrf.mxu0
  %v768 = vadd.f32 %v671, %v767
  %v769 = vpop.f32.mrf.mxu0
  %v770 = vpop.f32.mrf.mxu0
  %v771 = vadd.f32 %v674, %v770
  %v772 = vpop.f32.mrf.mxu0
  %773 = vmatprep.mubr.bf16.mxu0 %v321
  %774 = vmatmul.mubr.bf16.gmra.mxu0 %v320
  %v775 = vpop.f32.mrf.mxu0
  %v776 = vadd.f32 %v679, %v775
  %v777 = vpop.f32.mrf.mxu0
  %v778 = vpop.f32.mrf.mxu0
  %v779 = vadd.f32 %v682, %v778
  %v780 = vpop.f32.mrf.mxu0
  %781 = vmatprep.mubr.bf16.mxu0 %v326
  %782 = vmatmul.mubr.bf16.gmra.mxu0 %v325
  %v783 = vpop.f32.mrf.mxu0
  %v784 = vadd.f32 %v687, %v783
  %v785 = vpop.f32.mrf.mxu0
  %v786 = vpop.f32.mrf.mxu0
  %v787 = vadd.f32 %v690, %v786
  %v788 = vpop.f32.mrf.mxu0
  %789 = vmatprep.mubr.bf16.mxu0 %v331
  %790 = vmatmul.mubr.bf16.gmra.mxu0 %v330
  %v791 = vpop.f32.mrf.mxu0
  %v792 = vadd.f32 %v695, %v791
  %v793 = vpop.f32.mrf.mxu0
  %v794 = vpop.f32.mrf.mxu0
  %v795 = vadd.f32 %v698, %v794
  %v796 = vpop.f32.mrf.mxu0
  %797 = vmatprep.mubr.bf16.mxu0 %v336
  %798 = vmatmul.mubr.bf16.gmra.mxu0 %v335
  %v799 = vpop.f32.mrf.mxu0
  %v800 = vadd.f32 %v703, %v799
  %v801 = vpop.f32.mrf.mxu0
  %v802 = vpop.f32.mrf.mxu0
  %v803 = vadd.f32 %v706, %v802
  %v804 = vpop.f32.mrf.mxu0
  %805 = vmatprep.mubr.bf16.mxu0 %v341
  %806 = vmatmul.mubr.bf16.gmra.mxu0 %v340
  %v807 = vpop.f32.mrf.mxu0
  %v808 = vadd.f32 %v711, %v807
  %v809 = vpop.f32.mrf.mxu0
  %v810 = vpop.f32.mrf.mxu0
  %v811 = vadd.f32 %v714, %v810
  %v812 = vpop.f32.mrf.mxu0
  %813 = vmatprep.mubr.bf16.mxu0 %v346
  %814 = vmatmul.mubr.bf16.gmra.mxu0 %v345
  %v815 = vpop.f32.mrf.mxu0
  %v816 = vadd.f32 %v719, %v815
  %v817 = vpop.f32.mrf.mxu0
  %v818 = vpop.f32.mrf.mxu0
  %v819 = vadd.f32 %v722, %v818
  %v820 = vpop.f32.mrf.mxu0
  %821 = vdwg.mxu0
  %822 = vmatprep.subr.bf16.mxu0 0
  %823 = vmatpush1.bf16.msra.mxu0 %v587
  %824 = vmatprep.subr.bf16.mxu0 0
  %825 = vmatpush1.bf16.msra.mxu0 %v586
  %826 = vmatprep.subr.bf16.mxu0 0
  %827 = vmatpush1.bf16.msra.mxu0 %v585
  %828 = vmatprep.subr.bf16.mxu0 0
  %829 = vmatpush1.bf16.msra.mxu0 %v584
  %830 = vmatprep.subr.bf16.mxu0 0
  %831 = vmatpush1.bf16.msra.mxu0 %v583
  %832 = vmatprep.subr.bf16.mxu0 0
  %833 = vmatpush1.bf16.msra.mxu0 %v582
  %834 = vmatprep.subr.bf16.mxu0 0
  %835 = vmatpush1.bf16.msra.mxu0 %v581
  %836 = vmatprep.subr.bf16.mxu0 0
  %837 = vmatpush1.bf16.msra.mxu0 %v580
  %838 = vmatprep.subr.bf16.mxu0 0
  %839 = vmatpush2.bf16.msra.mxu0 0
  %840 = vmatprep.subr.bf16.mxu0 0
  %841 = vmatpush2.bf16.msra.mxu0 0
  %842 = vmatprep.subr.bf16.mxu0 0
  %843 = vmatpush2.bf16.msra.mxu0 0
  %844 = vmatprep.subr.bf16.mxu0 0
  %845 = vmatpush2.bf16.msra.mxu0 0
  %846 = vmatprep.subr.bf16.mxu0 0
  %847 = vmatpush2.bf16.msra.mxu0 0
  %848 = vmatprep.subr.bf16.mxu0 0
  %849 = vmatpush2.bf16.msra.mxu0 0
  %850 = vmatprep.subr.bf16.mxu0 0
  %851 = vmatpush2.bf16.msra.mxu0 0
  %852 = vmatprep.subr.bf16.mxu0 0
  %853 = vmatpush2.bf16.msra.mxu0 0
  %854 = vmatprep.mubr.bf16.mxu0 0
  %855 = vmatmul.mubr.bf16.gmra.mxu0 %v312
  %v856 = vpop.f32.mrf.mxu0
  %v857 = vadd.f32 %v760, %v856
  %v858 = vpop.f32.mrf.mxu0
  %v859 = vpop.f32.mrf.mxu0
  %v860 = vadd.f32 %v763, %v859
  %v861 = vpop.f32.mrf.mxu0
  %862 = vmatprep.mubr.bf16.mxu0 0
  %863 = vmatmul.mubr.bf16.gmra.mxu0 %v317
  %v864 = vpop.f32.mrf.mxu0
  %v865 = vadd.f32 %v768, %v864
  %v866 = vpop.f32.mrf.mxu0
  %v867 = vpop.f32.mrf.mxu0
  %v868 = vadd.f32 %v771, %v867
  %v869 = vpop.f32.mrf.mxu0
  %870 = vmatprep.mubr.bf16.mxu0 0
  %871 = vmatmul.mubr.bf16.gmra.mxu0 %v322
  %v872 = vpop.f32.mrf.mxu0
  %v873 = vadd.f32 %v776, %v872
  %v874 = vpop.f32.mrf.mxu0
  %v875 = vpop.f32.mrf.mxu0
  %v876 = vadd.f32 %v779, %v875
  %v877 = vpop.f32.mrf.mxu0
  %878 = vmatprep.mubr.bf16.mxu0 0
  %879 = vmatmul.mubr.bf16.gmra.mxu0 %v327
  %v880 = vpop.f32.mrf.mxu0
  %v881 = vadd.f32 %v784, %v880
  %v882 = vpop.f32.mrf.mxu0
  %v883 = vpop.f32.mrf.mxu0
  %v884 = vadd.f32 %v787, %v883
  %v885 = vpop.f32.mrf.mxu0
  %886 = vmatprep.mubr.bf16.mxu0 0
  %887 = vmatmul.mubr.bf16.gmra.mxu0 %v332
  %v888 = vpop.f32.mrf.mxu0
  %v889 = vadd.f32 %v792, %v888
  %v890 = vpop.f32.mrf.mxu0
  %v891 = vpop.f32.mrf.mxu0
  %v892 = vadd.f32 %v795, %v891
  %v893 = vpop.f32.mrf.mxu0
  %894 = vmatprep.mubr.bf16.mxu0 0
  %895 = vmatmul.mubr.bf16.gmra.mxu0 %v337
  %v896 = vpop.f32.mrf.mxu0
  %v897 = vadd.f32 %v800, %v896
  %v898 = vpop.f32.mrf.mxu0
  %v899 = vpop.f32.mrf.mxu0
  %v900 = vadd.f32 %v803, %v899
  %v901 = vpop.f32.mrf.mxu0
  %902 = vmatprep.mubr.bf16.mxu0 0
  %903 = vmatmul.mubr.bf16.gmra.mxu0 %v342
  %v904 = vpop.f32.mrf.mxu0
  %v905 = vadd.f32 %v808, %v904
  %v906 = vpop.f32.mrf.mxu0
  %v907 = vpop.f32.mrf.mxu0
  %v908 = vadd.f32 %v811, %v907
  %v909 = vpop.f32.mrf.mxu0
  %910 = vmatprep.mubr.bf16.mxu0 0
  %911 = vmatmul.mubr.bf16.gmra.mxu0 %v347
  %v912 = vpop.f32.mrf.mxu0
  %v913 = vadd.f32 %v816, %v912
  %v914 = vpop.f32.mrf.mxu0
  %v915 = vpop.f32.mrf.mxu0
  %v916 = vadd.f32 %v819, %v915
  %v917 = vpop.f32.mrf.mxu0
  %918 = vdwg.mxu0
  %v919 = vadd.f32 %v36, %v857
  %v920 = vadd.f32 %v37, %v860
  %v921 = vadd.f32 %v38, %v865
  %v922 = vadd.f32 %v39, %v868
  %v923 = vadd.f32 %v40, %v873
  %v924 = vadd.f32 %v41, %v876
  %v925 = vadd.f32 %v42, %v881
  %v926 = vadd.f32 %v43, %v884
  %v927 = vadd.f32 %v44, %v889
  %v928 = vadd.f32 %v45, %v892
  %v929 = vadd.f32 %v46, %v897
  %v930 = vadd.f32 %v47, %v900
  %v931 = vadd.f32 %v48, %v905
  %v932 = vadd.f32 %v49, %v908
  %v933 = vadd.f32 %v50, %v913
  %v934 = vadd.f32 %v51, %v916
  %vm935 = vcmask 523264
  %936 = vst.msk [vmem:[#allocation2] sm:$0xff] %vm935, %v919
  %937 = vst.msk [vmem:[#allocation2 + $0x8] sm:$0xff] %vm935, %v920
  %938 = vst.msk [vmem:[#allocation2 + $0x10] sm:$0xff] %vm935, %v921
  %939 = vst.msk [vmem:[#allocation2 + $0x18] sm:$0xff] %vm935, %v922
  %940 = vst.msk [vmem:[#allocation2 + $0x20] sm:$0xff] %vm935, %v923
  %941 = vst.msk [vmem:[#allocation2 + $0x28] sm:$0xff] %vm935, %v924
  %942 = vst.msk [vmem:[#allocation2 + $0x30] sm:$0xff] %vm935, %v925
  %943 = vst.msk [vmem:[#allocation2 + $0x38] sm:$0xff] %vm935, %v926
  %944 = vst.msk [vmem:[#allocation2 + $0x40] sm:$0xff] %vm935, %v927
  %945 = vst.msk [vmem:[#allocation2 + $0x48] sm:$0xff] %vm935, %v928
  %946 = vst.msk [vmem:[#allocation2 + $0x50] sm:$0xff] %vm935, %v929
  %947 = vst.msk [vmem:[#allocation2 + $0x58] sm:$0xff] %vm935, %v930
  %948 = vst.msk [vmem:[#allocation2 + $0x60] sm:$0xff] %vm935, %v931
  %949 = vst.msk [vmem:[#allocation2 + $0x68] sm:$0xff] %vm935, %v932
  %950 = vst.msk [vmem:[#allocation2 + $0x70] sm:$0xff] %vm935, %v933
  %951 = vst.msk [vmem:[#allocation2 + $0x78] sm:$0xff] %vm935, %v934
  // Predicated region
  $region18: #{_lambda_.17} parent=0 // pred_check
    %p952 = pneg %p15
  $region19: #{_lambda_.17} parent=0 // pred_check_branch
    %954 = sbr.rel (%p952) target = $region21
  $region20: #{_lambda_.17} parent=0 // pred_region
    %v955 = vld [vmem:[#allocation2] sm:$0xff]
    %v956 = vld [vmem:[#allocation2 + $0x8] sm:$0xff]
    %v957 = vld [vmem:[#allocation2 + $0x10] sm:$0xff]
    %v958 = vld [vmem:[#allocation2 + $0x18] sm:$0xff]
    %v959 = vld [vmem:[#allocation2 + $0x20] sm:$0xff]
    %v960 = vld [vmem:[#allocation2 + $0x28] sm:$0xff]
    %v961 = vld [vmem:[#allocation2 + $0x30] sm:$0xff]
    %v962 = vld [vmem:[#allocation2 + $0x38] sm:$0xff]
    %v963 = vld [vmem:[#allocation2 + $0x40] sm:$0xff]
    %v964 = vld [vmem:[#allocation2 + $0x48] sm:$0xff]
    %v965 = vld [vmem:[#allocation2 + $0x50] sm:$0xff]
    %v966 = vld [vmem:[#allocation2 + $0x58] sm:$0xff]
    %v967 = vld [vmem:[#allocation2 + $0x60] sm:$0xff]
    %v968 = vld [vmem:[#allocation2 + $0x68] sm:$0xff]
    %v969 = vld [vmem:[#allocation2 + $0x70] sm:$0xff]
    %v970 = vld [vmem:[#allocation2 + $0x78] sm:$0xff]
    %v971 = vld [vmem:[%s2] sm:$0x1]
    %v973 = vlaneseq
    %v974 = vshrl.u32 %v973, 7
    %v975 = vsub.s32 0, %v974
    %v976 = vrot.slane %v971, %v975
    %v978 = vadd.f32 %v955, %v976
    %v979 = vadd.f32 %v956, %v976
    %v980 = vadd.f32 %v957, %v976
    %v981 = vadd.f32 %v958, %v976
    %v982 = vadd.f32 %v959, %v976
    %v983 = vadd.f32 %v960, %v976
    %v984 = vadd.f32 %v961, %v976
    %v985 = vadd.f32 %v962, %v976
    %v986 = vadd.f32 %v963, %v976
    %v987 = vadd.f32 %v964, %v976
    %v988 = vadd.f32 %v965, %v976
    %v989 = vadd.f32 %v966, %v976
    %v990 = vadd.f32 %v967, %v976
    %v991 = vadd.f32 %v968, %v976
    %v992 = vadd.f32 %v969, %v976
    %v993 = vadd.f32 %v970, %v976
    %v994 = vmax.f32 %v978, 0.0
    %v995 = vmax.f32 %v979, 0.0
    %v996 = vmax.f32 %v980, 0.0
    %v997 = vmax.f32 %v981, 0.0
    %v998 = vmax.f32 %v982, 0.0
    %v999 = vmax.f32 %v983, 0.0
    %v1000 = vmax.f32 %v984, 0.0
    %v1001 = vmax.f32 %v985, 0.0
    %v1002 = vmax.f32 %v986, 0.0
    %v1003 = vmax.f32 %v987, 0.0
    %v1004 = vmax.f32 %v988, 0.0
    %v1005 = vmax.f32 %v989, 0.0
    %v1006 = vmax.f32 %v990, 0.0
    %v1007 = vmax.f32 %v991, 0.0
    %v1008 = vmax.f32 %v992, 0.0
    %v1009 = vmax.f32 %v993, 0.0
    %v1010 = vpack.c.bf16 %v995, %v994
    %v1011 = vpack.c.bf16 %v997, %v996
    %v1012 = vpack.c.bf16 %v999, %v998
    %v1013 = vpack.c.bf16 %v1001, %v1000
    %v1014 = vpack.c.bf16 %v1003, %v1002
    %v1015 = vpack.c.bf16 %v1005, %v1004
    %v1016 = vpack.c.bf16 %v1007, %v1006
    %v1017 = vpack.c.bf16 %v1009, %v1008
    %v1026 = vunpack.c.l.b16 %v1010
    %v1027 = vunpack.c.h.b16 %v1010
    %v1028 = vunpack.c.l.b16 %v1011
    %v1029 = vunpack.c.h.b16 %v1011
    %v1030 = vunpack.c.l.b16 %v1012
    %v1031 = vunpack.c.h.b16 %v1012
    %v1032 = vunpack.c.l.b16 %v1013
    %v1033 = vunpack.c.h.b16 %v1013
    %v1034 = vunpack.c.l.b16 %v1014
    %v1035 = vunpack.c.h.b16 %v1014
    %v1036 = vunpack.c.l.b16 %v1015
    %v1037 = vunpack.c.h.b16 %v1015
    %v1038 = vunpack.c.l.b16 %v1016
    %v1039 = vunpack.c.h.b16 %v1016
    %v1040 = vunpack.c.l.b16 %v1017
    %v1041 = vunpack.c.h.b16 %v1017
    %v1042 = vpack.c.b16 %v1026, %v1026
    %v1043 = vpack.c.b16 %v1027, %v1027
    %v1044 = vpack.c.b16 %v1028, %v1028
    %v1045 = vpack.c.b16 %v1029, %v1029
    %v1046 = vpack.c.b16 %v1030, %v1030
    %v1047 = vpack.c.b16 %v1031, %v1031
    %v1048 = vpack.c.b16 %v1032, %v1032
    %v1049 = vpack.c.b16 %v1033, %v1033
    %v1050 = vpack.c.b16 %v1034, %v1034
    %v1051 = vpack.c.b16 %v1035, %v1035
    %v1052 = vpack.c.b16 %v1036, %v1036
    %v1053 = vpack.c.b16 %v1037, %v1037
    %v1054 = vpack.c.b16 %v1038, %v1038
    %v1055 = vpack.c.b16 %v1039, %v1039
    %v1056 = vpack.c.b16 %v1040, %v1040
    %v1057 = vpack.c.b16 %v1041, %v1041
    %vm1074 = vcmask 519168
    %1075 = vst.msk [vmem:[%s3] sm:$0xf] %vm1074, %v1042
    %1076 = vst.msk [vmem:[%s3 + $0x4] sm:$0xf] %vm1074, %v1043
    %1077 = vst.msk [vmem:[%s3 + $0x8] sm:$0xf] %vm1074, %v1044
    %1078 = vst.msk [vmem:[%s3 + $0xc] sm:$0xf] %vm1074, %v1045
    %1079 = vst.msk [vmem:[%s3 + $0x10] sm:$0xf] %vm1074, %v1046
    %1080 = vst.msk [vmem:[%s3 + $0x14] sm:$0xf] %vm1074, %v1047
    %1081 = vst.msk [vmem:[%s3 + $0x18] sm:$0xf] %vm1074, %v1048
    %1082 = vst.msk [vmem:[%s3 + $0x1c] sm:$0xf] %vm1074, %v1049
    %1083 = vst.msk [vmem:[%s3 + $0x20] sm:$0xf] %vm1074, %v1050
    %1084 = vst.msk [vmem:[%s3 + $0x24] sm:$0xf] %vm1074, %v1051
    %1085 = vst.msk [vmem:[%s3 + $0x28] sm:$0xf] %vm1074, %v1052
    %1086 = vst.msk [vmem:[%s3 + $0x2c] sm:$0xf] %vm1074, %v1053
    %1087 = vst.msk [vmem:[%s3 + $0x30] sm:$0xf] %vm1074, %v1054
    %1088 = vst.msk [vmem:[%s3 + $0x34] sm:$0xf] %vm1074, %v1055
    %1089 = vst.msk [vmem:[%s3 + $0x38] sm:$0xf] %vm1074, %v1056
    %1090 = vst.msk [vmem:[%s3 + $0x3c] sm:$0xf] %vm1074, %v1057
  $region21: #{_lambda_.17} parent=0 // pred_fallthru
    _
  // Predicated region
  $region22: #{_lambda_.17} parent=0 // pred_check
    _
  $region23: #{_lambda_.17} parent=0 // pred_check_branch
    %1092 = sbr.rel (0) target = $region25
  $region24: #{_lambda_.17} parent=0 // pred_region
    _
  $region25: #{_lambda_.17} parent=0 // pred_fallthru
    _
  // Predicated region
  $region26: #{_lambda_.17} parent=0 // pred_check
    _
  $region27: #{_lambda_.17} parent=0 // pred_check_branch
    %1094 = sbr.rel (0) target = $region29
  $region28: #{_lambda_.17} parent=0 // pred_region
    _
  $region29: #{_lambda_.17} parent=0 // pred_fallthru
    _

// kernel: _lambda_.18
$region0: #{_lambda_.18}
  #allocation0 [shape = 'u32[]', space=smem, size = 0x4, offset = 0x4, fixed_abs, tag = 'smem constant byte address 0x4 - core index']
  #allocation1 [shape = 'u32[144,128]{1,0:T(1,128)}', space=vmem, size = 0x12000, scoped, tag = 'internal scratch']
  #allocation2 [shape = 'f32[128,64]{1,0:T(8,128)}', space=vmem, size = 0x10000, scoped, tag = 'scratch operand']
  %s0 = inlined_call_operand.vmem [shape: bf16[128,640], index: 0, kind: input, shape index: {}]
  %s1 = inlined_call_operand.vmem [shape: bf16[640,64], index: 1, kind: input, shape index: {}]
  %s2 = inlined_call_operand.vmem [shape: f32[1,64], index: 2, kind: input, shape index: {}]
  %s3 = inlined_call_operand.vmem [shape: bf16[128,64], index: 3, kind: input, shape index: {}]
  %s4 = inlined_call_operand.vmem [shape: bf16[128,64], index: 4, kind: output, shape index: {}]
  %s5 = sld [smem:[#allocation0]]
  $region34: #{_lambda_.18} parent=0
    _
  %s7 = ssub.s32 1, %s5
  %s8 = scalar_select 0, %s7, %s5
  // Predicated region
  $region2: #{_lambda_.18} parent=0 // pred_check
    _
  $region3: #{_lambda_.18} parent=0 // pred_check_branch
    %10 = sbr.rel (0) target = $region5
  $region4: #{_lambda_.18} parent=0 // pred_region
    _
  $region5: #{_lambda_.18} parent=0 // pred_fallthru
    _
  // Predicated region
  $region6: #{_lambda_.18} parent=0 // pred_check
    _
  $region7: #{_lambda_.18} parent=0 // pred_check_branch
    %12 = sbr.rel (0) target = $region9
  $region8: #{_lambda_.18} parent=0 // pred_region
    _
  $region9: #{_lambda_.18} parent=0 // pred_fallthru
    _
  // Predicated region
  $region10: #{_lambda_.18} parent=0 // pred_check
    _
  $region11: #{_lambda_.18} parent=0 // pred_check_branch
    %14 = sbr.rel (0) target = $region13
  $region12: #{_lambda_.18} parent=0 // pred_region
    _
  $region13: #{_lambda_.18} parent=0 // pred_fallthru
    _
  // Predicated region
  $region14: #{_lambda_.18} parent=0 // pred_check
    _
  $region15: #{_lambda_.18} parent=0 // pred_check_branch
    %16 = sbr.rel (0) target = $region17
  $region16: #{_lambda_.18} parent=0 // pred_region
    _
  $region17: #{_lambda_.18} parent=0 // pred_fallthru
    _
  %p18 = scmp.eq.s32.totalorder 0, 0
  // Predicated region
  $region18: #{_lambda_.18} parent=0 // pred_check
    %p19 = pneg %p18
  $region19: #{_lambda_.18} parent=0 // pred_check_branch
    %21 = sbr.rel (%p19) target = $region21
  $region20: #{_lambda_.18} parent=0 // pred_region
    %vm22 = vcmask 523264
    %23 = vst.msk [vmem:[#allocation2] sm:$0xff] %vm22, 0.0
    %24 = vst.msk [vmem:[#allocation2 + $0x8] sm:$0xff] %vm22, 0.0
    %25 = vst.msk [vmem:[#allocation2 + $0x10] sm:$0xff] %vm22, 0.0
    %26 = vst.msk [vmem:[#allocation2 + $0x18] sm:$0xff] %vm22, 0.0
    %27 = vst.msk [vmem:[#allocation2 + $0x20] sm:$0xff] %vm22, 0.0
    %28 = vst.msk [vmem:[#allocation2 + $0x28] sm:$0xff] %vm22, 0.0
    %29 = vst.msk [vmem:[#allocation2 + $0x30] sm:$0xff] %vm22, 0.0
    %30 = vst.msk [vmem:[#allocation2 + $0x38] sm:$0xff] %vm22, 0.0
    %31 = vst.msk [vmem:[#allocation2 + $0x40] sm:$0xff] %vm22, 0.0
    %32 = vst.msk [vmem:[#allocation2 + $0x48] sm:$0xff] %vm22, 0.0
    %33 = vst.msk [vmem:[#allocation2 + $0x50] sm:$0xff] %vm22, 0.0
    %34 = vst.msk [vmem:[#allocation2 + $0x58] sm:$0xff] %vm22, 0.0
    %35 = vst.msk [vmem:[#allocation2 + $0x60] sm:$0xff] %vm22, 0.0
    %36 = vst.msk [vmem:[#allocation2 + $0x68] sm:$0xff] %vm22, 0.0
    %37 = vst.msk [vmem:[#allocation2 + $0x70] sm:$0xff] %vm22, 0.0
    %38 = vst.msk [vmem:[#allocation2 + $0x78] sm:$0xff] %vm22, 0.0
  $region21: #{_lambda_.18} parent=0 // pred_fallthru
    _
  %v39 = vld [vmem:[#allocation2] sm:$0xff]
  %v40 = vld [vmem:[#allocation2 + $0x8] sm:$0xff]
  %v41 = vld [vmem:[#allocation2 + $0x10] sm:$0xff]
  %v42 = vld [vmem:[#allocation2 + $0x18] sm:$0xff]
  %v43 = vld [vmem:[#allocation2 + $0x20] sm:$0xff]
  %v44 = vld [vmem:[#allocation2 + $0x28] sm:$0xff]
  %v45 = vld [vmem:[#allocation2 + $0x30] sm:$0xff]
  %v46 = vld [vmem:[#allocation2 + $0x38] sm:$0xff]
  %v47 = vld [vmem:[#allocation2 + $0x40] sm:$0xff]
  %v48 = vld [vmem:[#allocation2 + $0x48] sm:$0xff]
  %v49 = vld [vmem:[#allocation2 + $0x50] sm:$0xff]
  %v50 = vld [vmem:[#allocation2 + $0x58] sm:$0xff]
  %v51 = vld [vmem:[#allocation2 + $0x60] sm:$0xff]
  %v52 = vld [vmem:[#allocation2 + $0x68] sm:$0xff]
  %v53 = vld [vmem:[#allocation2 + $0x70] sm:$0xff]
  %v54 = vld [vmem:[#allocation2 + $0x78] sm:$0xff]
  %v55 = vld [vmem:[%s0] sm:$0xff]
  %v56 = vld [vmem:[%s0 + $0x8] sm:$0xff]
  %v57 = vld [vmem:[%s0 + $0x10] sm:$0xf]
  %v58 = vld [vmem:[%s0 + $0x14] sm:$0xff]
  %v59 = vld [vmem:[%s0 + $0x1c] sm:$0xff]
  %v60 = vld [vmem:[%s0 + $0x24] sm:$0xf]
  %v61 = vld [vmem:[%s0 + $0x28] sm:$0xff]
  %v62 = vld [vmem:[%s0 + $0x30] sm:$0xff]
  %v63 = vld [vmem:[%s0 + $0x38] sm:$0xf]
  %v64 = vld [vmem:[%s0 + $0x3c] sm:$0xff]
  %v65 = vld [vmem:[%s0 + $0x44] sm:$0xff]
  %v66 = vld [vmem:[%s0 + $0x4c] sm:$0xf]
  %v67 = vld [vmem:[%s0 + $0x50] sm:$0xff]
  %v68 = vld [vmem:[%s0 + $0x58] sm:$0xff]
  %v69 = vld [vmem:[%s0 + $0x60] sm:$0xf]
  %v70 = vld [vmem:[%s0 + $0x64] sm:$0xff]
  %v71 = vld [vmem:[%s0 + $0x6c] sm:$0xff]
  %v72 = vld [vmem:[%s0 + $0x74] sm:$0xf]
  %v73 = vld [vmem:[%s0 + $0x78] sm:$0xff]
  %v74 = vld [vmem:[%s0 + $0x80] sm:$0xff]
  %v75 = vld [vmem:[%s0 + $0x88] sm:$0xf]
  %v76 = vld [vmem:[%s0 + $0x8c] sm:$0xff]
  %v77 = vld [vmem:[%s0 + $0x94] sm:$0xff]
  %v78 = vld [vmem:[%s0 + $0x9c] sm:$0xf]
  %v79 = vld [vmem:[%s0 + $0xa0] sm:$0xff]
  %v80 = vld [vmem:[%s0 + $0xa8] sm:$0xff]
  %v81 = vld [vmem:[%s0 + $0xb0] sm:$0xf]
  %v82 = vld [vmem:[%s0 + $0xb4] sm:$0xff]
  %v83 = vld [vmem:[%s0 + $0xbc] sm:$0xff]
  %v84 = vld [vmem:[%s0 + $0xc4] sm:$0xf]
  %v85 = vld [vmem:[%s0 + $0xc8] sm:$0xff]
  %v86 = vld [vmem:[%s0 + $0xd0] sm:$0xff]
  %v87 = vld [vmem:[%s0 + $0xd8] sm:$0xf]
  %v88 = vld [vmem:[%s0 + $0xdc] sm:$0xff]
  %v89 = vld [vmem:[%s0 + $0xe4] sm:$0xff]
  %v90 = vld [vmem:[%s0 + $0xec] sm:$0xf]
  %v91 = vld [vmem:[%s0 + $0xf0] sm:$0xff]
  %v92 = vld [vmem:[%s0 + $0xf8] sm:$0xff]
  %v93 = vld [vmem:[%s0 + $0x100] sm:$0xf]
  %v94 = vld [vmem:[%s0 + $0x104] sm:$0xff]
  %v95 = vld [vmem:[%s0 + $0x10c] sm:$0xff]
  %v96 = vld [vmem:[%s0 + $0x114] sm:$0xf]
  %v97 = vld [vmem:[%s0 + $0x118] sm:$0xff]
  %v98 = vld [vmem:[%s0 + $0x120] sm:$0xff]
  %v99 = vld [vmem:[%s0 + $0x128] sm:$0xf]
  %v100 = vld [vmem:[%s0 + $0x12c] sm:$0xff]
  %v101 = vld [vmem:[%s0 + $0x134] sm:$0xff]
  %v102 = vld [vmem:[%s0 + $0x13c] sm:$0xf]
  %v103 = vld [vmem:[%s1] sm:$0xf]
  %v104 = vld [vmem:[%s1 + $0x4] sm:$0xf]
  %v105 = vld [vmem:[%s1 + $0x8] sm:$0xf]
  %v106 = vld [vmem:[%s1 + $0xc] sm:$0xf]
  %v107 = vld [vmem:[%s1 + $0x10] sm:$0xf]
  %v108 = vld [vmem:[%s1 + $0x14] sm:$0xf]
  %v109 = vld [vmem:[%s1 + $0x18] sm:$0xf]
  %v110 = vld [vmem:[%s1 + $0x1c] sm:$0xf]
  %v111 = vld [vmem:[%s1 + $0x20] sm:$0xf]
  %v112 = vld [vmem:[%s1 + $0x24] sm:$0xf]
  %v113 = vld [vmem:[%s1 + $0x28] sm:$0xf]
  %v114 = vld [vmem:[%s1 + $0x2c] sm:$0xf]
  %v115 = vld [vmem:[%s1 + $0x30] sm:$0xf]
  %v116 = vld [vmem:[%s1 + $0x34] sm:$0xf]
  %v117 = vld [vmem:[%s1 + $0x38] sm:$0xf]
  %v118 = vld [vmem:[%s1 + $0x3c] sm:$0xf]
  %v119 = vld [vmem:[%s1 + $0x40] sm:$0xf]
  %v120 = vld [vmem:[%s1 + $0x44] sm:$0xf]
  %v121 = vld [vmem:[%s1 + $0x48] sm:$0xf]
  %v122 = vld [vmem:[%s1 + $0x4c] sm:$0xf]
  %v123 = vld [vmem:[%s1 + $0x50] sm:$0xf]
  %v124 = vld [vmem:[%s1 + $0x54] sm:$0xf]
  %v125 = vld [vmem:[%s1 + $0x58] sm:$0xf]
  %v126 = vld [vmem:[%s1 + $0x5c] sm:$0xf]
  %v127 = vld [vmem:[%s1 + $0x60] sm:$0xf]
  %v128 = vld [vmem:[%s1 + $0x64] sm:$0xf]
  %v129 = vld [vmem:[%s1 + $0x68] sm:$0xf]
  %v130 = vld [vmem:[%s1 + $0x6c] sm:$0xf]
  %v131 = vld [vmem:[%s1 + $0x70] sm:$0xf]
  %v132 = vld [vmem:[%s1 + $0x74] sm:$0xf]
  %v133 = vld [vmem:[%s1 + $0x78] sm:$0xf]
  %v134 = vld [vmem:[%s1 + $0x7c] sm:$0xf]
  %v135 = vld [vmem:[%s1 + $0x80] sm:$0xf]
  %v136 = vld [vmem:[%s1 + $0x84] sm:$0xf]
  %v137 = vld [vmem:[%s1 + $0x88] sm:$0xf]
  %v138 = vld [vmem:[%s1 + $0x8c] sm:$0xf]
  %v139 = vld [vmem:[%s1 + $0x90] sm:$0xf]
  %v140 = vld [vmem:[%s1 + $0x94] sm:$0xf]
  %v141 = vld [vmem:[%s1 + $0x98] sm:$0xf]
  %v142 = vld [vmem:[%s1 + $0x9c] sm:$0xf]
  %v143 = vld [vmem:[%s1 + $0xa0] sm:$0xf]
  %v144 = vld [vmem:[%s1 + $0xa4] sm:$0xf]
  %v145 = vld [vmem:[%s1 + $0xa8] sm:$0xf]
  %v146 = vld [vmem:[%s1 + $0xac] sm:$0xf]
  %v147 = vld [vmem:[%s1 + $0xb0] sm:$0xf]
  %v148 = vld [vmem:[%s1 + $0xb4] sm:$0xf]
  %v149 = vld [vmem:[%s1 + $0xb8] sm:$0xf]
  %v150 = vld [vmem:[%s1 + $0xbc] sm:$0xf]
  %v151 = vld [vmem:[%s1 + $0xc0] sm:$0xf]
  %v152 = vld [vmem:[%s1 + $0xc4] sm:$0xf]
  %v153 = vld [vmem:[%s1 + $0xc8] sm:$0xf]
  %v154 = vld [vmem:[%s1 + $0xcc] sm:$0xf]
  %v155 = vld [vmem:[%s1 + $0xd0] sm:$0xf]
  %v156 = vld [vmem:[%s1 + $0xd4] sm:$0xf]
  %v157 = vld [vmem:[%s1 + $0xd8] sm:$0xf]
  %v158 = vld [vmem:[%s1 + $0xdc] sm:$0xf]
  %v159 = vld [vmem:[%s1 + $0xe0] sm:$0xf]
  %v160 = vld [vmem:[%s1 + $0xe4] sm:$0xf]
  %v161 = vld [vmem:[%s1 + $0xe8] sm:$0xf]
  %v162 = vld [vmem:[%s1 + $0xec] sm:$0xf]
  %v163 = vld [vmem:[%s1 + $0xf0] sm:$0xf]
  %v164 = vld [vmem:[%s1 + $0xf4] sm:$0xf]
  %v165 = vld [vmem:[%s1 + $0xf8] sm:$0xf]
  %v166 = vld [vmem:[%s1 + $0xfc] sm:$0xf]
  %v167 = vld [vmem:[%s1 + $0x100] sm:$0xf]
  %v168 = vld [vmem:[%s1 + $0x104] sm:$0xf]
  %v169 = vld [vmem:[%s1 + $0x108] sm:$0xf]
  %v170 = vld [vmem:[%s1 + $0x10c] sm:$0xf]
  %v171 = vld [vmem:[%s1 + $0x110] sm:$0xf]
  %v172 = vld [vmem:[%s1 + $0x114] sm:$0xf]
  %v173 = vld [vmem:[%s1 + $0x118] sm:$0xf]
  %v174 = vld [vmem:[%s1 + $0x11c] sm:$0xf]
  %v175 = vld [vmem:[%s1 + $0x120] sm:$0xf]
  %v176 = vld [vmem:[%s1 + $0x124] sm:$0xf]
  %v177 = vld [vmem:[%s1 + $0x128] sm:$0xf]
  %v178 = vld [vmem:[%s1 + $0x12c] sm:$0xf]
  %v179 = vld [vmem:[%s1 + $0x130] sm:$0xf]
  %v180 = vld [vmem:[%s1 + $0x134] sm:$0xf]
  %v181 = vld [vmem:[%s1 + $0x138] sm:$0xf]
  %v182 = vld [vmem:[%s1 + $0x13c] sm:$0xf]
  %v231 = vunpack.c.l.b16 %v55
  %v232 = vunpack.c.h.b16 %v55
  %v233 = vunpack.c.l.b16 %v56
  %v234 = vunpack.c.h.b16 %v56
  %v235 = vunpack.c.l.b16 %v57
  %v236 = vunpack.c.l.b16 %v58
  %v237 = vunpack.c.h.b16 %v58
  %v238 = vunpack.c.l.b16 %v59
  %v239 = vunpack.c.h.b16 %v59
  %v240 = vunpack.c.l.b16 %v60
  %v241 = vunpack.c.l.b16 %v61
  %v242 = vunpack.c.h.b16 %v61
  %v243 = vunpack.c.l.b16 %v62
  %v244 = vunpack.c.h.b16 %v62
  %v245 = vunpack.c.l.b16 %v63
  %v246 = vunpack.c.l.b16 %v64
  %v247 = vunpack.c.h.b16 %v64
  %v248 = vunpack.c.l.b16 %v65
  %v249 = vunpack.c.h.b16 %v65
  %v250 = vunpack.c.l.b16 %v66
  %v251 = vunpack.c.l.b16 %v67
  %v252 = vunpack.c.h.b16 %v67
  %v253 = vunpack.c.l.b16 %v68
  %v254 = vunpack.c.h.b16 %v68
  %v255 = vunpack.c.l.b16 %v69
  %v256 = vunpack.c.l.b16 %v70
  %v257 = vunpack.c.h.b16 %v70
  %v258 = vunpack.c.l.b16 %v71
  %v259 = vunpack.c.h.b16 %v71
  %v260 = vunpack.c.l.b16 %v72
  %v261 = vunpack.c.l.b16 %v73
  %v262 = vunpack.c.h.b16 %v73
  %v263 = vunpack.c.l.b16 %v74
  %v264 = vunpack.c.h.b16 %v74
  %v265 = vunpack.c.l.b16 %v75
  %v266 = vunpack.c.l.b16 %v76
  %v267 = vunpack.c.h.b16 %v76
  %v268 = vunpack.c.l.b16 %v77
  %v269 = vunpack.c.h.b16 %v77
  %v270 = vunpack.c.l.b16 %v78
  %v271 = vunpack.c.l.b16 %v79
  %v272 = vunpack.c.h.b16 %v79
  %v273 = vunpack.c.l.b16 %v80
  %v274 = vunpack.c.h.b16 %v80
  %v275 = vunpack.c.l.b16 %v81
  %v276 = vunpack.c.l.b16 %v82
  %v277 = vunpack.c.h.b16 %v82
  %v278 = vunpack.c.l.b16 %v83
  %v279 = vunpack.c.h.b16 %v83
  %v280 = vunpack.c.l.b16 %v84
  %v281 = vunpack.c.l.b16 %v85
  %v282 = vunpack.c.h.b16 %v85
  %v283 = vunpack.c.l.b16 %v86
  %v284 = vunpack.c.h.b16 %v86
  %v285 = vunpack.c.l.b16 %v87
  %v286 = vunpack.c.l.b16 %v88
  %v287 = vunpack.c.h.b16 %v88
  %v288 = vunpack.c.l.b16 %v89
  %v289 = vunpack.c.h.b16 %v89
  %v290 = vunpack.c.l.b16 %v90
  %v291 = vunpack.c.l.b16 %v91
  %v292 = vunpack.c.h.b16 %v91
  %v293 = vunpack.c.l.b16 %v92
  %v294 = vunpack.c.h.b16 %v92
  %v295 = vunpack.c.l.b16 %v93
  %v296 = vunpack.c.l.b16 %v94
  %v297 = vunpack.c.h.b16 %v94
  %v298 = vunpack.c.l.b16 %v95
  %v299 = vunpack.c.h.b16 %v95
  %v300 = vunpack.c.l.b16 %v96
  %v301 = vunpack.c.l.b16 %v97
  %v302 = vunpack.c.h.b16 %v97
  %v303 = vunpack.c.l.b16 %v98
  %v304 = vunpack.c.h.b16 %v98
  %v305 = vunpack.c.l.b16 %v99
  %v306 = vunpack.c.l.b16 %v100
  %v307 = vunpack.c.h.b16 %v100
  %v308 = vunpack.c.l.b16 %v101
  %v309 = vunpack.c.h.b16 %v101
  %v310 = vunpack.c.l.b16 %v102
  %v311 = vpack.c.b16 %v236, %v231
  %v312 = vpack.c.b16 %v237, %v232
  %v313 = vpack.c.b16 %v238, %v233
  %v314 = vpack.c.b16 %v239, %v234
  %v315 = vpack.c.b16 %v240, %v235
  %v316 = vpack.c.b16 %v246, %v241
  %v317 = vpack.c.b16 %v247, %v242
  %v318 = vpack.c.b16 %v248, %v243
  %v319 = vpack.c.b16 %v249, %v244
  %v320 = vpack.c.b16 %v250, %v245
  %v321 = vpack.c.b16 %v256, %v251
  %v322 = vpack.c.b16 %v257, %v252
  %v323 = vpack.c.b16 %v258, %v253
  %v324 = vpack.c.b16 %v259, %v254
  %v325 = vpack.c.b16 %v260, %v255
  %v326 = vpack.c.b16 %v266, %v261
  %v327 = vpack.c.b16 %v267, %v262
  %v328 = vpack.c.b16 %v268, %v263
  %v329 = vpack.c.b16 %v269, %v264
  %v330 = vpack.c.b16 %v270, %v265
  %v331 = vpack.c.b16 %v276, %v271
  %v332 = vpack.c.b16 %v277, %v272
  %v333 = vpack.c.b16 %v278, %v273
  %v334 = vpack.c.b16 %v279, %v274
  %v335 = vpack.c.b16 %v280, %v275
  %v336 = vpack.c.b16 %v286, %v281
  %v337 = vpack.c.b16 %v287, %v282
  %v338 = vpack.c.b16 %v288, %v283
  %v339 = vpack.c.b16 %v289, %v284
  %v340 = vpack.c.b16 %v290, %v285
  %v341 = vpack.c.b16 %v296, %v291
  %v342 = vpack.c.b16 %v297, %v292
  %v343 = vpack.c.b16 %v298, %v293
  %v344 = vpack.c.b16 %v299, %v294
  %v345 = vpack.c.b16 %v300, %v295
  %v346 = vpack.c.b16 %v306, %v301
  %v347 = vpack.c.b16 %v307, %v302
  %v348 = vpack.c.b16 %v308, %v303
  %v349 = vpack.c.b16 %v309, %v304
  %v350 = vpack.c.b16 %v310, %v305
  %v471 = vunpack.c.l.b16 %v103
  %v472 = vunpack.c.l.b16 %v104
  %v473 = vunpack.c.l.b16 %v105
  %v474 = vunpack.c.l.b16 %v106
  %v475 = vunpack.c.l.b16 %v107
  %v476 = vunpack.c.l.b16 %v108
  %v477 = vunpack.c.l.b16 %v109
  %v478 = vunpack.c.l.b16 %v110
  %v479 = vunpack.c.l.b16 %v111
  %v480 = vunpack.c.l.b16 %v112
  %v481 = vunpack.c.l.b16 %v113
  %v482 = vunpack.c.l.b16 %v114
  %v483 = vunpack.c.l.b16 %v115
  %v484 = vunpack.c.l.b16 %v116
  %v485 = vunpack.c.l.b16 %v117
  %v486 = vunpack.c.l.b16 %v118
  %v487 = vunpack.c.l.b16 %v119
  %v488 = vunpack.c.l.b16 %v120
  %v489 = vunpack.c.l.b16 %v121
  %v490 = vunpack.c.l.b16 %v122
  %v491 = vunpack.c.l.b16 %v123
  %v492 = vunpack.c.l.b16 %v124
  %v493 = vunpack.c.l.b16 %v125
  %v494 = vunpack.c.l.b16 %v126
  %v495 = vunpack.c.l.b16 %v127
  %v496 = vunpack.c.l.b16 %v128
  %v497 = vunpack.c.l.b16 %v129
  %v498 = vunpack.c.l.b16 %v130
  %v499 = vunpack.c.l.b16 %v131
  %v500 = vunpack.c.l.b16 %v132
  %v501 = vunpack.c.l.b16 %v133
  %v502 = vunpack.c.l.b16 %v134
  %v503 = vunpack.c.l.b16 %v135
  %v504 = vunpack.c.l.b16 %v136
  %v505 = vunpack.c.l.b16 %v137
  %v506 = vunpack.c.l.b16 %v138
  %v507 = vunpack.c.l.b16 %v139
  %v508 = vunpack.c.l.b16 %v140
  %v509 = vunpack.c.l.b16 %v141
  %v510 = vunpack.c.l.b16 %v142
  %v511 = vunpack.c.l.b16 %v143
  %v512 = vunpack.c.l.b16 %v144
  %v513 = vunpack.c.l.b16 %v145
  %v514 = vunpack.c.l.b16 %v146
  %v515 = vunpack.c.l.b16 %v147
  %v516 = vunpack.c.l.b16 %v148
  %v517 = vunpack.c.l.b16 %v149
  %v518 = vunpack.c.l.b16 %v150
  %v519 = vunpack.c.l.b16 %v151
  %v520 = vunpack.c.l.b16 %v152
  %v521 = vunpack.c.l.b16 %v153
  %v522 = vunpack.c.l.b16 %v154
  %v523 = vunpack.c.l.b16 %v155
  %v524 = vunpack.c.l.b16 %v156
  %v525 = vunpack.c.l.b16 %v157
  %v526 = vunpack.c.l.b16 %v158
  %v527 = vunpack.c.l.b16 %v159
  %v528 = vunpack.c.l.b16 %v160
  %v529 = vunpack.c.l.b16 %v161
  %v530 = vunpack.c.l.b16 %v162
  %v531 = vunpack.c.l.b16 %v163
  %v532 = vunpack.c.l.b16 %v164
  %v533 = vunpack.c.l.b16 %v165
  %v534 = vunpack.c.l.b16 %v166
  %v535 = vunpack.c.l.b16 %v167
  %v536 = vunpack.c.l.b16 %v168
  %v537 = vunpack.c.l.b16 %v169
  %v538 = vunpack.c.l.b16 %v170
  %v539 = vunpack.c.l.b16 %v171
  %v540 = vunpack.c.l.b16 %v172
  %v541 = vunpack.c.l.b16 %v173
  %v542 = vunpack.c.l.b16 %v174
  %v543 = vunpack.c.l.b16 %v175
  %v544 = vunpack.c.l.b16 %v176
  %v545 = vunpack.c.l.b16 %v177
  %v546 = vunpack.c.l.b16 %v178
  %v547 = vunpack.c.l.b16 %v179
  %v548 = vunpack.c.l.b16 %v180
  %v549 = vunpack.c.l.b16 %v181
  %v550 = vunpack.c.l.b16 %v182
  %v551 = vpack.c.b16 %v472, %v471
  %v552 = vpack.c.b16 %v474, %v473
  %v553 = vpack.c.b16 %v476, %v475
  %v554 = vpack.c.b16 %v478, %v477
  %v555 = vpack.c.b16 %v480, %v479
  %v556 = vpack.c.b16 %v482, %v481
  %v557 = vpack.c.b16 %v484, %v483
  %v558 = vpack.c.b16 %v486, %v485
  %v559 = vpack.c.b16 %v488, %v487
  %v560 = vpack.c.b16 %v490, %v489
  %v561 = vpack.c.b16 %v492, %v491
  %v562 = vpack.c.b16 %v494, %v493
  %v563 = vpack.c.b16 %v496, %v495
  %v564 = vpack.c.b16 %v498, %v497
  %v565 = vpack.c.b16 %v500, %v499
  %v566 = vpack.c.b16 %v502, %v501
  %v567 = vpack.c.b16 %v504, %v503
  %v568 = vpack.c.b16 %v506, %v505
  %v569 = vpack.c.b16 %v508, %v507
  %v570 = vpack.c.b16 %v510, %v509
  %v571 = vpack.c.b16 %v512, %v511
  %v572 = vpack.c.b16 %v514, %v513
  %v573 = vpack.c.b16 %v516, %v515
  %v574 = vpack.c.b16 %v518, %v517
  %v575 = vpack.c.b16 %v520, %v519
  %v576 = vpack.c.b16 %v522, %v521
  %v577 = vpack.c.b16 %v524, %v523
  %v578 = vpack.c.b16 %v526, %v525
  %v579 = vpack.c.b16 %v528, %v527
  %v580 = vpack.c.b16 %v530, %v529
  %v581 = vpack.c.b16 %v532, %v531
  %v582 = vpack.c.b16 %v534, %v533
  %v583 = vpack.c.b16 %v536, %v535
  %v584 = vpack.c.b16 %v538, %v537
  %v585 = vpack.c.b16 %v540, %v539
  %v586 = vpack.c.b16 %v542, %v541
  %v587 = vpack.c.b16 %v544, %v543
  %v588 = vpack.c.b16 %v546, %v545
  %v589 = vpack.c.b16 %v548, %v547
  %v590 = vpack.c.b16 %v550, %v549
  %631 = vmatprep.subr.bf16.mxu0 0
  %632 = vmatpush1.bf16.msra.mxu0 %v558
  %633 = vmatprep.subr.bf16.mxu0 0
  %634 = vmatpush1.bf16.msra.mxu0 %v557
  %635 = vmatprep.subr.bf16.mxu0 0
  %636 = vmatpush1.bf16.msra.mxu0 %v556
  %637 = vmatprep.subr.bf16.mxu0 0
  %638 = vmatpush1.bf16.msra.mxu0 %v555
  %639 = vmatprep.subr.bf16.mxu0 0
  %640 = vmatpush1.bf16.msra.mxu0 %v554
  %641 = vmatprep.subr.bf16.mxu0 0
  %642 = vmatpush1.bf16.msra.mxu0 %v553
  %643 = vmatprep.subr.bf16.mxu0 0
  %644 = vmatpush1.bf16.msra.mxu0 %v552
  %645 = vmatprep.subr.bf16.mxu0 0
  %646 = vmatpush1.bf16.msra.mxu0 %v551
  %647 = vmatprep.subr.bf16.mxu0 0
  %648 = vmatpush2.bf16.msra.mxu0 %v566
  %649 = vmatprep.subr.bf16.mxu0 0
  %650 = vmatpush2.bf16.msra.mxu0 %v565
  %651 = vmatprep.subr.bf16.mxu0 0
  %652 = vmatpush2.bf16.msra.mxu0 %v564
  %653 = vmatprep.subr.bf16.mxu0 0
  %654 = vmatpush2.bf16.msra.mxu0 %v563
  %655 = vmatprep.subr.bf16.mxu0 0
  %656 = vmatpush2.bf16.msra.mxu0 %v562
  %657 = vmatprep.subr.bf16.mxu0 0
  %658 = vmatpush2.bf16.msra.mxu0 %v561
  %659 = vmatprep.subr.bf16.mxu0 0
  %660 = vmatpush2.bf16.msra.mxu0 %v560
  %661 = vmatprep.subr.bf16.mxu0 0
  %662 = vmatpush2.bf16.msra.mxu0 %v559
  %663 = vmatprep.mubr.bf16.mxu0 %v312
  %664 = vmatmul.mubr.bf16.gmra.mxu0 %v311
  %v665 = vpop.f32.mrf.mxu0
  %v666 = vadd.f32 0.0, %v665
  %v667 = vpop.f32.mrf.mxu0
  %v668 = vpop.f32.mrf.mxu0
  %v669 = vadd.f32 0.0, %v668
  %v670 = vpop.f32.mrf.mxu0
  %671 = vmatprep.mubr.bf16.mxu0 %v317
  %672 = vmatmul.mubr.bf16.gmra.mxu0 %v316
  %v673 = vpop.f32.mrf.mxu0
  %v674 = vadd.f32 0.0, %v673
  %v675 = vpop.f32.mrf.mxu0
  %v676 = vpop.f32.mrf.mxu0
  %v677 = vadd.f32 0.0, %v676
  %v678 = vpop.f32.mrf.mxu0
  %679 = vmatprep.mubr.bf16.mxu0 %v322
  %680 = vmatmul.mubr.bf16.gmra.mxu0 %v321
  %v681 = vpop.f32.mrf.mxu0
  %v682 = vadd.f32 0.0, %v681
  %v683 = vpop.f32.mrf.mxu0
  %v684 = vpop.f32.mrf.mxu0
  %v685 = vadd.f32 0.0, %v684
  %v686 = vpop.f32.mrf.mxu0
  %687 = vmatprep.mubr.bf16.mxu0 %v327
  %688 = vmatmul.mubr.bf16.gmra.mxu0 %v326
  %v689 = vpop.f32.mrf.mxu0
  %v690 = vadd.f32 0.0, %v689
  %v691 = vpop.f32.mrf.mxu0
  %v692 = vpop.f32.mrf.mxu0
  %v693 = vadd.f32 0.0, %v692
  %v694 = vpop.f32.mrf.mxu0
  %695 = vmatprep.mubr.bf16.mxu0 %v332
  %696 = vmatmul.mubr.bf16.gmra.mxu0 %v331
  %v697 = vpop.f32.mrf.mxu0
  %v698 = vadd.f32 0.0, %v697
  %v699 = vpop.f32.mrf.mxu0
  %v700 = vpop.f32.mrf.mxu0
  %v701 = vadd.f32 0.0, %v700
  %v702 = vpop.f32.mrf.mxu0
  %703 = vmatprep.mubr.bf16.mxu0 %v337
  %704 = vmatmul.mubr.bf16.gmra.mxu0 %v336
  %v705 = vpop.f32.mrf.mxu0
  %v706 = vadd.f32 0.0, %v705
  %v707 = vpop.f32.mrf.mxu0
  %v708 = vpop.f32.mrf.mxu0
  %v709 = vadd.f32 0.0, %v708
  %v710 = vpop.f32.mrf.mxu0
  %711 = vmatprep.mubr.bf16.mxu0 %v342
  %712 = vmatmul.mubr.bf16.gmra.mxu0 %v341
  %v713 = vpop.f32.mrf.mxu0
  %v714 = vadd.f32 0.0, %v713
  %v715 = vpop.f32.mrf.mxu0
  %v716 = vpop.f32.mrf.mxu0
  %v717 = vadd.f32 0.0, %v716
  %v718 = vpop.f32.mrf.mxu0
  %719 = vmatprep.mubr.bf16.mxu0 %v347
  %720 = vmatmul.mubr.bf16.gmra.mxu0 %v346
  %v721 = vpop.f32.mrf.mxu0
  %v722 = vadd.f32 0.0, %v721
  %v723 = vpop.f32.mrf.mxu0
  %v724 = vpop.f32.mrf.mxu0
  %v725 = vadd.f32 0.0, %v724
  %v726 = vpop.f32.mrf.mxu0
  %727 = vdwg.mxu0
  %728 = vmatprep.subr.bf16.mxu0 0
  %729 = vmatpush1.bf16.msra.mxu0 %v574
  %730 = vmatprep.subr.bf16.mxu0 0
  %731 = vmatpush1.bf16.msra.mxu0 %v573
  %732 = vmatprep.subr.bf16.mxu0 0
  %733 = vmatpush1.bf16.msra.mxu0 %v572
  %734 = vmatprep.subr.bf16.mxu0 0
  %735 = vmatpush1.bf16.msra.mxu0 %v571
  %736 = vmatprep.subr.bf16.mxu0 0
  %737 = vmatpush1.bf16.msra.mxu0 %v570
  %738 = vmatprep.subr.bf16.mxu0 0
  %739 = vmatpush1.bf16.msra.mxu0 %v569
  %740 = vmatprep.subr.bf16.mxu0 0
  %741 = vmatpush1.bf16.msra.mxu0 %v568
  %742 = vmatprep.subr.bf16.mxu0 0
  %743 = vmatpush1.bf16.msra.mxu0 %v567
  %744 = vmatprep.subr.bf16.mxu0 0
  %745 = vmatpush2.bf16.msra.mxu0 %v582
  %746 = vmatprep.subr.bf16.mxu0 0
  %747 = vmatpush2.bf16.msra.mxu0 %v581
  %748 = vmatprep.subr.bf16.mxu0 0
  %749 = vmatpush2.bf16.msra.mxu0 %v580
  %750 = vmatprep.subr.bf16.mxu0 0
  %751 = vmatpush2.bf16.msra.mxu0 %v579
  %752 = vmatprep.subr.bf16.mxu0 0
  %753 = vmatpush2.bf16.msra.mxu0 %v578
  %754 = vmatprep.subr.bf16.mxu0 0
  %755 = vmatpush2.bf16.msra.mxu0 %v577
  %756 = vmatprep.subr.bf16.mxu0 0
  %757 = vmatpush2.bf16.msra.mxu0 %v576
  %758 = vmatprep.subr.bf16.mxu0 0
  %759 = vmatpush2.bf16.msra.mxu0 %v575
  %760 = vmatprep.mubr.bf16.mxu0 %v314
  %761 = vmatmul.mubr.bf16.gmra.mxu0 %v313
  %v762 = vpop.f32.mrf.mxu0
  %v763 = vadd.f32 %v666, %v762
  %v764 = vpop.f32.mrf.mxu0
  %v765 = vpop.f32.mrf.mxu0
  %v766 = vadd.f32 %v669, %v765
  %v767 = vpop.f32.mrf.mxu0
  %768 = vmatprep.mubr.bf16.mxu0 %v319
  %769 = vmatmul.mubr.bf16.gmra.mxu0 %v318
  %v770 = vpop.f32.mrf.mxu0
  %v771 = vadd.f32 %v674, %v770
  %v772 = vpop.f32.mrf.mxu0
  %v773 = vpop.f32.mrf.mxu0
  %v774 = vadd.f32 %v677, %v773
  %v775 = vpop.f32.mrf.mxu0
  %776 = vmatprep.mubr.bf16.mxu0 %v324
  %777 = vmatmul.mubr.bf16.gmra.mxu0 %v323
  %v778 = vpop.f32.mrf.mxu0
  %v779 = vadd.f32 %v682, %v778
  %v780 = vpop.f32.mrf.mxu0
  %v781 = vpop.f32.mrf.mxu0
  %v782 = vadd.f32 %v685, %v781
  %v783 = vpop.f32.mrf.mxu0
  %784 = vmatprep.mubr.bf16.mxu0 %v329
  %785 = vmatmul.mubr.bf16.gmra.mxu0 %v328
  %v786 = vpop.f32.mrf.mxu0
  %v787 = vadd.f32 %v690, %v786
  %v788 = vpop.f32.mrf.mxu0
  %v789 = vpop.f32.mrf.mxu0
  %v790 = vadd.f32 %v693, %v789
  %v791 = vpop.f32.mrf.mxu0
  %792 = vmatprep.mubr.bf16.mxu0 %v334
  %793 = vmatmul.mubr.bf16.gmra.mxu0 %v333
  %v794 = vpop.f32.mrf.mxu0
  %v795 = vadd.f32 %v698, %v794
  %v796 = vpop.f32.mrf.mxu0
  %v797 = vpop.f32.mrf.mxu0
  %v798 = vadd.f32 %v701, %v797
  %v799 = vpop.f32.mrf.mxu0
  %800 = vmatprep.mubr.bf16.mxu0 %v339
  %801 = vmatmul.mubr.bf16.gmra.mxu0 %v338
  %v802 = vpop.f32.mrf.mxu0
  %v803 = vadd.f32 %v706, %v802
  %v804 = vpop.f32.mrf.mxu0
  %v805 = vpop.f32.mrf.mxu0
  %v806 = vadd.f32 %v709, %v805
  %v807 = vpop.f32.mrf.mxu0
  %808 = vmatprep.mubr.bf16.mxu0 %v344
  %809 = vmatmul.mubr.bf16.gmra.mxu0 %v343
  %v810 = vpop.f32.mrf.mxu0
  %v811 = vadd.f32 %v714, %v810
  %v812 = vpop.f32.mrf.mxu0
  %v813 = vpop.f32.mrf.mxu0
  %v814 = vadd.f32 %v717, %v813
  %v815 = vpop.f32.mrf.mxu0
  %816 = vmatprep.mubr.bf16.mxu0 %v349
  %817 = vmatmul.mubr.bf16.gmra.mxu0 %v348
  %v818 = vpop.f32.mrf.mxu0
  %v819 = vadd.f32 %v722, %v818
  %v820 = vpop.f32.mrf.mxu0
  %v821 = vpop.f32.mrf.mxu0
  %v822 = vadd.f32 %v725, %v821
  %v823 = vpop.f32.mrf.mxu0
  %824 = vdwg.mxu0
  %825 = vmatprep.subr.bf16.mxu0 0
  %826 = vmatpush1.bf16.msra.mxu0 %v590
  %827 = vmatprep.subr.bf16.mxu0 0
  %828 = vmatpush1.bf16.msra.mxu0 %v589
  %829 = vmatprep.subr.bf16.mxu0 0
  %830 = vmatpush1.bf16.msra.mxu0 %v588
  %831 = vmatprep.subr.bf16.mxu0 0
  %832 = vmatpush1.bf16.msra.mxu0 %v587
  %833 = vmatprep.subr.bf16.mxu0 0
  %834 = vmatpush1.bf16.msra.mxu0 %v586
  %835 = vmatprep.subr.bf16.mxu0 0
  %836 = vmatpush1.bf16.msra.mxu0 %v585
  %837 = vmatprep.subr.bf16.mxu0 0
  %838 = vmatpush1.bf16.msra.mxu0 %v584
  %839 = vmatprep.subr.bf16.mxu0 0
  %840 = vmatpush1.bf16.msra.mxu0 %v583
  %841 = vmatprep.subr.bf16.mxu0 0
  %842 = vmatpush2.bf16.msra.mxu0 0
  %843 = vmatprep.subr.bf16.mxu0 0
  %844 = vmatpush2.bf16.msra.mxu0 0
  %845 = vmatprep.subr.bf16.mxu0 0
  %846 = vmatpush2.bf16.msra.mxu0 0
  %847 = vmatprep.subr.bf16.mxu0 0
  %848 = vmatpush2.bf16.msra.mxu0 0
  %849 = vmatprep.subr.bf16.mxu0 0
  %850 = vmatpush2.bf16.msra.mxu0 0
  %851 = vmatprep.subr.bf16.mxu0 0
  %852 = vmatpush2.bf16.msra.mxu0 0
  %853 = vmatprep.subr.bf16.mxu0 0
  %854 = vmatpush2.bf16.msra.mxu0 0
  %855 = vmatprep.subr.bf16.mxu0 0
  %856 = vmatpush2.bf16.msra.mxu0 0
  %857 = vmatprep.mubr.bf16.mxu0 0
  %858 = vmatmul.mubr.bf16.gmra.mxu0 %v315
  %v859 = vpop.f32.mrf.mxu0
  %v860 = vadd.f32 %v763, %v859
  %v861 = vpop.f32.mrf.mxu0
  %v862 = vpop.f32.mrf.mxu0
  %v863 = vadd.f32 %v766, %v862
  %v864 = vpop.f32.mrf.mxu0
  %865 = vmatprep.mubr.bf16.mxu0 0
  %866 = vmatmul.mubr.bf16.gmra.mxu0 %v320
  %v867 = vpop.f32.mrf.mxu0
  %v868 = vadd.f32 %v771, %v867
  %v869 = vpop.f32.mrf.mxu0
  %v870 = vpop.f32.mrf.mxu0
  %v871 = vadd.f32 %v774, %v870
  %v872 = vpop.f32.mrf.mxu0
  %873 = vmatprep.mubr.bf16.mxu0 0
  %874 = vmatmul.mubr.bf16.gmra.mxu0 %v325
  %v875 = vpop.f32.mrf.mxu0
  %v876 = vadd.f32 %v779, %v875
  %v877 = vpop.f32.mrf.mxu0
  %v878 = vpop.f32.mrf.mxu0
  %v879 = vadd.f32 %v782, %v878
  %v880 = vpop.f32.mrf.mxu0
  %881 = vmatprep.mubr.bf16.mxu0 0
  %882 = vmatmul.mubr.bf16.gmra.mxu0 %v330
  %v883 = vpop.f32.mrf.mxu0
  %v884 = vadd.f32 %v787, %v883
  %v885 = vpop.f32.mrf.mxu0
  %v886 = vpop.f32.mrf.mxu0
  %v887 = vadd.f32 %v790, %v886
  %v888 = vpop.f32.mrf.mxu0
  %889 = vmatprep.mubr.bf16.mxu0 0
  %890 = vmatmul.mubr.bf16.gmra.mxu0 %v335
  %v891 = vpop.f32.mrf.mxu0
  %v892 = vadd.f32 %v795, %v891
  %v893 = vpop.f32.mrf.mxu0
  %v894 = vpop.f32.mrf.mxu0
  %v895 = vadd.f32 %v798, %v894
  %v896 = vpop.f32.mrf.mxu0
  %897 = vmatprep.mubr.bf16.mxu0 0
  %898 = vmatmul.mubr.bf16.gmra.mxu0 %v340
  %v899 = vpop.f32.mrf.mxu0
  %v900 = vadd.f32 %v803, %v899
  %v901 = vpop.f32.mrf.mxu0
  %v902 = vpop.f32.mrf.mxu0
  %v903 = vadd.f32 %v806, %v902
  %v904 = vpop.f32.mrf.mxu0
  %905 = vmatprep.mubr.bf16.mxu0 0
  %906 = vmatmul.mubr.bf16.gmra.mxu0 %v345
  %v907 = vpop.f32.mrf.mxu0
  %v908 = vadd.f32 %v811, %v907
  %v909 = vpop.f32.mrf.mxu0
  %v910 = vpop.f32.mrf.mxu0
  %v911 = vadd.f32 %v814, %v910
  %v912 = vpop.f32.mrf.mxu0
  %913 = vmatprep.mubr.bf16.mxu0 0
  %914 = vmatmul.mubr.bf16.gmra.mxu0 %v350
  %v915 = vpop.f32.mrf.mxu0
  %v916 = vadd.f32 %v819, %v915
  %v917 = vpop.f32.mrf.mxu0
  %v918 = vpop.f32.mrf.mxu0
  %v919 = vadd.f32 %v822, %v918
  %v920 = vpop.f32.mrf.mxu0
  %921 = vdwg.mxu0
  %v922 = vadd.f32 %v39, %v860
  %v923 = vadd.f32 %v40, %v863
  %v924 = vadd.f32 %v41, %v868
  %v925 = vadd.f32 %v42, %v871
  %v926 = vadd.f32 %v43, %v876
  %v927 = vadd.f32 %v44, %v879
  %v928 = vadd.f32 %v45, %v884
  %v929 = vadd.f32 %v46, %v887
  %v930 = vadd.f32 %v47, %v892
  %v931 = vadd.f32 %v48, %v895
  %v932 = vadd.f32 %v49, %v900
  %v933 = vadd.f32 %v50, %v903
  %v934 = vadd.f32 %v51, %v908
  %v935 = vadd.f32 %v52, %v911
  %v936 = vadd.f32 %v53, %v916
  %v937 = vadd.f32 %v54, %v919
  %vm938 = vcmask 523264
  %939 = vst.msk [vmem:[#allocation2] sm:$0xff] %vm938, %v922
  %940 = vst.msk [vmem:[#allocation2 + $0x8] sm:$0xff] %vm938, %v923
  %941 = vst.msk [vmem:[#allocation2 + $0x10] sm:$0xff] %vm938, %v924
  %942 = vst.msk [vmem:[#allocation2 + $0x18] sm:$0xff] %vm938, %v925
  %943 = vst.msk [vmem:[#allocation2 + $0x20] sm:$0xff] %vm938, %v926
  %944 = vst.msk [vmem:[#allocation2 + $0x28] sm:$0xff] %vm938, %v927
  %945 = vst.msk [vmem:[#allocation2 + $0x30] sm:$0xff] %vm938, %v928
  %946 = vst.msk [vmem:[#allocation2 + $0x38] sm:$0xff] %vm938, %v929
  %947 = vst.msk [vmem:[#allocation2 + $0x40] sm:$0xff] %vm938, %v930
  %948 = vst.msk [vmem:[#allocation2 + $0x48] sm:$0xff] %vm938, %v931
  %949 = vst.msk [vmem:[#allocation2 + $0x50] sm:$0xff] %vm938, %v932
  %950 = vst.msk [vmem:[#allocation2 + $0x58] sm:$0xff] %vm938, %v933
  %951 = vst.msk [vmem:[#allocation2 + $0x60] sm:$0xff] %vm938, %v934
  %952 = vst.msk [vmem:[#allocation2 + $0x68] sm:$0xff] %vm938, %v935
  %953 = vst.msk [vmem:[#allocation2 + $0x70] sm:$0xff] %vm938, %v936
  %954 = vst.msk [vmem:[#allocation2 + $0x78] sm:$0xff] %vm938, %v937
  // Predicated region
  $region22: #{_lambda_.18} parent=0 // pred_check
    %p955 = pneg %p18
  $region23: #{_lambda_.18} parent=0 // pred_check_branch
    %957 = sbr.rel (%p955) target = $region25
  $region24: #{_lambda_.18} parent=0 // pred_region
    %v958 = vld [vmem:[#allocation2] sm:$0xff]
    %v959 = vld [vmem:[#allocation2 + $0x8] sm:$0xff]
    %v960 = vld [vmem:[#allocation2 + $0x10] sm:$0xff]
    %v961 = vld [vmem:[#allocation2 + $0x18] sm:$0xff]
    %v962 = vld [vmem:[#allocation2 + $0x20] sm:$0xff]
    %v963 = vld [vmem:[#allocation2 + $0x28] sm:$0xff]
    %v964 = vld [vmem:[#allocation2 + $0x30] sm:$0xff]
    %v965 = vld [vmem:[#allocation2 + $0x38] sm:$0xff]
    %v966 = vld [vmem:[#allocation2 + $0x40] sm:$0xff]
    %v967 = vld [vmem:[#allocation2 + $0x48] sm:$0xff]
    %v968 = vld [vmem:[#allocation2 + $0x50] sm:$0xff]
    %v969 = vld [vmem:[#allocation2 + $0x58] sm:$0xff]
    %v970 = vld [vmem:[#allocation2 + $0x60] sm:$0xff]
    %v971 = vld [vmem:[#allocation2 + $0x68] sm:$0xff]
    %v972 = vld [vmem:[#allocation2 + $0x70] sm:$0xff]
    %v973 = vld [vmem:[#allocation2 + $0x78] sm:$0xff]
    %v974 = vld [vmem:[%s2] sm:$0x1]
    %v976 = vlaneseq
    %v977 = vshrl.u32 %v976, 7
    %v978 = vsub.s32 0, %v977
    %v979 = vrot.slane %v974, %v978
    %v981 = vadd.f32 %v958, %v979
    %v982 = vadd.f32 %v959, %v979
    %v983 = vadd.f32 %v960, %v979
    %v984 = vadd.f32 %v961, %v979
    %v985 = vadd.f32 %v962, %v979
    %v986 = vadd.f32 %v963, %v979
    %v987 = vadd.f32 %v964, %v979
    %v988 = vadd.f32 %v965, %v979
    %v989 = vadd.f32 %v966, %v979
    %v990 = vadd.f32 %v967, %v979
    %v991 = vadd.f32 %v968, %v979
    %v992 = vadd.f32 %v969, %v979
    %v993 = vadd.f32 %v970, %v979
    %v994 = vadd.f32 %v971, %v979
    %v995 = vadd.f32 %v972, %v979
    %v996 = vadd.f32 %v973, %v979
    %v997 = vmax.f32 %v981, 0.0
    %v998 = vmax.f32 %v982, 0.0
    %v999 = vmax.f32 %v983, 0.0
    %v1000 = vmax.f32 %v984, 0.0
    %v1001 = vmax.f32 %v985, 0.0
    %v1002 = vmax.f32 %v986, 0.0
    %v1003 = vmax.f32 %v987, 0.0
    %v1004 = vmax.f32 %v988, 0.0
    %v1005 = vmax.f32 %v989, 0.0
    %v1006 = vmax.f32 %v990, 0.0
    %v1007 = vmax.f32 %v991, 0.0
    %v1008 = vmax.f32 %v992, 0.0
    %v1009 = vmax.f32 %v993, 0.0
    %v1010 = vmax.f32 %v994, 0.0
    %v1011 = vmax.f32 %v995, 0.0
    %v1012 = vmax.f32 %v996, 0.0
    %v1013 = vld [vmem:[%s3] sm:$0xf]
    %v1014 = vld [vmem:[%s3 + $0x4] sm:$0xf]
    %v1015 = vld [vmem:[%s3 + $0x8] sm:$0xf]
    %v1016 = vld [vmem:[%s3 + $0xc] sm:$0xf]
    %v1017 = vld [vmem:[%s3 + $0x10] sm:$0xf]
    %v1018 = vld [vmem:[%s3 + $0x14] sm:$0xf]
    %v1019 = vld [vmem:[%s3 + $0x18] sm:$0xf]
    %v1020 = vld [vmem:[%s3 + $0x1c] sm:$0xf]
    %v1021 = vld [vmem:[%s3 + $0x20] sm:$0xf]
    %v1022 = vld [vmem:[%s3 + $0x24] sm:$0xf]
    %v1023 = vld [vmem:[%s3 + $0x28] sm:$0xf]
    %v1024 = vld [vmem:[%s3 + $0x2c] sm:$0xf]
    %v1025 = vld [vmem:[%s3 + $0x30] sm:$0xf]
    %v1026 = vld [vmem:[%s3 + $0x34] sm:$0xf]
    %v1027 = vld [vmem:[%s3 + $0x38] sm:$0xf]
    %v1028 = vld [vmem:[%s3 + $0x3c] sm:$0xf]
    %v1029 = vunpack.c.l.bf16 %v1013
    %v1030 = vunpack.c.l.bf16 %v1014
    %v1031 = vunpack.c.l.bf16 %v1015
    %v1032 = vunpack.c.l.bf16 %v1016
    %v1033 = vunpack.c.l.bf16 %v1017
    %v1034 = vunpack.c.l.bf16 %v1018
    %v1035 = vunpack.c.l.bf16 %v1019
    %v1036 = vunpack.c.l.bf16 %v1020
    %v1037 = vunpack.c.l.bf16 %v1021
    %v1038 = vunpack.c.l.bf16 %v1022
    %v1039 = vunpack.c.l.bf16 %v1023
    %v1040 = vunpack.c.l.bf16 %v1024
    %v1041 = vunpack.c.l.bf16 %v1025
    %v1042 = vunpack.c.l.bf16 %v1026
    %v1043 = vunpack.c.l.bf16 %v1027
    %v1044 = vunpack.c.l.bf16 %v1028
    %v1045 = vadd.f32 %v997, %v1029
    %v1046 = vadd.f32 %v998, %v1030
    %v1047 = vadd.f32 %v999, %v1031
    %v1048 = vadd.f32 %v1000, %v1032
    %v1049 = vadd.f32 %v1001, %v1033
    %v1050 = vadd.f32 %v1002, %v1034
    %v1051 = vadd.f32 %v1003, %v1035
    %v1052 = vadd.f32 %v1004, %v1036
    %v1053 = vadd.f32 %v1005, %v1037
    %v1054 = vadd.f32 %v1006, %v1038
    %v1055 = vadd.f32 %v1007, %v1039
    %v1056 = vadd.f32 %v1008, %v1040
    %v1057 = vadd.f32 %v1009, %v1041
    %v1058 = vadd.f32 %v1010, %v1042
    %v1059 = vadd.f32 %v1011, %v1043
    %v1060 = vadd.f32 %v1012, %v1044
    %v1061 = vmax.f32 %v1045, 0.0
    %v1062 = vmax.f32 %v1046, 0.0
    %v1063 = vmax.f32 %v1047, 0.0
    %v1064 = vmax.f32 %v1048, 0.0
    %v1065 = vmax.f32 %v1049, 0.0
    %v1066 = vmax.f32 %v1050, 0.0
    %v1067 = vmax.f32 %v1051, 0.0
    %v1068 = vmax.f32 %v1052, 0.0
    %v1069 = vmax.f32 %v1053, 0.0
    %v1070 = vmax.f32 %v1054, 0.0
    %v1071 = vmax.f32 %v1055, 0.0
    %v1072 = vmax.f32 %v1056, 0.0
    %v1073 = vmax.f32 %v1057, 0.0
    %v1074 = vmax.f32 %v1058, 0.0
    %v1075 = vmax.f32 %v1059, 0.0
    %v1076 = vmax.f32 %v1060, 0.0
    %v1077 = vpack.c.bf16 %v1062, %v1061
    %v1078 = vpack.c.bf16 %v1064, %v1063
    %v1079 = vpack.c.bf16 %v1066, %v1065
    %v1080 = vpack.c.bf16 %v1068, %v1067
    %v1081 = vpack.c.bf16 %v1070, %v1069
    %v1082 = vpack.c.bf16 %v1072, %v1071
    %v1083 = vpack.c.bf16 %v1074, %v1073
    %v1084 = vpack.c.bf16 %v1076, %v1075
    %v1093 = vunpack.c.l.b16 %v1077
    %v1094 = vunpack.c.h.b16 %v1077
    %v1095 = vunpack.c.l.b16 %v1078
    %v1096 = vunpack.c.h.b16 %v1078
    %v1097 = vunpack.c.l.b16 %v1079
    %v1098 = vunpack.c.h.b16 %v1079
    %v1099 = vunpack.c.l.b16 %v1080
    %v1100 = vunpack.c.h.b16 %v1080
    %v1101 = vunpack.c.l.b16 %v1081
    %v1102 = vunpack.c.h.b16 %v1081
    %v1103 = vunpack.c.l.b16 %v1082
    %v1104 = vunpack.c.h.b16 %v1082
    %v1105 = vunpack.c.l.b16 %v1083
    %v1106 = vunpack.c.h.b16 %v1083
    %v1107 = vunpack.c.l.b16 %v1084
    %v1108 = vunpack.c.h.b16 %v1084
    %v1109 = vpack.c.b16 %v1093, %v1093
    %v1110 = vpack.c.b16 %v1094, %v1094
    %v1111 = vpack.c.b16 %v1095, %v1095
    %v1112 = vpack.c.b16 %v1096, %v1096
    %v1113 = vpack.c.b16 %v1097, %v1097
    %v1114 = vpack.c.b16 %v1098, %v1098
    %v1115 = vpack.c.b16 %v1099, %v1099
    %v1116 = vpack.c.b16 %v1100, %v1100
    %v1117 = vpack.c.b16 %v1101, %v1101
    %v1118 = vpack.c.b16 %v1102, %v1102
    %v1119 = vpack.c.b16 %v1103, %v1103
    %v1120 = vpack.c.b16 %v1104, %v1104
    %v1121 = vpack.c.b16 %v1105, %v1105
    %v1122 = vpack.c.b16 %v1106, %v1106
    %v1123 = vpack.c.b16 %v1107, %v1107
    %v1124 = vpack.c.b16 %v1108, %v1108
    %vm1141 = vcmask 519168
    %1142 = vst.msk [vmem:[%s4] sm:$0xf] %vm1141, %v1109
    %1143 = vst.msk [vmem:[%s4 + $0x4] sm:$0xf] %vm1141, %v1110
    %1144 = vst.msk [vmem:[%s4 + $0x8] sm:$0xf] %vm1141, %v1111
    %1145 = vst.msk [vmem:[%s4 + $0xc] sm:$0xf] %vm1141, %v1112
    %1146 = vst.msk [vmem:[%s4 + $0x10] sm:$0xf] %vm1141, %v1113
    %1147 = vst.msk [vmem:[%s4 + $0x14] sm:$0xf] %vm1141, %v1114
    %1148 = vst.msk [vmem:[%s4 + $0x18] sm:$0xf] %vm1141, %v1115
    %1149 = vst.msk [vmem:[%s4 + $0x1c] sm:$0xf] %vm1141, %v1116
    %1150 = vst.msk [vmem:[%s4 + $0x20] sm:$0xf] %vm1141, %v1117
    %1151 = vst.msk [vmem:[%s4 + $0x24] sm:$0xf] %vm1141, %v1118
    %1152 = vst.msk [vmem:[%s4 + $0x28] sm:$0xf] %vm1141, %v1119
    %1153 = vst.msk [vmem:[%s4 + $0x2c] sm:$0xf] %vm1141, %v1120
    %1154 = vst.msk [vmem:[%s4 + $0x30] sm:$0xf] %vm1141, %v1121
    %1155 = vst.msk [vmem:[%s4 + $0x34] sm:$0xf] %vm1141, %v1122
    %1156 = vst.msk [vmem:[%s4 + $0x38] sm:$0xf] %vm1141, %v1123
    %1157 = vst.msk [vmem:[%s4 + $0x3c] sm:$0xf] %vm1141, %v1124
  $region25: #{_lambda_.18} parent=0 // pred_fallthru
    _
  // Predicated region
  $region26: #{_lambda_.18} parent=0 // pred_check
    _
  $region27: #{_lambda_.18} parent=0 // pred_check_branch
    %1159 = sbr.rel (0) target = $region29
  $region28: #{_lambda_.18} parent=0 // pred_region
    _
  $region29: #{_lambda_.18} parent=0 // pred_fallthru
    _
  // Predicated region
  $region30: #{_lambda_.18} parent=0 // pred_check
    _
  $region31: #{_lambda_.18} parent=0 // pred_check_branch
    %1161 = sbr.rel (0) target = $region33
  $region32: #{_lambda_.18} parent=0 // pred_region
    _
  $region33: #{_lambda_.18} parent=0 // pred_fallthru
    _

// kernel: _lambda_.22
$region0: #{_lambda_.22}
  #allocation0 [shape = 'u32[]', space=smem, size = 0x4, offset = 0x4, fixed_abs, tag = 'smem constant byte address 0x4 - core index']
  #allocation1 [shape = 'u32[144,128]{1,0:T(1,128)}', space=vmem, size = 0x12000, scoped, tag = 'internal scratch']
  #allocation2 [shape = 'f32[32,128]{1,0:T(8,128)}', space=vmem, size = 0x4000, scoped, tag = 'scratch operand']
  %s0 = inlined_call_operand.vmem [shape: bf16[32,640], index: 0, kind: input, shape index: {}]
  %s1 = inlined_call_operand.vmem [shape: bf16[640,128], index: 1, kind: input, shape index: {}]
  %s2 = inlined_call_operand.vmem [shape: f32[1,128], index: 2, kind: input, shape index: {}]
  %s3 = inlined_call_operand.vmem [shape: bf16[32,128], index: 3, kind: output, shape index: {}]
  %s4 = sld [smem:[#allocation0]]
  $region30: #{_lambda_.22} parent=0
    _
  %s6 = ssub.s32 1, %s4
  %s7 = scalar_select 0, %s6, %s4
  // Predicated region
  $region2: #{_lambda_.22} parent=0 // pred_check
    _
  $region3: #{_lambda_.22} parent=0 // pred_check_branch
    %9 = sbr.rel (0) target = $region5
  $region4: #{_lambda_.22} parent=0 // pred_region
    _
  $region5: #{_lambda_.22} parent=0 // pred_fallthru
    _
  // Predicated region
  $region6: #{_lambda_.22} parent=0 // pred_check
    _
  $region7: #{_lambda_.22} parent=0 // pred_check_branch
    %11 = sbr.rel (0) target = $region9
  $region8: #{_lambda_.22} parent=0 // pred_region
    _
  $region9: #{_lambda_.22} parent=0 // pred_fallthru
    _
  // Predicated region
  $region10: #{_lambda_.22} parent=0 // pred_check
    _
  $region11: #{_lambda_.22} parent=0 // pred_check_branch
    %13 = sbr.rel (0) target = $region13
  $region12: #{_lambda_.22} parent=0 // pred_region
    _
  $region13: #{_lambda_.22} parent=0 // pred_fallthru
    _
  %p15 = scmp.eq.s32.totalorder 0, 0
  // Predicated region
  $region14: #{_lambda_.22} parent=0 // pred_check
    %p16 = pneg %p15
  $region15: #{_lambda_.22} parent=0 // pred_check_branch
    %18 = sbr.rel (%p16) target = $region17
  $region16: #{_lambda_.22} parent=0 // pred_region
    %19 = vst [vmem:[#allocation2] sm:$0xff] 0.0
    %20 = vst [vmem:[#allocation2 + $0x8] sm:$0xff] 0.0
    %21 = vst [vmem:[#allocation2 + $0x10] sm:$0xff] 0.0
    %22 = vst [vmem:[#allocation2 + $0x18] sm:$0xff] 0.0
  $region17: #{_lambda_.22} parent=0 // pred_fallthru
    _
  %v23 = vld [vmem:[#allocation2] sm:$0xff]
  %v24 = vld [vmem:[#allocation2 + $0x8] sm:$0xff]
  %v25 = vld [vmem:[#allocation2 + $0x10] sm:$0xff]
  %v26 = vld [vmem:[#allocation2 + $0x18] sm:$0xff]
  %v27 = vld [vmem:[%s0] sm:$0xff]
  %v28 = vld [vmem:[%s0 + $0x8] sm:$0xff]
  %v29 = vld [vmem:[%s0 + $0x10] sm:$0xf]
  %v30 = vld [vmem:[%s0 + $0x14] sm:$0xff]
  %v31 = vld [vmem:[%s0 + $0x1c] sm:$0xff]
  %v32 = vld [vmem:[%s0 + $0x24] sm:$0xf]
  %v33 = vld [vmem:[%s0 + $0x28] sm:$0xff]
  %v34 = vld [vmem:[%s0 + $0x30] sm:$0xff]
  %v35 = vld [vmem:[%s0 + $0x38] sm:$0xf]
  %v36 = vld [vmem:[%s0 + $0x3c] sm:$0xff]
  %v37 = vld [vmem:[%s0 + $0x44] sm:$0xff]
  %v38 = vld [vmem:[%s0 + $0x4c] sm:$0xf]
  %v39 = vld [vmem:[%s1] sm:$0xf]
  %v40 = vld [vmem:[%s1 + $0x4] sm:$0xf]
  %v41 = vld [vmem:[%s1 + $0x8] sm:$0xf]
  %v42 = vld [vmem:[%s1 + $0xc] sm:$0xf]
  %v43 = vld [vmem:[%s1 + $0x10] sm:$0xf]
  %v44 = vld [vmem:[%s1 + $0x14] sm:$0xf]
  %v45 = vld [vmem:[%s1 + $0x18] sm:$0xf]
  %v46 = vld [vmem:[%s1 + $0x1c] sm:$0xf]
  %v47 = vld [vmem:[%s1 + $0x20] sm:$0xf]
  %v48 = vld [vmem:[%s1 + $0x24] sm:$0xf]
  %v49 = vld [vmem:[%s1 + $0x28] sm:$0xf]
  %v50 = vld [vmem:[%s1 + $0x2c] sm:$0xf]
  %v51 = vld [vmem:[%s1 + $0x30] sm:$0xf]
  %v52 = vld [vmem:[%s1 + $0x34] sm:$0xf]
  %v53 = vld [vmem:[%s1 + $0x38] sm:$0xf]
  %v54 = vld [vmem:[%s1 + $0x3c] sm:$0xf]
  %v55 = vld [vmem:[%s1 + $0x40] sm:$0xf]
  %v56 = vld [vmem:[%s1 + $0x44] sm:$0xf]
  %v57 = vld [vmem:[%s1 + $0x48] sm:$0xf]
  %v58 = vld [vmem:[%s1 + $0x4c] sm:$0xf]
  %v59 = vld [vmem:[%s1 + $0x50] sm:$0xf]
  %v60 = vld [vmem:[%s1 + $0x54] sm:$0xf]
  %v61 = vld [vmem:[%s1 + $0x58] sm:$0xf]
  %v62 = vld [vmem:[%s1 + $0x5c] sm:$0xf]
  %v63 = vld [vmem:[%s1 + $0x60] sm:$0xf]
  %v64 = vld [vmem:[%s1 + $0x64] sm:$0xf]
  %v65 = vld [vmem:[%s1 + $0x68] sm:$0xf]
  %v66 = vld [vmem:[%s1 + $0x6c] sm:$0xf]
  %v67 = vld [vmem:[%s1 + $0x70] sm:$0xf]
  %v68 = vld [vmem:[%s1 + $0x74] sm:$0xf]
  %v69 = vld [vmem:[%s1 + $0x78] sm:$0xf]
  %v70 = vld [vmem:[%s1 + $0x7c] sm:$0xf]
  %v71 = vld [vmem:[%s1 + $0x80] sm:$0xf]
  %v72 = vld [vmem:[%s1 + $0x84] sm:$0xf]
  %v73 = vld [vmem:[%s1 + $0x88] sm:$0xf]
  %v74 = vld [vmem:[%s1 + $0x8c] sm:$0xf]
  %v75 = vld [vmem:[%s1 + $0x90] sm:$0xf]
  %v76 = vld [vmem:[%s1 + $0x94] sm:$0xf]
  %v77 = vld [vmem:[%s1 + $0x98] sm:$0xf]
  %v78 = vld [vmem:[%s1 + $0x9c] sm:$0xf]
  %v79 = vld [vmem:[%s1 + $0xa0] sm:$0xf]
  %v80 = vld [vmem:[%s1 + $0xa4] sm:$0xf]
  %v81 = vld [vmem:[%s1 + $0xa8] sm:$0xf]
  %v82 = vld [vmem:[%s1 + $0xac] sm:$0xf]
  %v83 = vld [vmem:[%s1 + $0xb0] sm:$0xf]
  %v84 = vld [vmem:[%s1 + $0xb4] sm:$0xf]
  %v85 = vld [vmem:[%s1 + $0xb8] sm:$0xf]
  %v86 = vld [vmem:[%s1 + $0xbc] sm:$0xf]
  %v87 = vld [vmem:[%s1 + $0xc0] sm:$0xf]
  %v88 = vld [vmem:[%s1 + $0xc4] sm:$0xf]
  %v89 = vld [vmem:[%s1 + $0xc8] sm:$0xf]
  %v90 = vld [vmem:[%s1 + $0xcc] sm:$0xf]
  %v91 = vld [vmem:[%s1 + $0xd0] sm:$0xf]
  %v92 = vld [vmem:[%s1 + $0xd4] sm:$0xf]
  %v93 = vld [vmem:[%s1 + $0xd8] sm:$0xf]
  %v94 = vld [vmem:[%s1 + $0xdc] sm:$0xf]
  %v95 = vld [vmem:[%s1 + $0xe0] sm:$0xf]
  %v96 = vld [vmem:[%s1 + $0xe4] sm:$0xf]
  %v97 = vld [vmem:[%s1 + $0xe8] sm:$0xf]
  %v98 = vld [vmem:[%s1 + $0xec] sm:$0xf]
  %v99 = vld [vmem:[%s1 + $0xf0] sm:$0xf]
  %v100 = vld [vmem:[%s1 + $0xf4] sm:$0xf]
  %v101 = vld [vmem:[%s1 + $0xf8] sm:$0xf]
  %v102 = vld [vmem:[%s1 + $0xfc] sm:$0xf]
  %v103 = vld [vmem:[%s1 + $0x100] sm:$0xf]
  %v104 = vld [vmem:[%s1 + $0x104] sm:$0xf]
  %v105 = vld [vmem:[%s1 + $0x108] sm:$0xf]
  %v106 = vld [vmem:[%s1 + $0x10c] sm:$0xf]
  %v107 = vld [vmem:[%s1 + $0x110] sm:$0xf]
  %v108 = vld [vmem:[%s1 + $0x114] sm:$0xf]
  %v109 = vld [vmem:[%s1 + $0x118] sm:$0xf]
  %v110 = vld [vmem:[%s1 + $0x11c] sm:$0xf]
  %v111 = vld [vmem:[%s1 + $0x120] sm:$0xf]
  %v112 = vld [vmem:[%s1 + $0x124] sm:$0xf]
  %v113 = vld [vmem:[%s1 + $0x128] sm:$0xf]
  %v114 = vld [vmem:[%s1 + $0x12c] sm:$0xf]
  %v115 = vld [vmem:[%s1 + $0x130] sm:$0xf]
  %v116 = vld [vmem:[%s1 + $0x134] sm:$0xf]
  %v117 = vld [vmem:[%s1 + $0x138] sm:$0xf]
  %v118 = vld [vmem:[%s1 + $0x13c] sm:$0xf]
  %v131 = vunpack.c.l.b16 %v27
  %v132 = vunpack.c.h.b16 %v27
  %v133 = vunpack.c.l.b16 %v28
  %v134 = vunpack.c.h.b16 %v28
  %v135 = vunpack.c.l.b16 %v29
  %v136 = vunpack.c.l.b16 %v30
  %v137 = vunpack.c.h.b16 %v30
  %v138 = vunpack.c.l.b16 %v31
  %v139 = vunpack.c.h.b16 %v31
  %v140 = vunpack.c.l.b16 %v32
  %v141 = vunpack.c.l.b16 %v33
  %v142 = vunpack.c.h.b16 %v33
  %v143 = vunpack.c.l.b16 %v34
  %v144 = vunpack.c.h.b16 %v34
  %v145 = vunpack.c.l.b16 %v35
  %v146 = vunpack.c.l.b16 %v36
  %v147 = vunpack.c.h.b16 %v36
  %v148 = vunpack.c.l.b16 %v37
  %v149 = vunpack.c.h.b16 %v37
  %v150 = vunpack.c.l.b16 %v38
  %v151 = vpack.c.b16 %v136, %v131
  %v152 = vpack.c.b16 %v137, %v132
  %v153 = vpack.c.b16 %v138, %v133
  %v154 = vpack.c.b16 %v139, %v134
  %v155 = vpack.c.b16 %v140, %v135
  %v156 = vpack.c.b16 %v146, %v141
  %v157 = vpack.c.b16 %v147, %v142
  %v158 = vpack.c.b16 %v148, %v143
  %v159 = vpack.c.b16 %v149, %v144
  %v160 = vpack.c.b16 %v150, %v145
  %v251 = vunpack.c.l.b16 %v39
  %v252 = vunpack.c.l.b16 %v40
  %v253 = vunpack.c.l.b16 %v41
  %v254 = vunpack.c.l.b16 %v42
  %v255 = vunpack.c.l.b16 %v43
  %v256 = vunpack.c.l.b16 %v44
  %v257 = vunpack.c.l.b16 %v45
  %v258 = vunpack.c.l.b16 %v46
  %v259 = vunpack.c.l.b16 %v47
  %v260 = vunpack.c.l.b16 %v48
  %v261 = vunpack.c.l.b16 %v49
  %v262 = vunpack.c.l.b16 %v50
  %v263 = vunpack.c.l.b16 %v51
  %v264 = vunpack.c.l.b16 %v52
  %v265 = vunpack.c.l.b16 %v53
  %v266 = vunpack.c.l.b16 %v54
  %v267 = vunpack.c.l.b16 %v55
  %v268 = vunpack.c.l.b16 %v56
  %v269 = vunpack.c.l.b16 %v57
  %v270 = vunpack.c.l.b16 %v58
  %v271 = vunpack.c.l.b16 %v59
  %v272 = vunpack.c.l.b16 %v60
  %v273 = vunpack.c.l.b16 %v61
  %v274 = vunpack.c.l.b16 %v62
  %v275 = vunpack.c.l.b16 %v63
  %v276 = vunpack.c.l.b16 %v64
  %v277 = vunpack.c.l.b16 %v65
  %v278 = vunpack.c.l.b16 %v66
  %v279 = vunpack.c.l.b16 %v67
  %v280 = vunpack.c.l.b16 %v68
  %v281 = vunpack.c.l.b16 %v69
  %v282 = vunpack.c.l.b16 %v70
  %v283 = vunpack.c.l.b16 %v71
  %v284 = vunpack.c.l.b16 %v72
  %v285 = vunpack.c.l.b16 %v73
  %v286 = vunpack.c.l.b16 %v74
  %v287 = vunpack.c.l.b16 %v75
  %v288 = vunpack.c.l.b16 %v76
  %v289 = vunpack.c.l.b16 %v77
  %v290 = vunpack.c.l.b16 %v78
  %v291 = vunpack.c.l.b16 %v79
  %v292 = vunpack.c.l.b16 %v80
  %v293 = vunpack.c.l.b16 %v81
  %v294 = vunpack.c.l.b16 %v82
  %v295 = vunpack.c.l.b16 %v83
  %v296 = vunpack.c.l.b16 %v84
  %v297 = vunpack.c.l.b16 %v85
  %v298 = vunpack.c.l.b16 %v86
  %v299 = vunpack.c.l.b16 %v87
  %v300 = vunpack.c.l.b16 %v88
  %v301 = vunpack.c.l.b16 %v89
  %v302 = vunpack.c.l.b16 %v90
  %v303 = vunpack.c.l.b16 %v91
  %v304 = vunpack.c.l.b16 %v92
  %v305 = vunpack.c.l.b16 %v93
  %v306 = vunpack.c.l.b16 %v94
  %v307 = vunpack.c.l.b16 %v95
  %v308 = vunpack.c.l.b16 %v96
  %v309 = vunpack.c.l.b16 %v97
  %v310 = vunpack.c.l.b16 %v98
  %v311 = vunpack.c.l.b16 %v99
  %v312 = vunpack.c.l.b16 %v100
  %v313 = vunpack.c.l.b16 %v101
  %v314 = vunpack.c.l.b16 %v102
  %v315 = vunpack.c.l.b16 %v103
  %v316 = vunpack.c.l.b16 %v104
  %v317 = vunpack.c.l.b16 %v105
  %v318 = vunpack.c.l.b16 %v106
  %v319 = vunpack.c.l.b16 %v107
  %v320 = vunpack.c.l.b16 %v108
  %v321 = vunpack.c.l.b16 %v109
  %v322 = vunpack.c.l.b16 %v110
  %v323 = vunpack.c.l.b16 %v111
  %v324 = vunpack.c.l.b16 %v112
  %v325 = vunpack.c.l.b16 %v113
  %v326 = vunpack.c.l.b16 %v114
  %v327 = vunpack.c.l.b16 %v115
  %v328 = vunpack.c.l.b16 %v116
  %v329 = vunpack.c.l.b16 %v117
  %v330 = vunpack.c.l.b16 %v118
  %v331 = vpack.c.b16 %v252, %v251
  %v332 = vpack.c.b16 %v254, %v253
  %v333 = vpack.c.b16 %v256, %v255
  %v334 = vpack.c.b16 %v258, %v257
  %v335 = vpack.c.b16 %v260, %v259
  %v336 = vpack.c.b16 %v262, %v261
  %v337 = vpack.c.b16 %v264, %v263
  %v338 = vpack.c.b16 %v266, %v265
  %v339 = vpack.c.b16 %v268, %v267
  %v340 = vpack.c.b16 %v270, %v269
  %v341 = vpack.c.b16 %v272, %v271
  %v342 = vpack.c.b16 %v274, %v273
  %v343 = vpack.c.b16 %v276, %v275
  %v344 = vpack.c.b16 %v278, %v277
  %v345 = vpack.c.b16 %v280, %v279
  %v346 = vpack.c.b16 %v282, %v281
  %v347 = vpack.c.b16 %v284, %v283
  %v348 = vpack.c.b16 %v286, %v285
  %v349 = vpack.c.b16 %v288, %v287
  %v350 = vpack.c.b16 %v290, %v289
  %v351 = vpack.c.b16 %v292, %v291
  %v352 = vpack.c.b16 %v294, %v293
  %v353 = vpack.c.b16 %v296, %v295
  %v354 = vpack.c.b16 %v298, %v297
  %v355 = vpack.c.b16 %v300, %v299
  %v356 = vpack.c.b16 %v302, %v301
  %v357 = vpack.c.b16 %v304, %v303
  %v358 = vpack.c.b16 %v306, %v305
  %v359 = vpack.c.b16 %v308, %v307
  %v360 = vpack.c.b16 %v310, %v309
  %v361 = vpack.c.b16 %v312, %v311
  %v362 = vpack.c.b16 %v314, %v313
  %v363 = vpack.c.b16 %v316, %v315
  %v364 = vpack.c.b16 %v318, %v317
  %v365 = vpack.c.b16 %v320, %v319
  %v366 = vpack.c.b16 %v322, %v321
  %v367 = vpack.c.b16 %v324, %v323
  %v368 = vpack.c.b16 %v326, %v325
  %v369 = vpack.c.b16 %v328, %v327
  %v370 = vpack.c.b16 %v330, %v329
  %411 = vmatprep.subr.bf16.mxu0 0
  %412 = vmatpush1.bf16.msra.mxu0 %v338
  %413 = vmatprep.subr.bf16.mxu0 0
  %414 = vmatpush1.bf16.msra.mxu0 %v337
  %415 = vmatprep.subr.bf16.mxu0 0
  %416 = vmatpush1.bf16.msra.mxu0 %v336
  %417 = vmatprep.subr.bf16.mxu0 0
  %418 = vmatpush1.bf16.msra.mxu0 %v335
  %419 = vmatprep.subr.bf16.mxu0 0
  %420 = vmatpush1.bf16.msra.mxu0 %v334
  %421 = vmatprep.subr.bf16.mxu0 0
  %422 = vmatpush1.bf16.msra.mxu0 %v333
  %423 = vmatprep.subr.bf16.mxu0 0
  %424 = vmatpush1.bf16.msra.mxu0 %v332
  %425 = vmatprep.subr.bf16.mxu0 0
  %426 = vmatpush1.bf16.msra.mxu0 %v331
  %427 = vmatprep.subr.bf16.mxu0 0
  %428 = vmatpush2.bf16.msra.mxu0 %v346
  %429 = vmatprep.subr.bf16.mxu0 0
  %430 = vmatpush2.bf16.msra.mxu0 %v345
  %431 = vmatprep.subr.bf16.mxu0 0
  %432 = vmatpush2.bf16.msra.mxu0 %v344
  %433 = vmatprep.subr.bf16.mxu0 0
  %434 = vmatpush2.bf16.msra.mxu0 %v343
  %435 = vmatprep.subr.bf16.mxu0 0
  %436 = vmatpush2.bf16.msra.mxu0 %v342
  %437 = vmatprep.subr.bf16.mxu0 0
  %438 = vmatpush2.bf16.msra.mxu0 %v341
  %439 = vmatprep.subr.bf16.mxu0 0
  %440 = vmatpush2.bf16.msra.mxu0 %v340
  %441 = vmatprep.subr.bf16.mxu0 0
  %442 = vmatpush2.bf16.msra.mxu0 %v339
  %443 = vmatprep.mubr.bf16.mxu0 %v152
  %444 = vmatmul.mubr.bf16.gmra.mxu0 %v151
  %v445 = vpop.f32.mrf.mxu0
  %v446 = vadd.f32 0.0, %v445
  %v447 = vpop.f32.mrf.mxu0
  %v448 = vpop.f32.mrf.mxu0
  %v449 = vadd.f32 0.0, %v448
  %v450 = vpop.f32.mrf.mxu0
  %451 = vmatprep.mubr.bf16.mxu0 %v157
  %452 = vmatmul.mubr.bf16.gmra.mxu0 %v156
  %v453 = vpop.f32.mrf.mxu0
  %v454 = vadd.f32 0.0, %v453
  %v455 = vpop.f32.mrf.mxu0
  %v456 = vpop.f32.mrf.mxu0
  %v457 = vadd.f32 0.0, %v456
  %v458 = vpop.f32.mrf.mxu0
  %459 = vdwg.mxu0
  %460 = vmatprep.subr.bf16.mxu0 0
  %461 = vmatpush1.bf16.msra.mxu0 %v354
  %462 = vmatprep.subr.bf16.mxu0 0
  %463 = vmatpush1.bf16.msra.mxu0 %v353
  %464 = vmatprep.subr.bf16.mxu0 0
  %465 = vmatpush1.bf16.msra.mxu0 %v352
  %466 = vmatprep.subr.bf16.mxu0 0
  %467 = vmatpush1.bf16.msra.mxu0 %v351
  %468 = vmatprep.subr.bf16.mxu0 0
  %469 = vmatpush1.bf16.msra.mxu0 %v350
  %470 = vmatprep.subr.bf16.mxu0 0
  %471 = vmatpush1.bf16.msra.mxu0 %v349
  %472 = vmatprep.subr.bf16.mxu0 0
  %473 = vmatpush1.bf16.msra.mxu0 %v348
  %474 = vmatprep.subr.bf16.mxu0 0
  %475 = vmatpush1.bf16.msra.mxu0 %v347
  %476 = vmatprep.subr.bf16.mxu0 0
  %477 = vmatpush2.bf16.msra.mxu0 %v362
  %478 = vmatprep.subr.bf16.mxu0 0
  %479 = vmatpush2.bf16.msra.mxu0 %v361
  %480 = vmatprep.subr.bf16.mxu0 0
  %481 = vmatpush2.bf16.msra.mxu0 %v360
  %482 = vmatprep.subr.bf16.mxu0 0
  %483 = vmatpush2.bf16.msra.mxu0 %v359
  %484 = vmatprep.subr.bf16.mxu0 0
  %485 = vmatpush2.bf16.msra.mxu0 %v358
  %486 = vmatprep.subr.bf16.mxu0 0
  %487 = vmatpush2.bf16.msra.mxu0 %v357
  %488 = vmatprep.subr.bf16.mxu0 0
  %489 = vmatpush2.bf16.msra.mxu0 %v356
  %490 = vmatprep.subr.bf16.mxu0 0
  %491 = vmatpush2.bf16.msra.mxu0 %v355
  %492 = vmatprep.mubr.bf16.mxu0 %v154
  %493 = vmatmul.mubr.bf16.gmra.mxu0 %v153
  %v494 = vpop.f32.mrf.mxu0
  %v495 = vadd.f32 %v446, %v494
  %v496 = vpop.f32.mrf.mxu0
  %v497 = vpop.f32.mrf.mxu0
  %v498 = vadd.f32 %v449, %v497
  %v499 = vpop.f32.mrf.mxu0
  %500 = vmatprep.mubr.bf16.mxu0 %v159
  %501 = vmatmul.mubr.bf16.gmra.mxu0 %v158
  %v502 = vpop.f32.mrf.mxu0
  %v503 = vadd.f32 %v454, %v502
  %v504 = vpop.f32.mrf.mxu0
  %v505 = vpop.f32.mrf.mxu0
  %v506 = vadd.f32 %v457, %v505
  %v507 = vpop.f32.mrf.mxu0
  %508 = vdwg.mxu0
  %509 = vmatprep.subr.bf16.mxu0 0
  %510 = vmatpush1.bf16.msra.mxu0 %v370
  %511 = vmatprep.subr.bf16.mxu0 0
  %512 = vmatpush1.bf16.msra.mxu0 %v369
  %513 = vmatprep.subr.bf16.mxu0 0
  %514 = vmatpush1.bf16.msra.mxu0 %v368
  %515 = vmatprep.subr.bf16.mxu0 0
  %516 = vmatpush1.bf16.msra.mxu0 %v367
  %517 = vmatprep.subr.bf16.mxu0 0
  %518 = vmatpush1.bf16.msra.mxu0 %v366
  %519 = vmatprep.subr.bf16.mxu0 0
  %520 = vmatpush1.bf16.msra.mxu0 %v365
  %521 = vmatprep.subr.bf16.mxu0 0
  %522 = vmatpush1.bf16.msra.mxu0 %v364
  %523 = vmatprep.subr.bf16.mxu0 0
  %524 = vmatpush1.bf16.msra.mxu0 %v363
  %525 = vmatprep.subr.bf16.mxu0 0
  %526 = vmatpush2.bf16.msra.mxu0 0
  %527 = vmatprep.subr.bf16.mxu0 0
  %528 = vmatpush2.bf16.msra.mxu0 0
  %529 = vmatprep.subr.bf16.mxu0 0
  %530 = vmatpush2.bf16.msra.mxu0 0
  %531 = vmatprep.subr.bf16.mxu0 0
  %532 = vmatpush2.bf16.msra.mxu0 0
  %533 = vmatprep.subr.bf16.mxu0 0
  %534 = vmatpush2.bf16.msra.mxu0 0
  %535 = vmatprep.subr.bf16.mxu0 0
  %536 = vmatpush2.bf16.msra.mxu0 0
  %537 = vmatprep.subr.bf16.mxu0 0
  %538 = vmatpush2.bf16.msra.mxu0 0
  %539 = vmatprep.subr.bf16.mxu0 0
  %540 = vmatpush2.bf16.msra.mxu0 0
  %541 = vmatprep.mubr.bf16.mxu0 0
  %542 = vmatmul.mubr.bf16.gmra.mxu0 %v155
  %v543 = vpop.f32.mrf.mxu0
  %v544 = vadd.f32 %v495, %v543
  %v545 = vpop.f32.mrf.mxu0
  %v546 = vpop.f32.mrf.mxu0
  %v547 = vadd.f32 %v498, %v546
  %v548 = vpop.f32.mrf.mxu0
  %549 = vmatprep.mubr.bf16.mxu0 0
  %550 = vmatmul.mubr.bf16.gmra.mxu0 %v160
  %v551 = vpop.f32.mrf.mxu0
  %v552 = vadd.f32 %v503, %v551
  %v553 = vpop.f32.mrf.mxu0
  %v554 = vpop.f32.mrf.mxu0
  %v555 = vadd.f32 %v506, %v554
  %v556 = vpop.f32.mrf.mxu0
  %557 = vdwg.mxu0
  %v558 = vadd.f32 %v23, %v544
  %v559 = vadd.f32 %v24, %v547
  %v560 = vadd.f32 %v25, %v552
  %v561 = vadd.f32 %v26, %v555
  %562 = vst [vmem:[#allocation2] sm:$0xff] %v558
  %563 = vst [vmem:[#allocation2 + $0x8] sm:$0xff] %v559
  %564 = vst [vmem:[#allocation2 + $0x10] sm:$0xff] %v560
  %565 = vst [vmem:[#allocation2 + $0x18] sm:$0xff] %v561
  // Predicated region
  $region18: #{_lambda_.22} parent=0 // pred_check
    %p566 = pneg %p15
  $region19: #{_lambda_.22} parent=0 // pred_check_branch
    %568 = sbr.rel (%p566) target = $region21
  $region20: #{_lambda_.22} parent=0 // pred_region
    %v569 = vld [vmem:[#allocation2] sm:$0xff]
    %v570 = vld [vmem:[#allocation2 + $0x8] sm:$0xff]
    %v571 = vld [vmem:[#allocation2 + $0x10] sm:$0xff]
    %v572 = vld [vmem:[#allocation2 + $0x18] sm:$0xff]
    %v573 = vld [vmem:[%s2] sm:$0x1]
    %v575 = vlaneseq
    %v576 = vshrl.u32 %v575, 7
    %v577 = vsub.s32 0, %v576
    %v578 = vrot.slane %v573, %v577
    %v580 = vadd.f32 %v569, %v578
    %v581 = vadd.f32 %v570, %v578
    %v582 = vadd.f32 %v571, %v578
    %v583 = vadd.f32 %v572, %v578
    %v584 = vmax.f32 %v580, 0.0
    %v585 = vmax.f32 %v581, 0.0
    %v586 = vmax.f32 %v582, 0.0
    %v587 = vmax.f32 %v583, 0.0
    %v588 = vpack.c.bf16 %v585, %v584
    %v589 = vpack.c.bf16 %v587, %v586
    %v592 = vunpack.c.l.b16 %v588
    %v593 = vunpack.c.h.b16 %v588
    %v594 = vunpack.c.l.b16 %v589
    %v595 = vunpack.c.h.b16 %v589
    %v596 = vpack.c.b16 %v592, %v592
    %v597 = vpack.c.b16 %v593, %v593
    %v598 = vpack.c.b16 %v594, %v594
    %v599 = vpack.c.b16 %v595, %v595
    %604 = vst [vmem:[%s3] sm:$0xf] %v596
    %605 = vst [vmem:[%s3 + $0x4] sm:$0xf] %v597
    %606 = vst [vmem:[%s3 + $0x8] sm:$0xf] %v598
    %607 = vst [vmem:[%s3 + $0xc] sm:$0xf] %v599
  $region21: #{_lambda_.22} parent=0 // pred_fallthru
    _
  // Predicated region
  $region22: #{_lambda_.22} parent=0 // pred_check
    _
  $region23: #{_lambda_.22} parent=0 // pred_check_branch
    %609 = sbr.rel (0) target = $region25
  $region24: #{_lambda_.22} parent=0 // pred_region
    _
  $region25: #{_lambda_.22} parent=0 // pred_fallthru
    _
  // Predicated region
  $region26: #{_lambda_.22} parent=0 // pred_check
    _
  $region27: #{_lambda_.22} parent=0 // pred_check_branch
    %611 = sbr.rel (0) target = $region29
  $region28: #{_lambda_.22} parent=0 // pred_region
    _
  $region29: #{_lambda_.22} parent=0 // pred_fallthru
    _

// kernel: _lambda_.21
$region0: #{_lambda_.21}
  #allocation0 [shape = 'u32[]', space=smem, size = 0x4, offset = 0x4, fixed_abs, tag = 'smem constant byte address 0x4 - core index']
  #allocation1 [shape = 'u32[144,128]{1,0:T(1,128)}', space=vmem, size = 0x12000, scoped, tag = 'internal scratch']
  #allocation2 [shape = 'f32[32,128]{1,0:T(8,128)}', space=vmem, size = 0x4000, scoped, tag = 'scratch operand']
  %s0 = inlined_call_operand.vmem [shape: bf16[32,64], index: 0, kind: input, shape index: {}]
  %s1 = inlined_call_operand.vmem [shape: bf16[64,128], index: 1, kind: input, shape index: {}]
  %s2 = inlined_call_operand.vmem [shape: f32[1,128], index: 2, kind: input, shape index: {}]
  %s3 = inlined_call_operand.vmem [shape: bf16[32,128], index: 3, kind: output, shape index: {}]
  %s4 = sld [smem:[#allocation0]]
  $region30: #{_lambda_.21} parent=0
    _
  %s6 = ssub.s32 1, %s4
  %s7 = scalar_select 0, %s6, %s4
  // Predicated region
  $region2: #{_lambda_.21} parent=0 // pred_check
    _
  $region3: #{_lambda_.21} parent=0 // pred_check_branch
    %9 = sbr.rel (0) target = $region5
  $region4: #{_lambda_.21} parent=0 // pred_region
    _
  $region5: #{_lambda_.21} parent=0 // pred_fallthru
    _
  // Predicated region
  $region6: #{_lambda_.21} parent=0 // pred_check
    _
  $region7: #{_lambda_.21} parent=0 // pred_check_branch
    %11 = sbr.rel (0) target = $region9
  $region8: #{_lambda_.21} parent=0 // pred_region
    _
  $region9: #{_lambda_.21} parent=0 // pred_fallthru
    _
  // Predicated region
  $region10: #{_lambda_.21} parent=0 // pred_check
    _
  $region11: #{_lambda_.21} parent=0 // pred_check_branch
    %13 = sbr.rel (0) target = $region13
  $region12: #{_lambda_.21} parent=0 // pred_region
    _
  $region13: #{_lambda_.21} parent=0 // pred_fallthru
    _
  %p15 = scmp.eq.s32.totalorder 0, 0
  // Predicated region
  $region14: #{_lambda_.21} parent=0 // pred_check
    %p16 = pneg %p15
  $region15: #{_lambda_.21} parent=0 // pred_check_branch
    %18 = sbr.rel (%p16) target = $region17
  $region16: #{_lambda_.21} parent=0 // pred_region
    %19 = vst [vmem:[#allocation2] sm:$0xff] 0.0
    %20 = vst [vmem:[#allocation2 + $0x8] sm:$0xff] 0.0
    %21 = vst [vmem:[#allocation2 + $0x10] sm:$0xff] 0.0
    %22 = vst [vmem:[#allocation2 + $0x18] sm:$0xff] 0.0
  $region17: #{_lambda_.21} parent=0 // pred_fallthru
    _
  %v23 = vld [vmem:[#allocation2] sm:$0xff]
  %v24 = vld [vmem:[#allocation2 + $0x8] sm:$0xff]
  %v25 = vld [vmem:[#allocation2 + $0x10] sm:$0xff]
  %v26 = vld [vmem:[#allocation2 + $0x18] sm:$0xff]
  %v27 = vld [vmem:[%s0] sm:$0xf]
  %v28 = vld [vmem:[%s0 + $0x4] sm:$0xf]
  %v29 = vld [vmem:[%s0 + $0x8] sm:$0xf]
  %v30 = vld [vmem:[%s0 + $0xc] sm:$0xf]
  %v31 = vld [vmem:[%s1] sm:$0xf]
  %v32 = vld [vmem:[%s1 + $0x4] sm:$0xf]
  %v33 = vld [vmem:[%s1 + $0x8] sm:$0xf]
  %v34 = vld [vmem:[%s1 + $0xc] sm:$0xf]
  %v35 = vld [vmem:[%s1 + $0x10] sm:$0xf]
  %v36 = vld [vmem:[%s1 + $0x14] sm:$0xf]
  %v37 = vld [vmem:[%s1 + $0x18] sm:$0xf]
  %v38 = vld [vmem:[%s1 + $0x1c] sm:$0xf]
  %v43 = vunpack.c.l.b16 %v27
  %v44 = vunpack.c.l.b16 %v28
  %v45 = vunpack.c.l.b16 %v29
  %v46 = vunpack.c.l.b16 %v30
  %v47 = vpack.c.b16 %v44, %v43
  %v48 = vpack.c.b16 %v46, %v45
  %v57 = vunpack.c.l.b16 %v31
  %v58 = vunpack.c.l.b16 %v32
  %v59 = vunpack.c.l.b16 %v33
  %v60 = vunpack.c.l.b16 %v34
  %v61 = vunpack.c.l.b16 %v35
  %v62 = vunpack.c.l.b16 %v36
  %v63 = vunpack.c.l.b16 %v37
  %v64 = vunpack.c.l.b16 %v38
  %v65 = vpack.c.b16 %v58, %v57
  %v66 = vpack.c.b16 %v60, %v59
  %v67 = vpack.c.b16 %v62, %v61
  %v68 = vpack.c.b16 %v64, %v63
  %vm73 = vcmask 523264
  %v75 = vsel %vm73, %v47, 0
  %v78 = vsel %vm73, %v48, 0
  %80 = vmatprep.subr.bf16.mxu0 0
  %81 = vmatpush1.bf16.msra.mxu0 0
  %82 = vmatprep.subr.bf16.mxu0 0
  %83 = vmatpush1.bf16.msra.mxu0 0
  %84 = vmatprep.subr.bf16.mxu0 0
  %85 = vmatpush1.bf16.msra.mxu0 0
  %86 = vmatprep.subr.bf16.mxu0 0
  %87 = vmatpush1.bf16.msra.mxu0 0
  %88 = vmatprep.subr.bf16.mxu0 0
  %89 = vmatpush1.bf16.msra.mxu0 %v68
  %90 = vmatprep.subr.bf16.mxu0 0
  %91 = vmatpush1.bf16.msra.mxu0 %v67
  %92 = vmatprep.subr.bf16.mxu0 0
  %93 = vmatpush1.bf16.msra.mxu0 %v66
  %94 = vmatprep.subr.bf16.mxu0 0
  %95 = vmatpush1.bf16.msra.mxu0 %v65
  %96 = vmatprep.subr.bf16.mxu0 0
  %97 = vmatpush2.bf16.msra.mxu0 0
  %98 = vmatprep.subr.bf16.mxu0 0
  %99 = vmatpush2.bf16.msra.mxu0 0
  %100 = vmatprep.subr.bf16.mxu0 0
  %101 = vmatpush2.bf16.msra.mxu0 0
  %102 = vmatprep.subr.bf16.mxu0 0
  %103 = vmatpush2.bf16.msra.mxu0 0
  %104 = vmatprep.subr.bf16.mxu0 0
  %105 = vmatpush2.bf16.msra.mxu0 0
  %106 = vmatprep.subr.bf16.mxu0 0
  %107 = vmatpush2.bf16.msra.mxu0 0
  %108 = vmatprep.subr.bf16.mxu0 0
  %109 = vmatpush2.bf16.msra.mxu0 0
  %110 = vmatprep.subr.bf16.mxu0 0
  %111 = vmatpush2.bf16.msra.mxu0 0
  %112 = vmatprep.mubr.bf16.mxu0 0
  %113 = vmatmul.mubr.bf16.gmra.mxu0 %v75
  %v114 = vpop.f32.mrf.mxu0
  %v115 = vadd.f32 0.0, %v114
  %v116 = vpop.f32.mrf.mxu0
  %v117 = vpop.f32.mrf.mxu0
  %v118 = vadd.f32 0.0, %v117
  %v119 = vpop.f32.mrf.mxu0
  %120 = vmatprep.mubr.bf16.mxu0 0
  %121 = vmatmul.mubr.bf16.gmra.mxu0 %v78
  %v122 = vpop.f32.mrf.mxu0
  %v123 = vadd.f32 0.0, %v122
  %v124 = vpop.f32.mrf.mxu0
  %v125 = vpop.f32.mrf.mxu0
  %v126 = vadd.f32 0.0, %v125
  %v127 = vpop.f32.mrf.mxu0
  %128 = vdwg.mxu0
  %v129 = vadd.f32 %v23, %v115
  %v130 = vadd.f32 %v24, %v118
  %v131 = vadd.f32 %v25, %v123
  %v132 = vadd.f32 %v26, %v126
  %133 = vst [vmem:[#allocation2] sm:$0xff] %v129
  %134 = vst [vmem:[#allocation2 + $0x8] sm:$0xff] %v130
  %135 = vst [vmem:[#allocation2 + $0x10] sm:$0xff] %v131
  %136 = vst [vmem:[#allocation2 + $0x18] sm:$0xff] %v132
  // Predicated region
  $region18: #{_lambda_.21} parent=0 // pred_check
    %p137 = pneg %p15
  $region19: #{_lambda_.21} parent=0 // pred_check_branch
    %139 = sbr.rel (%p137) target = $region21
  $region20: #{_lambda_.21} parent=0 // pred_region
    %v140 = vld [vmem:[#allocation2] sm:$0xff]
    %v141 = vld [vmem:[#allocation2 + $0x8] sm:$0xff]
    %v142 = vld [vmem:[#allocation2 + $0x10] sm:$0xff]
    %v143 = vld [vmem:[#allocation2 + $0x18] sm:$0xff]
    %v144 = vld [vmem:[%s2] sm:$0x1]
    %v146 = vlaneseq
    %v147 = vshrl.u32 %v146, 7
    %v148 = vsub.s32 0, %v147
    %v149 = vrot.slane %v144, %v148
    %v151 = vadd.f32 %v140, %v149
    %v152 = vadd.f32 %v141, %v149
    %v153 = vadd.f32 %v142, %v149
    %v154 = vadd.f32 %v143, %v149
    %v155 = vpack.c.bf16 %v152, %v151
    %v156 = vpack.c.bf16 %v154, %v153
    %v159 = vunpack.c.l.b16 %v155
    %v160 = vunpack.c.h.b16 %v155
    %v161 = vunpack.c.l.b16 %v156
    %v162 = vunpack.c.h.b16 %v156
    %v163 = vpack.c.b16 %v159, %v159
    %v164 = vpack.c.b16 %v160, %v160
    %v165 = vpack.c.b16 %v161, %v161
    %v166 = vpack.c.b16 %v162, %v162
    %171 = vst [vmem:[%s3] sm:$0xf] %v163
    %172 = vst [vmem:[%s3 + $0x4] sm:$0xf] %v164
    %173 = vst [vmem:[%s3 + $0x8] sm:$0xf] %v165
    %174 = vst [vmem:[%s3 + $0xc] sm:$0xf] %v166
  $region21: #{_lambda_.21} parent=0 // pred_fallthru
    _
  // Predicated region
  $region22: #{_lambda_.21} parent=0 // pred_check
    _
  $region23: #{_lambda_.21} parent=0 // pred_check_branch
    %176 = sbr.rel (0) target = $region25
  $region24: #{_lambda_.21} parent=0 // pred_region
    _
  $region25: #{_lambda_.21} parent=0 // pred_fallthru
    _
  // Predicated region
  $region26: #{_lambda_.21} parent=0 // pred_check
    _
  $region27: #{_lambda_.21} parent=0 // pred_check_branch
    %178 = sbr.rel (0) target = $region29
  $region28: #{_lambda_.21} parent=0 // pred_region
    _
  $region29: #{_lambda_.21} parent=0 // pred_fallthru
    _

// kernel: _lambda_.23
$region0: #{_lambda_.23}
  #allocation0 [shape = 'u32[]', space=smem, size = 0x4, offset = 0x4, fixed_abs, tag = 'smem constant byte address 0x4 - core index']
  #allocation1 [shape = 'u32[144,128]{1,0:T(1,128)}', space=vmem, size = 0x12000, scoped, tag = 'internal scratch']
  #allocation2 [shape = 'f32[32,128]{1,0:T(8,128)}', space=vmem, size = 0x4000, scoped, tag = 'scratch operand']
  %s0 = inlined_call_operand.vmem [shape: bf16[32,1152], index: 0, kind: input, shape index: {}]
  %s1 = inlined_call_operand.vmem [shape: bf16[1152,128], index: 1, kind: input, shape index: {}]
  %s2 = inlined_call_operand.vmem [shape: f32[1,128], index: 2, kind: input, shape index: {}]
  %s3 = inlined_call_operand.vmem [shape: bf16[32,128], index: 3, kind: input, shape index: {}]
  %s4 = inlined_call_operand.vmem [shape: bf16[32,128], index: 4, kind: output, shape index: {}]
  %s5 = sld [smem:[#allocation0]]
  $region83: #{_lambda_.23} parent=0
    _
  %s7 = ssub.s32 1, %s5
  %s8 = scalar_select 0, %s7, %s5
  $region1: #{_lambda_.23} parent=0
    #allocation3 [shape = 'u8[49152]{0}', space=vmem, size = 0xc000, scoped, tag = 'input window, operand 0']
    loop: start=0, step=1, limit=5
    $region2: #{_lambda_.23} parent=1 // loop_pre_header
      _
    $region3: #{_lambda_.23} parent=1 // loop_header
      %s10 = sphi 0, %s14
      %p11 = scmp.ge.s32.totalorder %s10, 5
      %s17 = sphi 0, %s36
      %s18 = sphi 0, %s32
      %s19 = sphi 0, %s28
      %s20 = sphi 0, %s17
      %s21 = sphi 0, %s18
      %s22 = sphi 0, %s19
      %s23 = sphi 0, %s20
      %s24 = sphi 0, %s21
      %s25 = sphi 0, %s22
      %s41 = sphi 0, %s43
      %s44 = sphi 0, %s41
      %s45 = sphi 0, %s44
      %s61 = sphi 0, %s45
      %s69 = sphi 0, %s71
      %s72 = sphi 0, %s69
      %s73 = sphi 0, %s72
      %s89 = sphi 0, %s73
      %s95 = sphi 0, %s97
      %s98 = sphi 0, %s95
      %s99 = sphi 0, %s98
      %s115 = sphi 0, %s99
      %s123 = sphi 0, %s125
      %s126 = sphi 0, %s123
      %s127 = sphi 0, %s126
      %s143 = sphi 0, %s127
      %s151 = sphi 0, %s153
      %s154 = sphi 0, %s151
      %s155 = sphi 0, %s154
      %s171 = sphi 0, %s155
    $region4: #{_lambda_.23} parent=1 // loop_header_branch
      %13 = sbr.rel (%p11) target = $region8
    $region5: #{_lambda_.23} parent=1 // loop_body
      %s15 = ssub.s32 %s10, 1
      %s16 = ssub.s32 %s10, 2
      %s26 = sadd.s32 1, %s19
      %p27 = scmp.ge.s32.totalorder %s26, 3
      %s28 = scalar_select %p27, 0, %s26
      %s29 = sadd.s32 1, %s18
      %s30 = scalar_select %p27, %s29, %s18
      %p31 = scmp.ge.s32.totalorder %s30, 1
      %s32 = scalar_select %p31, 0, %s30
      %s33 = sadd.s32 1, %s17
      %s34 = scalar_select %p31, %s33, %s17
      %p35 = scmp.ge.s32.totalorder %s34, 1
      %s36 = scalar_select %p35, 0, %s34
      %s37 = ssub.s32 %s17, %s36
      %s38 = ssub.s32 %s19, %s28
      %s39 = sor.u32 %s37, %s38
      %p40 = scmp.eq.s32.totalorder %s39, 0
      %s42 = sadd.s32 %s41, 1
      %s43 = scalar_select %p40, %s41, %s42
      %p46 = pneg %p40
      %p47 = scmp.eq.s32.totalorder %s10, 2
      %p48 = por %p46, %p47
      %p49 = scmp.ne.s32.totalorder %s41, %s44
      %p50 = scmp.eq.s32.totalorder %s10, 0
      %p51 = por %p49, %p50
      %p52 = scmp.ne.s32.totalorder %s41, %s44
      %p53 = scmp.eq.s32.totalorder %s15, 2
      %p54 = por %p52, %p53
      %p55 = scmp.ne.s32.totalorder %s44, %s45
      %p56 = scmp.eq.s32.totalorder %s15, 0
      %p57 = por %p55, %p56
      %p58 = scmp.ne.s32.totalorder %s44, %s45
      %p59 = scmp.eq.s32.totalorder %s16, 2
      %p60 = por %p58, %p59
      %p62 = scmp.ne.s32.totalorder %s45, %s61
      %p63 = scmp.eq.s32.totalorder %s16, 0
      %p64 = por %p62, %p63
      %s65 = ssub.s32 %s19, %s28
      %s66 = ssub.s32 %s18, %s32
      %s67 = sor.u32 %s65, %s66
      %p68 = scmp.eq.s32.totalorder %s67, 0
      %s70 = sadd.s32 %s69, 1
      %s71 = scalar_select %p68, %s69, %s70
      %p74 = pneg %p68
      %p75 = scmp.eq.s32.totalorder %s10, 2
      %p76 = por %p74, %p75
      %p77 = scmp.ne.s32.totalorder %s69, %s72
      %p78 = scmp.eq.s32.totalorder %s10, 0
      %p79 = por %p77, %p78
      %p80 = scmp.ne.s32.totalorder %s69, %s72
      %p81 = scmp.eq.s32.totalorder %s15, 2
      %p82 = por %p80, %p81
      %p83 = scmp.ne.s32.totalorder %s72, %s73
      %p84 = scmp.eq.s32.totalorder %s15, 0
      %p85 = por %p83, %p84
      %p86 = scmp.ne.s32.totalorder %s72, %s73
      %p87 = scmp.eq.s32.totalorder %s16, 2
      %p88 = por %p86, %p87
      %p90 = scmp.ne.s32.totalorder %s73, %s89
      %p91 = scmp.eq.s32.totalorder %s16, 0
      %p92 = por %p90, %p91
      %s93 = ssub.s32 %s18, %s32
      %p94 = scmp.eq.s32.totalorder %s93, 0
      %s96 = sadd.s32 %s95, 1
      %s97 = scalar_select %p94, %s95, %s96
      %p100 = pneg %p94
      %p101 = scmp.eq.s32.totalorder %s10, 2
      %p102 = por %p100, %p101
      %p103 = scmp.ne.s32.totalorder %s95, %s98
      %p104 = scmp.eq.s32.totalorder %s10, 0
      %p105 = por %p103, %p104
      %p106 = scmp.ne.s32.totalorder %s95, %s98
      %p107 = scmp.eq.s32.totalorder %s15, 2
      %p108 = por %p106, %p107
      %p109 = scmp.ne.s32.totalorder %s98, %s99
      %p110 = scmp.eq.s32.totalorder %s15, 0
      %p111 = por %p109, %p110
      %p112 = scmp.ne.s32.totalorder %s98, %s99
      %p113 = scmp.eq.s32.totalorder %s16, 2
      %p114 = por %p112, %p113
      %p116 = scmp.ne.s32.totalorder %s99, %s115
      %p117 = scmp.eq.s32.totalorder %s16, 0
      %p118 = por %p116, %p117
      %s119 = ssub.s32 %s17, %s36
      %s120 = ssub.s32 %s18, %s32
      %s121 = sor.u32 %s119, %s120
      %p122 = scmp.eq.s32.totalorder %s121, 0
      %s124 = sadd.s32 %s123, 1
      %s125 = scalar_select %p122, %s123, %s124
      %p128 = pneg %p122
      %p129 = scmp.eq.s32.totalorder %s10, 2
      %p130 = por %p128, %p129
      %p131 = scmp.ne.s32.totalorder %s123, %s126
      %p132 = scmp.eq.s32.totalorder %s10, 0
      %p133 = por %p131, %p132
      %p134 = scmp.ne.s32.totalorder %s123, %s126
      %p135 = scmp.eq.s32.totalorder %s15, 2
      %p136 = por %p134, %p135
      %p137 = scmp.ne.s32.totalorder %s126, %s127
      %p138 = scmp.eq.s32.totalorder %s15, 0
      %p139 = por %p137, %p138
      %p140 = scmp.ne.s32.totalorder %s126, %s127
      %p141 = scmp.eq.s32.totalorder %s16, 2
      %p142 = por %p140, %p141
      %p144 = scmp.ne.s32.totalorder %s127, %s143
      %p145 = scmp.eq.s32.totalorder %s16, 0
      %p146 = por %p144, %p145
      %s147 = ssub.s32 %s17, %s36
      %s148 = ssub.s32 %s18, %s32
      %s149 = sor.u32 %s147, %s148
      %p150 = scmp.eq.s32.totalorder %s149, 0
      %s152 = sadd.s32 %s151, 1
      %s153 = scalar_select %p150, %s151, %s152
      %p156 = pneg %p150
      %p157 = scmp.eq.s32.totalorder %s10, 2
      %p158 = por %p156, %p157
      %p159 = scmp.ne.s32.totalorder %s151, %s154
      %p160 = scmp.eq.s32.totalorder %s10, 0
      %p161 = por %p159, %p160
      %p162 = scmp.ne.s32.totalorder %s151, %s154
      %p163 = scmp.eq.s32.totalorder %s15, 2
      %p164 = por %p162, %p163
      %p165 = scmp.ne.s32.totalorder %s154, %s155
      %p166 = scmp.eq.s32.totalorder %s15, 0
      %p167 = por %p165, %p166
      %p168 = scmp.ne.s32.totalorder %s154, %s155
      %p169 = scmp.eq.s32.totalorder %s16, 2
      %p170 = por %p168, %p169
      %p172 = scmp.ne.s32.totalorder %s155, %s171
      %p173 = scmp.eq.s32.totalorder %s16, 0
      %p174 = por %p172, %p173
      %p175 = scmp.le.s32.totalorder 1, %s10
      %p176 = scmp.lt.s32.totalorder %s10, 4
      %p177 = pnand %p175, %p176
      %p178 = pneg %p177
      // Predicated region
      $region9: #{_lambda_.23} parent=5 // pred_check
        _
      $region10: #{_lambda_.23} parent=5 // pred_check_branch
        %180 = sbr.rel (%p177) target = $region12
      $region11: #{_lambda_.23} parent=5 // pred_region
        %s181 = ssub.s32 %s10, 1
        // Predicated region
        $region13: #{_lambda_.23} parent=11 // pred_check
          %p182 = pneg %p111
        $region14: #{_lambda_.23} parent=11 // pred_check_branch
          %184 = sbr.rel (%p182) target = $region16
        $region15: #{_lambda_.23} parent=11 // pred_region
          %p185 = scmp.lt.s32.totalorder %s21, 0
          %s186 = scalar_select %p185, %s21, 0
          %s187 = scalar_lea.vmem %s2, %s186
        $region16: #{_lambda_.23} parent=11 // pred_fallthru
          _
        // Predicated region
        $region17: #{_lambda_.23} parent=11 // pred_check
          %p188 = pneg %p139
        $region18: #{_lambda_.23} parent=11 // pred_check_branch
          %190 = sbr.rel (%p188) target = $region20
        $region19: #{_lambda_.23} parent=11 // pred_region
          %s191 = smul.u32 4, %s20
          %p192 = scmp.lt.s32.totalorder %s191, 3
          %s193 = scalar_select %p192, %s191, 3
          %p194 = scmp.lt.s32.totalorder %s21, 0
          %s195 = scalar_select %p194, %s21, 0
          %s196 = sadd.s32 %s195, %s193
          %s197 = smul.addr %s196, 4
          %s198 = scalar_lea.vmem %s3, %s197
          %s199 = smul.u32 4, %s20
        $region20: #{_lambda_.23} parent=11 // pred_fallthru
          _
      $region12: #{_lambda_.23} parent=5 // pred_fallthru
        _
      %p200 = scmp.lt.s32.totalorder %s10, 3
      // Predicated region
      $region21: #{_lambda_.23} parent=5 // pred_check
        %p201 = pneg %p200
      $region22: #{_lambda_.23} parent=5 // pred_check_branch
        %203 = sbr.rel (%p201) target = $region24
      $region23: #{_lambda_.23} parent=5 // pred_region
        // Predicated region
        $region25: #{_lambda_.23} parent=23 // pred_check
          %p204 = pneg %p51
        $region26: #{_lambda_.23} parent=23 // pred_check_branch
          %206 = sbr.rel (%p204) target = $region28
        $region27: #{_lambda_.23} parent=23 // pred_region
          %s207 = sand.u32 %s41, 1
          %s208 = sand.u32 %s41, 1
          %s209 = smul.addr %s208, 48
          %s210 = scalar_lea.vmem [#allocation3], %s209
          %s211 = smul.u32 4, %s17
          %s212 = smul.u32 3, %s19
          %s213 = smul.addr %s211, 9
          %s214 = sadd.s32 %s212, %s213
          %s215 = smul.addr %s214, 4
          %s216 = scalar_lea.vmem %s0, %s215
          // Predicated region
          $region29: #{_lambda_.23} parent=27 // pred_check
            _
          $region30: #{_lambda_.23} parent=27 // pred_check_branch
            %218 = sbr.rel (0) target = $region32
          $region31: #{_lambda_.23} parent=27 // pred_region
            // Predicated region
            $region33: #{_lambda_.23} parent=31 // pred_check
              _
            $region34: #{_lambda_.23} parent=31 // pred_check_branch
              %220 = sbr.rel (0) target = $region36
            $region35: #{_lambda_.23} parent=31 // pred_region
              %s221 = scalar_lea.vmem %s216, 8
              %s222 = scalar_lea.vmem %s210, 8 [#allocation3]
              loop: start=0, step=1, limit=1
              $region37: #{_lambda_.23} parent=35 // loop_pre_header
                _
              $region38: #{_lambda_.23} parent=35 // loop_header
                %s224 = sphi 0, %s228
                %p225 = scmp.ge.s32.totalorder %s224, 1
                %s229 = sphi %s216, %s216
                %s230 = sphi %s210, %s210
              $region39: #{_lambda_.23} parent=35 // loop_header_branch
                %227 = sbr.rel (%p225) target = $region43
              $region40: #{_lambda_.23} parent=35 // loop_body
                %v231 = vld [vmem:[%s229] sm:$0xff]
                %232 = vst [vmem:[%s230] sm:$0xff] %v231
                %v233 = vld [vmem:[%s229 + $0x24] sm:$0xff]
                %234 = vst [vmem:[%s230 + $0xc] sm:$0xff] %v233
                %v235 = vld [vmem:[%s229 + $0x48] sm:$0xff]
                %236 = vst [vmem:[%s230 + $0x18] sm:$0xff] %v235
                %v237 = vld [vmem:[%s229 + $0x6c] sm:$0xff]
                %238 = vst [vmem:[%s230 + $0x24] sm:$0xff] %v237
              $region41: #{_lambda_.23} parent=35 // loop_footer
                %s228 = sadd.s32 1, %s224
              $region42: #{_lambda_.23} parent=35 // loop_footer_branch
                %223 = sbr.rel target = $region38
              $region43: #{_lambda_.23} parent=35 // loop_exit
                _
              %s240 = ssub.s32 16, 1
              loop: start=0, step=1, limit=1
              $region44: #{_lambda_.23} parent=35 // loop_pre_header
                _
              $region45: #{_lambda_.23} parent=35 // loop_header
                %s242 = sphi 0, %s246
                %p243 = scmp.ge.s32.totalorder %s242, 1
                %s247 = sphi %s221, %s221
                %s248 = sphi %s222, %s222
              $region46: #{_lambda_.23} parent=35 // loop_header_branch
                %245 = sbr.rel (%p243) target = $region50
              $region47: #{_lambda_.23} parent=35 // loop_body
                %v249 = vld [vmem:[%s247] sm:%s240]
                %250 = vst [vmem:[%s248] sm:%s240] %v249
                %v251 = vld [vmem:[%s247 + $0x24] sm:%s240]
                %252 = vst [vmem:[%s248 + $0xc] sm:%s240] %v251
                %v253 = vld [vmem:[%s247 + $0x48] sm:%s240]
                %254 = vst [vmem:[%s248 + $0x18] sm:%s240] %v253
                %v255 = vld [vmem:[%s247 + $0x6c] sm:%s240]
                %256 = vst [vmem:[%s248 + $0x24] sm:%s240] %v255
              $region48: #{_lambda_.23} parent=35 // loop_footer
                %s246 = sadd.s32 1, %s242
              $region49: #{_lambda_.23} parent=35 // loop_footer_branch
                %241 = sbr.rel target = $region45
              $region50: #{_lambda_.23} parent=35 // loop_exit
                _
            $region36: #{_lambda_.23} parent=31 // pred_fallthru
              _
          $region32: #{_lambda_.23} parent=27 // pred_fallthru
            _
          %257 = vnop
        $region28: #{_lambda_.23} parent=23 // pred_fallthru
          _
        // Predicated region
        $region51: #{_lambda_.23} parent=23 // pred_check
          %p258 = pneg %p79
        $region52: #{_lambda_.23} parent=23 // pred_check_branch
          %260 = sbr.rel (%p258) target = $region54
        $region53: #{_lambda_.23} parent=23 // pred_region
          %s261 = smul.u32 48, %s19
          %p262 = scmp.lt.s32.totalorder %s261, 143
          %s263 = scalar_select %p262, %s261, 143
          %p264 = scmp.lt.s32.totalorder %s18, 0
          %s265 = scalar_select %p264, %s18, 0
          %s266 = sadd.s32 %s265, %s263
          %s267 = smul.addr %s266, 4
          %s268 = scalar_lea.vmem %s1, %s267
          %s269 = smul.u32 48, %s19
        $region54: #{_lambda_.23} parent=23 // pred_fallthru
          _
      $region24: #{_lambda_.23} parent=5 // pred_fallthru
        _
      %p270 = scmp.le.s32.totalorder 1, %s10
      %p271 = scmp.lt.s32.totalorder %s10, 4
      %p272 = pnand %p270, %p271
      %p273 = pneg %p272
      // Predicated region
      $region55: #{_lambda_.23} parent=5 // pred_check
        _
      $region56: #{_lambda_.23} parent=5 // pred_check_branch
        %275 = sbr.rel (%p272) target = $region58
      $region57: #{_lambda_.23} parent=5 // pred_region
        %s276 = ssub.s32 %s10, 1
        %s277 = sand.u32 %s44, 1
        %s278 = sand.u32 %s44, 1
        %s279 = smul.addr %s278, 48
        %s280 = scalar_lea.vmem [#allocation3], %s279
        // Predicated region
        $region59: #{_lambda_.23} parent=57 // pred_check
          %p281 = pneg %p57
        $region60: #{_lambda_.23} parent=57 // pred_check_branch
          %283 = sbr.rel (%p281) target = $region62
        $region61: #{_lambda_.23} parent=57 // pred_region
          _
        $region62: #{_lambda_.23} parent=57 // pred_fallthru
          _
        %s284 = sand.u32 %s44, 1
        %s285 = sand.u32 %s44, 1
        %s286 = smul.addr %s285, 48
        %s287 = scalar_lea.vmem [#allocation3], %s286
        %p288 = pneg %p57
        %p289 = pneg %p54
        %s290 = smul.u32 48, %s22
        %p291 = scmp.lt.s32.totalorder %s290, 143
        %s292 = scalar_select %p291, %s290, 143
        %p293 = scmp.lt.s32.totalorder %s21, 0
        %s294 = scalar_select %p293, %s21, 0
        %s295 = sadd.s32 %s294, %s292
        %s296 = smul.addr %s295, 4
        %s297 = scalar_lea.vmem %s1, %s296
        %p298 = pneg %p85
        %p299 = pneg %p82
        %p300 = scmp.lt.s32.totalorder %s21, 0
        %s301 = scalar_select %p300, %s21, 0
        %s302 = scalar_lea.vmem %s2, %s301
        %p303 = pneg %p111
        %p304 = pneg %p108
        %s305 = smul.u32 4, %s20
        %p306 = scmp.lt.s32.totalorder %s305, 3
        %s307 = scalar_select %p306, %s305, 3
        %p308 = scmp.lt.s32.totalorder %s21, 0
        %s309 = scalar_select %p308, %s21, 0
        %s310 = sadd.s32 %s309, %s307
        %s311 = smul.addr %s310, 4
        %s312 = scalar_lea.vmem %s3, %s311
        %p313 = pneg %p139
        %p314 = pneg %p136
        %p315 = pneg %p167
        %p316 = pneg %p164
        %s317 = smul.u32 4, %s20
        %p318 = scmp.lt.s32.totalorder %s317, 3
        %s319 = scalar_select %p318, %s317, 3
        %p320 = scmp.lt.s32.totalorder %s21, 0
        %s321 = scalar_select %p320, %s21, 0
        %s322 = sadd.s32 %s321, %s319
        %s323 = smul.addr %s322, 4
        %s324 = scalar_lea.vmem %s4, %s323
        %s325 = smul.u32 4, %s20
        %s326 = smul.u32 3, %s22
        %s327 = smul.u32 48, %s22
        %p328 = scmp.lt.s32.totalorder %s327, 143
        %s329 = scalar_select %p328, %s327, 143
        %p330 = scmp.lt.s32.totalorder %s21, 0
        %s331 = scalar_select %p330, %s21, 0
        %s332 = sadd.s32 %s331, %s329
        %s333 = smul.addr %s332, 4
        %s334 = scalar_lea.vmem %s1, %s333
        %s335 = smul.u32 48, %s22
        %p336 = scmp.lt.s32.totalorder %s21, 0
        %s337 = scalar_select %p336, %s21, 0
        %s338 = scalar_lea.vmem %s2, %s337
        %s339 = smul.u32 4, %s20
        %p340 = scmp.lt.s32.totalorder %s339, 3
        %s341 = scalar_select %p340, %s339, 3
        %p342 = scmp.lt.s32.totalorder %s21, 0
        %s343 = scalar_select %p342, %s21, 0
        %s344 = sadd.s32 %s343, %s341
        %s345 = smul.addr %s344, 4
        %s346 = scalar_lea.vmem %s3, %s345
        %s347 = smul.u32 4, %s20
        %s348 = smul.u32 4, %s20
        %p349 = scmp.lt.s32.totalorder %s348, 3
        %s350 = scalar_select %p349, %s348, 3
        %p351 = scmp.lt.s32.totalorder %s21, 0
        %s352 = scalar_select %p351, %s21, 0
        %s353 = sadd.s32 %s352, %s350
        %s354 = smul.addr %s353, 4
        %s355 = scalar_lea.vmem %s4, %s354
        %s356 = smul.u32 4, %s20
        %p358 = scmp.eq.s32.totalorder %s22, 0
        // Predicated region
        $region63: #{_lambda_.23} parent=57 // pred_check
          %p359 = pneg %p358
        $region64: #{_lambda_.23} parent=57 // pred_check_branch
          %361 = sbr.rel (%p359) target = $region66
        $region65: #{_lambda_.23} parent=57 // pred_region
          %362 = vst [vmem:[#allocation2] sm:$0xff] 0.0
          %363 = vst [vmem:[#allocation2 + $0x8] sm:$0xff] 0.0
          %364 = vst [vmem:[#allocation2 + $0x10] sm:$0xff] 0.0
          %365 = vst [vmem:[#allocation2 + $0x18] sm:$0xff] 0.0
        $region66: #{_lambda_.23} parent=57 // pred_fallthru
          _
        %v366 = vld [vmem:[#allocation2] sm:$0xff]
        %v367 = vld [vmem:[#allocation2 + $0x8] sm:$0xff]
        %v368 = vld [vmem:[#allocation2 + $0x10] sm:$0xff]
        %v369 = vld [vmem:[#allocation2 + $0x18] sm:$0xff]
        %v370 = vld [vmem:[%s280] sm:$0xff]
        %v371 = vld [vmem:[%s280 + $0x8] sm:$0xf]
        %v372 = vld [vmem:[%s280 + $0xc] sm:$0xff]
        %v373 = vld [vmem:[%s280 + $0x14] sm:$0xf]
        %v374 = vld [vmem:[%s280 + $0x18] sm:$0xff]
        %v375 = vld [vmem:[%s280 + $0x20] sm:$0xf]
        %v376 = vld [vmem:[%s280 + $0x24] sm:$0xff]
        %v377 = vld [vmem:[%s280 + $0x2c] sm:$0xf]
        %v378 = vld [vmem:[%s334] sm:$0xf]
        %v379 = vld [vmem:[%s334 + $0x4] sm:$0xf]
        %v380 = vld [vmem:[%s334 + $0x8] sm:$0xf]
        %v381 = vld [vmem:[%s334 + $0xc] sm:$0xf]
        %v382 = vld [vmem:[%s334 + $0x10] sm:$0xf]
        %v383 = vld [vmem:[%s334 + $0x14] sm:$0xf]
        %v384 = vld [vmem:[%s334 + $0x18] sm:$0xf]
        %v385 = vld [vmem:[%s334 + $0x1c] sm:$0xf]
        %v386 = vld [vmem:[%s334 + $0x20] sm:$0xf]
        %v387 = vld [vmem:[%s334 + $0x24] sm:$0xf]
        %v388 = vld [vmem:[%s334 + $0x28] sm:$0xf]
        %v389 = vld [vmem:[%s334 + $0x2c] sm:$0xf]
        %v390 = vld [vmem:[%s334 + $0x30] sm:$0xf]
        %v391 = vld [vmem:[%s334 + $0x34] sm:$0xf]
        %v392 = vld [vmem:[%s334 + $0x38] sm:$0xf]
        %v393 = vld [vmem:[%s334 + $0x3c] sm:$0xf]
        %v394 = vld [vmem:[%s334 + $0x40] sm:$0xf]
        %v395 = vld [vmem:[%s334 + $0x44] sm:$0xf]
        %v396 = vld [vmem:[%s334 + $0x48] sm:$0xf]
        %v397 = vld [vmem:[%s334 + $0x4c] sm:$0xf]
        %v398 = vld [vmem:[%s334 + $0x50] sm:$0xf]
        %v399 = vld [vmem:[%s334 + $0x54] sm:$0xf]
        %v400 = vld [vmem:[%s334 + $0x58] sm:$0xf]
        %v401 = vld [vmem:[%s334 + $0x5c] sm:$0xf]
        %v402 = vld [vmem:[%s334 + $0x60] sm:$0xf]
        %v403 = vld [vmem:[%s334 + $0x64] sm:$0xf]
        %v404 = vld [vmem:[%s334 + $0x68] sm:$0xf]
        %v405 = vld [vmem:[%s334 + $0x6c] sm:$0xf]
        %v406 = vld [vmem:[%s334 + $0x70] sm:$0xf]
        %v407 = vld [vmem:[%s334 + $0x74] sm:$0xf]
        %v408 = vld [vmem:[%s334 + $0x78] sm:$0xf]
        %v409 = vld [vmem:[%s334 + $0x7c] sm:$0xf]
        %v410 = vld [vmem:[%s334 + $0x80] sm:$0xf]
        %v411 = vld [vmem:[%s334 + $0x84] sm:$0xf]
        %v412 = vld [vmem:[%s334 + $0x88] sm:$0xf]
        %v413 = vld [vmem:[%s334 + $0x8c] sm:$0xf]
        %v414 = vld [vmem:[%s334 + $0x90] sm:$0xf]
        %v415 = vld [vmem:[%s334 + $0x94] sm:$0xf]
        %v416 = vld [vmem:[%s334 + $0x98] sm:$0xf]
        %v417 = vld [vmem:[%s334 + $0x9c] sm:$0xf]
        %v418 = vld [vmem:[%s334 + $0xa0] sm:$0xf]
        %v419 = vld [vmem:[%s334 + $0xa4] sm:$0xf]
        %v420 = vld [vmem:[%s334 + $0xa8] sm:$0xf]
        %v421 = vld [vmem:[%s334 + $0xac] sm:$0xf]
        %v422 = vld [vmem:[%s334 + $0xb0] sm:$0xf]
        %v423 = vld [vmem:[%s334 + $0xb4] sm:$0xf]
        %v424 = vld [vmem:[%s334 + $0xb8] sm:$0xf]
        %v425 = vld [vmem:[%s334 + $0xbc] sm:$0xf]
        %v434 = vunpack.c.l.b16 %v370
        %v435 = vunpack.c.h.b16 %v370
        %v436 = vunpack.c.l.b16 %v371
        %v437 = vunpack.c.l.b16 %v372
        %v438 = vunpack.c.h.b16 %v372
        %v439 = vunpack.c.l.b16 %v373
        %v440 = vunpack.c.l.b16 %v374
        %v441 = vunpack.c.h.b16 %v374
        %v442 = vunpack.c.l.b16 %v375
        %v443 = vunpack.c.l.b16 %v376
        %v444 = vunpack.c.h.b16 %v376
        %v445 = vunpack.c.l.b16 %v377
        %v446 = vpack.c.b16 %v437, %v434
        %v447 = vpack.c.b16 %v438, %v435
        %v448 = vpack.c.b16 %v439, %v436
        %v449 = vpack.c.b16 %v443, %v440
        %v450 = vpack.c.b16 %v444, %v441
        %v451 = vpack.c.b16 %v445, %v442
        %v506 = vunpack.c.l.b16 %v378
        %v507 = vunpack.c.l.b16 %v379
        %v508 = vunpack.c.l.b16 %v380
        %v509 = vunpack.c.l.b16 %v381
        %v510 = vunpack.c.l.b16 %v382
        %v511 = vunpack.c.l.b16 %v383
        %v512 = vunpack.c.l.b16 %v384
        %v513 = vunpack.c.l.b16 %v385
        %v514 = vunpack.c.l.b16 %v386
        %v515 = vunpack.c.l.b16 %v387
        %v516 = vunpack.c.l.b16 %v388
        %v517 = vunpack.c.l.b16 %v389
        %v518 = vunpack.c.l.b16 %v390
        %v519 = vunpack.c.l.b16 %v391
        %v520 = vunpack.c.l.b16 %v392
        %v521 = vunpack.c.l.b16 %v393
        %v522 = vunpack.c.l.b16 %v394
        %v523 = vunpack.c.l.b16 %v395
        %v524 = vunpack.c.l.b16 %v396
        %v525 = vunpack.c.l.b16 %v397
        %v526 = vunpack.c.l.b16 %v398
        %v527 = vunpack.c.l.b16 %v399
        %v528 = vunpack.c.l.b16 %v400
        %v529 = vunpack.c.l.b16 %v401
        %v530 = vunpack.c.l.b16 %v402
        %v531 = vunpack.c.l.b16 %v403
        %v532 = vunpack.c.l.b16 %v404
        %v533 = vunpack.c.l.b16 %v405
        %v534 = vunpack.c.l.b16 %v406
        %v535 = vunpack.c.l.b16 %v407
        %v536 = vunpack.c.l.b16 %v408
        %v537 = vunpack.c.l.b16 %v409
        %v538 = vunpack.c.l.b16 %v410
        %v539 = vunpack.c.l.b16 %v411
        %v540 = vunpack.c.l.b16 %v412
        %v541 = vunpack.c.l.b16 %v413
        %v542 = vunpack.c.l.b16 %v414
        %v543 = vunpack.c.l.b16 %v415
        %v544 = vunpack.c.l.b16 %v416
        %v545 = vunpack.c.l.b16 %v417
        %v546 = vunpack.c.l.b16 %v418
        %v547 = vunpack.c.l.b16 %v419
        %v548 = vunpack.c.l.b16 %v420
        %v549 = vunpack.c.l.b16 %v421
        %v550 = vunpack.c.l.b16 %v422
        %v551 = vunpack.c.l.b16 %v423
        %v552 = vunpack.c.l.b16 %v424
        %v553 = vunpack.c.l.b16 %v425
        %v554 = vpack.c.b16 %v507, %v506
        %v555 = vpack.c.b16 %v509, %v508
        %v556 = vpack.c.b16 %v511, %v510
        %v557 = vpack.c.b16 %v513, %v512
        %v558 = vpack.c.b16 %v515, %v514
        %v559 = vpack.c.b16 %v517, %v516
        %v560 = vpack.c.b16 %v519, %v518
        %v561 = vpack.c.b16 %v521, %v520
        %v562 = vpack.c.b16 %v523, %v522
        %v563 = vpack.c.b16 %v525, %v524
        %v564 = vpack.c.b16 %v527, %v526
        %v565 = vpack.c.b16 %v529, %v528
        %v566 = vpack.c.b16 %v531, %v530
        %v567 = vpack.c.b16 %v533, %v532
        %v568 = vpack.c.b16 %v535, %v534
        %v569 = vpack.c.b16 %v537, %v536
        %v570 = vpack.c.b16 %v539, %v538
        %v571 = vpack.c.b16 %v541, %v540
        %v572 = vpack.c.b16 %v543, %v542
        %v573 = vpack.c.b16 %v545, %v544
        %v574 = vpack.c.b16 %v547, %v546
        %v575 = vpack.c.b16 %v549, %v548
        %v576 = vpack.c.b16 %v551, %v550
        %v577 = vpack.c.b16 %v553, %v552
        %602 = vmatprep.subr.bf16.mxu0 0
        %603 = vmatpush1.bf16.msra.mxu0 %v561
        %604 = vmatprep.subr.bf16.mxu0 0
        %605 = vmatpush1.bf16.msra.mxu0 %v560
        %606 = vmatprep.subr.bf16.mxu0 0
        %607 = vmatpush1.bf16.msra.mxu0 %v559
        %608 = vmatprep.subr.bf16.mxu0 0
        %609 = vmatpush1.bf16.msra.mxu0 %v558
        %610 = vmatprep.subr.bf16.mxu0 0
        %611 = vmatpush1.bf16.msra.mxu0 %v557
        %612 = vmatprep.subr.bf16.mxu0 0
        %613 = vmatpush1.bf16.msra.mxu0 %v556
        %614 = vmatprep.subr.bf16.mxu0 0
        %615 = vmatpush1.bf16.msra.mxu0 %v555
        %616 = vmatprep.subr.bf16.mxu0 0
        %617 = vmatpush1.bf16.msra.mxu0 %v554
        %618 = vmatprep.subr.bf16.mxu0 0
        %619 = vmatpush2.bf16.msra.mxu0 %v569
        %620 = vmatprep.subr.bf16.mxu0 0
        %621 = vmatpush2.bf16.msra.mxu0 %v568
        %622 = vmatprep.subr.bf16.mxu0 0
        %623 = vmatpush2.bf16.msra.mxu0 %v567
        %624 = vmatprep.subr.bf16.mxu0 0
        %625 = vmatpush2.bf16.msra.mxu0 %v566
        %626 = vmatprep.subr.bf16.mxu0 0
        %627 = vmatpush2.bf16.msra.mxu0 %v565
        %628 = vmatprep.subr.bf16.mxu0 0
        %629 = vmatpush2.bf16.msra.mxu0 %v564
        %630 = vmatprep.subr.bf16.mxu0 0
        %631 = vmatpush2.bf16.msra.mxu0 %v563
        %632 = vmatprep.subr.bf16.mxu0 0
        %633 = vmatpush2.bf16.msra.mxu0 %v562
        %634 = vmatprep.mubr.bf16.mxu0 %v447
        %635 = vmatmul.mubr.bf16.gmra.mxu0 %v446
        %v636 = vpop.f32.mrf.mxu0
        %v637 = vadd.f32 0.0, %v636
        %v638 = vpop.f32.mrf.mxu0
        %v639 = vpop.f32.mrf.mxu0
        %v640 = vadd.f32 0.0, %v639
        %v641 = vpop.f32.mrf.mxu0
        %642 = vmatprep.mubr.bf16.mxu0 %v450
        %643 = vmatmul.mubr.bf16.gmra.mxu0 %v449
        %v644 = vpop.f32.mrf.mxu0
        %v645 = vadd.f32 0.0, %v644
        %v646 = vpop.f32.mrf.mxu0
        %v647 = vpop.f32.mrf.mxu0
        %v648 = vadd.f32 0.0, %v647
        %v649 = vpop.f32.mrf.mxu0
        %650 = vdwg.mxu0
        %651 = vmatprep.subr.bf16.mxu0 0
        %652 = vmatpush1.bf16.msra.mxu0 %v577
        %653 = vmatprep.subr.bf16.mxu0 0
        %654 = vmatpush1.bf16.msra.mxu0 %v576
        %655 = vmatprep.subr.bf16.mxu0 0
        %656 = vmatpush1.bf16.msra.mxu0 %v575
        %657 = vmatprep.subr.bf16.mxu0 0
        %658 = vmatpush1.bf16.msra.mxu0 %v574
        %659 = vmatprep.subr.bf16.mxu0 0
        %660 = vmatpush1.bf16.msra.mxu0 %v573
        %661 = vmatprep.subr.bf16.mxu0 0
        %662 = vmatpush1.bf16.msra.mxu0 %v572
        %663 = vmatprep.subr.bf16.mxu0 0
        %664 = vmatpush1.bf16.msra.mxu0 %v571
        %665 = vmatprep.subr.bf16.mxu0 0
        %666 = vmatpush1.bf16.msra.mxu0 %v570
        %667 = vmatprep.subr.bf16.mxu0 0
        %668 = vmatpush2.bf16.msra.mxu0 0
        %669 = vmatprep.subr.bf16.mxu0 0
        %670 = vmatpush2.bf16.msra.mxu0 0
        %671 = vmatprep.subr.bf16.mxu0 0
        %672 = vmatpush2.bf16.msra.mxu0 0
        %673 = vmatprep.subr.bf16.mxu0 0
        %674 = vmatpush2.bf16.msra.mxu0 0
        %675 = vmatprep.subr.bf16.mxu0 0
        %676 = vmatpush2.bf16.msra.mxu0 0
        %677 = vmatprep.subr.bf16.mxu0 0
        %678 = vmatpush2.bf16.msra.mxu0 0
        %679 = vmatprep.subr.bf16.mxu0 0
        %680 = vmatpush2.bf16.msra.mxu0 0
        %681 = vmatprep.subr.bf16.mxu0 0
        %682 = vmatpush2.bf16.msra.mxu0 0
        %683 = vmatprep.mubr.bf16.mxu0 0
        %684 = vmatmul.mubr.bf16.gmra.mxu0 %v448
        %v685 = vpop.f32.mrf.mxu0
        %v686 = vadd.f32 %v637, %v685
        %v687 = vpop.f32.mrf.mxu0
        %v688 = vpop.f32.mrf.mxu0
        %v689 = vadd.f32 %v640, %v688
        %v690 = vpop.f32.mrf.mxu0
        %691 = vmatprep.mubr.bf16.mxu0 0
        %692 = vmatmul.mubr.bf16.gmra.mxu0 %v451
        %v693 = vpop.f32.mrf.mxu0
        %v694 = vadd.f32 %v645, %v693
        %v695 = vpop.f32.mrf.mxu0
        %v696 = vpop.f32.mrf.mxu0
        %v697 = vadd.f32 %v648, %v696
        %v698 = vpop.f32.mrf.mxu0
        %699 = vdwg.mxu0
        %v700 = vadd.f32 %v366, %v686
        %v701 = vadd.f32 %v367, %v689
        %v702 = vadd.f32 %v368, %v694
        %v703 = vadd.f32 %v369, %v697
        %704 = vst [vmem:[#allocation2] sm:$0xff] %v700
        %705 = vst [vmem:[#allocation2 + $0x8] sm:$0xff] %v701
        %706 = vst [vmem:[#allocation2 + $0x10] sm:$0xff] %v702
        %707 = vst [vmem:[#allocation2 + $0x18] sm:$0xff] %v703
        %p708 = scmp.eq.s32.totalorder %s22, 2
        // Predicated region
        $region67: #{_lambda_.23} parent=57 // pred_check
          %p709 = pneg %p708
        $region68: #{_lambda_.23} parent=57 // pred_check_branch
          %711 = sbr.rel (%p709) target = $region70
        $region69: #{_lambda_.23} parent=57 // pred_region
          %v712 = vld [vmem:[#allocation2] sm:$0xff]
          %v713 = vld [vmem:[#allocation2 + $0x8] sm:$0xff]
          %v714 = vld [vmem:[#allocation2 + $0x10] sm:$0xff]
          %v715 = vld [vmem:[#allocation2 + $0x18] sm:$0xff]
          %v716 = vld [vmem:[%s338] sm:$0x1]
          %v718 = vlaneseq
          %v719 = vshrl.u32 %v718, 7
          %v720 = vsub.s32 0, %v719
          %v721 = vrot.slane %v716, %v720
          %v723 = vadd.f32 %v712, %v721
          %v724 = vadd.f32 %v713, %v721
          %v725 = vadd.f32 %v714, %v721
          %v726 = vadd.f32 %v715, %v721
          %v727 = vmax.f32 %v723, 0.0
          %v728 = vmax.f32 %v724, 0.0
          %v729 = vmax.f32 %v725, 0.0
          %v730 = vmax.f32 %v726, 0.0
          %v731 = vld [vmem:[%s346] sm:$0xf]
          %v732 = vld [vmem:[%s346 + $0x4] sm:$0xf]
          %v733 = vld [vmem:[%s346 + $0x8] sm:$0xf]
          %v734 = vld [vmem:[%s346 + $0xc] sm:$0xf]
          %v735 = vunpack.c.l.bf16 %v731
          %v736 = vunpack.c.l.bf16 %v732
          %v737 = vunpack.c.l.bf16 %v733
          %v738 = vunpack.c.l.bf16 %v734
          %v739 = vadd.f32 %v727, %v735
          %v740 = vadd.f32 %v728, %v736
          %v741 = vadd.f32 %v729, %v737
          %v742 = vadd.f32 %v730, %v738
          %v743 = vmax.f32 %v739, 0.0
          %v744 = vmax.f32 %v740, 0.0
          %v745 = vmax.f32 %v741, 0.0
          %v746 = vmax.f32 %v742, 0.0
          %v747 = vpack.c.bf16 %v744, %v743
          %v748 = vpack.c.bf16 %v746, %v745
          %v751 = vunpack.c.l.b16 %v747
          %v752 = vunpack.c.h.b16 %v747
          %v753 = vunpack.c.l.b16 %v748
          %v754 = vunpack.c.h.b16 %v748
          %v755 = vpack.c.b16 %v751, %v751
          %v756 = vpack.c.b16 %v752, %v752
          %v757 = vpack.c.b16 %v753, %v753
          %v758 = vpack.c.b16 %v754, %v754
          %763 = vst [vmem:[%s355] sm:$0xf] %v755
          %764 = vst [vmem:[%s355 + $0x4] sm:$0xf] %v756
          %765 = vst [vmem:[%s355 + $0x8] sm:$0xf] %v757
          %766 = vst [vmem:[%s355 + $0xc] sm:$0xf] %v758
        $region70: #{_lambda_.23} parent=57 // pred_fallthru
          _
        %s767 = smul.u32 4, %s20
        %p768 = scmp.lt.s32.totalorder %s767, 3
        %s769 = scalar_select %p768, %s767, 3
        %p770 = scmp.lt.s32.totalorder %s21, 0
        %s771 = scalar_select %p770, %s21, 0
        %s772 = sadd.s32 %s771, %s769
        %s773 = smul.addr %s772, 4
        %s774 = scalar_lea.vmem %s4, %s773
        // Predicated region
        $region71: #{_lambda_.23} parent=57 // pred_check
          %p775 = pneg %p164
        $region72: #{_lambda_.23} parent=57 // pred_check_branch
          %777 = sbr.rel (%p775) target = $region74
        $region73: #{_lambda_.23} parent=57 // pred_region
          %s778 = smul.u32 4, %s20
        $region74: #{_lambda_.23} parent=57 // pred_fallthru
          _
        // Predicated region
        $region75: #{_lambda_.23} parent=57 // pred_check
          %p779 = pneg %p164
        $region76: #{_lambda_.23} parent=57 // pred_check_branch
          %781 = sbr.rel (%p779) target = $region78
        $region77: #{_lambda_.23} parent=57 // pred_region
          %s782 = smul.u32 4, %s20
          %p783 = scmp.lt.s32.totalorder %s782, 3
          %s784 = scalar_select %p783, %s782, 3
          %p785 = scmp.lt.s32.totalorder %s21, 0
          %s786 = scalar_select %p785, %s21, 0
          %s787 = sadd.s32 %s786, %s784
          %s788 = smul.addr %s787, 4
          %s789 = scalar_lea.vmem %s4, %s788
        $region78: #{_lambda_.23} parent=57 // pred_fallthru
          _
      $region58: #{_lambda_.23} parent=5 // pred_fallthru
        _
      %p790 = scmp.le.s32.totalorder 2, %s10
      // Predicated region
      $region79: #{_lambda_.23} parent=5 // pred_check
        %p791 = pneg %p790
      $region80: #{_lambda_.23} parent=5 // pred_check_branch
        %793 = sbr.rel (%p791) target = $region82
      $region81: #{_lambda_.23} parent=5 // pred_region
        %s794 = ssub.s32 %s10, 2
      $region82: #{_lambda_.23} parent=5 // pred_fallthru
        _
    $region6: #{_lambda_.23} parent=1 // loop_footer
      %s14 = sadd.s32 1, %s10
    $region7: #{_lambda_.23} parent=1 // loop_footer_branch
      %9 = sbr.rel target = $region3
    $region8: #{_lambda_.23} parent=1 // loop_exit
      _

// kernel: _lambda_.24
$region0: #{_lambda_.24}
  #allocation0 [shape = 'u32[]', space=smem, size = 0x4, offset = 0x4, fixed_abs, tag = 'smem constant byte address 0x4 - core index']
  #allocation1 [shape = 'u32[144,128]{1,0:T(1,128)}', space=vmem, size = 0x12000, scoped, tag = 'internal scratch']
  #allocation2 [shape = 'f32[32,128]{1,0:T(8,128)}', space=vmem, size = 0x4000, scoped, tag = 'scratch operand']
  %s0 = inlined_call_operand.vmem [shape: bf16[32,1152], index: 0, kind: input, shape index: {}]
  %s1 = inlined_call_operand.vmem [shape: bf16[1152,128], index: 1, kind: input, shape index: {}]
  %s2 = inlined_call_operand.vmem [shape: f32[1,128], index: 2, kind: input, shape index: {}]
  %s3 = inlined_call_operand.vmem [shape: bf16[32,128], index: 3, kind: output, shape index: {}]
  %s4 = sld [smem:[#allocation0]]
  $region79: #{_lambda_.24} parent=0
    _
  %s6 = ssub.s32 1, %s4
  %s7 = scalar_select 0, %s6, %s4
  $region1: #{_lambda_.24} parent=0
    #allocation3 [shape = 'u8[49152]{0}', space=vmem, size = 0xc000, scoped, tag = 'input window, operand 0']
    loop: start=0, step=1, limit=5
    $region2: #{_lambda_.24} parent=1 // loop_pre_header
      _
    $region3: #{_lambda_.24} parent=1 // loop_header
      %s9 = sphi 0, %s13
      %p10 = scmp.ge.s32.totalorder %s9, 5
      %s16 = sphi 0, %s35
      %s17 = sphi 0, %s31
      %s18 = sphi 0, %s27
      %s19 = sphi 0, %s16
      %s20 = sphi 0, %s17
      %s21 = sphi 0, %s18
      %s22 = sphi 0, %s19
      %s23 = sphi 0, %s20
      %s24 = sphi 0, %s21
      %s40 = sphi 0, %s42
      %s43 = sphi 0, %s40
      %s44 = sphi 0, %s43
      %s60 = sphi 0, %s44
      %s68 = sphi 0, %s70
      %s71 = sphi 0, %s68
      %s72 = sphi 0, %s71
      %s88 = sphi 0, %s72
      %s94 = sphi 0, %s96
      %s97 = sphi 0, %s94
      %s98 = sphi 0, %s97
      %s114 = sphi 0, %s98
      %s122 = sphi 0, %s124
      %s125 = sphi 0, %s122
      %s126 = sphi 0, %s125
      %s142 = sphi 0, %s126
    $region4: #{_lambda_.24} parent=1 // loop_header_branch
      %12 = sbr.rel (%p10) target = $region8
    $region5: #{_lambda_.24} parent=1 // loop_body
      %s14 = ssub.s32 %s9, 1
      %s15 = ssub.s32 %s9, 2
      %s25 = sadd.s32 1, %s18
      %p26 = scmp.ge.s32.totalorder %s25, 3
      %s27 = scalar_select %p26, 0, %s25
      %s28 = sadd.s32 1, %s17
      %s29 = scalar_select %p26, %s28, %s17
      %p30 = scmp.ge.s32.totalorder %s29, 1
      %s31 = scalar_select %p30, 0, %s29
      %s32 = sadd.s32 1, %s16
      %s33 = scalar_select %p30, %s32, %s16
      %p34 = scmp.ge.s32.totalorder %s33, 1
      %s35 = scalar_select %p34, 0, %s33
      %s36 = ssub.s32 %s16, %s35
      %s37 = ssub.s32 %s18, %s27
      %s38 = sor.u32 %s36, %s37
      %p39 = scmp.eq.s32.totalorder %s38, 0
      %s41 = sadd.s32 %s40, 1
      %s42 = scalar_select %p39, %s40, %s41
      %p45 = pneg %p39
      %p46 = scmp.eq.s32.totalorder %s9, 2
      %p47 = por %p45, %p46
      %p48 = scmp.ne.s32.totalorder %s40, %s43
      %p49 = scmp.eq.s32.totalorder %s9, 0
      %p50 = por %p48, %p49
      %p51 = scmp.ne.s32.totalorder %s40, %s43
      %p52 = scmp.eq.s32.totalorder %s14, 2
      %p53 = por %p51, %p52
      %p54 = scmp.ne.s32.totalorder %s43, %s44
      %p55 = scmp.eq.s32.totalorder %s14, 0
      %p56 = por %p54, %p55
      %p57 = scmp.ne.s32.totalorder %s43, %s44
      %p58 = scmp.eq.s32.totalorder %s15, 2
      %p59 = por %p57, %p58
      %p61 = scmp.ne.s32.totalorder %s44, %s60
      %p62 = scmp.eq.s32.totalorder %s15, 0
      %p63 = por %p61, %p62
      %s64 = ssub.s32 %s18, %s27
      %s65 = ssub.s32 %s17, %s31
      %s66 = sor.u32 %s64, %s65
      %p67 = scmp.eq.s32.totalorder %s66, 0
      %s69 = sadd.s32 %s68, 1
      %s70 = scalar_select %p67, %s68, %s69
      %p73 = pneg %p67
      %p74 = scmp.eq.s32.totalorder %s9, 2
      %p75 = por %p73, %p74
      %p76 = scmp.ne.s32.totalorder %s68, %s71
      %p77 = scmp.eq.s32.totalorder %s9, 0
      %p78 = por %p76, %p77
      %p79 = scmp.ne.s32.totalorder %s68, %s71
      %p80 = scmp.eq.s32.totalorder %s14, 2
      %p81 = por %p79, %p80
      %p82 = scmp.ne.s32.totalorder %s71, %s72
      %p83 = scmp.eq.s32.totalorder %s14, 0
      %p84 = por %p82, %p83
      %p85 = scmp.ne.s32.totalorder %s71, %s72
      %p86 = scmp.eq.s32.totalorder %s15, 2
      %p87 = por %p85, %p86
      %p89 = scmp.ne.s32.totalorder %s72, %s88
      %p90 = scmp.eq.s32.totalorder %s15, 0
      %p91 = por %p89, %p90
      %s92 = ssub.s32 %s17, %s31
      %p93 = scmp.eq.s32.totalorder %s92, 0
      %s95 = sadd.s32 %s94, 1
      %s96 = scalar_select %p93, %s94, %s95
      %p99 = pneg %p93
      %p100 = scmp.eq.s32.totalorder %s9, 2
      %p101 = por %p99, %p100
      %p102 = scmp.ne.s32.totalorder %s94, %s97
      %p103 = scmp.eq.s32.totalorder %s9, 0
      %p104 = por %p102, %p103
      %p105 = scmp.ne.s32.totalorder %s94, %s97
      %p106 = scmp.eq.s32.totalorder %s14, 2
      %p107 = por %p105, %p106
      %p108 = scmp.ne.s32.totalorder %s97, %s98
      %p109 = scmp.eq.s32.totalorder %s14, 0
      %p110 = por %p108, %p109
      %p111 = scmp.ne.s32.totalorder %s97, %s98
      %p112 = scmp.eq.s32.totalorder %s15, 2
      %p113 = por %p111, %p112
      %p115 = scmp.ne.s32.totalorder %s98, %s114
      %p116 = scmp.eq.s32.totalorder %s15, 0
      %p117 = por %p115, %p116
      %s118 = ssub.s32 %s16, %s35
      %s119 = ssub.s32 %s17, %s31
      %s120 = sor.u32 %s118, %s119
      %p121 = scmp.eq.s32.totalorder %s120, 0
      %s123 = sadd.s32 %s122, 1
      %s124 = scalar_select %p121, %s122, %s123
      %p127 = pneg %p121
      %p128 = scmp.eq.s32.totalorder %s9, 2
      %p129 = por %p127, %p128
      %p130 = scmp.ne.s32.totalorder %s122, %s125
      %p131 = scmp.eq.s32.totalorder %s9, 0
      %p132 = por %p130, %p131
      %p133 = scmp.ne.s32.totalorder %s122, %s125
      %p134 = scmp.eq.s32.totalorder %s14, 2
      %p135 = por %p133, %p134
      %p136 = scmp.ne.s32.totalorder %s125, %s126
      %p137 = scmp.eq.s32.totalorder %s14, 0
      %p138 = por %p136, %p137
      %p139 = scmp.ne.s32.totalorder %s125, %s126
      %p140 = scmp.eq.s32.totalorder %s15, 2
      %p141 = por %p139, %p140
      %p143 = scmp.ne.s32.totalorder %s126, %s142
      %p144 = scmp.eq.s32.totalorder %s15, 0
      %p145 = por %p143, %p144
      %p146 = scmp.le.s32.totalorder 1, %s9
      %p147 = scmp.lt.s32.totalorder %s9, 4
      %p148 = pnand %p146, %p147
      %p149 = pneg %p148
      // Predicated region
      $region9: #{_lambda_.24} parent=5 // pred_check
        _
      $region10: #{_lambda_.24} parent=5 // pred_check_branch
        %151 = sbr.rel (%p148) target = $region12
      $region11: #{_lambda_.24} parent=5 // pred_region
        %s152 = ssub.s32 %s9, 1
        // Predicated region
        $region13: #{_lambda_.24} parent=11 // pred_check
          %p153 = pneg %p110
        $region14: #{_lambda_.24} parent=11 // pred_check_branch
          %155 = sbr.rel (%p153) target = $region16
        $region15: #{_lambda_.24} parent=11 // pred_region
          %p156 = scmp.lt.s32.totalorder %s20, 0
          %s157 = scalar_select %p156, %s20, 0
          %s158 = scalar_lea.vmem %s2, %s157
        $region16: #{_lambda_.24} parent=11 // pred_fallthru
          _
      $region12: #{_lambda_.24} parent=5 // pred_fallthru
        _
      %p159 = scmp.lt.s32.totalorder %s9, 3
      // Predicated region
      $region17: #{_lambda_.24} parent=5 // pred_check
        %p160 = pneg %p159
      $region18: #{_lambda_.24} parent=5 // pred_check_branch
        %162 = sbr.rel (%p160) target = $region20
      $region19: #{_lambda_.24} parent=5 // pred_region
        // Predicated region
        $region21: #{_lambda_.24} parent=19 // pred_check
          %p163 = pneg %p50
        $region22: #{_lambda_.24} parent=19 // pred_check_branch
          %165 = sbr.rel (%p163) target = $region24
        $region23: #{_lambda_.24} parent=19 // pred_region
          %s166 = sand.u32 %s40, 1
          %s167 = sand.u32 %s40, 1
          %s168 = smul.addr %s167, 48
          %s169 = scalar_lea.vmem [#allocation3], %s168
          %s170 = smul.u32 4, %s16
          %s171 = smul.u32 3, %s18
          %s172 = smul.addr %s170, 9
          %s173 = sadd.s32 %s171, %s172
          %s174 = smul.addr %s173, 4
          %s175 = scalar_lea.vmem %s0, %s174
          // Predicated region
          $region25: #{_lambda_.24} parent=23 // pred_check
            _
          $region26: #{_lambda_.24} parent=23 // pred_check_branch
            %177 = sbr.rel (0) target = $region28
          $region27: #{_lambda_.24} parent=23 // pred_region
            // Predicated region
            $region29: #{_lambda_.24} parent=27 // pred_check
              _
            $region30: #{_lambda_.24} parent=27 // pred_check_branch
              %179 = sbr.rel (0) target = $region32
            $region31: #{_lambda_.24} parent=27 // pred_region
              %s180 = scalar_lea.vmem %s175, 8
              %s181 = scalar_lea.vmem %s169, 8 [#allocation3]
              loop: start=0, step=1, limit=1
              $region33: #{_lambda_.24} parent=31 // loop_pre_header
                _
              $region34: #{_lambda_.24} parent=31 // loop_header
                %s183 = sphi 0, %s187
                %p184 = scmp.ge.s32.totalorder %s183, 1
                %s188 = sphi %s175, %s175
                %s189 = sphi %s169, %s169
              $region35: #{_lambda_.24} parent=31 // loop_header_branch
                %186 = sbr.rel (%p184) target = $region39
              $region36: #{_lambda_.24} parent=31 // loop_body
                %v190 = vld [vmem:[%s188] sm:$0xff]
                %191 = vst [vmem:[%s189] sm:$0xff] %v190
                %v192 = vld [vmem:[%s188 + $0x24] sm:$0xff]
                %193 = vst [vmem:[%s189 + $0xc] sm:$0xff] %v192
                %v194 = vld [vmem:[%s188 + $0x48] sm:$0xff]
                %195 = vst [vmem:[%s189 + $0x18] sm:$0xff] %v194
                %v196 = vld [vmem:[%s188 + $0x6c] sm:$0xff]
                %197 = vst [vmem:[%s189 + $0x24] sm:$0xff] %v196
              $region37: #{_lambda_.24} parent=31 // loop_footer
                %s187 = sadd.s32 1, %s183
              $region38: #{_lambda_.24} parent=31 // loop_footer_branch
                %182 = sbr.rel target = $region34
              $region39: #{_lambda_.24} parent=31 // loop_exit
                _
              %s199 = ssub.s32 16, 1
              loop: start=0, step=1, limit=1
              $region40: #{_lambda_.24} parent=31 // loop_pre_header
                _
              $region41: #{_lambda_.24} parent=31 // loop_header
                %s201 = sphi 0, %s205
                %p202 = scmp.ge.s32.totalorder %s201, 1
                %s206 = sphi %s180, %s180
                %s207 = sphi %s181, %s181
              $region42: #{_lambda_.24} parent=31 // loop_header_branch
                %204 = sbr.rel (%p202) target = $region46
              $region43: #{_lambda_.24} parent=31 // loop_body
                %v208 = vld [vmem:[%s206] sm:%s199]
                %209 = vst [vmem:[%s207] sm:%s199] %v208
                %v210 = vld [vmem:[%s206 + $0x24] sm:%s199]
                %211 = vst [vmem:[%s207 + $0xc] sm:%s199] %v210
                %v212 = vld [vmem:[%s206 + $0x48] sm:%s199]
                %213 = vst [vmem:[%s207 + $0x18] sm:%s199] %v212
                %v214 = vld [vmem:[%s206 + $0x6c] sm:%s199]
                %215 = vst [vmem:[%s207 + $0x24] sm:%s199] %v214
              $region44: #{_lambda_.24} parent=31 // loop_footer
                %s205 = sadd.s32 1, %s201
              $region45: #{_lambda_.24} parent=31 // loop_footer_branch
                %200 = sbr.rel target = $region41
              $region46: #{_lambda_.24} parent=31 // loop_exit
                _
            $region32: #{_lambda_.24} parent=27 // pred_fallthru
              _
          $region28: #{_lambda_.24} parent=23 // pred_fallthru
            _
          %216 = vnop
        $region24: #{_lambda_.24} parent=19 // pred_fallthru
          _
        // Predicated region
        $region47: #{_lambda_.24} parent=19 // pred_check
          %p217 = pneg %p78
        $region48: #{_lambda_.24} parent=19 // pred_check_branch
          %219 = sbr.rel (%p217) target = $region50
        $region49: #{_lambda_.24} parent=19 // pred_region
          %s220 = smul.u32 48, %s18
          %p221 = scmp.lt.s32.totalorder %s220, 143
          %s222 = scalar_select %p221, %s220, 143
          %p223 = scmp.lt.s32.totalorder %s17, 0
          %s224 = scalar_select %p223, %s17, 0
          %s225 = sadd.s32 %s224, %s222
          %s226 = smul.addr %s225, 4
          %s227 = scalar_lea.vmem %s1, %s226
          %s228 = smul.u32 48, %s18
        $region50: #{_lambda_.24} parent=19 // pred_fallthru
          _
      $region20: #{_lambda_.24} parent=5 // pred_fallthru
        _
      %p229 = scmp.le.s32.totalorder 1, %s9
      %p230 = scmp.lt.s32.totalorder %s9, 4
      %p231 = pnand %p229, %p230
      %p232 = pneg %p231
      // Predicated region
      $region51: #{_lambda_.24} parent=5 // pred_check
        _
      $region52: #{_lambda_.24} parent=5 // pred_check_branch
        %234 = sbr.rel (%p231) target = $region54
      $region53: #{_lambda_.24} parent=5 // pred_region
        %s235 = ssub.s32 %s9, 1
        %s236 = sand.u32 %s43, 1
        %s237 = sand.u32 %s43, 1
        %s238 = smul.addr %s237, 48
        %s239 = scalar_lea.vmem [#allocation3], %s238
        // Predicated region
        $region55: #{_lambda_.24} parent=53 // pred_check
          %p240 = pneg %p56
        $region56: #{_lambda_.24} parent=53 // pred_check_branch
          %242 = sbr.rel (%p240) target = $region58
        $region57: #{_lambda_.24} parent=53 // pred_region
          _
        $region58: #{_lambda_.24} parent=53 // pred_fallthru
          _
        %s243 = sand.u32 %s43, 1
        %s244 = sand.u32 %s43, 1
        %s245 = smul.addr %s244, 48
        %s246 = scalar_lea.vmem [#allocation3], %s245
        %p247 = pneg %p56
        %p248 = pneg %p53
        %s249 = smul.u32 48, %s21
        %p250 = scmp.lt.s32.totalorder %s249, 143
        %s251 = scalar_select %p250, %s249, 143
        %p252 = scmp.lt.s32.totalorder %s20, 0
        %s253 = scalar_select %p252, %s20, 0
        %s254 = sadd.s32 %s253, %s251
        %s255 = smul.addr %s254, 4
        %s256 = scalar_lea.vmem %s1, %s255
        %p257 = pneg %p84
        %p258 = pneg %p81
        %p259 = scmp.lt.s32.totalorder %s20, 0
        %s260 = scalar_select %p259, %s20, 0
        %s261 = scalar_lea.vmem %s2, %s260
        %p262 = pneg %p110
        %p263 = pneg %p107
        %p264 = pneg %p138
        %p265 = pneg %p135
        %s266 = smul.u32 4, %s19
        %p267 = scmp.lt.s32.totalorder %s266, 3
        %s268 = scalar_select %p267, %s266, 3
        %p269 = scmp.lt.s32.totalorder %s20, 0
        %s270 = scalar_select %p269, %s20, 0
        %s271 = sadd.s32 %s270, %s268
        %s272 = smul.addr %s271, 4
        %s273 = scalar_lea.vmem %s3, %s272
        %s274 = smul.u32 4, %s19
        %s275 = smul.u32 3, %s21
        %s276 = smul.u32 48, %s21
        %p277 = scmp.lt.s32.totalorder %s276, 143
        %s278 = scalar_select %p277, %s276, 143
        %p279 = scmp.lt.s32.totalorder %s20, 0
        %s280 = scalar_select %p279, %s20, 0
        %s281 = sadd.s32 %s280, %s278
        %s282 = smul.addr %s281, 4
        %s283 = scalar_lea.vmem %s1, %s282
        %s284 = smul.u32 48, %s21
        %p285 = scmp.lt.s32.totalorder %s20, 0
        %s286 = scalar_select %p285, %s20, 0
        %s287 = scalar_lea.vmem %s2, %s286
        %s288 = smul.u32 4, %s19
        %p289 = scmp.lt.s32.totalorder %s288, 3
        %s290 = scalar_select %p289, %s288, 3
        %p291 = scmp.lt.s32.totalorder %s20, 0
        %s292 = scalar_select %p291, %s20, 0
        %s293 = sadd.s32 %s292, %s290
        %s294 = smul.addr %s293, 4
        %s295 = scalar_lea.vmem %s3, %s294
        %s296 = smul.u32 4, %s19
        %p298 = scmp.eq.s32.totalorder %s21, 0
        // Predicated region
        $region59: #{_lambda_.24} parent=53 // pred_check
          %p299 = pneg %p298
        $region60: #{_lambda_.24} parent=53 // pred_check_branch
          %301 = sbr.rel (%p299) target = $region62
        $region61: #{_lambda_.24} parent=53 // pred_region
          %302 = vst [vmem:[#allocation2] sm:$0xff] 0.0
          %303 = vst [vmem:[#allocation2 + $0x8] sm:$0xff] 0.0
          %304 = vst [vmem:[#allocation2 + $0x10] sm:$0xff] 0.0
          %305 = vst [vmem:[#allocation2 + $0x18] sm:$0xff] 0.0
        $region62: #{_lambda_.24} parent=53 // pred_fallthru
          _
        %v306 = vld [vmem:[#allocation2] sm:$0xff]
        %v307 = vld [vmem:[#allocation2 + $0x8] sm:$0xff]
        %v308 = vld [vmem:[#allocation2 + $0x10] sm:$0xff]
        %v309 = vld [vmem:[#allocation2 + $0x18] sm:$0xff]
        %v310 = vld [vmem:[%s239] sm:$0xff]
        %v311 = vld [vmem:[%s239 + $0x8] sm:$0xf]
        %v312 = vld [vmem:[%s239 + $0xc] sm:$0xff]
        %v313 = vld [vmem:[%s239 + $0x14] sm:$0xf]
        %v314 = vld [vmem:[%s239 + $0x18] sm:$0xff]
        %v315 = vld [vmem:[%s239 + $0x20] sm:$0xf]
        %v316 = vld [vmem:[%s239 + $0x24] sm:$0xff]
        %v317 = vld [vmem:[%s239 + $0x2c] sm:$0xf]
        %v318 = vld [vmem:[%s283] sm:$0xf]
        %v319 = vld [vmem:[%s283 + $0x4] sm:$0xf]
        %v320 = vld [vmem:[%s283 + $0x8] sm:$0xf]
        %v321 = vld [vmem:[%s283 + $0xc] sm:$0xf]
        %v322 = vld [vmem:[%s283 + $0x10] sm:$0xf]
        %v323 = vld [vmem:[%s283 + $0x14] sm:$0xf]
        %v324 = vld [vmem:[%s283 + $0x18] sm:$0xf]
        %v325 = vld [vmem:[%s283 + $0x1c] sm:$0xf]
        %v326 = vld [vmem:[%s283 + $0x20] sm:$0xf]
        %v327 = vld [vmem:[%s283 + $0x24] sm:$0xf]
        %v328 = vld [vmem:[%s283 + $0x28] sm:$0xf]
        %v329 = vld [vmem:[%s283 + $0x2c] sm:$0xf]
        %v330 = vld [vmem:[%s283 + $0x30] sm:$0xf]
        %v331 = vld [vmem:[%s283 + $0x34] sm:$0xf]
        %v332 = vld [vmem:[%s283 + $0x38] sm:$0xf]
        %v333 = vld [vmem:[%s283 + $0x3c] sm:$0xf]
        %v334 = vld [vmem:[%s283 + $0x40] sm:$0xf]
        %v335 = vld [vmem:[%s283 + $0x44] sm:$0xf]
        %v336 = vld [vmem:[%s283 + $0x48] sm:$0xf]
        %v337 = vld [vmem:[%s283 + $0x4c] sm:$0xf]
        %v338 = vld [vmem:[%s283 + $0x50] sm:$0xf]
        %v339 = vld [vmem:[%s283 + $0x54] sm:$0xf]
        %v340 = vld [vmem:[%s283 + $0x58] sm:$0xf]
        %v341 = vld [vmem:[%s283 + $0x5c] sm:$0xf]
        %v342 = vld [vmem:[%s283 + $0x60] sm:$0xf]
        %v343 = vld [vmem:[%s283 + $0x64] sm:$0xf]
        %v344 = vld [vmem:[%s283 + $0x68] sm:$0xf]
        %v345 = vld [vmem:[%s283 + $0x6c] sm:$0xf]
        %v346 = vld [vmem:[%s283 + $0x70] sm:$0xf]
        %v347 = vld [vmem:[%s283 + $0x74] sm:$0xf]
        %v348 = vld [vmem:[%s283 + $0x78] sm:$0xf]
        %v349 = vld [vmem:[%s283 + $0x7c] sm:$0xf]
        %v350 = vld [vmem:[%s283 + $0x80] sm:$0xf]
        %v351 = vld [vmem:[%s283 + $0x84] sm:$0xf]
        %v352 = vld [vmem:[%s283 + $0x88] sm:$0xf]
        %v353 = vld [vmem:[%s283 + $0x8c] sm:$0xf]
        %v354 = vld [vmem:[%s283 + $0x90] sm:$0xf]
        %v355 = vld [vmem:[%s283 + $0x94] sm:$0xf]
        %v356 = vld [vmem:[%s283 + $0x98] sm:$0xf]
        %v357 = vld [vmem:[%s283 + $0x9c] sm:$0xf]
        %v358 = vld [vmem:[%s283 + $0xa0] sm:$0xf]
        %v359 = vld [vmem:[%s283 + $0xa4] sm:$0xf]
        %v360 = vld [vmem:[%s283 + $0xa8] sm:$0xf]
        %v361 = vld [vmem:[%s283 + $0xac] sm:$0xf]
        %v362 = vld [vmem:[%s283 + $0xb0] sm:$0xf]
        %v363 = vld [vmem:[%s283 + $0xb4] sm:$0xf]
        %v364 = vld [vmem:[%s283 + $0xb8] sm:$0xf]
        %v365 = vld [vmem:[%s283 + $0xbc] sm:$0xf]
        %v374 = vunpack.c.l.b16 %v310
        %v375 = vunpack.c.h.b16 %v310
        %v376 = vunpack.c.l.b16 %v311
        %v377 = vunpack.c.l.b16 %v312
        %v378 = vunpack.c.h.b16 %v312
        %v379 = vunpack.c.l.b16 %v313
        %v380 = vunpack.c.l.b16 %v314
        %v381 = vunpack.c.h.b16 %v314
        %v382 = vunpack.c.l.b16 %v315
        %v383 = vunpack.c.l.b16 %v316
        %v384 = vunpack.c.h.b16 %v316
        %v385 = vunpack.c.l.b16 %v317
        %v386 = vpack.c.b16 %v377, %v374
        %v387 = vpack.c.b16 %v378, %v375
        %v388 = vpack.c.b16 %v379, %v376
        %v389 = vpack.c.b16 %v383, %v380
        %v390 = vpack.c.b16 %v384, %v381
        %v391 = vpack.c.b16 %v385, %v382
        %v446 = vunpack.c.l.b16 %v318
        %v447 = vunpack.c.l.b16 %v319
        %v448 = vunpack.c.l.b16 %v320
        %v449 = vunpack.c.l.b16 %v321
        %v450 = vunpack.c.l.b16 %v322
        %v451 = vunpack.c.l.b16 %v323
        %v452 = vunpack.c.l.b16 %v324
        %v453 = vunpack.c.l.b16 %v325
        %v454 = vunpack.c.l.b16 %v326
        %v455 = vunpack.c.l.b16 %v327
        %v456 = vunpack.c.l.b16 %v328
        %v457 = vunpack.c.l.b16 %v329
        %v458 = vunpack.c.l.b16 %v330
        %v459 = vunpack.c.l.b16 %v331
        %v460 = vunpack.c.l.b16 %v332
        %v461 = vunpack.c.l.b16 %v333
        %v462 = vunpack.c.l.b16 %v334
        %v463 = vunpack.c.l.b16 %v335
        %v464 = vunpack.c.l.b16 %v336
        %v465 = vunpack.c.l.b16 %v337
        %v466 = vunpack.c.l.b16 %v338
        %v467 = vunpack.c.l.b16 %v339
        %v468 = vunpack.c.l.b16 %v340
        %v469 = vunpack.c.l.b16 %v341
        %v470 = vunpack.c.l.b16 %v342
        %v471 = vunpack.c.l.b16 %v343
        %v472 = vunpack.c.l.b16 %v344
        %v473 = vunpack.c.l.b16 %v345
        %v474 = vunpack.c.l.b16 %v346
        %v475 = vunpack.c.l.b16 %v347
        %v476 = vunpack.c.l.b16 %v348
        %v477 = vunpack.c.l.b16 %v349
        %v478 = vunpack.c.l.b16 %v350
        %v479 = vunpack.c.l.b16 %v351
        %v480 = vunpack.c.l.b16 %v352
        %v481 = vunpack.c.l.b16 %v353
        %v482 = vunpack.c.l.b16 %v354
        %v483 = vunpack.c.l.b16 %v355
        %v484 = vunpack.c.l.b16 %v356
        %v485 = vunpack.c.l.b16 %v357
        %v486 = vunpack.c.l.b16 %v358
        %v487 = vunpack.c.l.b16 %v359
        %v488 = vunpack.c.l.b16 %v360
        %v489 = vunpack.c.l.b16 %v361
        %v490 = vunpack.c.l.b16 %v362
        %v491 = vunpack.c.l.b16 %v363
        %v492 = vunpack.c.l.b16 %v364
        %v493 = vunpack.c.l.b16 %v365
        %v494 = vpack.c.b16 %v447, %v446
        %v495 = vpack.c.b16 %v449, %v448
        %v496 = vpack.c.b16 %v451, %v450
        %v497 = vpack.c.b16 %v453, %v452
        %v498 = vpack.c.b16 %v455, %v454
        %v499 = vpack.c.b16 %v457, %v456
        %v500 = vpack.c.b16 %v459, %v458
        %v501 = vpack.c.b16 %v461, %v460
        %v502 = vpack.c.b16 %v463, %v462
        %v503 = vpack.c.b16 %v465, %v464
        %v504 = vpack.c.b16 %v467, %v466
        %v505 = vpack.c.b16 %v469, %v468
        %v506 = vpack.c.b16 %v471, %v470
        %v507 = vpack.c.b16 %v473, %v472
        %v508 = vpack.c.b16 %v475, %v474
        %v509 = vpack.c.b16 %v477, %v476
        %v510 = vpack.c.b16 %v479, %v478
        %v511 = vpack.c.b16 %v481, %v480
        %v512 = vpack.c.b16 %v483, %v482
        %v513 = vpack.c.b16 %v485, %v484
        %v514 = vpack.c.b16 %v487, %v486
        %v515 = vpack.c.b16 %v489, %v488
        %v516 = vpack.c.b16 %v491, %v490
        %v517 = vpack.c.b16 %v493, %v492
        %542 = vmatprep.subr.bf16.mxu0 0
        %543 = vmatpush1.bf16.msra.mxu0 %v501
        %544 = vmatprep.subr.bf16.mxu0 0
        %545 = vmatpush1.bf16.msra.mxu0 %v500
        %546 = vmatprep.subr.bf16.mxu0 0
        %547 = vmatpush1.bf16.msra.mxu0 %v499
        %548 = vmatprep.subr.bf16.mxu0 0
        %549 = vmatpush1.bf16.msra.mxu0 %v498
        %550 = vmatprep.subr.bf16.mxu0 0
        %551 = vmatpush1.bf16.msra.mxu0 %v497
        %552 = vmatprep.subr.bf16.mxu0 0
        %553 = vmatpush1.bf16.msra.mxu0 %v496
        %554 = vmatprep.subr.bf16.mxu0 0
        %555 = vmatpush1.bf16.msra.mxu0 %v495
        %556 = vmatprep.subr.bf16.mxu0 0
        %557 = vmatpush1.bf16.msra.mxu0 %v494
        %558 = vmatprep.subr.bf16.mxu0 0
        %559 = vmatpush2.bf16.msra.mxu0 %v509
        %560 = vmatprep.subr.bf16.mxu0 0
        %561 = vmatpush2.bf16.msra.mxu0 %v508
        %562 = vmatprep.subr.bf16.mxu0 0
        %563 = vmatpush2.bf16.msra.mxu0 %v507
        %564 = vmatprep.subr.bf16.mxu0 0
        %565 = vmatpush2.bf16.msra.mxu0 %v506
        %566 = vmatprep.subr.bf16.mxu0 0
        %567 = vmatpush2.bf16.msra.mxu0 %v505
        %568 = vmatprep.subr.bf16.mxu0 0
        %569 = vmatpush2.bf16.msra.mxu0 %v504
        %570 = vmatprep.subr.bf16.mxu0 0
        %571 = vmatpush2.bf16.msra.mxu0 %v503
        %572 = vmatprep.subr.bf16.mxu0 0
        %573 = vmatpush2.bf16.msra.mxu0 %v502
        %574 = vmatprep.mubr.bf16.mxu0 %v387
        %575 = vmatmul.mubr.bf16.gmra.mxu0 %v386
        %v576 = vpop.f32.mrf.mxu0
        %v577 = vadd.f32 0.0, %v576
        %v578 = vpop.f32.mrf.mxu0
        %v579 = vpop.f32.mrf.mxu0
        %v580 = vadd.f32 0.0, %v579
        %v581 = vpop.f32.mrf.mxu0
        %582 = vmatprep.mubr.bf16.mxu0 %v390
        %583 = vmatmul.mubr.bf16.gmra.mxu0 %v389
        %v584 = vpop.f32.mrf.mxu0
        %v585 = vadd.f32 0.0, %v584
        %v586 = vpop.f32.mrf.mxu0
        %v587 = vpop.f32.mrf.mxu0
        %v588 = vadd.f32 0.0, %v587
        %v589 = vpop.f32.mrf.mxu0
        %590 = vdwg.mxu0
        %591 = vmatprep.subr.bf16.mxu0 0
        %592 = vmatpush1.bf16.msra.mxu0 %v517
        %593 = vmatprep.subr.bf16.mxu0 0
        %594 = vmatpush1.bf16.msra.mxu0 %v516
        %595 = vmatprep.subr.bf16.mxu0 0
        %596 = vmatpush1.bf16.msra.mxu0 %v515
        %597 = vmatprep.subr.bf16.mxu0 0
        %598 = vmatpush1.bf16.msra.mxu0 %v514
        %599 = vmatprep.subr.bf16.mxu0 0
        %600 = vmatpush1.bf16.msra.mxu0 %v513
        %601 = vmatprep.subr.bf16.mxu0 0
        %602 = vmatpush1.bf16.msra.mxu0 %v512
        %603 = vmatprep.subr.bf16.mxu0 0
        %604 = vmatpush1.bf16.msra.mxu0 %v511
        %605 = vmatprep.subr.bf16.mxu0 0
        %606 = vmatpush1.bf16.msra.mxu0 %v510
        %607 = vmatprep.subr.bf16.mxu0 0
        %608 = vmatpush2.bf16.msra.mxu0 0
        %609 = vmatprep.subr.bf16.mxu0 0
        %610 = vmatpush2.bf16.msra.mxu0 0
        %611 = vmatprep.subr.bf16.mxu0 0
        %612 = vmatpush2.bf16.msra.mxu0 0
        %613 = vmatprep.subr.bf16.mxu0 0
        %614 = vmatpush2.bf16.msra.mxu0 0
        %615 = vmatprep.subr.bf16.mxu0 0
        %616 = vmatpush2.bf16.msra.mxu0 0
        %617 = vmatprep.subr.bf16.mxu0 0
        %618 = vmatpush2.bf16.msra.mxu0 0
        %619 = vmatprep.subr.bf16.mxu0 0
        %620 = vmatpush2.bf16.msra.mxu0 0
        %621 = vmatprep.subr.bf16.mxu0 0
        %622 = vmatpush2.bf16.msra.mxu0 0
        %623 = vmatprep.mubr.bf16.mxu0 0
        %624 = vmatmul.mubr.bf16.gmra.mxu0 %v388
        %v625 = vpop.f32.mrf.mxu0
        %v626 = vadd.f32 %v577, %v625
        %v627 = vpop.f32.mrf.mxu0
        %v628 = vpop.f32.mrf.mxu0
        %v629 = vadd.f32 %v580, %v628
        %v630 = vpop.f32.mrf.mxu0
        %631 = vmatprep.mubr.bf16.mxu0 0
        %632 = vmatmul.mubr.bf16.gmra.mxu0 %v391
        %v633 = vpop.f32.mrf.mxu0
        %v634 = vadd.f32 %v585, %v633
        %v635 = vpop.f32.mrf.mxu0
        %v636 = vpop.f32.mrf.mxu0
        %v637 = vadd.f32 %v588, %v636
        %v638 = vpop.f32.mrf.mxu0
        %639 = vdwg.mxu0
        %v640 = vadd.f32 %v306, %v626
        %v641 = vadd.f32 %v307, %v629
        %v642 = vadd.f32 %v308, %v634
        %v643 = vadd.f32 %v309, %v637
        %644 = vst [vmem:[#allocation2] sm:$0xff] %v640
        %645 = vst [vmem:[#allocation2 + $0x8] sm:$0xff] %v641
        %646 = vst [vmem:[#allocation2 + $0x10] sm:$0xff] %v642
        %647 = vst [vmem:[#allocation2 + $0x18] sm:$0xff] %v643
        %p648 = scmp.eq.s32.totalorder %s21, 2
        // Predicated region
        $region63: #{_lambda_.24} parent=53 // pred_check
          %p649 = pneg %p648
        $region64: #{_lambda_.24} parent=53 // pred_check_branch
          %651 = sbr.rel (%p649) target = $region66
        $region65: #{_lambda_.24} parent=53 // pred_region
          %v652 = vld [vmem:[#allocation2] sm:$0xff]
          %v653 = vld [vmem:[#allocation2 + $0x8] sm:$0xff]
          %v654 = vld [vmem:[#allocation2 + $0x10] sm:$0xff]
          %v655 = vld [vmem:[#allocation2 + $0x18] sm:$0xff]
          %v656 = vld [vmem:[%s287] sm:$0x1]
          %v658 = vlaneseq
          %v659 = vshrl.u32 %v658, 7
          %v660 = vsub.s32 0, %v659
          %v661 = vrot.slane %v656, %v660
          %v663 = vadd.f32 %v652, %v661
          %v664 = vadd.f32 %v653, %v661
          %v665 = vadd.f32 %v654, %v661
          %v666 = vadd.f32 %v655, %v661
          %v667 = vmax.f32 %v663, 0.0
          %v668 = vmax.f32 %v664, 0.0
          %v669 = vmax.f32 %v665, 0.0
          %v670 = vmax.f32 %v666, 0.0
          %v671 = vpack.c.bf16 %v668, %v667
          %v672 = vpack.c.bf16 %v670, %v669
          %v675 = vunpack.c.l.b16 %v671
          %v676 = vunpack.c.h.b16 %v671
          %v677 = vunpack.c.l.b16 %v672
          %v678 = vunpack.c.h.b16 %v672
          %v679 = vpack.c.b16 %v675, %v675
          %v680 = vpack.c.b16 %v676, %v676
          %v681 = vpack.c.b16 %v677, %v677
          %v682 = vpack.c.b16 %v678, %v678
          %687 = vst [vmem:[%s295] sm:$0xf] %v679
          %688 = vst [vmem:[%s295 + $0x4] sm:$0xf] %v680
          %689 = vst [vmem:[%s295 + $0x8] sm:$0xf] %v681
          %690 = vst [vmem:[%s295 + $0xc] sm:$0xf] %v682
        $region66: #{_lambda_.24} parent=53 // pred_fallthru
          _
        %s691 = smul.u32 4, %s19
        %p692 = scmp.lt.s32.totalorder %s691, 3
        %s693 = scalar_select %p692, %s691, 3
        %p694 = scmp.lt.s32.totalorder %s20, 0
        %s695 = scalar_select %p694, %s20, 0
        %s696 = sadd.s32 %s695, %s693
        %s697 = smul.addr %s696, 4
        %s698 = scalar_lea.vmem %s3, %s697
        // Predicated region
        $region67: #{_lambda_.24} parent=53 // pred_check
          %p699 = pneg %p135
        $region68: #{_lambda_.24} parent=53 // pred_check_branch
          %701 = sbr.rel (%p699) target = $region70
        $region69: #{_lambda_.24} parent=53 // pred_region
          %s702 = smul.u32 4, %s19
        $region70: #{_lambda_.24} parent=53 // pred_fallthru
          _
        // Predicated region
        $region71: #{_lambda_.24} parent=53 // pred_check
          %p703 = pneg %p135
        $region72: #{_lambda_.24} parent=53 // pred_check_branch
          %705 = sbr.rel (%p703) target = $region74
        $region73: #{_lambda_.24} parent=53 // pred_region
          %s706 = smul.u32 4, %s19
          %p707 = scmp.lt.s32.totalorder %s706, 3
          %s708 = scalar_select %p707, %s706, 3
          %p709 = scmp.lt.s32.totalorder %s20, 0
          %s710 = scalar_select %p709, %s20, 0
          %s711 = sadd.s32 %s710, %s708
          %s712 = smul.addr %s711, 4
          %s713 = scalar_lea.vmem %s3, %s712
        $region74: #{_lambda_.24} parent=53 // pred_fallthru
          _
      $region54: #{_lambda_.24} parent=5 // pred_fallthru
        _
      %p714 = scmp.le.s32.totalorder 2, %s9
      // Predicated region
      $region75: #{_lambda_.24} parent=5 // pred_check
        %p715 = pneg %p714
      $region76: #{_lambda_.24} parent=5 // pred_check_branch
        %717 = sbr.rel (%p715) target = $region78
      $region77: #{_lambda_.24} parent=5 // pred_region
        %s718 = ssub.s32 %s9, 2
      $region78: #{_lambda_.24} parent=5 // pred_fallthru
        _
    $region6: #{_lambda_.24} parent=1 // loop_footer
      %s13 = sadd.s32 1, %s9
    $region7: #{_lambda_.24} parent=1 // loop_footer_branch
      %8 = sbr.rel target = $region3
    $region8: #{_lambda_.24} parent=1 // loop_exit
      _

// kernel: _lambda_.27
$region0: #{_lambda_.27}
  #allocation0 [shape = 'u32[]', space=smem, size = 0x4, offset = 0x4, fixed_abs, tag = 'smem constant byte address 0x4 - core index']
  #allocation1 [shape = 'u32[144,128]{1,0:T(1,128)}', space=vmem, size = 0x12000, scoped, tag = 'internal scratch']
  #allocation2 [shape = 'f32[8,128]{1,0:T(8,128)}', space=vmem, size = 0x1000, scoped, tag = 'scratch operand']
  %s0 = inlined_call_operand.vmem [shape: bf16[8,1152], index: 0, kind: input, shape index: {}]
  %s1 = inlined_call_operand.vmem [shape: bf16[1152,128], index: 1, kind: input, shape index: {}]
  %s2 = inlined_call_operand.vmem [shape: f32[1,128], index: 2, kind: input, shape index: {}]
  %s3 = inlined_call_operand.vmem [shape: bf16[8,128], index: 3, kind: output, shape index: {}]
  %s4 = sld [smem:[#allocation0]]
  $region53: #{_lambda_.27} parent=0
    _
  %s6 = ssub.s32 1, %s4
  %s7 = scalar_select 0, %s6, %s4
  loop: start=0, step=1, limit=5
  $region2: #{_lambda_.27} parent=0 // loop_pre_header
    _
  $region3: #{_lambda_.27} parent=0 // loop_header
    %s9 = sphi 0, %s13
    %p10 = scmp.ge.s32.totalorder %s9, 5
    %s16 = sphi 0, %s35
    %s17 = sphi 0, %s31
    %s18 = sphi 0, %s27
    %s19 = sphi 0, %s16
    %s20 = sphi 0, %s17
    %s21 = sphi 0, %s18
    %s22 = sphi 0, %s19
    %s23 = sphi 0, %s20
    %s24 = sphi 0, %s21
    %s40 = sphi 0, %s42
    %s43 = sphi 0, %s40
    %s44 = sphi 0, %s43
    %s60 = sphi 0, %s44
    %s68 = sphi 0, %s70
    %s71 = sphi 0, %s68
    %s72 = sphi 0, %s71
    %s88 = sphi 0, %s72
    %s94 = sphi 0, %s96
    %s97 = sphi 0, %s94
    %s98 = sphi 0, %s97
    %s114 = sphi 0, %s98
    %s122 = sphi 0, %s124
    %s125 = sphi 0, %s122
    %s126 = sphi 0, %s125
    %s142 = sphi 0, %s126
  $region4: #{_lambda_.27} parent=0 // loop_header_branch
    %12 = sbr.rel (%p10) target = $region8
  $region5: #{_lambda_.27} parent=0 // loop_body
    %s14 = ssub.s32 %s9, 1
    %s15 = ssub.s32 %s9, 2
    %s25 = sadd.s32 1, %s18
    %p26 = scmp.ge.s32.totalorder %s25, 3
    %s27 = scalar_select %p26, 0, %s25
    %s28 = sadd.s32 1, %s17
    %s29 = scalar_select %p26, %s28, %s17
    %p30 = scmp.ge.s32.totalorder %s29, 1
    %s31 = scalar_select %p30, 0, %s29
    %s32 = sadd.s32 1, %s16
    %s33 = scalar_select %p30, %s32, %s16
    %p34 = scmp.ge.s32.totalorder %s33, 1
    %s35 = scalar_select %p34, 0, %s33
    %s36 = ssub.s32 %s16, %s35
    %s37 = ssub.s32 %s18, %s27
    %s38 = sor.u32 %s36, %s37
    %p39 = scmp.eq.s32.totalorder %s38, 0
    %s41 = sadd.s32 %s40, 1
    %s42 = scalar_select %p39, %s40, %s41
    %p45 = pneg %p39
    %p46 = scmp.eq.s32.totalorder %s9, 2
    %p47 = por %p45, %p46
    %p48 = scmp.ne.s32.totalorder %s40, %s43
    %p49 = scmp.eq.s32.totalorder %s9, 0
    %p50 = por %p48, %p49
    %p51 = scmp.ne.s32.totalorder %s40, %s43
    %p52 = scmp.eq.s32.totalorder %s14, 2
    %p53 = por %p51, %p52
    %p54 = scmp.ne.s32.totalorder %s43, %s44
    %p55 = scmp.eq.s32.totalorder %s14, 0
    %p56 = por %p54, %p55
    %p57 = scmp.ne.s32.totalorder %s43, %s44
    %p58 = scmp.eq.s32.totalorder %s15, 2
    %p59 = por %p57, %p58
    %p61 = scmp.ne.s32.totalorder %s44, %s60
    %p62 = scmp.eq.s32.totalorder %s15, 0
    %p63 = por %p61, %p62
    %s64 = ssub.s32 %s18, %s27
    %s65 = ssub.s32 %s17, %s31
    %s66 = sor.u32 %s64, %s65
    %p67 = scmp.eq.s32.totalorder %s66, 0
    %s69 = sadd.s32 %s68, 1
    %s70 = scalar_select %p67, %s68, %s69
    %p73 = pneg %p67
    %p74 = scmp.eq.s32.totalorder %s9, 2
    %p75 = por %p73, %p74
    %p76 = scmp.ne.s32.totalorder %s68, %s71
    %p77 = scmp.eq.s32.totalorder %s9, 0
    %p78 = por %p76, %p77
    %p79 = scmp.ne.s32.totalorder %s68, %s71
    %p80 = scmp.eq.s32.totalorder %s14, 2
    %p81 = por %p79, %p80
    %p82 = scmp.ne.s32.totalorder %s71, %s72
    %p83 = scmp.eq.s32.totalorder %s14, 0
    %p84 = por %p82, %p83
    %p85 = scmp.ne.s32.totalorder %s71, %s72
    %p86 = scmp.eq.s32.totalorder %s15, 2
    %p87 = por %p85, %p86
    %p89 = scmp.ne.s32.totalorder %s72, %s88
    %p90 = scmp.eq.s32.totalorder %s15, 0
    %p91 = por %p89, %p90
    %s92 = ssub.s32 %s17, %s31
    %p93 = scmp.eq.s32.totalorder %s92, 0
    %s95 = sadd.s32 %s94, 1
    %s96 = scalar_select %p93, %s94, %s95
    %p99 = pneg %p93
    %p100 = scmp.eq.s32.totalorder %s9, 2
    %p101 = por %p99, %p100
    %p102 = scmp.ne.s32.totalorder %s94, %s97
    %p103 = scmp.eq.s32.totalorder %s9, 0
    %p104 = por %p102, %p103
    %p105 = scmp.ne.s32.totalorder %s94, %s97
    %p106 = scmp.eq.s32.totalorder %s14, 2
    %p107 = por %p105, %p106
    %p108 = scmp.ne.s32.totalorder %s97, %s98
    %p109 = scmp.eq.s32.totalorder %s14, 0
    %p110 = por %p108, %p109
    %p111 = scmp.ne.s32.totalorder %s97, %s98
    %p112 = scmp.eq.s32.totalorder %s15, 2
    %p113 = por %p111, %p112
    %p115 = scmp.ne.s32.totalorder %s98, %s114
    %p116 = scmp.eq.s32.totalorder %s15, 0
    %p117 = por %p115, %p116
    %s118 = ssub.s32 %s16, %s35
    %s119 = ssub.s32 %s17, %s31
    %s120 = sor.u32 %s118, %s119
    %p121 = scmp.eq.s32.totalorder %s120, 0
    %s123 = sadd.s32 %s122, 1
    %s124 = scalar_select %p121, %s122, %s123
    %p127 = pneg %p121
    %p128 = scmp.eq.s32.totalorder %s9, 2
    %p129 = por %p127, %p128
    %p130 = scmp.ne.s32.totalorder %s122, %s125
    %p131 = scmp.eq.s32.totalorder %s9, 0
    %p132 = por %p130, %p131
    %p133 = scmp.ne.s32.totalorder %s122, %s125
    %p134 = scmp.eq.s32.totalorder %s14, 2
    %p135 = por %p133, %p134
    %p136 = scmp.ne.s32.totalorder %s125, %s126
    %p137 = scmp.eq.s32.totalorder %s14, 0
    %p138 = por %p136, %p137
    %p139 = scmp.ne.s32.totalorder %s125, %s126
    %p140 = scmp.eq.s32.totalorder %s15, 2
    %p141 = por %p139, %p140
    %p143 = scmp.ne.s32.totalorder %s126, %s142
    %p144 = scmp.eq.s32.totalorder %s15, 0
    %p145 = por %p143, %p144
    %p146 = scmp.le.s32.totalorder 1, %s9
    %p147 = scmp.lt.s32.totalorder %s9, 4
    %p148 = pnand %p146, %p147
    %p149 = pneg %p148
    // Predicated region
    $region9: #{_lambda_.27} parent=5 // pred_check
      _
    $region10: #{_lambda_.27} parent=5 // pred_check_branch
      %151 = sbr.rel (%p148) target = $region12
    $region11: #{_lambda_.27} parent=5 // pred_region
      %s152 = ssub.s32 %s9, 1
      // Predicated region
      $region13: #{_lambda_.27} parent=11 // pred_check
        %p153 = pneg %p110
      $region14: #{_lambda_.27} parent=11 // pred_check_branch
        %155 = sbr.rel (%p153) target = $region16
      $region15: #{_lambda_.27} parent=11 // pred_region
        %p156 = scmp.lt.s32.totalorder %s20, 0
        %s157 = scalar_select %p156, %s20, 0
        %s158 = scalar_lea.vmem %s2, %s157
      $region16: #{_lambda_.27} parent=11 // pred_fallthru
        _
    $region12: #{_lambda_.27} parent=5 // pred_fallthru
      _
    %p159 = scmp.lt.s32.totalorder %s9, 3
    // Predicated region
    $region17: #{_lambda_.27} parent=5 // pred_check
      %p160 = pneg %p159
    $region18: #{_lambda_.27} parent=5 // pred_check_branch
      %162 = sbr.rel (%p160) target = $region20
    $region19: #{_lambda_.27} parent=5 // pred_region
      // Predicated region
      $region21: #{_lambda_.27} parent=19 // pred_check
        %p163 = pneg %p50
      $region22: #{_lambda_.27} parent=19 // pred_check_branch
        %165 = sbr.rel (%p163) target = $region24
      $region23: #{_lambda_.27} parent=19 // pred_region
        %s166 = smul.u32 3, %s18
        %p167 = scmp.lt.s32.totalorder %s16, 0
        %s168 = scalar_select %p167, %s16, 0
        %p169 = scmp.lt.s32.totalorder %s166, 8
        %s170 = scalar_select %p169, %s166, 8
        %s171 = smul.addr %s168, 9
        %s172 = sadd.s32 %s170, %s171
        %s173 = smul.addr %s172, 4
        %s174 = scalar_lea.vmem %s0, %s173
        %s175 = smul.u32 3, %s18
      $region24: #{_lambda_.27} parent=19 // pred_fallthru
        _
      // Predicated region
      $region25: #{_lambda_.27} parent=19 // pred_check
        %p176 = pneg %p78
      $region26: #{_lambda_.27} parent=19 // pred_check_branch
        %178 = sbr.rel (%p176) target = $region28
      $region27: #{_lambda_.27} parent=19 // pred_region
        %s179 = smul.u32 48, %s18
        %p180 = scmp.lt.s32.totalorder %s179, 143
        %s181 = scalar_select %p180, %s179, 143
        %p182 = scmp.lt.s32.totalorder %s17, 0
        %s183 = scalar_select %p182, %s17, 0
        %s184 = sadd.s32 %s183, %s181
        %s185 = smul.addr %s184, 4
        %s186 = scalar_lea.vmem %s1, %s185
        %s187 = smul.u32 48, %s18
      $region28: #{_lambda_.27} parent=19 // pred_fallthru
        _
    $region20: #{_lambda_.27} parent=5 // pred_fallthru
      _
    %p188 = scmp.le.s32.totalorder 1, %s9
    %p189 = scmp.lt.s32.totalorder %s9, 4
    %p190 = pnand %p188, %p189
    %p191 = pneg %p190
    // Predicated region
    $region29: #{_lambda_.27} parent=5 // pred_check
      _
    $region30: #{_lambda_.27} parent=5 // pred_check_branch
      %193 = sbr.rel (%p190) target = $region32
    $region31: #{_lambda_.27} parent=5 // pred_region
      %s194 = ssub.s32 %s9, 1
      %s195 = smul.u32 3, %s21
      %p196 = scmp.lt.s32.totalorder %s19, 0
      %s197 = scalar_select %p196, %s19, 0
      %p198 = scmp.lt.s32.totalorder %s195, 8
      %s199 = scalar_select %p198, %s195, 8
      %s200 = smul.addr %s197, 9
      %s201 = sadd.s32 %s199, %s200
      %s202 = smul.addr %s201, 4
      %s203 = scalar_lea.vmem %s0, %s202
      %p204 = pneg %p56
      %p205 = pneg %p53
      %s206 = smul.u32 48, %s21
      %p207 = scmp.lt.s32.totalorder %s206, 143
      %s208 = scalar_select %p207, %s206, 143
      %p209 = scmp.lt.s32.totalorder %s20, 0
      %s210 = scalar_select %p209, %s20, 0
      %s211 = sadd.s32 %s210, %s208
      %s212 = smul.addr %s211, 4
      %s213 = scalar_lea.vmem %s1, %s212
      %p214 = pneg %p84
      %p215 = pneg %p81
      %p216 = scmp.lt.s32.totalorder %s20, 0
      %s217 = scalar_select %p216, %s20, 0
      %s218 = scalar_lea.vmem %s2, %s217
      %p219 = pneg %p110
      %p220 = pneg %p107
      %p221 = pneg %p138
      %p222 = pneg %p135
      %p223 = scmp.lt.s32.totalorder %s19, 0
      %s224 = scalar_select %p223, %s19, 0
      %p225 = scmp.lt.s32.totalorder %s20, 0
      %s226 = scalar_select %p225, %s20, 0
      %s227 = sadd.s32 %s226, %s224
      %s228 = smul.addr %s227, 4
      %s229 = scalar_lea.vmem %s3, %s228
      %s230 = smul.u32 3, %s21
      %p231 = scmp.lt.s32.totalorder %s19, 0
      %s232 = scalar_select %p231, %s19, 0
      %p233 = scmp.lt.s32.totalorder %s230, 8
      %s234 = scalar_select %p233, %s230, 8
      %s235 = smul.addr %s232, 9
      %s236 = sadd.s32 %s234, %s235
      %s237 = smul.addr %s236, 4
      %s238 = scalar_lea.vmem %s0, %s237
      %s239 = smul.u32 3, %s21
      %s240 = smul.u32 48, %s21
      %p241 = scmp.lt.s32.totalorder %s240, 143
      %s242 = scalar_select %p241, %s240, 143
      %p243 = scmp.lt.s32.totalorder %s20, 0
      %s244 = scalar_select %p243, %s20, 0
      %s245 = sadd.s32 %s244, %s242
      %s246 = smul.addr %s245, 4
      %s247 = scalar_lea.vmem %s1, %s246
      %s248 = smul.u32 48, %s21
      %p249 = scmp.lt.s32.totalorder %s20, 0
      %s250 = scalar_select %p249, %s20, 0
      %s251 = scalar_lea.vmem %s2, %s250
      %p252 = scmp.lt.s32.totalorder %s19, 0
      %s253 = scalar_select %p252, %s19, 0
      %p254 = scmp.lt.s32.totalorder %s20, 0
      %s255 = scalar_select %p254, %s20, 0
      %s256 = sadd.s32 %s255, %s253
      %s257 = smul.addr %s256, 4
      %s258 = scalar_lea.vmem %s3, %s257
      %p260 = scmp.eq.s32.totalorder %s21, 0
      // Predicated region
      $region33: #{_lambda_.27} parent=31 // pred_check
        %p261 = pneg %p260
      $region34: #{_lambda_.27} parent=31 // pred_check_branch
        %263 = sbr.rel (%p261) target = $region36
      $region35: #{_lambda_.27} parent=31 // pred_region
        %264 = vst [vmem:[#allocation2] sm:$0xff] 0.0
      $region36: #{_lambda_.27} parent=31 // pred_fallthru
        _
      %v265 = vld [vmem:[#allocation2] sm:$0xff]
      %v266 = vld [vmem:[%s238] sm:$0xff]
      %v267 = vld [vmem:[%s238 + $0x8] sm:$0xf]
      %v268 = vld [vmem:[%s247] sm:$0xf]
      %v269 = vld [vmem:[%s247 + $0x4] sm:$0xf]
      %v270 = vld [vmem:[%s247 + $0x8] sm:$0xf]
      %v271 = vld [vmem:[%s247 + $0xc] sm:$0xf]
      %v272 = vld [vmem:[%s247 + $0x10] sm:$0xf]
      %v273 = vld [vmem:[%s247 + $0x14] sm:$0xf]
      %v274 = vld [vmem:[%s247 + $0x18] sm:$0xf]
      %v275 = vld [vmem:[%s247 + $0x1c] sm:$0xf]
      %v276 = vld [vmem:[%s247 + $0x20] sm:$0xf]
      %v277 = vld [vmem:[%s247 + $0x24] sm:$0xf]
      %v278 = vld [vmem:[%s247 + $0x28] sm:$0xf]
      %v279 = vld [vmem:[%s247 + $0x2c] sm:$0xf]
      %v280 = vld [vmem:[%s247 + $0x30] sm:$0xf]
      %v281 = vld [vmem:[%s247 + $0x34] sm:$0xf]
      %v282 = vld [vmem:[%s247 + $0x38] sm:$0xf]
      %v283 = vld [vmem:[%s247 + $0x3c] sm:$0xf]
      %v284 = vld [vmem:[%s247 + $0x40] sm:$0xf]
      %v285 = vld [vmem:[%s247 + $0x44] sm:$0xf]
      %v286 = vld [vmem:[%s247 + $0x48] sm:$0xf]
      %v287 = vld [vmem:[%s247 + $0x4c] sm:$0xf]
      %v288 = vld [vmem:[%s247 + $0x50] sm:$0xf]
      %v289 = vld [vmem:[%s247 + $0x54] sm:$0xf]
      %v290 = vld [vmem:[%s247 + $0x58] sm:$0xf]
      %v291 = vld [vmem:[%s247 + $0x5c] sm:$0xf]
      %v292 = vld [vmem:[%s247 + $0x60] sm:$0xf]
      %v293 = vld [vmem:[%s247 + $0x64] sm:$0xf]
      %v294 = vld [vmem:[%s247 + $0x68] sm:$0xf]
      %v295 = vld [vmem:[%s247 + $0x6c] sm:$0xf]
      %v296 = vld [vmem:[%s247 + $0x70] sm:$0xf]
      %v297 = vld [vmem:[%s247 + $0x74] sm:$0xf]
      %v298 = vld [vmem:[%s247 + $0x78] sm:$0xf]
      %v299 = vld [vmem:[%s247 + $0x7c] sm:$0xf]
      %v300 = vld [vmem:[%s247 + $0x80] sm:$0xf]
      %v301 = vld [vmem:[%s247 + $0x84] sm:$0xf]
      %v302 = vld [vmem:[%s247 + $0x88] sm:$0xf]
      %v303 = vld [vmem:[%s247 + $0x8c] sm:$0xf]
      %v304 = vld [vmem:[%s247 + $0x90] sm:$0xf]
      %v305 = vld [vmem:[%s247 + $0x94] sm:$0xf]
      %v306 = vld [vmem:[%s247 + $0x98] sm:$0xf]
      %v307 = vld [vmem:[%s247 + $0x9c] sm:$0xf]
      %v308 = vld [vmem:[%s247 + $0xa0] sm:$0xf]
      %v309 = vld [vmem:[%s247 + $0xa4] sm:$0xf]
      %v310 = vld [vmem:[%s247 + $0xa8] sm:$0xf]
      %v311 = vld [vmem:[%s247 + $0xac] sm:$0xf]
      %v312 = vld [vmem:[%s247 + $0xb0] sm:$0xf]
      %v313 = vld [vmem:[%s247 + $0xb4] sm:$0xf]
      %v314 = vld [vmem:[%s247 + $0xb8] sm:$0xf]
      %v315 = vld [vmem:[%s247 + $0xbc] sm:$0xf]
      %v318 = vunpack.c.l.b16 %v266
      %v319 = vunpack.c.h.b16 %v266
      %v320 = vunpack.c.l.b16 %v267
      %v321 = vpack.c.b16 %v318, %v318
      %v322 = vpack.c.b16 %v319, %v319
      %v323 = vpack.c.b16 %v320, %v320
      %v375 = vunpack.c.l.b16 %v268
      %v376 = vunpack.c.l.b16 %v269
      %v377 = vunpack.c.l.b16 %v270
      %v378 = vunpack.c.l.b16 %v271
      %v379 = vunpack.c.l.b16 %v272
      %v380 = vunpack.c.l.b16 %v273
      %v381 = vunpack.c.l.b16 %v274
      %v382 = vunpack.c.l.b16 %v275
      %v383 = vunpack.c.l.b16 %v276
      %v384 = vunpack.c.l.b16 %v277
      %v385 = vunpack.c.l.b16 %v278
      %v386 = vunpack.c.l.b16 %v279
      %v387 = vunpack.c.l.b16 %v280
      %v388 = vunpack.c.l.b16 %v281
      %v389 = vunpack.c.l.b16 %v282
      %v390 = vunpack.c.l.b16 %v283
      %v391 = vunpack.c.l.b16 %v284
      %v392 = vunpack.c.l.b16 %v285
      %v393 = vunpack.c.l.b16 %v286
      %v394 = vunpack.c.l.b16 %v287
      %v395 = vunpack.c.l.b16 %v288
      %v396 = vunpack.c.l.b16 %v289
      %v397 = vunpack.c.l.b16 %v290
      %v398 = vunpack.c.l.b16 %v291
      %v399 = vunpack.c.l.b16 %v292
      %v400 = vunpack.c.l.b16 %v293
      %v401 = vunpack.c.l.b16 %v294
      %v402 = vunpack.c.l.b16 %v295
      %v403 = vunpack.c.l.b16 %v296
      %v404 = vunpack.c.l.b16 %v297
      %v405 = vunpack.c.l.b16 %v298
      %v406 = vunpack.c.l.b16 %v299
      %v407 = vunpack.c.l.b16 %v300
      %v408 = vunpack.c.l.b16 %v301
      %v409 = vunpack.c.l.b16 %v302
      %v410 = vunpack.c.l.b16 %v303
      %v411 = vunpack.c.l.b16 %v304
      %v412 = vunpack.c.l.b16 %v305
      %v413 = vunpack.c.l.b16 %v306
      %v414 = vunpack.c.l.b16 %v307
      %v415 = vunpack.c.l.b16 %v308
      %v416 = vunpack.c.l.b16 %v309
      %v417 = vunpack.c.l.b16 %v310
      %v418 = vunpack.c.l.b16 %v311
      %v419 = vunpack.c.l.b16 %v312
      %v420 = vunpack.c.l.b16 %v313
      %v421 = vunpack.c.l.b16 %v314
      %v422 = vunpack.c.l.b16 %v315
      %v423 = vpack.c.b16 %v376, %v375
      %v424 = vpack.c.b16 %v378, %v377
      %v425 = vpack.c.b16 %v380, %v379
      %v426 = vpack.c.b16 %v382, %v381
      %v427 = vpack.c.b16 %v384, %v383
      %v428 = vpack.c.b16 %v386, %v385
      %v429 = vpack.c.b16 %v388, %v387
      %v430 = vpack.c.b16 %v390, %v389
      %v431 = vpack.c.b16 %v392, %v391
      %v432 = vpack.c.b16 %v394, %v393
      %v433 = vpack.c.b16 %v396, %v395
      %v434 = vpack.c.b16 %v398, %v397
      %v435 = vpack.c.b16 %v400, %v399
      %v436 = vpack.c.b16 %v402, %v401
      %v437 = vpack.c.b16 %v404, %v403
      %v438 = vpack.c.b16 %v406, %v405
      %v439 = vpack.c.b16 %v408, %v407
      %v440 = vpack.c.b16 %v410, %v409
      %v441 = vpack.c.b16 %v412, %v411
      %v442 = vpack.c.b16 %v414, %v413
      %v443 = vpack.c.b16 %v416, %v415
      %v444 = vpack.c.b16 %v418, %v417
      %v445 = vpack.c.b16 %v420, %v419
      %v446 = vpack.c.b16 %v422, %v421
      %471 = vmatprep.subr.bf16.mxu0 0
      %472 = vmatpush1.bf16.msra.mxu0 %v430
      %473 = vmatprep.subr.bf16.mxu0 0
      %474 = vmatpush1.bf16.msra.mxu0 %v429
      %475 = vmatprep.subr.bf16.mxu0 0
      %476 = vmatpush1.bf16.msra.mxu0 %v428
      %477 = vmatprep.subr.bf16.mxu0 0
      %478 = vmatpush1.bf16.msra.mxu0 %v427
      %479 = vmatprep.subr.bf16.mxu0 0
      %480 = vmatpush1.bf16.msra.mxu0 %v426
      %481 = vmatprep.subr.bf16.mxu0 0
      %482 = vmatpush1.bf16.msra.mxu0 %v425
      %483 = vmatprep.subr.bf16.mxu0 0
      %484 = vmatpush1.bf16.msra.mxu0 %v424
      %485 = vmatprep.subr.bf16.mxu0 0
      %486 = vmatpush1.bf16.msra.mxu0 %v423
      %487 = vmatprep.subr.bf16.mxu0 0
      %488 = vmatpush2.bf16.msra.mxu0 %v438
      %489 = vmatprep.subr.bf16.mxu0 0
      %490 = vmatpush2.bf16.msra.mxu0 %v437
      %491 = vmatprep.subr.bf16.mxu0 0
      %492 = vmatpush2.bf16.msra.mxu0 %v436
      %493 = vmatprep.subr.bf16.mxu0 0
      %494 = vmatpush2.bf16.msra.mxu0 %v435
      %495 = vmatprep.subr.bf16.mxu0 0
      %496 = vmatpush2.bf16.msra.mxu0 %v434
      %497 = vmatprep.subr.bf16.mxu0 0
      %498 = vmatpush2.bf16.msra.mxu0 %v433
      %499 = vmatprep.subr.bf16.mxu0 0
      %500 = vmatpush2.bf16.msra.mxu0 %v432
      %501 = vmatprep.subr.bf16.mxu0 0
      %502 = vmatpush2.bf16.msra.mxu0 %v431
      %503 = vmatprep.mubr.bf16.mxu0 %v322
      %504 = vmatmul.mubr.bf16.gmra.mxu0 %v321
      %v505 = vpop.f32.mrf.mxu0
      %v506 = vadd.f32 0.0, %v505
      %v507 = vpop.f32.mrf.mxu0
      %v508 = vpop.f32.mrf.mxu0
      %v509 = vpop.f32.mrf.mxu0
      %510 = vdwg.mxu0
      %511 = vmatprep.subr.bf16.mxu0 0
      %512 = vmatpush1.bf16.msra.mxu0 %v446
      %513 = vmatprep.subr.bf16.mxu0 0
      %514 = vmatpush1.bf16.msra.mxu0 %v445
      %515 = vmatprep.subr.bf16.mxu0 0
      %516 = vmatpush1.bf16.msra.mxu0 %v444
      %517 = vmatprep.subr.bf16.mxu0 0
      %518 = vmatpush1.bf16.msra.mxu0 %v443
      %519 = vmatprep.subr.bf16.mxu0 0
      %520 = vmatpush1.bf16.msra.mxu0 %v442
      %521 = vmatprep.subr.bf16.mxu0 0
      %522 = vmatpush1.bf16.msra.mxu0 %v441
      %523 = vmatprep.subr.bf16.mxu0 0
      %524 = vmatpush1.bf16.msra.mxu0 %v440
      %525 = vmatprep.subr.bf16.mxu0 0
      %526 = vmatpush1.bf16.msra.mxu0 %v439
      %527 = vmatprep.subr.bf16.mxu0 0
      %528 = vmatpush2.bf16.msra.mxu0 0
      %529 = vmatprep.subr.bf16.mxu0 0
      %530 = vmatpush2.bf16.msra.mxu0 0
      %531 = vmatprep.subr.bf16.mxu0 0
      %532 = vmatpush2.bf16.msra.mxu0 0
      %533 = vmatprep.subr.bf16.mxu0 0
      %534 = vmatpush2.bf16.msra.mxu0 0
      %535 = vmatprep.subr.bf16.mxu0 0
      %536 = vmatpush2.bf16.msra.mxu0 0
      %537 = vmatprep.subr.bf16.mxu0 0
      %538 = vmatpush2.bf16.msra.mxu0 0
      %539 = vmatprep.subr.bf16.mxu0 0
      %540 = vmatpush2.bf16.msra.mxu0 0
      %541 = vmatprep.subr.bf16.mxu0 0
      %542 = vmatpush2.bf16.msra.mxu0 0
      %543 = vmatprep.mubr.bf16.mxu0 0
      %544 = vmatmul.mubr.bf16.gmra.mxu0 %v323
      %v545 = vpop.f32.mrf.mxu0
      %v546 = vadd.f32 %v506, %v545
      %v547 = vpop.f32.mrf.mxu0
      %v548 = vpop.f32.mrf.mxu0
      %v549 = vpop.f32.mrf.mxu0
      %550 = vdwg.mxu0
      %v551 = vadd.f32 %v265, %v546
      %552 = vst [vmem:[#allocation2] sm:$0xff] %v551
      %p553 = scmp.eq.s32.totalorder %s21, 2
      // Predicated region
      $region37: #{_lambda_.27} parent=31 // pred_check
        %p554 = pneg %p553
      $region38: #{_lambda_.27} parent=31 // pred_check_branch
        %556 = sbr.rel (%p554) target = $region40
      $region39: #{_lambda_.27} parent=31 // pred_region
        %v557 = vld [vmem:[#allocation2] sm:$0xff]
        %v558 = vld [vmem:[%s251] sm:$0x1]
        %v560 = vlaneseq
        %v561 = vshrl.u32 %v560, 7
        %v562 = vsub.s32 0, %v561
        %v563 = vrot.slane %v558, %v562
        %v565 = vadd.f32 %v557, %v563
        %v566 = vmax.f32 %v565, 0.0
        %v567 = vpack.c.bf16 %v566, %v566
        %568 = vst [vmem:[%s258] sm:$0xf] %v567
      $region40: #{_lambda_.27} parent=31 // pred_fallthru
        _
      %p569 = scmp.lt.s32.totalorder %s19, 0
      %s570 = scalar_select %p569, %s19, 0
      %p571 = scmp.lt.s32.totalorder %s20, 0
      %s572 = scalar_select %p571, %s20, 0
      %s573 = sadd.s32 %s572, %s570
      %s574 = smul.addr %s573, 4
      %s575 = scalar_lea.vmem %s3, %s574
      // Predicated region
      $region41: #{_lambda_.27} parent=31 // pred_check
        %p576 = pneg %p135
      $region42: #{_lambda_.27} parent=31 // pred_check_branch
        %578 = sbr.rel (%p576) target = $region44
      $region43: #{_lambda_.27} parent=31 // pred_region
        _
      $region44: #{_lambda_.27} parent=31 // pred_fallthru
        _
      // Predicated region
      $region45: #{_lambda_.27} parent=31 // pred_check
        %p579 = pneg %p135
      $region46: #{_lambda_.27} parent=31 // pred_check_branch
        %581 = sbr.rel (%p579) target = $region48
      $region47: #{_lambda_.27} parent=31 // pred_region
        %p582 = scmp.lt.s32.totalorder %s19, 0
        %s583 = scalar_select %p582, %s19, 0
        %p584 = scmp.lt.s32.totalorder %s20, 0
        %s585 = scalar_select %p584, %s20, 0
        %s586 = sadd.s32 %s585, %s583
        %s587 = smul.addr %s586, 4
        %s588 = scalar_lea.vmem %s3, %s587
      $region48: #{_lambda_.27} parent=31 // pred_fallthru
        _
    $region32: #{_lambda_.27} parent=5 // pred_fallthru
      _
    %p589 = scmp.le.s32.totalorder 2, %s9
    // Predicated region
    $region49: #{_lambda_.27} parent=5 // pred_check
      %p590 = pneg %p589
    $region50: #{_lambda_.27} parent=5 // pred_check_branch
      %592 = sbr.rel (%p590) target = $region52
    $region51: #{_lambda_.27} parent=5 // pred_region
      %s593 = ssub.s32 %s9, 2
    $region52: #{_lambda_.27} parent=5 // pred_fallthru
      _
  $region6: #{_lambda_.27} parent=0 // loop_footer
    %s13 = sadd.s32 1, %s9
  $region7: #{_lambda_.27} parent=0 // loop_footer_branch
    %8 = sbr.rel target = $region3
  $region8: #{_lambda_.27} parent=0 // loop_exit
    _

// kernel: _lambda_.26
$region0: #{_lambda_.26}
  #allocation0 [shape = 'u32[]', space=smem, size = 0x4, offset = 0x4, fixed_abs, tag = 'smem constant byte address 0x4 - core index']
  #allocation1 [shape = 'u32[144,128]{1,0:T(1,128)}', space=vmem, size = 0x12000, scoped, tag = 'internal scratch']
  #allocation2 [shape = 'f32[8,128]{1,0:T(8,128)}', space=vmem, size = 0x1000, scoped, tag = 'scratch operand']
  %s0 = inlined_call_operand.vmem [shape: bf16[8,128], index: 0, kind: input, shape index: {}]
  %s1 = inlined_call_operand.vmem [shape: bf16[128,128], index: 1, kind: input, shape index: {}]
  %s2 = inlined_call_operand.vmem [shape: f32[1,128], index: 2, kind: input, shape index: {}]
  %s3 = inlined_call_operand.vmem [shape: bf16[8,128], index: 3, kind: output, shape index: {}]
  %s4 = sld [smem:[#allocation0]]
  $region30: #{_lambda_.26} parent=0
    _
  %s6 = ssub.s32 1, %s4
  %s7 = scalar_select 0, %s6, %s4
  // Predicated region
  $region2: #{_lambda_.26} parent=0 // pred_check
    _
  $region3: #{_lambda_.26} parent=0 // pred_check_branch
    %9 = sbr.rel (0) target = $region5
  $region4: #{_lambda_.26} parent=0 // pred_region
    _
  $region5: #{_lambda_.26} parent=0 // pred_fallthru
    _
  // Predicated region
  $region6: #{_lambda_.26} parent=0 // pred_check
    _
  $region7: #{_lambda_.26} parent=0 // pred_check_branch
    %11 = sbr.rel (0) target = $region9
  $region8: #{_lambda_.26} parent=0 // pred_region
    _
  $region9: #{_lambda_.26} parent=0 // pred_fallthru
    _
  // Predicated region
  $region10: #{_lambda_.26} parent=0 // pred_check
    _
  $region11: #{_lambda_.26} parent=0 // pred_check_branch
    %13 = sbr.rel (0) target = $region13
  $region12: #{_lambda_.26} parent=0 // pred_region
    _
  $region13: #{_lambda_.26} parent=0 // pred_fallthru
    _
  %p15 = scmp.eq.s32.totalorder 0, 0
  // Predicated region
  $region14: #{_lambda_.26} parent=0 // pred_check
    %p16 = pneg %p15
  $region15: #{_lambda_.26} parent=0 // pred_check_branch
    %18 = sbr.rel (%p16) target = $region17
  $region16: #{_lambda_.26} parent=0 // pred_region
    %19 = vst [vmem:[#allocation2] sm:$0xff] 0.0
  $region17: #{_lambda_.26} parent=0 // pred_fallthru
    _
  %v20 = vld [vmem:[#allocation2] sm:$0xff]
  %v21 = vld [vmem:[%s0] sm:$0xf]
  %v22 = vld [vmem:[%s1] sm:$0xf]
  %v23 = vld [vmem:[%s1 + $0x4] sm:$0xf]
  %v24 = vld [vmem:[%s1 + $0x8] sm:$0xf]
  %v25 = vld [vmem:[%s1 + $0xc] sm:$0xf]
  %v26 = vld [vmem:[%s1 + $0x10] sm:$0xf]
  %v27 = vld [vmem:[%s1 + $0x14] sm:$0xf]
  %v28 = vld [vmem:[%s1 + $0x18] sm:$0xf]
  %v29 = vld [vmem:[%s1 + $0x1c] sm:$0xf]
  %v30 = vld [vmem:[%s1 + $0x20] sm:$0xf]
  %v31 = vld [vmem:[%s1 + $0x24] sm:$0xf]
  %v32 = vld [vmem:[%s1 + $0x28] sm:$0xf]
  %v33 = vld [vmem:[%s1 + $0x2c] sm:$0xf]
  %v34 = vld [vmem:[%s1 + $0x30] sm:$0xf]
  %v35 = vld [vmem:[%s1 + $0x34] sm:$0xf]
  %v36 = vld [vmem:[%s1 + $0x38] sm:$0xf]
  %v37 = vld [vmem:[%s1 + $0x3c] sm:$0xf]
  %v54 = vunpack.c.l.b16 %v22
  %v55 = vunpack.c.l.b16 %v23
  %v56 = vunpack.c.l.b16 %v24
  %v57 = vunpack.c.l.b16 %v25
  %v58 = vunpack.c.l.b16 %v26
  %v59 = vunpack.c.l.b16 %v27
  %v60 = vunpack.c.l.b16 %v28
  %v61 = vunpack.c.l.b16 %v29
  %v62 = vunpack.c.l.b16 %v30
  %v63 = vunpack.c.l.b16 %v31
  %v64 = vunpack.c.l.b16 %v32
  %v65 = vunpack.c.l.b16 %v33
  %v66 = vunpack.c.l.b16 %v34
  %v67 = vunpack.c.l.b16 %v35
  %v68 = vunpack.c.l.b16 %v36
  %v69 = vunpack.c.l.b16 %v37
  %v70 = vpack.c.b16 %v55, %v54
  %v71 = vpack.c.b16 %v57, %v56
  %v72 = vpack.c.b16 %v59, %v58
  %v73 = vpack.c.b16 %v61, %v60
  %v74 = vpack.c.b16 %v63, %v62
  %v75 = vpack.c.b16 %v65, %v64
  %v76 = vpack.c.b16 %v67, %v66
  %v77 = vpack.c.b16 %v69, %v68
  %86 = vmatprep.subr.bf16.mxu0 0
  %87 = vmatpush1.bf16.msra.mxu0 %v77
  %88 = vmatprep.subr.bf16.mxu0 0
  %89 = vmatpush1.bf16.msra.mxu0 %v76
  %90 = vmatprep.subr.bf16.mxu0 0
  %91 = vmatpush1.bf16.msra.mxu0 %v75
  %92 = vmatprep.subr.bf16.mxu0 0
  %93 = vmatpush1.bf16.msra.mxu0 %v74
  %94 = vmatprep.subr.bf16.mxu0 0
  %95 = vmatpush1.bf16.msra.mxu0 %v73
  %96 = vmatprep.subr.bf16.mxu0 0
  %97 = vmatpush1.bf16.msra.mxu0 %v72
  %98 = vmatprep.subr.bf16.mxu0 0
  %99 = vmatpush1.bf16.msra.mxu0 %v71
  %100 = vmatprep.subr.bf16.mxu0 0
  %101 = vmatpush1.bf16.msra.mxu0 %v70
  %102 = vmatprep.subr.bf16.mxu0 0
  %103 = vmatpush2.bf16.msra.mxu0 0
  %104 = vmatprep.subr.bf16.mxu0 0
  %105 = vmatpush2.bf16.msra.mxu0 0
  %106 = vmatprep.subr.bf16.mxu0 0
  %107 = vmatpush2.bf16.msra.mxu0 0
  %108 = vmatprep.subr.bf16.mxu0 0
  %109 = vmatpush2.bf16.msra.mxu0 0
  %110 = vmatprep.subr.bf16.mxu0 0
  %111 = vmatpush2.bf16.msra.mxu0 0
  %112 = vmatprep.subr.bf16.mxu0 0
  %113 = vmatpush2.bf16.msra.mxu0 0
  %114 = vmatprep.subr.bf16.mxu0 0
  %115 = vmatpush2.bf16.msra.mxu0 0
  %116 = vmatprep.subr.bf16.mxu0 0
  %117 = vmatpush2.bf16.msra.mxu0 0
  %118 = vmatprep.mubr.bf16.mxu0 0
  %119 = vmatmul.mubr.bf16.gmra.mxu0 %v21
  %v120 = vpop.f32.mrf.mxu0
  %v121 = vadd.f32 0.0, %v120
  %v122 = vpop.f32.mrf.mxu0
  %v123 = vpop.f32.mrf.mxu0
  %v124 = vpop.f32.mrf.mxu0
  %125 = vdwg.mxu0
  %v126 = vadd.f32 %v20, %v121
  %127 = vst [vmem:[#allocation2] sm:$0xff] %v126
  // Predicated region
  $region18: #{_lambda_.26} parent=0 // pred_check
    %p128 = pneg %p15
  $region19: #{_lambda_.26} parent=0 // pred_check_branch
    %130 = sbr.rel (%p128) target = $region21
  $region20: #{_lambda_.26} parent=0 // pred_region
    %v131 = vld [vmem:[#allocation2] sm:$0xff]
    %v132 = vld [vmem:[%s2] sm:$0x1]
    %v134 = vlaneseq
    %v135 = vshrl.u32 %v134, 7
    %v136 = vsub.s32 0, %v135
    %v137 = vrot.slane %v132, %v136
    %v139 = vadd.f32 %v131, %v137
    %v140 = vpack.c.bf16 %v139, %v139
    %141 = vst [vmem:[%s3] sm:$0xf] %v140
  $region21: #{_lambda_.26} parent=0 // pred_fallthru
    _
  // Predicated region
  $region22: #{_lambda_.26} parent=0 // pred_check
    _
  $region23: #{_lambda_.26} parent=0 // pred_check_branch
    %143 = sbr.rel (0) target = $region25
  $region24: #{_lambda_.26} parent=0 // pred_region
    _
  $region25: #{_lambda_.26} parent=0 // pred_fallthru
    _
  // Predicated region
  $region26: #{_lambda_.26} parent=0 // pred_check
    _
  $region27: #{_lambda_.26} parent=0 // pred_check_branch
    %145 = sbr.rel (0) target = $region29
  $region28: #{_lambda_.26} parent=0 // pred_region
    _
  $region29: #{_lambda_.26} parent=0 // pred_fallthru
    _

// kernel: _lambda_.31
$region0: #{_lambda_.31}
  #allocation0 [shape = 'u32[]', space=smem, size = 0x4, offset = 0x4, fixed_abs, tag = 'smem constant byte address 0x4 - core index']
  #allocation1 [shape = 'u32[144,128]{1,0:T(1,128)}', space=vmem, size = 0x12000, scoped, tag = 'internal scratch']
  #allocation2 [shape = 'f32[8,128]{1,0:T(8,128)}', space=vmem, size = 0x1000, scoped, tag = 'scratch operand']
  %s0 = inlined_call_operand.vmem [shape: bf16[8,128], index: 0, kind: input, shape index: {}]
  %s1 = inlined_call_operand.vmem [shape: bf16[128,128], index: 1, kind: input, shape index: {}]
  %s2 = inlined_call_operand.vmem [shape: f32[1,128], index: 2, kind: input, shape index: {}]
  %s3 = inlined_call_operand.hbm [shape: f32[8,128], index: 3, kind: output, shape index: {}]
  %s4 = sld [smem:[#allocation0]]
  $region30: #{_lambda_.31} parent=0
    _
  %s6 = ssub.s32 1, %s4
  %s7 = scalar_select 0, %s6, %s4
  $region1: #{_lambda_.31} parent=0
    #allocation3 [shape = 'u8[4096]{0}', space=vmem, size = 0x1000, scoped, tag = 'output window, operand 0, single buffered']
    #allocation4 [shape = 's32[1]{0}', space=sflag, size = 0x4, scoped, tag = 'scoped memory for _lambda_.31']
    %8 = vsyncpa [#allocation4], 0
    // Predicated region
    $region2: #{_lambda_.31} parent=1 // pred_check
      _
    $region3: #{_lambda_.31} parent=1 // pred_check_branch
      %10 = sbr.rel (0) target = $region5
    $region4: #{_lambda_.31} parent=1 // pred_region
      _
    $region5: #{_lambda_.31} parent=1 // pred_fallthru
      _
    // Predicated region
    $region6: #{_lambda_.31} parent=1 // pred_check
      _
    $region7: #{_lambda_.31} parent=1 // pred_check_branch
      %12 = sbr.rel (0) target = $region9
    $region8: #{_lambda_.31} parent=1 // pred_region
      _
    $region9: #{_lambda_.31} parent=1 // pred_fallthru
      _
    // Predicated region
    $region10: #{_lambda_.31} parent=1 // pred_check
      _
    $region11: #{_lambda_.31} parent=1 // pred_check_branch
      %14 = sbr.rel (0) target = $region13
    $region12: #{_lambda_.31} parent=1 // pred_region
      _
    $region13: #{_lambda_.31} parent=1 // pred_fallthru
      _
    %p16 = scmp.eq.s32.totalorder 0, 0
    // Predicated region
    $region14: #{_lambda_.31} parent=1 // pred_check
      %p17 = pneg %p16
    $region15: #{_lambda_.31} parent=1 // pred_check_branch
      %19 = sbr.rel (%p17) target = $region17
    $region16: #{_lambda_.31} parent=1 // pred_region
      %20 = vst [vmem:[#allocation2] sm:$0xff] 0.0
    $region17: #{_lambda_.31} parent=1 // pred_fallthru
      _
    %v21 = vld [vmem:[#allocation2] sm:$0xff]
    %v22 = vld [vmem:[%s0] sm:$0xf]
    %v23 = vld [vmem:[%s1] sm:$0xf]
    %v24 = vld [vmem:[%s1 + $0x4] sm:$0xf]
    %v25 = vld [vmem:[%s1 + $0x8] sm:$0xf]
    %v26 = vld [vmem:[%s1 + $0xc] sm:$0xf]
    %v27 = vld [vmem:[%s1 + $0x10] sm:$0xf]
    %v28 = vld [vmem:[%s1 + $0x14] sm:$0xf]
    %v29 = vld [vmem:[%s1 + $0x18] sm:$0xf]
    %v30 = vld [vmem:[%s1 + $0x1c] sm:$0xf]
    %v31 = vld [vmem:[%s1 + $0x20] sm:$0xf]
    %v32 = vld [vmem:[%s1 + $0x24] sm:$0xf]
    %v33 = vld [vmem:[%s1 + $0x28] sm:$0xf]
    %v34 = vld [vmem:[%s1 + $0x2c] sm:$0xf]
    %v35 = vld [vmem:[%s1 + $0x30] sm:$0xf]
    %v36 = vld [vmem:[%s1 + $0x34] sm:$0xf]
    %v37 = vld [vmem:[%s1 + $0x38] sm:$0xf]
    %v38 = vld [vmem:[%s1 + $0x3c] sm:$0xf]
    %v55 = vunpack.c.l.b16 %v23
    %v56 = vunpack.c.l.b16 %v24
    %v57 = vunpack.c.l.b16 %v25
    %v58 = vunpack.c.l.b16 %v26
    %v59 = vunpack.c.l.b16 %v27
    %v60 = vunpack.c.l.b16 %v28
    %v61 = vunpack.c.l.b16 %v29
    %v62 = vunpack.c.l.b16 %v30
    %v63 = vunpack.c.l.b16 %v31
    %v64 = vunpack.c.l.b16 %v32
    %v65 = vunpack.c.l.b16 %v33
    %v66 = vunpack.c.l.b16 %v34
    %v67 = vunpack.c.l.b16 %v35
    %v68 = vunpack.c.l.b16 %v36
    %v69 = vunpack.c.l.b16 %v37
    %v70 = vunpack.c.l.b16 %v38
    %v71 = vpack.c.b16 %v56, %v55
    %v72 = vpack.c.b16 %v58, %v57
    %v73 = vpack.c.b16 %v60, %v59
    %v74 = vpack.c.b16 %v62, %v61
    %v75 = vpack.c.b16 %v64, %v63
    %v76 = vpack.c.b16 %v66, %v65
    %v77 = vpack.c.b16 %v68, %v67
    %v78 = vpack.c.b16 %v70, %v69
    %87 = vmatprep.subr.bf16.mxu0 0
    %88 = vmatpush1.bf16.msra.mxu0 %v78
    %89 = vmatprep.subr.bf16.mxu0 0
    %90 = vmatpush1.bf16.msra.mxu0 %v77
    %91 = vmatprep.subr.bf16.mxu0 0
    %92 = vmatpush1.bf16.msra.mxu0 %v76
    %93 = vmatprep.subr.bf16.mxu0 0
    %94 = vmatpush1.bf16.msra.mxu0 %v75
    %95 = vmatprep.subr.bf16.mxu0 0
    %96 = vmatpush1.bf16.msra.mxu0 %v74
    %97 = vmatprep.subr.bf16.mxu0 0
    %98 = vmatpush1.bf16.msra.mxu0 %v73
    %99 = vmatprep.subr.bf16.mxu0 0
    %100 = vmatpush1.bf16.msra.mxu0 %v72
    %101 = vmatprep.subr.bf16.mxu0 0
    %102 = vmatpush1.bf16.msra.mxu0 %v71
    %103 = vmatprep.subr.bf16.mxu0 0
    %104 = vmatpush2.bf16.msra.mxu0 0
    %105 = vmatprep.subr.bf16.mxu0 0
    %106 = vmatpush2.bf16.msra.mxu0 0
    %107 = vmatprep.subr.bf16.mxu0 0
    %108 = vmatpush2.bf16.msra.mxu0 0
    %109 = vmatprep.subr.bf16.mxu0 0
    %110 = vmatpush2.bf16.msra.mxu0 0
    %111 = vmatprep.subr.bf16.mxu0 0
    %112 = vmatpush2.bf16.msra.mxu0 0
    %113 = vmatprep.subr.bf16.mxu0 0
    %114 = vmatpush2.bf16.msra.mxu0 0
    %115 = vmatprep.subr.bf16.mxu0 0
    %116 = vmatpush2.bf16.msra.mxu0 0
    %117 = vmatprep.subr.bf16.mxu0 0
    %118 = vmatpush2.bf16.msra.mxu0 0
    %119 = vmatprep.mubr.bf16.mxu0 0
    %120 = vmatmul.mubr.bf16.gmra.mxu0 %v22
    %v121 = vpop.f32.mrf.mxu0
    %v122 = vadd.f32 0.0, %v121
    %v123 = vpop.f32.mrf.mxu0
    %v124 = vpop.f32.mrf.mxu0
    %v125 = vpop.f32.mrf.mxu0
    %126 = vdwg.mxu0
    %v127 = vadd.f32 %v21, %v122
    %128 = vst [vmem:[#allocation2] sm:$0xff] %v127
    // Predicated region
    $region18: #{_lambda_.31} parent=1 // pred_check
      %p129 = pneg %p16
    $region19: #{_lambda_.31} parent=1 // pred_check_branch
      %131 = sbr.rel (%p129) target = $region21
    $region20: #{_lambda_.31} parent=1 // pred_region
      %v132 = vld [vmem:[#allocation2] sm:$0xff]
      %v133 = vld [vmem:[%s2] sm:$0x1]
      %v135 = vlaneseq
      %v136 = vshrl.u32 %v135, 7
      %v137 = vsub.s32 0, %v136
      %v138 = vrot.slane %v133, %v137
      %v140 = vadd.f32 %v132, %v138
      %141 = vst [vmem:[#allocation3] sm:$0xff] %v140
    $region21: #{_lambda_.31} parent=1 // pred_fallthru
      _
    // Predicated region
    $region22: #{_lambda_.31} parent=1 // pred_check
      _
    $region23: #{_lambda_.31} parent=1 // pred_check_branch
      %143 = sbr.rel (0) target = $region25
    $region24: #{_lambda_.31} parent=1 // pred_region
      %s145 = ssub.s32 128, 128
      %146 = vsyncadd [#allocation4], %s145
      %s148 = sshll.u32 [#allocation3], 4
      %s149 = int_to_ptr.vmem [resolvable:$true] %s148
      %151 = dma.vmem_to_hbm [thread:$0]  %s149, 128, %s3, [#allocation4]
    $region25: #{_lambda_.31} parent=1 // pred_fallthru
      _
    // Predicated region
    $region26: #{_lambda_.31} parent=1 // pred_check
      _
    $region27: #{_lambda_.31} parent=1 // pred_check_branch
      %153 = sbr.rel (0) target = $region29
    $region28: #{_lambda_.31} parent=1 // pred_region
      %154 = dma.done [#allocation4], 128
    $region29: #{_lambda_.31} parent=1 // pred_fallthru
      _
    %155 = vsyncpa [#allocation4], 1

// kernel: _lambda_.28
$region0: #{_lambda_.28}
  #allocation0 [shape = 'u32[]', space=smem, size = 0x4, offset = 0x4, fixed_abs, tag = 'smem constant byte address 0x4 - core index']
  #allocation1 [shape = 'u32[144,128]{1,0:T(1,128)}', space=vmem, size = 0x12000, scoped, tag = 'internal scratch']
  #allocation2 [shape = 'f32[8,128]{1,0:T(8,128)}', space=vmem, size = 0x1000, scoped, tag = 'scratch operand']
  %s0 = inlined_call_operand.vmem [shape: bf16[8,1152], index: 0, kind: input, shape index: {}]
  %s1 = inlined_call_operand.vmem [shape: bf16[1152,128], index: 1, kind: input, shape index: {}]
  %s2 = inlined_call_operand.vmem [shape: f32[1,128], index: 2, kind: input, shape index: {}]
  %s3 = inlined_call_operand.vmem [shape: bf16[8,128], index: 3, kind: input, shape index: {}]
  %s4 = inlined_call_operand.vmem [shape: bf16[8,128], index: 4, kind: output, shape index: {}]
  %s5 = sld [smem:[#allocation0]]
  $region57: #{_lambda_.28} parent=0
    _
  %s7 = ssub.s32 1, %s5
  %s8 = scalar_select 0, %s7, %s5
  loop: start=0, step=1, limit=5
  $region2: #{_lambda_.28} parent=0 // loop_pre_header
    _
  $region3: #{_lambda_.28} parent=0 // loop_header
    %s10 = sphi 0, %s14
    %p11 = scmp.ge.s32.totalorder %s10, 5
    %s17 = sphi 0, %s36
    %s18 = sphi 0, %s32
    %s19 = sphi 0, %s28
    %s20 = sphi 0, %s17
    %s21 = sphi 0, %s18
    %s22 = sphi 0, %s19
    %s23 = sphi 0, %s20
    %s24 = sphi 0, %s21
    %s25 = sphi 0, %s22
    %s41 = sphi 0, %s43
    %s44 = sphi 0, %s41
    %s45 = sphi 0, %s44
    %s61 = sphi 0, %s45
    %s69 = sphi 0, %s71
    %s72 = sphi 0, %s69
    %s73 = sphi 0, %s72
    %s89 = sphi 0, %s73
    %s95 = sphi 0, %s97
    %s98 = sphi 0, %s95
    %s99 = sphi 0, %s98
    %s115 = sphi 0, %s99
    %s123 = sphi 0, %s125
    %s126 = sphi 0, %s123
    %s127 = sphi 0, %s126
    %s143 = sphi 0, %s127
    %s151 = sphi 0, %s153
    %s154 = sphi 0, %s151
    %s155 = sphi 0, %s154
    %s171 = sphi 0, %s155
  $region4: #{_lambda_.28} parent=0 // loop_header_branch
    %13 = sbr.rel (%p11) target = $region8
  $region5: #{_lambda_.28} parent=0 // loop_body
    %s15 = ssub.s32 %s10, 1
    %s16 = ssub.s32 %s10, 2
    %s26 = sadd.s32 1, %s19
    %p27 = scmp.ge.s32.totalorder %s26, 3
    %s28 = scalar_select %p27, 0, %s26
    %s29 = sadd.s32 1, %s18
    %s30 = scalar_select %p27, %s29, %s18
    %p31 = scmp.ge.s32.totalorder %s30, 1
    %s32 = scalar_select %p31, 0, %s30
    %s33 = sadd.s32 1, %s17
    %s34 = scalar_select %p31, %s33, %s17
    %p35 = scmp.ge.s32.totalorder %s34, 1
    %s36 = scalar_select %p35, 0, %s34
    %s37 = ssub.s32 %s17, %s36
    %s38 = ssub.s32 %s19, %s28
    %s39 = sor.u32 %s37, %s38
    %p40 = scmp.eq.s32.totalorder %s39, 0
    %s42 = sadd.s32 %s41, 1
    %s43 = scalar_select %p40, %s41, %s42
    %p46 = pneg %p40
    %p47 = scmp.eq.s32.totalorder %s10, 2
    %p48 = por %p46, %p47
    %p49 = scmp.ne.s32.totalorder %s41, %s44
    %p50 = scmp.eq.s32.totalorder %s10, 0
    %p51 = por %p49, %p50
    %p52 = scmp.ne.s32.totalorder %s41, %s44
    %p53 = scmp.eq.s32.totalorder %s15, 2
    %p54 = por %p52, %p53
    %p55 = scmp.ne.s32.totalorder %s44, %s45
    %p56 = scmp.eq.s32.totalorder %s15, 0
    %p57 = por %p55, %p56
    %p58 = scmp.ne.s32.totalorder %s44, %s45
    %p59 = scmp.eq.s32.totalorder %s16, 2
    %p60 = por %p58, %p59
    %p62 = scmp.ne.s32.totalorder %s45, %s61
    %p63 = scmp.eq.s32.totalorder %s16, 0
    %p64 = por %p62, %p63
    %s65 = ssub.s32 %s19, %s28
    %s66 = ssub.s32 %s18, %s32
    %s67 = sor.u32 %s65, %s66
    %p68 = scmp.eq.s32.totalorder %s67, 0
    %s70 = sadd.s32 %s69, 1
    %s71 = scalar_select %p68, %s69, %s70
    %p74 = pneg %p68
    %p75 = scmp.eq.s32.totalorder %s10, 2
    %p76 = por %p74, %p75
    %p77 = scmp.ne.s32.totalorder %s69, %s72
    %p78 = scmp.eq.s32.totalorder %s10, 0
    %p79 = por %p77, %p78
    %p80 = scmp.ne.s32.totalorder %s69, %s72
    %p81 = scmp.eq.s32.totalorder %s15, 2
    %p82 = por %p80, %p81
    %p83 = scmp.ne.s32.totalorder %s72, %s73
    %p84 = scmp.eq.s32.totalorder %s15, 0
    %p85 = por %p83, %p84
    %p86 = scmp.ne.s32.totalorder %s72, %s73
    %p87 = scmp.eq.s32.totalorder %s16, 2
    %p88 = por %p86, %p87
    %p90 = scmp.ne.s32.totalorder %s73, %s89
    %p91 = scmp.eq.s32.totalorder %s16, 0
    %p92 = por %p90, %p91
    %s93 = ssub.s32 %s18, %s32
    %p94 = scmp.eq.s32.totalorder %s93, 0
    %s96 = sadd.s32 %s95, 1
    %s97 = scalar_select %p94, %s95, %s96
    %p100 = pneg %p94
    %p101 = scmp.eq.s32.totalorder %s10, 2
    %p102 = por %p100, %p101
    %p103 = scmp.ne.s32.totalorder %s95, %s98
    %p104 = scmp.eq.s32.totalorder %s10, 0
    %p105 = por %p103, %p104
    %p106 = scmp.ne.s32.totalorder %s95, %s98
    %p107 = scmp.eq.s32.totalorder %s15, 2
    %p108 = por %p106, %p107
    %p109 = scmp.ne.s32.totalorder %s98, %s99
    %p110 = scmp.eq.s32.totalorder %s15, 0
    %p111 = por %p109, %p110
    %p112 = scmp.ne.s32.totalorder %s98, %s99
    %p113 = scmp.eq.s32.totalorder %s16, 2
    %p114 = por %p112, %p113
    %p116 = scmp.ne.s32.totalorder %s99, %s115
    %p117 = scmp.eq.s32.totalorder %s16, 0
    %p118 = por %p116, %p117
    %s119 = ssub.s32 %s17, %s36
    %s120 = ssub.s32 %s18, %s32
    %s121 = sor.u32 %s119, %s120
    %p122 = scmp.eq.s32.totalorder %s121, 0
    %s124 = sadd.s32 %s123, 1
    %s125 = scalar_select %p122, %s123, %s124
    %p128 = pneg %p122
    %p129 = scmp.eq.s32.totalorder %s10, 2
    %p130 = por %p128, %p129
    %p131 = scmp.ne.s32.totalorder %s123, %s126
    %p132 = scmp.eq.s32.totalorder %s10, 0
    %p133 = por %p131, %p132
    %p134 = scmp.ne.s32.totalorder %s123, %s126
    %p135 = scmp.eq.s32.totalorder %s15, 2
    %p136 = por %p134, %p135
    %p137 = scmp.ne.s32.totalorder %s126, %s127
    %p138 = scmp.eq.s32.totalorder %s15, 0
    %p139 = por %p137, %p138
    %p140 = scmp.ne.s32.totalorder %s126, %s127
    %p141 = scmp.eq.s32.totalorder %s16, 2
    %p142 = por %p140, %p141
    %p144 = scmp.ne.s32.totalorder %s127, %s143
    %p145 = scmp.eq.s32.totalorder %s16, 0
    %p146 = por %p144, %p145
    %s147 = ssub.s32 %s17, %s36
    %s148 = ssub.s32 %s18, %s32
    %s149 = sor.u32 %s147, %s148
    %p150 = scmp.eq.s32.totalorder %s149, 0
    %s152 = sadd.s32 %s151, 1
    %s153 = scalar_select %p150, %s151, %s152
    %p156 = pneg %p150
    %p157 = scmp.eq.s32.totalorder %s10, 2
    %p158 = por %p156, %p157
    %p159 = scmp.ne.s32.totalorder %s151, %s154
    %p160 = scmp.eq.s32.totalorder %s10, 0
    %p161 = por %p159, %p160
    %p162 = scmp.ne.s32.totalorder %s151, %s154
    %p163 = scmp.eq.s32.totalorder %s15, 2
    %p164 = por %p162, %p163
    %p165 = scmp.ne.s32.totalorder %s154, %s155
    %p166 = scmp.eq.s32.totalorder %s15, 0
    %p167 = por %p165, %p166
    %p168 = scmp.ne.s32.totalorder %s154, %s155
    %p169 = scmp.eq.s32.totalorder %s16, 2
    %p170 = por %p168, %p169
    %p172 = scmp.ne.s32.totalorder %s155, %s171
    %p173 = scmp.eq.s32.totalorder %s16, 0
    %p174 = por %p172, %p173
    %p175 = scmp.le.s32.totalorder 1, %s10
    %p176 = scmp.lt.s32.totalorder %s10, 4
    %p177 = pnand %p175, %p176
    %p178 = pneg %p177
    // Predicated region
    $region9: #{_lambda_.28} parent=5 // pred_check
      _
    $region10: #{_lambda_.28} parent=5 // pred_check_branch
      %180 = sbr.rel (%p177) target = $region12
    $region11: #{_lambda_.28} parent=5 // pred_region
      %s181 = ssub.s32 %s10, 1
      // Predicated region
      $region13: #{_lambda_.28} parent=11 // pred_check
        %p182 = pneg %p111
      $region14: #{_lambda_.28} parent=11 // pred_check_branch
        %184 = sbr.rel (%p182) target = $region16
      $region15: #{_lambda_.28} parent=11 // pred_region
        %p185 = scmp.lt.s32.totalorder %s21, 0
        %s186 = scalar_select %p185, %s21, 0
        %s187 = scalar_lea.vmem %s2, %s186
      $region16: #{_lambda_.28} parent=11 // pred_fallthru
        _
      // Predicated region
      $region17: #{_lambda_.28} parent=11 // pred_check
        %p188 = pneg %p139
      $region18: #{_lambda_.28} parent=11 // pred_check_branch
        %190 = sbr.rel (%p188) target = $region20
      $region19: #{_lambda_.28} parent=11 // pred_region
        %p191 = scmp.lt.s32.totalorder %s20, 0
        %s192 = scalar_select %p191, %s20, 0
        %p193 = scmp.lt.s32.totalorder %s21, 0
        %s194 = scalar_select %p193, %s21, 0
        %s195 = sadd.s32 %s194, %s192
        %s196 = smul.addr %s195, 4
        %s197 = scalar_lea.vmem %s3, %s196
      $region20: #{_lambda_.28} parent=11 // pred_fallthru
        _
    $region12: #{_lambda_.28} parent=5 // pred_fallthru
      _
    %p198 = scmp.lt.s32.totalorder %s10, 3
    // Predicated region
    $region21: #{_lambda_.28} parent=5 // pred_check
      %p199 = pneg %p198
    $region22: #{_lambda_.28} parent=5 // pred_check_branch
      %201 = sbr.rel (%p199) target = $region24
    $region23: #{_lambda_.28} parent=5 // pred_region
      // Predicated region
      $region25: #{_lambda_.28} parent=23 // pred_check
        %p202 = pneg %p51
      $region26: #{_lambda_.28} parent=23 // pred_check_branch
        %204 = sbr.rel (%p202) target = $region28
      $region27: #{_lambda_.28} parent=23 // pred_region
        %s205 = smul.u32 3, %s19
        %p206 = scmp.lt.s32.totalorder %s17, 0
        %s207 = scalar_select %p206, %s17, 0
        %p208 = scmp.lt.s32.totalorder %s205, 8
        %s209 = scalar_select %p208, %s205, 8
        %s210 = smul.addr %s207, 9
        %s211 = sadd.s32 %s209, %s210
        %s212 = smul.addr %s211, 4
        %s213 = scalar_lea.vmem %s0, %s212
        %s214 = smul.u32 3, %s19
      $region28: #{_lambda_.28} parent=23 // pred_fallthru
        _
      // Predicated region
      $region29: #{_lambda_.28} parent=23 // pred_check
        %p215 = pneg %p79
      $region30: #{_lambda_.28} parent=23 // pred_check_branch
        %217 = sbr.rel (%p215) target = $region32
      $region31: #{_lambda_.28} parent=23 // pred_region
        %s218 = smul.u32 48, %s19
        %p219 = scmp.lt.s32.totalorder %s218, 143
        %s220 = scalar_select %p219, %s218, 143
        %p221 = scmp.lt.s32.totalorder %s18, 0
        %s222 = scalar_select %p221, %s18, 0
        %s223 = sadd.s32 %s222, %s220
        %s224 = smul.addr %s223, 4
        %s225 = scalar_lea.vmem %s1, %s224
        %s226 = smul.u32 48, %s19
      $region32: #{_lambda_.28} parent=23 // pred_fallthru
        _
    $region24: #{_lambda_.28} parent=5 // pred_fallthru
      _
    %p227 = scmp.le.s32.totalorder 1, %s10
    %p228 = scmp.lt.s32.totalorder %s10, 4
    %p229 = pnand %p227, %p228
    %p230 = pneg %p229
    // Predicated region
    $region33: #{_lambda_.28} parent=5 // pred_check
      _
    $region34: #{_lambda_.28} parent=5 // pred_check_branch
      %232 = sbr.rel (%p229) target = $region36
    $region35: #{_lambda_.28} parent=5 // pred_region
      %s233 = ssub.s32 %s10, 1
      %s234 = smul.u32 3, %s22
      %p235 = scmp.lt.s32.totalorder %s20, 0
      %s236 = scalar_select %p235, %s20, 0
      %p237 = scmp.lt.s32.totalorder %s234, 8
      %s238 = scalar_select %p237, %s234, 8
      %s239 = smul.addr %s236, 9
      %s240 = sadd.s32 %s238, %s239
      %s241 = smul.addr %s240, 4
      %s242 = scalar_lea.vmem %s0, %s241
      %p243 = pneg %p57
      %p244 = pneg %p54
      %s245 = smul.u32 48, %s22
      %p246 = scmp.lt.s32.totalorder %s245, 143
      %s247 = scalar_select %p246, %s245, 143
      %p248 = scmp.lt.s32.totalorder %s21, 0
      %s249 = scalar_select %p248, %s21, 0
      %s250 = sadd.s32 %s249, %s247
      %s251 = smul.addr %s250, 4
      %s252 = scalar_lea.vmem %s1, %s251
      %p253 = pneg %p85
      %p254 = pneg %p82
      %p255 = scmp.lt.s32.totalorder %s21, 0
      %s256 = scalar_select %p255, %s21, 0
      %s257 = scalar_lea.vmem %s2, %s256
      %p258 = pneg %p111
      %p259 = pneg %p108
      %p260 = scmp.lt.s32.totalorder %s20, 0
      %s261 = scalar_select %p260, %s20, 0
      %p262 = scmp.lt.s32.totalorder %s21, 0
      %s263 = scalar_select %p262, %s21, 0
      %s264 = sadd.s32 %s263, %s261
      %s265 = smul.addr %s264, 4
      %s266 = scalar_lea.vmem %s3, %s265
      %p267 = pneg %p139
      %p268 = pneg %p136
      %p269 = pneg %p167
      %p270 = pneg %p164
      %p271 = scmp.lt.s32.totalorder %s20, 0
      %s272 = scalar_select %p271, %s20, 0
      %p273 = scmp.lt.s32.totalorder %s21, 0
      %s274 = scalar_select %p273, %s21, 0
      %s275 = sadd.s32 %s274, %s272
      %s276 = smul.addr %s275, 4
      %s277 = scalar_lea.vmem %s4, %s276
      %s278 = smul.u32 3, %s22
      %p279 = scmp.lt.s32.totalorder %s20, 0
      %s280 = scalar_select %p279, %s20, 0
      %p281 = scmp.lt.s32.totalorder %s278, 8
      %s282 = scalar_select %p281, %s278, 8
      %s283 = smul.addr %s280, 9
      %s284 = sadd.s32 %s282, %s283
      %s285 = smul.addr %s284, 4
      %s286 = scalar_lea.vmem %s0, %s285
      %s287 = smul.u32 3, %s22
      %s288 = smul.u32 48, %s22
      %p289 = scmp.lt.s32.totalorder %s288, 143
      %s290 = scalar_select %p289, %s288, 143
      %p291 = scmp.lt.s32.totalorder %s21, 0
      %s292 = scalar_select %p291, %s21, 0
      %s293 = sadd.s32 %s292, %s290
      %s294 = smul.addr %s293, 4
      %s295 = scalar_lea.vmem %s1, %s294
      %s296 = smul.u32 48, %s22
      %p297 = scmp.lt.s32.totalorder %s21, 0
      %s298 = scalar_select %p297, %s21, 0
      %s299 = scalar_lea.vmem %s2, %s298
      %p300 = scmp.lt.s32.totalorder %s20, 0
      %s301 = scalar_select %p300, %s20, 0
      %p302 = scmp.lt.s32.totalorder %s21, 0
      %s303 = scalar_select %p302, %s21, 0
      %s304 = sadd.s32 %s303, %s301
      %s305 = smul.addr %s304, 4
      %s306 = scalar_lea.vmem %s3, %s305
      %p307 = scmp.lt.s32.totalorder %s20, 0
      %s308 = scalar_select %p307, %s20, 0
      %p309 = scmp.lt.s32.totalorder %s21, 0
      %s310 = scalar_select %p309, %s21, 0
      %s311 = sadd.s32 %s310, %s308
      %s312 = smul.addr %s311, 4
      %s313 = scalar_lea.vmem %s4, %s312
      %p315 = scmp.eq.s32.totalorder %s22, 0
      // Predicated region
      $region37: #{_lambda_.28} parent=35 // pred_check
        %p316 = pneg %p315
      $region38: #{_lambda_.28} parent=35 // pred_check_branch
        %318 = sbr.rel (%p316) target = $region40
      $region39: #{_lambda_.28} parent=35 // pred_region
        %319 = vst [vmem:[#allocation2] sm:$0xff] 0.0
      $region40: #{_lambda_.28} parent=35 // pred_fallthru
        _
      %v320 = vld [vmem:[#allocation2] sm:$0xff]
      %v321 = vld [vmem:[%s286] sm:$0xff]
      %v322 = vld [vmem:[%s286 + $0x8] sm:$0xf]
      %v323 = vld [vmem:[%s295] sm:$0xf]
      %v324 = vld [vmem:[%s295 + $0x4] sm:$0xf]
      %v325 = vld [vmem:[%s295 + $0x8] sm:$0xf]
      %v326 = vld [vmem:[%s295 + $0xc] sm:$0xf]
      %v327 = vld [vmem:[%s295 + $0x10] sm:$0xf]
      %v328 = vld [vmem:[%s295 + $0x14] sm:$0xf]
      %v329 = vld [vmem:[%s295 + $0x18] sm:$0xf]
      %v330 = vld [vmem:[%s295 + $0x1c] sm:$0xf]
      %v331 = vld [vmem:[%s295 + $0x20] sm:$0xf]
      %v332 = vld [vmem:[%s295 + $0x24] sm:$0xf]
      %v333 = vld [vmem:[%s295 + $0x28] sm:$0xf]
      %v334 = vld [vmem:[%s295 + $0x2c] sm:$0xf]
      %v335 = vld [vmem:[%s295 + $0x30] sm:$0xf]
      %v336 = vld [vmem:[%s295 + $0x34] sm:$0xf]
      %v337 = vld [vmem:[%s295 + $0x38] sm:$0xf]
      %v338 = vld [vmem:[%s295 + $0x3c] sm:$0xf]
      %v339 = vld [vmem:[%s295 + $0x40] sm:$0xf]
      %v340 = vld [vmem:[%s295 + $0x44] sm:$0xf]
      %v341 = vld [vmem:[%s295 + $0x48] sm:$0xf]
      %v342 = vld [vmem:[%s295 + $0x4c] sm:$0xf]
      %v343 = vld [vmem:[%s295 + $0x50] sm:$0xf]
      %v344 = vld [vmem:[%s295 + $0x54] sm:$0xf]
      %v345 = vld [vmem:[%s295 + $0x58] sm:$0xf]
      %v346 = vld [vmem:[%s295 + $0x5c] sm:$0xf]
      %v347 = vld [vmem:[%s295 + $0x60] sm:$0xf]
      %v348 = vld [vmem:[%s295 + $0x64] sm:$0xf]
      %v349 = vld [vmem:[%s295 + $0x68] sm:$0xf]
      %v350 = vld [vmem:[%s295 + $0x6c] sm:$0xf]
      %v351 = vld [vmem:[%s295 + $0x70] sm:$0xf]
      %v352 = vld [vmem:[%s295 + $0x74] sm:$0xf]
      %v353 = vld [vmem:[%s295 + $0x78] sm:$0xf]
      %v354 = vld [vmem:[%s295 + $0x7c] sm:$0xf]
      %v355 = vld [vmem:[%s295 + $0x80] sm:$0xf]
      %v356 = vld [vmem:[%s295 + $0x84] sm:$0xf]
      %v357 = vld [vmem:[%s295 + $0x88] sm:$0xf]
      %v358 = vld [vmem:[%s295 + $0x8c] sm:$0xf]
      %v359 = vld [vmem:[%s295 + $0x90] sm:$0xf]
      %v360 = vld [vmem:[%s295 + $0x94] sm:$0xf]
      %v361 = vld [vmem:[%s295 + $0x98] sm:$0xf]
      %v362 = vld [vmem:[%s295 + $0x9c] sm:$0xf]
      %v363 = vld [vmem:[%s295 + $0xa0] sm:$0xf]
      %v364 = vld [vmem:[%s295 + $0xa4] sm:$0xf]
      %v365 = vld [vmem:[%s295 + $0xa8] sm:$0xf]
      %v366 = vld [vmem:[%s295 + $0xac] sm:$0xf]
      %v367 = vld [vmem:[%s295 + $0xb0] sm:$0xf]
      %v368 = vld [vmem:[%s295 + $0xb4] sm:$0xf]
      %v369 = vld [vmem:[%s295 + $0xb8] sm:$0xf]
      %v370 = vld [vmem:[%s295 + $0xbc] sm:$0xf]
      %v373 = vunpack.c.l.b16 %v321
      %v374 = vunpack.c.h.b16 %v321
      %v375 = vunpack.c.l.b16 %v322
      %v376 = vpack.c.b16 %v373, %v373
      %v377 = vpack.c.b16 %v374, %v374
      %v378 = vpack.c.b16 %v375, %v375
      %v430 = vunpack.c.l.b16 %v323
      %v431 = vunpack.c.l.b16 %v324
      %v432 = vunpack.c.l.b16 %v325
      %v433 = vunpack.c.l.b16 %v326
      %v434 = vunpack.c.l.b16 %v327
      %v435 = vunpack.c.l.b16 %v328
      %v436 = vunpack.c.l.b16 %v329
      %v437 = vunpack.c.l.b16 %v330
      %v438 = vunpack.c.l.b16 %v331
      %v439 = vunpack.c.l.b16 %v332
      %v440 = vunpack.c.l.b16 %v333
      %v441 = vunpack.c.l.b16 %v334
      %v442 = vunpack.c.l.b16 %v335
      %v443 = vunpack.c.l.b16 %v336
      %v444 = vunpack.c.l.b16 %v337
      %v445 = vunpack.c.l.b16 %v338
      %v446 = vunpack.c.l.b16 %v339
      %v447 = vunpack.c.l.b16 %v340
      %v448 = vunpack.c.l.b16 %v341
      %v449 = vunpack.c.l.b16 %v342
      %v450 = vunpack.c.l.b16 %v343
      %v451 = vunpack.c.l.b16 %v344
      %v452 = vunpack.c.l.b16 %v345
      %v453 = vunpack.c.l.b16 %v346
      %v454 = vunpack.c.l.b16 %v347
      %v455 = vunpack.c.l.b16 %v348
      %v456 = vunpack.c.l.b16 %v349
      %v457 = vunpack.c.l.b16 %v350
      %v458 = vunpack.c.l.b16 %v351
      %v459 = vunpack.c.l.b16 %v352
      %v460 = vunpack.c.l.b16 %v353
      %v461 = vunpack.c.l.b16 %v354
      %v462 = vunpack.c.l.b16 %v355
      %v463 = vunpack.c.l.b16 %v356
      %v464 = vunpack.c.l.b16 %v357
      %v465 = vunpack.c.l.b16 %v358
      %v466 = vunpack.c.l.b16 %v359
      %v467 = vunpack.c.l.b16 %v360
      %v468 = vunpack.c.l.b16 %v361
      %v469 = vunpack.c.l.b16 %v362
      %v470 = vunpack.c.l.b16 %v363
      %v471 = vunpack.c.l.b16 %v364
      %v472 = vunpack.c.l.b16 %v365
      %v473 = vunpack.c.l.b16 %v366
      %v474 = vunpack.c.l.b16 %v367
      %v475 = vunpack.c.l.b16 %v368
      %v476 = vunpack.c.l.b16 %v369
      %v477 = vunpack.c.l.b16 %v370
      %v478 = vpack.c.b16 %v431, %v430
      %v479 = vpack.c.b16 %v433, %v432
      %v480 = vpack.c.b16 %v435, %v434
      %v481 = vpack.c.b16 %v437, %v436
      %v482 = vpack.c.b16 %v439, %v438
      %v483 = vpack.c.b16 %v441, %v440
      %v484 = vpack.c.b16 %v443, %v442
      %v485 = vpack.c.b16 %v445, %v444
      %v486 = vpack.c.b16 %v447, %v446
      %v487 = vpack.c.b16 %v449, %v448
      %v488 = vpack.c.b16 %v451, %v450
      %v489 = vpack.c.b16 %v453, %v452
      %v490 = vpack.c.b16 %v455, %v454
      %v491 = vpack.c.b16 %v457, %v456
      %v492 = vpack.c.b16 %v459, %v458
      %v493 = vpack.c.b16 %v461, %v460
      %v494 = vpack.c.b16 %v463, %v462
      %v495 = vpack.c.b16 %v465, %v464
      %v496 = vpack.c.b16 %v467, %v466
      %v497 = vpack.c.b16 %v469, %v468
      %v498 = vpack.c.b16 %v471, %v470
      %v499 = vpack.c.b16 %v473, %v472
      %v500 = vpack.c.b16 %v475, %v474
      %v501 = vpack.c.b16 %v477, %v476
      %526 = vmatprep.subr.bf16.mxu0 0
      %527 = vmatpush1.bf16.msra.mxu0 %v485
      %528 = vmatprep.subr.bf16.mxu0 0
      %529 = vmatpush1.bf16.msra.mxu0 %v484
      %530 = vmatprep.subr.bf16.mxu0 0
      %531 = vmatpush1.bf16.msra.mxu0 %v483
      %532 = vmatprep.subr.bf16.mxu0 0
      %533 = vmatpush1.bf16.msra.mxu0 %v482
      %534 = vmatprep.subr.bf16.mxu0 0
      %535 = vmatpush1.bf16.msra.mxu0 %v481
      %536 = vmatprep.subr.bf16.mxu0 0
      %537 = vmatpush1.bf16.msra.mxu0 %v480
      %538 = vmatprep.subr.bf16.mxu0 0
      %539 = vmatpush1.bf16.msra.mxu0 %v479
      %540 = vmatprep.subr.bf16.mxu0 0
      %541 = vmatpush1.bf16.msra.mxu0 %v478
      %542 = vmatprep.subr.bf16.mxu0 0
      %543 = vmatpush2.bf16.msra.mxu0 %v493
      %544 = vmatprep.subr.bf16.mxu0 0
      %545 = vmatpush2.bf16.msra.mxu0 %v492
      %546 = vmatprep.subr.bf16.mxu0 0
      %547 = vmatpush2.bf16.msra.mxu0 %v491
      %548 = vmatprep.subr.bf16.mxu0 0
      %549 = vmatpush2.bf16.msra.mxu0 %v490
      %550 = vmatprep.subr.bf16.mxu0 0
      %551 = vmatpush2.bf16.msra.mxu0 %v489
      %552 = vmatprep.subr.bf16.mxu0 0
      %553 = vmatpush2.bf16.msra.mxu0 %v488
      %554 = vmatprep.subr.bf16.mxu0 0
      %555 = vmatpush2.bf16.msra.mxu0 %v487
      %556 = vmatprep.subr.bf16.mxu0 0
      %557 = vmatpush2.bf16.msra.mxu0 %v486
      %558 = vmatprep.mubr.bf16.mxu0 %v377
      %559 = vmatmul.mubr.bf16.gmra.mxu0 %v376
      %v560 = vpop.f32.mrf.mxu0
      %v561 = vadd.f32 0.0, %v560
      %v562 = vpop.f32.mrf.mxu0
      %v563 = vpop.f32.mrf.mxu0
      %v564 = vpop.f32.mrf.mxu0
      %565 = vdwg.mxu0
      %566 = vmatprep.subr.bf16.mxu0 0
      %567 = vmatpush1.bf16.msra.mxu0 %v501
      %568 = vmatprep.subr.bf16.mxu0 0
      %569 = vmatpush1.bf16.msra.mxu0 %v500
      %570 = vmatprep.subr.bf16.mxu0 0
      %571 = vmatpush1.bf16.msra.mxu0 %v499
      %572 = vmatprep.subr.bf16.mxu0 0
      %573 = vmatpush1.bf16.msra.mxu0 %v498
      %574 = vmatprep.subr.bf16.mxu0 0
      %575 = vmatpush1.bf16.msra.mxu0 %v497
      %576 = vmatprep.subr.bf16.mxu0 0
      %577 = vmatpush1.bf16.msra.mxu0 %v496
      %578 = vmatprep.subr.bf16.mxu0 0
      %579 = vmatpush1.bf16.msra.mxu0 %v495
      %580 = vmatprep.subr.bf16.mxu0 0
      %581 = vmatpush1.bf16.msra.mxu0 %v494
      %582 = vmatprep.subr.bf16.mxu0 0
      %583 = vmatpush2.bf16.msra.mxu0 0
      %584 = vmatprep.subr.bf16.mxu0 0
      %585 = vmatpush2.bf16.msra.mxu0 0
      %586 = vmatprep.subr.bf16.mxu0 0
      %587 = vmatpush2.bf16.msra.mxu0 0
      %588 = vmatprep.subr.bf16.mxu0 0
      %589 = vmatpush2.bf16.msra.mxu0 0
      %590 = vmatprep.subr.bf16.mxu0 0
      %591 = vmatpush2.bf16.msra.mxu0 0
      %592 = vmatprep.subr.bf16.mxu0 0
      %593 = vmatpush2.bf16.msra.mxu0 0
      %594 = vmatprep.subr.bf16.mxu0 0
      %595 = vmatpush2.bf16.msra.mxu0 0
      %596 = vmatprep.subr.bf16.mxu0 0
      %597 = vmatpush2.bf16.msra.mxu0 0
      %598 = vmatprep.mubr.bf16.mxu0 0
      %599 = vmatmul.mubr.bf16.gmra.mxu0 %v378
      %v600 = vpop.f32.mrf.mxu0
      %v601 = vadd.f32 %v561, %v600
      %v602 = vpop.f32.mrf.mxu0
      %v603 = vpop.f32.mrf.mxu0
      %v604 = vpop.f32.mrf.mxu0
      %605 = vdwg.mxu0
      %v606 = vadd.f32 %v320, %v601
      %607 = vst [vmem:[#allocation2] sm:$0xff] %v606
      %p608 = scmp.eq.s32.totalorder %s22, 2
      // Predicated region
      $region41: #{_lambda_.28} parent=35 // pred_check
        %p609 = pneg %p608
      $region42: #{_lambda_.28} parent=35 // pred_check_branch
        %611 = sbr.rel (%p609) target = $region44
      $region43: #{_lambda_.28} parent=35 // pred_region
        %v612 = vld [vmem:[#allocation2] sm:$0xff]
        %v613 = vld [vmem:[%s299] sm:$0x1]
        %v615 = vlaneseq
        %v616 = vshrl.u32 %v615, 7
        %v617 = vsub.s32 0, %v616
        %v618 = vrot.slane %v613, %v617
        %v620 = vadd.f32 %v612, %v618
        %v621 = vmax.f32 %v620, 0.0
        %v622 = vld [vmem:[%s306] sm:$0xf]
        %v623 = vunpack.c.l.bf16 %v622
        %v624 = vadd.f32 %v621, %v623
        %v625 = vmax.f32 %v624, 0.0
        %v626 = vpack.c.bf16 %v625, %v625
        %627 = vst [vmem:[%s313] sm:$0xf] %v626
      $region44: #{_lambda_.28} parent=35 // pred_fallthru
        _
      %p628 = scmp.lt.s32.totalorder %s20, 0
      %s629 = scalar_select %p628, %s20, 0
      %p630 = scmp.lt.s32.totalorder %s21, 0
      %s631 = scalar_select %p630, %s21, 0
      %s632 = sadd.s32 %s631, %s629
      %s633 = smul.addr %s632, 4
      %s634 = scalar_lea.vmem %s4, %s633
      // Predicated region
      $region45: #{_lambda_.28} parent=35 // pred_check
        %p635 = pneg %p164
      $region46: #{_lambda_.28} parent=35 // pred_check_branch
        %637 = sbr.rel (%p635) target = $region48
      $region47: #{_lambda_.28} parent=35 // pred_region
        _
      $region48: #{_lambda_.28} parent=35 // pred_fallthru
        _
      // Predicated region
      $region49: #{_lambda_.28} parent=35 // pred_check
        %p638 = pneg %p164
      $region50: #{_lambda_.28} parent=35 // pred_check_branch
        %640 = sbr.rel (%p638) target = $region52
      $region51: #{_lambda_.28} parent=35 // pred_region
        %p641 = scmp.lt.s32.totalorder %s20, 0
        %s642 = scalar_select %p641, %s20, 0
        %p643 = scmp.lt.s32.totalorder %s21, 0
        %s644 = scalar_select %p643, %s21, 0
        %s645 = sadd.s32 %s644, %s642
        %s646 = smul.addr %s645, 4
        %s647 = scalar_lea.vmem %s4, %s646
      $region52: #{_lambda_.28} parent=35 // pred_fallthru
        _
    $region36: #{_lambda_.28} parent=5 // pred_fallthru
      _
    %p648 = scmp.le.s32.totalorder 2, %s10
    // Predicated region
    $region53: #{_lambda_.28} parent=5 // pred_check
      %p649 = pneg %p648
    $region54: #{_lambda_.28} parent=5 // pred_check_branch
      %651 = sbr.rel (%p649) target = $region56
    $region55: #{_lambda_.28} parent=5 // pred_region
      %s652 = ssub.s32 %s10, 2
    $region56: #{_lambda_.28} parent=5 // pred_fallthru
      _
  $region6: #{_lambda_.28} parent=0 // loop_footer
    %s14 = sadd.s32 1, %s10
  $region7: #{_lambda_.28} parent=0 // loop_footer_branch
    %9 = sbr.rel target = $region3
  $region8: #{_lambda_.28} parent=0 // loop_exit
    _

</llo_original>
